<compile_context>
chip_gen: v6e
topology: v6e:2x2x1
jax: 0.10.0
libtpu: 0.0.40
codegen_flags: <defaults>
</compile_context>

<pallas_src>
import functools

import jax
import jax.numpy as jnp
import numpy as np
from jax import lax
from jax.experimental import pallas as pl
from jax.experimental.pallas import tpu as pltpu


# --------------------------------------------------------------------------
# Fused kernel: one grid step = the FULL rnn_steps recurrence for one batch
# element.  All state lives in registers / VMEM values; only the per-step
# (8, H*W) logits slab is written to HBM.
#
# Inputs : axh   (1, 3Ch, HW)  x-path preactivation (+bx, +bh_z, +bh_r)
#          wh_t  (9, 3Ch, Ch)  per-tap transposed h-path weights
#          bhn   (Ch, HW)      broadcast candidate-gate bias
#          masks (9, Ch, HW)   zero-padding boundary masks for the roll taps
#          woutT (8, Ch)       1x1 head weight, transposed, sublane-padded
#          boutB (8, HW)       head bias, broadcast, sublane-padded
# Output : out   (1, steps, 8, HW)  per-step logits (rows >= n_classes are 0)
# --------------------------------------------------------------------------
def rcnn3_kernel(axh_ref, wh_ref, bhn_ref, masks_ref, woutT_ref, boutB_ref,
                 out_ref, *, W):
    three_ch, HW = axh_ref.shape[1], axh_ref.shape[2]
    Ch = three_ch // 3
    steps = out_ref.shape[1]

    def gru_step(h):
        # h-path 3x3 conv via 9 lane-rolls on the flat (Ch, HW) state.
        ah = None
        for k in range(9):
            dy, dx = k // 3 - 1, k % 3 - 1
            off = dy * W + dx
            if off == 0:
                tap = h                                    # center tap, no mask
            else:
                tap = pltpu.roll(h, shift=(-off) % HW, axis=1) * masks_ref[k]
            contrib = jnp.dot(wh_ref[k], tap,
                              preferred_element_type=jnp.float32)
            ah = contrib if ah is None else ah + contrib

        # GRU gates (one sigmoid over the concatenated [z|r] block).
        zr = jax.nn.sigmoid(axh_ref[0, 0:2 * Ch, :] + ah[0:2 * Ch])
        z = zr[0:Ch]
        r = zr[Ch:2 * Ch]
        n = jnp.tanh(axh_ref[0, 2 * Ch:3 * Ch, :]
                     + r * (ah[2 * Ch:3 * Ch] + bhn_ref[...]))
        return (1.0 - z) * n + z * h

    h = jnp.zeros((Ch, HW), jnp.float32)                   # Ht = None -> zeros
    for s in range(steps):
        h = gru_step(h)
        # 1x1 head, already channel-major -> full-lane (8, HW) store.
        out_ref[0, s] = (jnp.dot(woutT_ref[...], h,
                                 preferred_element_type=jnp.float32)
                         + boutB_ref[...])


def rcnn3_forward(x_nchw, params, rnn_steps):
    """Mirrors rcnn3.forward: unrolled ConvGRU, returns the list of ht (NCHW)."""
    x_nhwc = jnp.transpose(x_nchw, (0, 2, 3, 1)).astype(jnp.float32)
    N, H, W, _ = x_nhwc.shape
    Ch = params["wh"].shape[2]
    nc = params["wout"].shape[-1]
    HW = H * W
    NCP = 8                                   # class rows padded to 1 sublane grp

    # ---- step-invariant x-path conv, done once by XLA ------------------------
    dn = ("NHWC", "HWIO", "NHWC")
    # bh for z/r folds into the x-path; bh_n must stay inside (multiplied by r).
    bias = params["bx"] + jnp.concatenate(
        [params["bh"][:2 * Ch], jnp.zeros((Ch,), jnp.float32)])
    axh = lax.conv_general_dilated(x_nhwc, params["wx"], (1, 1), "SAME",
                                   dimension_numbers=dn) + bias
    axh = jnp.transpose(axh, (0, 3, 1, 2)).reshape(N, 3 * Ch, HW)

    # ---- weight / bias repacking (channel-major) ------------------------------
    wh_t = jnp.transpose(params["wh"], (0, 1, 3, 2)).reshape(9, 3 * Ch, Ch)
    bhn_b = jnp.broadcast_to(params["bh"][2 * Ch:].reshape(Ch, 1), (Ch, HW))
    wout_t = jnp.zeros((NCP, Ch), jnp.float32).at[:nc].set(params["wout"].T)
    bout_b = jnp.zeros((NCP, HW), jnp.float32).at[:nc].set(
        jnp.broadcast_to(params["bout"].reshape(nc, 1), (nc, HW)))

    # ---- boundary masks for the 9 roll-based taps (SAME zero padding) --------
    ys = np.arange(HW) // W
    xs = np.arange(HW) % W
    m = np.zeros((9, HW), np.float32)
    for k in range(9):
        dy, dx = k // 3 - 1, k % 3 - 1
        m[k] = ((ys + dy >= 0) & (ys + dy < H)
                & (xs + dx >= 0) & (xs + dx < W)).astype(np.float32)
    masks = jnp.asarray(np.ascontiguousarray(
        np.broadcast_to(m[:, None, :], (9, Ch, HW))))

    kernel = functools.partial(rcnn3_kernel, W=W)

    grid_spec = pltpu.PrefetchScalarGridSpec(
        num_scalar_prefetch=0,
        grid=(N,),
        in_specs=[
            pl.BlockSpec((1, 3 * Ch, HW), lambda n: (n, 0, 0)),
            pl.BlockSpec((9, 3 * Ch, Ch), lambda n: (0, 0, 0)),
            pl.BlockSpec((Ch, HW), lambda n: (0, 0)),
            pl.BlockSpec((9, Ch, HW), lambda n: (0, 0, 0)),
            pl.BlockSpec((NCP, Ch), lambda n: (0, 0)),
            pl.BlockSpec((NCP, HW), lambda n: (0, 0)),
        ],
        out_specs=pl.BlockSpec((1, rnn_steps, NCP, HW),
                               lambda n: (n, 0, 0, 0)),
    )

    out = pl.pallas_call(
        kernel,
        out_shape=jax.ShapeDtypeStruct((N, rnn_steps, NCP, HW), jnp.float32),
        grid_spec=grid_spec,
        compiler_params=pltpu.CompilerParams(
            dimension_semantics=("parallel",)),
    )(axh, wh_t, bhn_b, masks, wout_t, bout_b)

    # (N, steps, 8, H*W) -> list of per-step PyTorch-NCHW logits
    logits = out[:, :, :nc, :].reshape(N, rnn_steps, nc, H, W)
    logits = jnp.transpose(logits, (1, 0, 2, 3, 4))        # (steps, N, nc, H, W)
    return [logits[i] for i in range(rnn_steps)]


# --------------------------------------------------------------------------
# Pure-JAX reference (lax.conv) to validate the fused kernel numerics.
# --------------------------------------------------------------------------
def _ref_cell(x_nhwc, h_nhwc, params):
    Ch = h_nhwc.shape[-1]
    dn = ("NHWC", "HWIO", "NHWC")
    ax = lax.conv_general_dilated(x_nhwc, params["wx"], (1, 1), "SAME",
                                  dimension_numbers=dn) + params["bx"]
    ah = lax.conv_general_dilated(h_nhwc, params["wh"], (1, 1), "SAME",
                                  dimension_numbers=dn) + params["bh"]
    z = jax.nn.sigmoid(ax[..., :Ch] + ah[..., :Ch])
    r = jax.nn.sigmoid(ax[..., Ch:2 * Ch] + ah[..., Ch:2 * Ch])
    n = jnp.tanh(ax[..., 2 * Ch:] + r * ah[..., 2 * Ch:])
    hnew = (1.0 - z) * n + z * h_nhwc
    ht = jnp.einsum("nhwc,ck->nhwk", hnew, params["wout"]) + params["bout"]
    return hnew, ht


def _ref_forward(x_nchw, params, rnn_steps):
    x_nhwc = jnp.transpose(x_nchw, (0, 2, 3, 1)).astype(jnp.float32)
    N, H, W, _ = x_nhwc.shape
    Ch = params["wh"].shape[2]
    Ht = jnp.zeros((N, H, W, Ch), jnp.float32)
    outs = []
    for _ in range(rnn_steps):
        Ht, ht = _ref_cell(x_nhwc, Ht, params)
        outs.append(jnp.transpose(ht, (0, 3, 1, 2)))
    return outs


def init_params(key, cin, hidden, n_classes):
    ks = jax.random.split(key, 6)
    s = 0.1
    return {
        "wx": s * jax.random.normal(ks[0], (3, 3, cin, 3 * hidden), jnp.float32),
        "wh": s * jax.random.normal(ks[1], (3, 3, hidden, 3 * hidden), jnp.float32),
        "bx": s * jax.random.normal(ks[2], (3 * hidden,), jnp.float32),
        "bh": s * jax.random.normal(ks[3], (3 * hidden,), jnp.float32),
        "wout": s * jax.random.normal(ks[4], (hidden, n_classes), jnp.float32),
        "bout": s * jax.random.normal(ks[5], (n_classes,), jnp.float32),
    }


if __name__ == "__main__":
    # args.steps = 3, args.hidden_size = 32, input_size = 3, n_classes = 2
    STEPS, HIDDEN, CIN, NCLASSES = 3, 32, 3, 2
    N, H, W = 2, 16, 16

    key = jax.random.PRNGKey(0)
    kx_, kp = jax.random.split(key)
    x = jax.random.normal(kx_, (N, CIN, H, W), jnp.float32)   # PyTorch NCHW input
    params = init_params(kp, CIN, HIDDEN, NCLASSES)

    outs = rcnn3_forward(x, params, STEPS)
    outs = [jax.block_until_ready(o) for o in outs]

    refs = _ref_forward(x, params, STEPS)
    for o, r in zip(outs, refs):
        assert o.shape == (N, NCLASSES, H, W)
        np.testing.assert_allclose(np.asarray(o), np.asarray(r),
                                   rtol=2e-3, atol=2e-3)

    print("KERNEL_OK")
</pallas_src>

<mosaic_0001>
module attributes {stable_mosaic.version = 11 : i64} {
  func.func @rcnn3_kernel(%arg0: i32, %arg1: memref<1x96x256xf32, #tpu.memory_space<vmem>>, %arg2: memref<9x96x32xf32, #tpu.memory_space<vmem>>, %arg3: memref<32x256xf32, #tpu.memory_space<vmem>>, %arg4: memref<9x32x256xf32, #tpu.memory_space<vmem>>, %arg5: memref<8x32xf32, #tpu.memory_space<vmem>>, %arg6: memref<8x256xf32, #tpu.memory_space<vmem>>, %arg7: memref<1x3x8x256xf32, #tpu.memory_space<vmem>>) attributes {dimension_semantics = [#tpu.dimension_semantics<parallel>], iteration_bounds = array<i64: 2>, scalar_prefetch = 0 : i64, scratch_operands = 0 : i64, tpu.core_type = #tpu.core_type<tc>, window_params = [{transform_indices = @transform_0, window_bounds = array<i64: 1, 96, 256>}, {pipeline_mode = #tpu.pipeline_mode<synchronous>, transform_indices = @transform_1, window_bounds = array<i64: 9, 96, 32>}, {pipeline_mode = #tpu.pipeline_mode<synchronous>, transform_indices = @transform_2, window_bounds = array<i64: 32, 256>}, {pipeline_mode = #tpu.pipeline_mode<synchronous>, transform_indices = @transform_3, window_bounds = array<i64: 9, 32, 256>}, {pipeline_mode = #tpu.pipeline_mode<synchronous>, transform_indices = @transform_4, window_bounds = array<i64: 8, 32>}, {pipeline_mode = #tpu.pipeline_mode<synchronous>, transform_indices = @transform_5, window_bounds = array<i64: 8, 256>}, {transform_indices = @transform_6, window_bounds = array<i64: 1, 3, 8, 256>}]} {
    %cst = arith.constant 0.000000e+00 : f32
    %0 = vector.broadcast %cst : f32 to vector<32x256xf32>
    %c17_i32 = arith.constant 17 : i32
    %1 = tpu.dynamic_rotate %0 by %c17_i32 dim 1 : vector<32x256xf32>, i32 -> vector<32x256xf32>
    %c0 = arith.constant 0 : index
    %c0_0 = arith.constant 0 : index
    %c0_1 = arith.constant 0 : index
    %2 = vector.load %arg4[%c0, %c0_0, %c0_1] : memref<9x32x256xf32, #tpu.memory_space<vmem>>, vector<1x32x256xf32>
    %3 = vector.shape_cast %2 : vector<1x32x256xf32> to vector<32x256xf32>
    %4 = arith.mulf %1, %3 : vector<32x256xf32>
    %c0_2 = arith.constant 0 : index
    %c0_3 = arith.constant 0 : index
    %c0_4 = arith.constant 0 : index
    %5 = vector.load %arg2[%c0_2, %c0_3, %c0_4] : memref<9x96x32xf32, #tpu.memory_space<vmem>>, vector<1x96x32xf32>
    %6 = vector.shape_cast %5 : vector<1x96x32xf32> to vector<96x32xf32>
    %cst_5 = arith.constant dense<0.000000e+00> : vector<96x256xf32>
    %7 = tpu.matmul %6, %4, %cst_5 {dimension_numbers = #tpu.dot_dimension_numbers<[1], [0], [0], [1], [0, 0, 1, 1], [], []>} : vector<96x32xf32>, vector<32x256xf32>, vector<96x256xf32> -> vector<96x256xf32>
    %c16_i32 = arith.constant 16 : i32
    %8 = tpu.dynamic_rotate %0 by %c16_i32 dim 1 : vector<32x256xf32>, i32 -> vector<32x256xf32>
    %c1 = arith.constant 1 : index
    %c0_6 = arith.constant 0 : index
    %c0_7 = arith.constant 0 : index
    %9 = vector.load %arg4[%c1, %c0_6, %c0_7] : memref<9x32x256xf32, #tpu.memory_space<vmem>>, vector<1x32x256xf32>
    %10 = vector.shape_cast %9 : vector<1x32x256xf32> to vector<32x256xf32>
    %11 = arith.mulf %8, %10 : vector<32x256xf32>
    %c1_8 = arith.constant 1 : index
    %c0_9 = arith.constant 0 : index
    %c0_10 = arith.constant 0 : index
    %12 = vector.load %arg2[%c1_8, %c0_9, %c0_10] : memref<9x96x32xf32, #tpu.memory_space<vmem>>, vector<1x96x32xf32>
    %13 = vector.shape_cast %12 : vector<1x96x32xf32> to vector<96x32xf32>
    %cst_11 = arith.constant dense<0.000000e+00> : vector<96x256xf32>
    %14 = tpu.matmul %13, %11, %cst_11 {dimension_numbers = #tpu.dot_dimension_numbers<[1], [0], [0], [1], [0, 0, 1, 1], [], []>} : vector<96x32xf32>, vector<32x256xf32>, vector<96x256xf32> -> vector<96x256xf32>
    %15 = arith.addf %7, %14 : vector<96x256xf32>
    %c15_i32 = arith.constant 15 : i32
    %16 = tpu.dynamic_rotate %0 by %c15_i32 dim 1 : vector<32x256xf32>, i32 -> vector<32x256xf32>
    %c2 = arith.constant 2 : index
    %c0_12 = arith.constant 0 : index
    %c0_13 = arith.constant 0 : index
    %17 = vector.load %arg4[%c2, %c0_12, %c0_13] : memref<9x32x256xf32, #tpu.memory_space<vmem>>, vector<1x32x256xf32>
    %18 = vector.shape_cast %17 : vector<1x32x256xf32> to vector<32x256xf32>
    %19 = arith.mulf %16, %18 : vector<32x256xf32>
    %c2_14 = arith.constant 2 : index
    %c0_15 = arith.constant 0 : index
    %c0_16 = arith.constant 0 : index
    %20 = vector.load %arg2[%c2_14, %c0_15, %c0_16] : memref<9x96x32xf32, #tpu.memory_space<vmem>>, vector<1x96x32xf32>
    %21 = vector.shape_cast %20 : vector<1x96x32xf32> to vector<96x32xf32>
    %cst_17 = arith.constant dense<0.000000e+00> : vector<96x256xf32>
    %22 = tpu.matmul %21, %19, %cst_17 {dimension_numbers = #tpu.dot_dimension_numbers<[1], [0], [0], [1], [0, 0, 1, 1], [], []>} : vector<96x32xf32>, vector<32x256xf32>, vector<96x256xf32> -> vector<96x256xf32>
    %23 = arith.addf %15, %22 : vector<96x256xf32>
    %c1_i32 = arith.constant 1 : i32
    %24 = tpu.dynamic_rotate %0 by %c1_i32 dim 1 : vector<32x256xf32>, i32 -> vector<32x256xf32>
    %c3 = arith.constant 3 : index
    %c0_18 = arith.constant 0 : index
    %c0_19 = arith.constant 0 : index
    %25 = vector.load %arg4[%c3, %c0_18, %c0_19] : memref<9x32x256xf32, #tpu.memory_space<vmem>>, vector<1x32x256xf32>
    %26 = vector.shape_cast %25 : vector<1x32x256xf32> to vector<32x256xf32>
    %27 = arith.mulf %24, %26 : vector<32x256xf32>
    %c3_20 = arith.constant 3 : index
    %c0_21 = arith.constant 0 : index
    %c0_22 = arith.constant 0 : index
    %28 = vector.load %arg2[%c3_20, %c0_21, %c0_22] : memref<9x96x32xf32, #tpu.memory_space<vmem>>, vector<1x96x32xf32>
    %29 = vector.shape_cast %28 : vector<1x96x32xf32> to vector<96x32xf32>
    %cst_23 = arith.constant dense<0.000000e+00> : vector<96x256xf32>
    %30 = tpu.matmul %29, %27, %cst_23 {dimension_numbers = #tpu.dot_dimension_numbers<[1], [0], [0], [1], [0, 0, 1, 1], [], []>} : vector<96x32xf32>, vector<32x256xf32>, vector<96x256xf32> -> vector<96x256xf32>
    %31 = arith.addf %23, %30 : vector<96x256xf32>
    %c4 = arith.constant 4 : index
    %c0_24 = arith.constant 0 : index
    %c0_25 = arith.constant 0 : index
    %32 = vector.load %arg2[%c4, %c0_24, %c0_25] : memref<9x96x32xf32, #tpu.memory_space<vmem>>, vector<1x96x32xf32>
    %33 = vector.shape_cast %32 : vector<1x96x32xf32> to vector<96x32xf32>
    %cst_26 = arith.constant dense<0.000000e+00> : vector<96x256xf32>
    %34 = tpu.matmul %33, %0, %cst_26 {dimension_numbers = #tpu.dot_dimension_numbers<[1], [0], [0], [1], [0, 0, 1, 1], [], []>} : vector<96x32xf32>, vector<32x256xf32>, vector<96x256xf32> -> vector<96x256xf32>
    %35 = arith.addf %31, %34 : vector<96x256xf32>
    %c255_i32 = arith.constant 255 : i32
    %36 = tpu.dynamic_rotate %0 by %c255_i32 dim 1 : vector<32x256xf32>, i32 -> vector<32x256xf32>
    %c5 = arith.constant 5 : index
    %c0_27 = arith.constant 0 : index
    %c0_28 = arith.constant 0 : index
    %37 = vector.load %arg4[%c5, %c0_27, %c0_28] : memref<9x32x256xf32, #tpu.memory_space<vmem>>, vector<1x32x256xf32>
    %38 = vector.shape_cast %37 : vector<1x32x256xf32> to vector<32x256xf32>
    %39 = arith.mulf %36, %38 : vector<32x256xf32>
    %c5_29 = arith.constant 5 : index
    %c0_30 = arith.constant 0 : index
    %c0_31 = arith.constant 0 : index
    %40 = vector.load %arg2[%c5_29, %c0_30, %c0_31] : memref<9x96x32xf32, #tpu.memory_space<vmem>>, vector<1x96x32xf32>
    %41 = vector.shape_cast %40 : vector<1x96x32xf32> to vector<96x32xf32>
    %cst_32 = arith.constant dense<0.000000e+00> : vector<96x256xf32>
    %42 = tpu.matmul %41, %39, %cst_32 {dimension_numbers = #tpu.dot_dimension_numbers<[1], [0], [0], [1], [0, 0, 1, 1], [], []>} : vector<96x32xf32>, vector<32x256xf32>, vector<96x256xf32> -> vector<96x256xf32>
    %43 = arith.addf %35, %42 : vector<96x256xf32>
    %c241_i32 = arith.constant 241 : i32
    %44 = tpu.dynamic_rotate %0 by %c241_i32 dim 1 : vector<32x256xf32>, i32 -> vector<32x256xf32>
    %c6 = arith.constant 6 : index
    %c0_33 = arith.constant 0 : index
    %c0_34 = arith.constant 0 : index
    %45 = vector.load %arg4[%c6, %c0_33, %c0_34] : memref<9x32x256xf32, #tpu.memory_space<vmem>>, vector<1x32x256xf32>
    %46 = vector.shape_cast %45 : vector<1x32x256xf32> to vector<32x256xf32>
    %47 = arith.mulf %44, %46 : vector<32x256xf32>
    %c6_35 = arith.constant 6 : index
    %c0_36 = arith.constant 0 : index
    %c0_37 = arith.constant 0 : index
    %48 = vector.load %arg2[%c6_35, %c0_36, %c0_37] : memref<9x96x32xf32, #tpu.memory_space<vmem>>, vector<1x96x32xf32>
    %49 = vector.shape_cast %48 : vector<1x96x32xf32> to vector<96x32xf32>
    %cst_38 = arith.constant dense<0.000000e+00> : vector<96x256xf32>
    %50 = tpu.matmul %49, %47, %cst_38 {dimension_numbers = #tpu.dot_dimension_numbers<[1], [0], [0], [1], [0, 0, 1, 1], [], []>} : vector<96x32xf32>, vector<32x256xf32>, vector<96x256xf32> -> vector<96x256xf32>
    %51 = arith.addf %43, %50 : vector<96x256xf32>
    %c240_i32 = arith.constant 240 : i32
    %52 = tpu.dynamic_rotate %0 by %c240_i32 dim 1 : vector<32x256xf32>, i32 -> vector<32x256xf32>
    %c7 = arith.constant 7 : index
    %c0_39 = arith.constant 0 : index
    %c0_40 = arith.constant 0 : index
    %53 = vector.load %arg4[%c7, %c0_39, %c0_40] : memref<9x32x256xf32, #tpu.memory_space<vmem>>, vector<1x32x256xf32>
    %54 = vector.shape_cast %53 : vector<1x32x256xf32> to vector<32x256xf32>
    %55 = arith.mulf %52, %54 : vector<32x256xf32>
    %c7_41 = arith.constant 7 : index
    %c0_42 = arith.constant 0 : index
    %c0_43 = arith.constant 0 : index
    %56 = vector.load %arg2[%c7_41, %c0_42, %c0_43] : memref<9x96x32xf32, #tpu.memory_space<vmem>>, vector<1x96x32xf32>
    %57 = vector.shape_cast %56 : vector<1x96x32xf32> to vector<96x32xf32>
    %cst_44 = arith.constant dense<0.000000e+00> : vector<96x256xf32>
    %58 = tpu.matmul %57, %55, %cst_44 {dimension_numbers = #tpu.dot_dimension_numbers<[1], [0], [0], [1], [0, 0, 1, 1], [], []>} : vector<96x32xf32>, vector<32x256xf32>, vector<96x256xf32> -> vector<96x256xf32>
    %59 = arith.addf %51, %58 : vector<96x256xf32>
    %c239_i32 = arith.constant 239 : i32
    %60 = tpu.dynamic_rotate %0 by %c239_i32 dim 1 : vector<32x256xf32>, i32 -> vector<32x256xf32>
    %c8 = arith.constant 8 : index
    %c0_45 = arith.constant 0 : index
    %c0_46 = arith.constant 0 : index
    %61 = vector.load %arg4[%c8, %c0_45, %c0_46] : memref<9x32x256xf32, #tpu.memory_space<vmem>>, vector<1x32x256xf32>
    %62 = vector.shape_cast %61 : vector<1x32x256xf32> to vector<32x256xf32>
    %63 = arith.mulf %60, %62 : vector<32x256xf32>
    %c8_47 = arith.constant 8 : index
    %c0_48 = arith.constant 0 : index
    %c0_49 = arith.constant 0 : index
    %64 = vector.load %arg2[%c8_47, %c0_48, %c0_49] : memref<9x96x32xf32, #tpu.memory_space<vmem>>, vector<1x96x32xf32>
    %65 = vector.shape_cast %64 : vector<1x96x32xf32> to vector<96x32xf32>
    %cst_50 = arith.constant dense<0.000000e+00> : vector<96x256xf32>
    %66 = tpu.matmul %65, %63, %cst_50 {dimension_numbers = #tpu.dot_dimension_numbers<[1], [0], [0], [1], [0, 0, 1, 1], [], []>} : vector<96x32xf32>, vector<32x256xf32>, vector<96x256xf32> -> vector<96x256xf32>
    %67 = arith.addf %59, %66 : vector<96x256xf32>
    %c0_51 = arith.constant 0 : index
    %c0_52 = arith.constant 0 : index
    %c0_53 = arith.constant 0 : index
    %68 = vector.load %arg1[%c0_51, %c0_52, %c0_53] : memref<1x96x256xf32, #tpu.memory_space<vmem>>, vector<1x64x256xf32>
    %69 = vector.shape_cast %68 : vector<1x64x256xf32> to vector<64x256xf32>
    %70 = vector.extract_strided_slice %67 {offsets = [0, 0], sizes = [64, 256], strides = [1, 1]} : vector<96x256xf32> to vector<64x256xf32>
    %71 = arith.addf %69, %70 : vector<64x256xf32>
    %72 = arith.negf %71 : vector<64x256xf32>
    %73 = math.exp %72 : vector<64x256xf32>
    %cst_54 = arith.constant 1.000000e+00 : f32
    %74 = vector.broadcast %cst_54 : f32 to vector<64x256xf32>
    %75 = arith.addf %74, %73 : vector<64x256xf32>
    %76 = arith.divf %74, %75 : vector<64x256xf32>
    %77 = vector.extract_strided_slice %76 {offsets = [0, 0], sizes = [32, 256], strides = [1, 1]} : vector<64x256xf32> to vector<32x256xf32>
    %78 = vector.extract_strided_slice %76 {offsets = [32, 0], sizes = [32, 256], strides = [1, 1]} : vector<64x256xf32> to vector<32x256xf32>
    %c0_55 = arith.constant 0 : index
    %c64 = arith.constant 64 : index
    %c0_56 = arith.constant 0 : index
    %79 = vector.load %arg1[%c0_55, %c64, %c0_56] : memref<1x96x256xf32, #tpu.memory_space<vmem>>, vector<1x32x256xf32>
    %80 = vector.shape_cast %79 : vector<1x32x256xf32> to vector<32x256xf32>
    %81 = vector.extract_strided_slice %67 {offsets = [64, 0], sizes = [32, 256], strides = [1, 1]} : vector<96x256xf32> to vector<32x256xf32>
    %c0_57 = arith.constant 0 : index
    %c0_58 = arith.constant 0 : index
    %82 = vector.load %arg3[%c0_57, %c0_58] : memref<32x256xf32, #tpu.memory_space<vmem>>, vector<32x256xf32>
    %83 = arith.addf %81, %82 : vector<32x256xf32>
    %84 = arith.mulf %78, %83 : vector<32x256xf32>
    %85 = arith.addf %80, %84 : vector<32x256xf32>
    %86 = math.tanh %85 : vector<32x256xf32>
    %cst_59 = arith.constant 1.000000e+00 : f32
    %87 = vector.broadcast %cst_59 : f32 to vector<32x256xf32>
    %88 = arith.subf %87, %77 : vector<32x256xf32>
    %89 = arith.mulf %88, %86 : vector<32x256xf32>
    %90 = arith.mulf %77, %0 : vector<32x256xf32>
    %91 = arith.addf %89, %90 : vector<32x256xf32>
    %c0_60 = arith.constant 0 : index
    %c0_61 = arith.constant 0 : index
    %92 = vector.load %arg5[%c0_60, %c0_61] : memref<8x32xf32, #tpu.memory_space<vmem>>, vector<8x32xf32>
    %cst_62 = arith.constant dense<0.000000e+00> : vector<8x256xf32>
    %93 = tpu.matmul %92, %91, %cst_62 {dimension_numbers = #tpu.dot_dimension_numbers<[1], [0], [0], [1], [0, 0, 1, 1], [], []>} : vector<8x32xf32>, vector<32x256xf32>, vector<8x256xf32> -> vector<8x256xf32>
    %c0_63 = arith.constant 0 : index
    %c0_64 = arith.constant 0 : index
    %94 = vector.load %arg6[%c0_63, %c0_64] : memref<8x256xf32, #tpu.memory_space<vmem>>, vector<8x256xf32>
    %95 = arith.addf %93, %94 : vector<8x256xf32>
    %c0_65 = arith.constant 0 : index
    %c0_66 = arith.constant 0 : index
    %c0_67 = arith.constant 0 : index
    %c0_68 = arith.constant 0 : index
    %96 = vector.load %arg7[%c0_65, %c0_66, %c0_67, %c0_68] : memref<1x3x8x256xf32, #tpu.memory_space<vmem>>, vector<1x1x8x256xf32>
    %97 = vector.shape_cast %96 : vector<1x1x8x256xf32> to vector<8x256xf32>
    %98 = vector.shape_cast %95 : vector<8x256xf32> to vector<1x1x8x256xf32>
    tpu.vector_store %arg7[%c0_65, %c0_66, %c0_67, %c0_68], %98 {strides = array<i32>} : memref<1x3x8x256xf32, #tpu.memory_space<vmem>>, vector<1x1x8x256xf32>,
    %c17_i32_69 = arith.constant 17 : i32
    %99 = tpu.dynamic_rotate %91 by %c17_i32_69 dim 1 : vector<32x256xf32>, i32 -> vector<32x256xf32>
    %c0_70 = arith.constant 0 : index
    %c0_71 = arith.constant 0 : index
    %c0_72 = arith.constant 0 : index
    %100 = vector.load %arg4[%c0_70, %c0_71, %c0_72] : memref<9x32x256xf32, #tpu.memory_space<vmem>>, vector<1x32x256xf32>
    %101 = vector.shape_cast %100 : vector<1x32x256xf32> to vector<32x256xf32>
    %102 = arith.mulf %99, %101 : vector<32x256xf32>
    %c0_73 = arith.constant 0 : index
    %c0_74 = arith.constant 0 : index
    %c0_75 = arith.constant 0 : index
    %103 = vector.load %arg2[%c0_73, %c0_74, %c0_75] : memref<9x96x32xf32, #tpu.memory_space<vmem>>, vector<1x96x32xf32>
    %104 = vector.shape_cast %103 : vector<1x96x32xf32> to vector<96x32xf32>
    %cst_76 = arith.constant dense<0.000000e+00> : vector<96x256xf32>
    %105 = tpu.matmul %104, %102, %cst_76 {dimension_numbers = #tpu.dot_dimension_numbers<[1], [0], [0], [1], [0, 0, 1, 1], [], []>} : vector<96x32xf32>, vector<32x256xf32>, vector<96x256xf32> -> vector<96x256xf32>
    %c16_i32_77 = arith.constant 16 : i32
    %106 = tpu.dynamic_rotate %91 by %c16_i32_77 dim 1 : vector<32x256xf32>, i32 -> vector<32x256xf32>
    %c1_78 = arith.constant 1 : index
    %c0_79 = arith.constant 0 : index
    %c0_80 = arith.constant 0 : index
    %107 = vector.load %arg4[%c1_78, %c0_79, %c0_80] : memref<9x32x256xf32, #tpu.memory_space<vmem>>, vector<1x32x256xf32>
    %108 = vector.shape_cast %107 : vector<1x32x256xf32> to vector<32x256xf32>
    %109 = arith.mulf %106, %108 : vector<32x256xf32>
    %c1_81 = arith.constant 1 : index
    %c0_82 = arith.constant 0 : index
    %c0_83 = arith.constant 0 : index
    %110 = vector.load %arg2[%c1_81, %c0_82, %c0_83] : memref<9x96x32xf32, #tpu.memory_space<vmem>>, vector<1x96x32xf32>
    %111 = vector.shape_cast %110 : vector<1x96x32xf32> to vector<96x32xf32>
    %cst_84 = arith.constant dense<0.000000e+00> : vector<96x256xf32>
    %112 = tpu.matmul %111, %109, %cst_84 {dimension_numbers = #tpu.dot_dimension_numbers<[1], [0], [0], [1], [0, 0, 1, 1], [], []>} : vector<96x32xf32>, vector<32x256xf32>, vector<96x256xf32> -> vector<96x256xf32>
    %113 = arith.addf %105, %112 : vector<96x256xf32>
    %c15_i32_85 = arith.constant 15 : i32
    %114 = tpu.dynamic_rotate %91 by %c15_i32_85 dim 1 : vector<32x256xf32>, i32 -> vector<32x256xf32>
    %c2_86 = arith.constant 2 : index
    %c0_87 = arith.constant 0 : index
    %c0_88 = arith.constant 0 : index
    %115 = vector.load %arg4[%c2_86, %c0_87, %c0_88] : memref<9x32x256xf32, #tpu.memory_space<vmem>>, vector<1x32x256xf32>
    %116 = vector.shape_cast %115 : vector<1x32x256xf32> to vector<32x256xf32>
    %117 = arith.mulf %114, %116 : vector<32x256xf32>
    %c2_89 = arith.constant 2 : index
    %c0_90 = arith.constant 0 : index
    %c0_91 = arith.constant 0 : index
    %118 = vector.load %arg2[%c2_89, %c0_90, %c0_91] : memref<9x96x32xf32, #tpu.memory_space<vmem>>, vector<1x96x32xf32>
    %119 = vector.shape_cast %118 : vector<1x96x32xf32> to vector<96x32xf32>
    %cst_92 = arith.constant dense<0.000000e+00> : vector<96x256xf32>
    %120 = tpu.matmul %119, %117, %cst_92 {dimension_numbers = #tpu.dot_dimension_numbers<[1], [0], [0], [1], [0, 0, 1, 1], [], []>} : vector<96x32xf32>, vector<32x256xf32>, vector<96x256xf32> -> vector<96x256xf32>
    %121 = arith.addf %113, %120 : vector<96x256xf32>
    %c1_i32_93 = arith.constant 1 : i32
    %122 = tpu.dynamic_rotate %91 by %c1_i32_93 dim 1 : vector<32x256xf32>, i32 -> vector<32x256xf32>
    %c3_94 = arith.constant 3 : index
    %c0_95 = arith.constant 0 : index
    %c0_96 = arith.constant 0 : index
    %123 = vector.load %arg4[%c3_94, %c0_95, %c0_96] : memref<9x32x256xf32, #tpu.memory_space<vmem>>, vector<1x32x256xf32>
    %124 = vector.shape_cast %123 : vector<1x32x256xf32> to vector<32x256xf32>
    %125 = arith.mulf %122, %124 : vector<32x256xf32>
    %c3_97 = arith.constant 3 : index
    %c0_98 = arith.constant 0 : index
    %c0_99 = arith.constant 0 : index
    %126 = vector.load %arg2[%c3_97, %c0_98, %c0_99] : memref<9x96x32xf32, #tpu.memory_space<vmem>>, vector<1x96x32xf32>
    %127 = vector.shape_cast %126 : vector<1x96x32xf32> to vector<96x32xf32>
    %cst_100 = arith.constant dense<0.000000e+00> : vector<96x256xf32>
    %128 = tpu.matmul %127, %125, %cst_100 {dimension_numbers = #tpu.dot_dimension_numbers<[1], [0], [0], [1], [0, 0, 1, 1], [], []>} : vector<96x32xf32>, vector<32x256xf32>, vector<96x256xf32> -> vector<96x256xf32>
    %129 = arith.addf %121, %128 : vector<96x256xf32>
    %c4_101 = arith.constant 4 : index
    %c0_102 = arith.constant 0 : index
    %c0_103 = arith.constant 0 : index
    %130 = vector.load %arg2[%c4_101, %c0_102, %c0_103] : memref<9x96x32xf32, #tpu.memory_space<vmem>>, vector<1x96x32xf32>
    %131 = vector.shape_cast %130 : vector<1x96x32xf32> to vector<96x32xf32>
    %cst_104 = arith.constant dense<0.000000e+00> : vector<96x256xf32>
    %132 = tpu.matmul %131, %91, %cst_104 {dimension_numbers = #tpu.dot_dimension_numbers<[1], [0], [0], [1], [0, 0, 1, 1], [], []>} : vector<96x32xf32>, vector<32x256xf32>, vector<96x256xf32> -> vector<96x256xf32>
    %133 = arith.addf %129, %132 : vector<96x256xf32>
    %c255_i32_105 = arith.constant 255 : i32
    %134 = tpu.dynamic_rotate %91 by %c255_i32_105 dim 1 : vector<32x256xf32>, i32 -> vector<32x256xf32>
    %c5_106 = arith.constant 5 : index
    %c0_107 = arith.constant 0 : index
    %c0_108 = arith.constant 0 : index
    %135 = vector.load %arg4[%c5_106, %c0_107, %c0_108] : memref<9x32x256xf32, #tpu.memory_space<vmem>>, vector<1x32x256xf32>
    %136 = vector.shape_cast %135 : vector<1x32x256xf32> to vector<32x256xf32>
    %137 = arith.mulf %134, %136 : vector<32x256xf32>
    %c5_109 = arith.constant 5 : index
    %c0_110 = arith.constant 0 : index
    %c0_111 = arith.constant 0 : index
    %138 = vector.load %arg2[%c5_109, %c0_110, %c0_111] : memref<9x96x32xf32, #tpu.memory_space<vmem>>, vector<1x96x32xf32>
    %139 = vector.shape_cast %138 : vector<1x96x32xf32> to vector<96x32xf32>
    %cst_112 = arith.constant dense<0.000000e+00> : vector<96x256xf32>
    %140 = tpu.matmul %139, %137, %cst_112 {dimension_numbers = #tpu.dot_dimension_numbers<[1], [0], [0], [1], [0, 0, 1, 1], [], []>} : vector<96x32xf32>, vector<32x256xf32>, vector<96x256xf32> -> vector<96x256xf32>
    %141 = arith.addf %133, %140 : vector<96x256xf32>
    %c241_i32_113 = arith.constant 241 : i32
    %142 = tpu.dynamic_rotate %91 by %c241_i32_113 dim 1 : vector<32x256xf32>, i32 -> vector<32x256xf32>
    %c6_114 = arith.constant 6 : index
    %c0_115 = arith.constant 0 : index
    %c0_116 = arith.constant 0 : index
    %143 = vector.load %arg4[%c6_114, %c0_115, %c0_116] : memref<9x32x256xf32, #tpu.memory_space<vmem>>, vector<1x32x256xf32>
    %144 = vector.shape_cast %143 : vector<1x32x256xf32> to vector<32x256xf32>
    %145 = arith.mulf %142, %144 : vector<32x256xf32>
    %c6_117 = arith.constant 6 : index
    %c0_118 = arith.constant 0 : index
    %c0_119 = arith.constant 0 : index
    %146 = vector.load %arg2[%c6_117, %c0_118, %c0_119] : memref<9x96x32xf32, #tpu.memory_space<vmem>>, vector<1x96x32xf32>
    %147 = vector.shape_cast %146 : vector<1x96x32xf32> to vector<96x32xf32>
    %cst_120 = arith.constant dense<0.000000e+00> : vector<96x256xf32>
    %148 = tpu.matmul %147, %145, %cst_120 {dimension_numbers = #tpu.dot_dimension_numbers<[1], [0], [0], [1], [0, 0, 1, 1], [], []>} : vector<96x32xf32>, vector<32x256xf32>, vector<96x256xf32> -> vector<96x256xf32>
    %149 = arith.addf %141, %148 : vector<96x256xf32>
    %c240_i32_121 = arith.constant 240 : i32
    %150 = tpu.dynamic_rotate %91 by %c240_i32_121 dim 1 : vector<32x256xf32>, i32 -> vector<32x256xf32>
    %c7_122 = arith.constant 7 : index
    %c0_123 = arith.constant 0 : index
    %c0_124 = arith.constant 0 : index
    %151 = vector.load %arg4[%c7_122, %c0_123, %c0_124] : memref<9x32x256xf32, #tpu.memory_space<vmem>>, vector<1x32x256xf32>
    %152 = vector.shape_cast %151 : vector<1x32x256xf32> to vector<32x256xf32>
    %153 = arith.mulf %150, %152 : vector<32x256xf32>
    %c7_125 = arith.constant 7 : index
    %c0_126 = arith.constant 0 : index
    %c0_127 = arith.constant 0 : index
    %154 = vector.load %arg2[%c7_125, %c0_126, %c0_127] : memref<9x96x32xf32, #tpu.memory_space<vmem>>, vector<1x96x32xf32>
    %155 = vector.shape_cast %154 : vector<1x96x32xf32> to vector<96x32xf32>
    %cst_128 = arith.constant dense<0.000000e+00> : vector<96x256xf32>
    %156 = tpu.matmul %155, %153, %cst_128 {dimension_numbers = #tpu.dot_dimension_numbers<[1], [0], [0], [1], [0, 0, 1, 1], [], []>} : vector<96x32xf32>, vector<32x256xf32>, vector<96x256xf32> -> vector<96x256xf32>
    %157 = arith.addf %149, %156 : vector<96x256xf32>
    %c239_i32_129 = arith.constant 239 : i32
    %158 = tpu.dynamic_rotate %91 by %c239_i32_129 dim 1 : vector<32x256xf32>, i32 -> vector<32x256xf32>
    %c8_130 = arith.constant 8 : index
    %c0_131 = arith.constant 0 : index
    %c0_132 = arith.constant 0 : index
    %159 = vector.load %arg4[%c8_130, %c0_131, %c0_132] : memref<9x32x256xf32, #tpu.memory_space<vmem>>, vector<1x32x256xf32>
    %160 = vector.shape_cast %159 : vector<1x32x256xf32> to vector<32x256xf32>
    %161 = arith.mulf %158, %160 : vector<32x256xf32>
    %c8_133 = arith.constant 8 : index
    %c0_134 = arith.constant 0 : index
    %c0_135 = arith.constant 0 : index
    %162 = vector.load %arg2[%c8_133, %c0_134, %c0_135] : memref<9x96x32xf32, #tpu.memory_space<vmem>>, vector<1x96x32xf32>
    %163 = vector.shape_cast %162 : vector<1x96x32xf32> to vector<96x32xf32>
    %cst_136 = arith.constant dense<0.000000e+00> : vector<96x256xf32>
    %164 = tpu.matmul %163, %161, %cst_136 {dimension_numbers = #tpu.dot_dimension_numbers<[1], [0], [0], [1], [0, 0, 1, 1], [], []>} : vector<96x32xf32>, vector<32x256xf32>, vector<96x256xf32> -> vector<96x256xf32>
    %165 = arith.addf %157, %164 : vector<96x256xf32>
    %c0_137 = arith.constant 0 : index
    %c0_138 = arith.constant 0 : index
    %c0_139 = arith.constant 0 : index
    %166 = vector.load %arg1[%c0_137, %c0_138, %c0_139] : memref<1x96x256xf32, #tpu.memory_space<vmem>>, vector<1x64x256xf32>
    %167 = vector.shape_cast %166 : vector<1x64x256xf32> to vector<64x256xf32>
    %168 = vector.extract_strided_slice %165 {offsets = [0, 0], sizes = [64, 256], strides = [1, 1]} : vector<96x256xf32> to vector<64x256xf32>
    %169 = arith.addf %167, %168 : vector<64x256xf32>
    %170 = arith.negf %169 : vector<64x256xf32>
    %171 = math.exp %170 : vector<64x256xf32>
    %cst_140 = arith.constant 1.000000e+00 : f32
    %172 = vector.broadcast %cst_140 : f32 to vector<64x256xf32>
    %173 = arith.addf %172, %171 : vector<64x256xf32>
    %174 = arith.divf %172, %173 : vector<64x256xf32>
    %175 = vector.extract_strided_slice %174 {offsets = [0, 0], sizes = [32, 256], strides = [1, 1]} : vector<64x256xf32> to vector<32x256xf32>
    %176 = vector.extract_strided_slice %174 {offsets = [32, 0], sizes = [32, 256], strides = [1, 1]} : vector<64x256xf32> to vector<32x256xf32>
    %c0_141 = arith.constant 0 : index
    %c64_142 = arith.constant 64 : index
    %c0_143 = arith.constant 0 : index
    %177 = vector.load %arg1[%c0_141, %c64_142, %c0_143] : memref<1x96x256xf32, #tpu.memory_space<vmem>>, vector<1x32x256xf32>
    %178 = vector.shape_cast %177 : vector<1x32x256xf32> to vector<32x256xf32>
    %179 = vector.extract_strided_slice %165 {offsets = [64, 0], sizes = [32, 256], strides = [1, 1]} : vector<96x256xf32> to vector<32x256xf32>
    %c0_144 = arith.constant 0 : index
    %c0_145 = arith.constant 0 : index
    %180 = vector.load %arg3[%c0_144, %c0_145] : memref<32x256xf32, #tpu.memory_space<vmem>>, vector<32x256xf32>
    %181 = arith.addf %179, %180 : vector<32x256xf32>
    %182 = arith.mulf %176, %181 : vector<32x256xf32>
    %183 = arith.addf %178, %182 : vector<32x256xf32>
    %184 = math.tanh %183 : vector<32x256xf32>
    %cst_146 = arith.constant 1.000000e+00 : f32
    %185 = vector.broadcast %cst_146 : f32 to vector<32x256xf32>
    %186 = arith.subf %185, %175 : vector<32x256xf32>
    %187 = arith.mulf %186, %184 : vector<32x256xf32>
    %188 = arith.mulf %175, %91 : vector<32x256xf32>
    %189 = arith.addf %187, %188 : vector<32x256xf32>
    %c0_147 = arith.constant 0 : index
    %c0_148 = arith.constant 0 : index
    %190 = vector.load %arg5[%c0_147, %c0_148] : memref<8x32xf32, #tpu.memory_space<vmem>>, vector<8x32xf32>
    %cst_149 = arith.constant dense<0.000000e+00> : vector<8x256xf32>
    %191 = tpu.matmul %190, %189, %cst_149 {dimension_numbers = #tpu.dot_dimension_numbers<[1], [0], [0], [1], [0, 0, 1, 1], [], []>} : vector<8x32xf32>, vector<32x256xf32>, vector<8x256xf32> -> vector<8x256xf32>
    %c0_150 = arith.constant 0 : index
    %c0_151 = arith.constant 0 : index
    %192 = vector.load %arg6[%c0_150, %c0_151] : memref<8x256xf32, #tpu.memory_space<vmem>>, vector<8x256xf32>
    %193 = arith.addf %191, %192 : vector<8x256xf32>
    %c0_152 = arith.constant 0 : index
    %c1_153 = arith.constant 1 : index
    %c0_154 = arith.constant 0 : index
    %c0_155 = arith.constant 0 : index
    %194 = vector.load %arg7[%c0_152, %c1_153, %c0_154, %c0_155] : memref<1x3x8x256xf32, #tpu.memory_space<vmem>>, vector<1x1x8x256xf32>
    %195 = vector.shape_cast %194 : vector<1x1x8x256xf32> to vector<8x256xf32>
    %196 = vector.shape_cast %193 : vector<8x256xf32> to vector<1x1x8x256xf32>
    tpu.vector_store %arg7[%c0_152, %c1_153, %c0_154, %c0_155], %196 {strides = array<i32>} : memref<1x3x8x256xf32, #tpu.memory_space<vmem>>, vector<1x1x8x256xf32>,
    %c17_i32_156 = arith.constant 17 : i32
    %197 = tpu.dynamic_rotate %189 by %c17_i32_156 dim 1 : vector<32x256xf32>, i32 -> vector<32x256xf32>
    %c0_157 = arith.constant 0 : index
    %c0_158 = arith.constant 0 : index
    %c0_159 = arith.constant 0 : index
    %198 = vector.load %arg4[%c0_157, %c0_158, %c0_159] : memref<9x32x256xf32, #tpu.memory_space<vmem>>, vector<1x32x256xf32>
    %199 = vector.shape_cast %198 : vector<1x32x256xf32> to vector<32x256xf32>
    %200 = arith.mulf %197, %199 : vector<32x256xf32>
    %c0_160 = arith.constant 0 : index
    %c0_161 = arith.constant 0 : index
    %c0_162 = arith.constant 0 : index
    %201 = vector.load %arg2[%c0_160, %c0_161, %c0_162] : memref<9x96x32xf32, #tpu.memory_space<vmem>>, vector<1x96x32xf32>
    %202 = vector.shape_cast %201 : vector<1x96x32xf32> to vector<96x32xf32>
    %cst_163 = arith.constant dense<0.000000e+00> : vector<96x256xf32>
    %203 = tpu.matmul %202, %200, %cst_163 {dimension_numbers = #tpu.dot_dimension_numbers<[1], [0], [0], [1], [0, 0, 1, 1], [], []>} : vector<96x32xf32>, vector<32x256xf32>, vector<96x256xf32> -> vector<96x256xf32>
    %c16_i32_164 = arith.constant 16 : i32
    %204 = tpu.dynamic_rotate %189 by %c16_i32_164 dim 1 : vector<32x256xf32>, i32 -> vector<32x256xf32>
    %c1_165 = arith.constant 1 : index
    %c0_166 = arith.constant 0 : index
    %c0_167 = arith.constant 0 : index
    %205 = vector.load %arg4[%c1_165, %c0_166, %c0_167] : memref<9x32x256xf32, #tpu.memory_space<vmem>>, vector<1x32x256xf32>
    %206 = vector.shape_cast %205 : vector<1x32x256xf32> to vector<32x256xf32>
    %207 = arith.mulf %204, %206 : vector<32x256xf32>
    %c1_168 = arith.constant 1 : index
    %c0_169 = arith.constant 0 : index
    %c0_170 = arith.constant 0 : index
    %208 = vector.load %arg2[%c1_168, %c0_169, %c0_170] : memref<9x96x32xf32, #tpu.memory_space<vmem>>, vector<1x96x32xf32>
    %209 = vector.shape_cast %208 : vector<1x96x32xf32> to vector<96x32xf32>
    %cst_171 = arith.constant dense<0.000000e+00> : vector<96x256xf32>
    %210 = tpu.matmul %209, %207, %cst_171 {dimension_numbers = #tpu.dot_dimension_numbers<[1], [0], [0], [1], [0, 0, 1, 1], [], []>} : vector<96x32xf32>, vector<32x256xf32>, vector<96x256xf32> -> vector<96x256xf32>
    %211 = arith.addf %203, %210 : vector<96x256xf32>
    %c15_i32_172 = arith.constant 15 : i32
    %212 = tpu.dynamic_rotate %189 by %c15_i32_172 dim 1 : vector<32x256xf32>, i32 -> vector<32x256xf32>
    %c2_173 = arith.constant 2 : index
    %c0_174 = arith.constant 0 : index
    %c0_175 = arith.constant 0 : index
    %213 = vector.load %arg4[%c2_173, %c0_174, %c0_175] : memref<9x32x256xf32, #tpu.memory_space<vmem>>, vector<1x32x256xf32>
    %214 = vector.shape_cast %213 : vector<1x32x256xf32> to vector<32x256xf32>
    %215 = arith.mulf %212, %214 : vector<32x256xf32>
    %c2_176 = arith.constant 2 : index
    %c0_177 = arith.constant 0 : index
    %c0_178 = arith.constant 0 : index
    %216 = vector.load %arg2[%c2_176, %c0_177, %c0_178] : memref<9x96x32xf32, #tpu.memory_space<vmem>>, vector<1x96x32xf32>
    %217 = vector.shape_cast %216 : vector<1x96x32xf32> to vector<96x32xf32>
    %cst_179 = arith.constant dense<0.000000e+00> : vector<96x256xf32>
    %218 = tpu.matmul %217, %215, %cst_179 {dimension_numbers = #tpu.dot_dimension_numbers<[1], [0], [0], [1], [0, 0, 1, 1], [], []>} : vector<96x32xf32>, vector<32x256xf32>, vector<96x256xf32> -> vector<96x256xf32>
    %219 = arith.addf %211, %218 : vector<96x256xf32>
    %c1_i32_180 = arith.constant 1 : i32
    %220 = tpu.dynamic_rotate %189 by %c1_i32_180 dim 1 : vector<32x256xf32>, i32 -> vector<32x256xf32>
    %c3_181 = arith.constant 3 : index
    %c0_182 = arith.constant 0 : index
    %c0_183 = arith.constant 0 : index
    %221 = vector.load %arg4[%c3_181, %c0_182, %c0_183] : memref<9x32x256xf32, #tpu.memory_space<vmem>>, vector<1x32x256xf32>
    %222 = vector.shape_cast %221 : vector<1x32x256xf32> to vector<32x256xf32>
    %223 = arith.mulf %220, %222 : vector<32x256xf32>
    %c3_184 = arith.constant 3 : index
    %c0_185 = arith.constant 0 : index
    %c0_186 = arith.constant 0 : index
    %224 = vector.load %arg2[%c3_184, %c0_185, %c0_186] : memref<9x96x32xf32, #tpu.memory_space<vmem>>, vector<1x96x32xf32>
    %225 = vector.shape_cast %224 : vector<1x96x32xf32> to vector<96x32xf32>
    %cst_187 = arith.constant dense<0.000000e+00> : vector<96x256xf32>
    %226 = tpu.matmul %225, %223, %cst_187 {dimension_numbers = #tpu.dot_dimension_numbers<[1], [0], [0], [1], [0, 0, 1, 1], [], []>} : vector<96x32xf32>, vector<32x256xf32>, vector<96x256xf32> -> vector<96x256xf32>
    %227 = arith.addf %219, %226 : vector<96x256xf32>
    %c4_188 = arith.constant 4 : index
    %c0_189 = arith.constant 0 : index
    %c0_190 = arith.constant 0 : index
    %228 = vector.load %arg2[%c4_188, %c0_189, %c0_190] : memref<9x96x32xf32, #tpu.memory_space<vmem>>, vector<1x96x32xf32>
    %229 = vector.shape_cast %228 : vector<1x96x32xf32> to vector<96x32xf32>
    %cst_191 = arith.constant dense<0.000000e+00> : vector<96x256xf32>
    %230 = tpu.matmul %229, %189, %cst_191 {dimension_numbers = #tpu.dot_dimension_numbers<[1], [0], [0], [1], [0, 0, 1, 1], [], []>} : vector<96x32xf32>, vector<32x256xf32>, vector<96x256xf32> -> vector<96x256xf32>
    %231 = arith.addf %227, %230 : vector<96x256xf32>
    %c255_i32_192 = arith.constant 255 : i32
    %232 = tpu.dynamic_rotate %189 by %c255_i32_192 dim 1 : vector<32x256xf32>, i32 -> vector<32x256xf32>
    %c5_193 = arith.constant 5 : index
    %c0_194 = arith.constant 0 : index
    %c0_195 = arith.constant 0 : index
    %233 = vector.load %arg4[%c5_193, %c0_194, %c0_195] : memref<9x32x256xf32, #tpu.memory_space<vmem>>, vector<1x32x256xf32>
    %234 = vector.shape_cast %233 : vector<1x32x256xf32> to vector<32x256xf32>
    %235 = arith.mulf %232, %234 : vector<32x256xf32>
    %c5_196 = arith.constant 5 : index
    %c0_197 = arith.constant 0 : index
    %c0_198 = arith.constant 0 : index
    %236 = vector.load %arg2[%c5_196, %c0_197, %c0_198] : memref<9x96x32xf32, #tpu.memory_space<vmem>>, vector<1x96x32xf32>
    %237 = vector.shape_cast %236 : vector<1x96x32xf32> to vector<96x32xf32>
    %cst_199 = arith.constant dense<0.000000e+00> : vector<96x256xf32>
    %238 = tpu.matmul %237, %235, %cst_199 {dimension_numbers = #tpu.dot_dimension_numbers<[1], [0], [0], [1], [0, 0, 1, 1], [], []>} : vector<96x32xf32>, vector<32x256xf32>, vector<96x256xf32> -> vector<96x256xf32>
    %239 = arith.addf %231, %238 : vector<96x256xf32>
    %c241_i32_200 = arith.constant 241 : i32
    %240 = tpu.dynamic_rotate %189 by %c241_i32_200 dim 1 : vector<32x256xf32>, i32 -> vector<32x256xf32>
    %c6_201 = arith.constant 6 : index
    %c0_202 = arith.constant 0 : index
    %c0_203 = arith.constant 0 : index
    %241 = vector.load %arg4[%c6_201, %c0_202, %c0_203] : memref<9x32x256xf32, #tpu.memory_space<vmem>>, vector<1x32x256xf32>
    %242 = vector.shape_cast %241 : vector<1x32x256xf32> to vector<32x256xf32>
    %243 = arith.mulf %240, %242 : vector<32x256xf32>
    %c6_204 = arith.constant 6 : index
    %c0_205 = arith.constant 0 : index
    %c0_206 = arith.constant 0 : index
    %244 = vector.load %arg2[%c6_204, %c0_205, %c0_206] : memref<9x96x32xf32, #tpu.memory_space<vmem>>, vector<1x96x32xf32>
    %245 = vector.shape_cast %244 : vector<1x96x32xf32> to vector<96x32xf32>
    %cst_207 = arith.constant dense<0.000000e+00> : vector<96x256xf32>
    %246 = tpu.matmul %245, %243, %cst_207 {dimension_numbers = #tpu.dot_dimension_numbers<[1], [0], [0], [1], [0, 0, 1, 1], [], []>} : vector<96x32xf32>, vector<32x256xf32>, vector<96x256xf32> -> vector<96x256xf32>
    %247 = arith.addf %239, %246 : vector<96x256xf32>
    %c240_i32_208 = arith.constant 240 : i32
    %248 = tpu.dynamic_rotate %189 by %c240_i32_208 dim 1 : vector<32x256xf32>, i32 -> vector<32x256xf32>
    %c7_209 = arith.constant 7 : index
    %c0_210 = arith.constant 0 : index
    %c0_211 = arith.constant 0 : index
    %249 = vector.load %arg4[%c7_209, %c0_210, %c0_211] : memref<9x32x256xf32, #tpu.memory_space<vmem>>, vector<1x32x256xf32>
    %250 = vector.shape_cast %249 : vector<1x32x256xf32> to vector<32x256xf32>
    %251 = arith.mulf %248, %250 : vector<32x256xf32>
    %c7_212 = arith.constant 7 : index
    %c0_213 = arith.constant 0 : index
    %c0_214 = arith.constant 0 : index
    %252 = vector.load %arg2[%c7_212, %c0_213, %c0_214] : memref<9x96x32xf32, #tpu.memory_space<vmem>>, vector<1x96x32xf32>
    %253 = vector.shape_cast %252 : vector<1x96x32xf32> to vector<96x32xf32>
    %cst_215 = arith.constant dense<0.000000e+00> : vector<96x256xf32>
    %254 = tpu.matmul %253, %251, %cst_215 {dimension_numbers = #tpu.dot_dimension_numbers<[1], [0], [0], [1], [0, 0, 1, 1], [], []>} : vector<96x32xf32>, vector<32x256xf32>, vector<96x256xf32> -> vector<96x256xf32>
    %255 = arith.addf %247, %254 : vector<96x256xf32>
    %c239_i32_216 = arith.constant 239 : i32
    %256 = tpu.dynamic_rotate %189 by %c239_i32_216 dim 1 : vector<32x256xf32>, i32 -> vector<32x256xf32>
    %c8_217 = arith.constant 8 : index
    %c0_218 = arith.constant 0 : index
    %c0_219 = arith.constant 0 : index
    %257 = vector.load %arg4[%c8_217, %c0_218, %c0_219] : memref<9x32x256xf32, #tpu.memory_space<vmem>>, vector<1x32x256xf32>
    %258 = vector.shape_cast %257 : vector<1x32x256xf32> to vector<32x256xf32>
    %259 = arith.mulf %256, %258 : vector<32x256xf32>
    %c8_220 = arith.constant 8 : index
    %c0_221 = arith.constant 0 : index
    %c0_222 = arith.constant 0 : index
    %260 = vector.load %arg2[%c8_220, %c0_221, %c0_222] : memref<9x96x32xf32, #tpu.memory_space<vmem>>, vector<1x96x32xf32>
    %261 = vector.shape_cast %260 : vector<1x96x32xf32> to vector<96x32xf32>
    %cst_223 = arith.constant dense<0.000000e+00> : vector<96x256xf32>
    %262 = tpu.matmul %261, %259, %cst_223 {dimension_numbers = #tpu.dot_dimension_numbers<[1], [0], [0], [1], [0, 0, 1, 1], [], []>} : vector<96x32xf32>, vector<32x256xf32>, vector<96x256xf32> -> vector<96x256xf32>
    %263 = arith.addf %255, %262 : vector<96x256xf32>
    %c0_224 = arith.constant 0 : index
    %c0_225 = arith.constant 0 : index
    %c0_226 = arith.constant 0 : index
    %264 = vector.load %arg1[%c0_224, %c0_225, %c0_226] : memref<1x96x256xf32, #tpu.memory_space<vmem>>, vector<1x64x256xf32>
    %265 = vector.shape_cast %264 : vector<1x64x256xf32> to vector<64x256xf32>
    %266 = vector.extract_strided_slice %263 {offsets = [0, 0], sizes = [64, 256], strides = [1, 1]} : vector<96x256xf32> to vector<64x256xf32>
    %267 = arith.addf %265, %266 : vector<64x256xf32>
    %268 = arith.negf %267 : vector<64x256xf32>
    %269 = math.exp %268 : vector<64x256xf32>
    %cst_227 = arith.constant 1.000000e+00 : f32
    %270 = vector.broadcast %cst_227 : f32 to vector<64x256xf32>
    %271 = arith.addf %270, %269 : vector<64x256xf32>
    %272 = arith.divf %270, %271 : vector<64x256xf32>
    %273 = vector.extract_strided_slice %272 {offsets = [0, 0], sizes = [32, 256], strides = [1, 1]} : vector<64x256xf32> to vector<32x256xf32>
    %274 = vector.extract_strided_slice %272 {offsets = [32, 0], sizes = [32, 256], strides = [1, 1]} : vector<64x256xf32> to vector<32x256xf32>
    %c0_228 = arith.constant 0 : index
    %c64_229 = arith.constant 64 : index
    %c0_230 = arith.constant 0 : index
    %275 = vector.load %arg1[%c0_228, %c64_229, %c0_230] : memref<1x96x256xf32, #tpu.memory_space<vmem>>, vector<1x32x256xf32>
    %276 = vector.shape_cast %275 : vector<1x32x256xf32> to vector<32x256xf32>
    %277 = vector.extract_strided_slice %263 {offsets = [64, 0], sizes = [32, 256], strides = [1, 1]} : vector<96x256xf32> to vector<32x256xf32>
    %c0_231 = arith.constant 0 : index
    %c0_232 = arith.constant 0 : index
    %278 = vector.load %arg3[%c0_231, %c0_232] : memref<32x256xf32, #tpu.memory_space<vmem>>, vector<32x256xf32>
    %279 = arith.addf %277, %278 : vector<32x256xf32>
    %280 = arith.mulf %274, %279 : vector<32x256xf32>
    %281 = arith.addf %276, %280 : vector<32x256xf32>
    %282 = math.tanh %281 : vector<32x256xf32>
    %cst_233 = arith.constant 1.000000e+00 : f32
    %283 = vector.broadcast %cst_233 : f32 to vector<32x256xf32>
    %284 = arith.subf %283, %273 : vector<32x256xf32>
    %285 = arith.mulf %284, %282 : vector<32x256xf32>
    %286 = arith.mulf %273, %189 : vector<32x256xf32>
    %287 = arith.addf %285, %286 : vector<32x256xf32>
    %c0_234 = arith.constant 0 : index
    %c0_235 = arith.constant 0 : index
    %288 = vector.load %arg5[%c0_234, %c0_235] : memref<8x32xf32, #tpu.memory_space<vmem>>, vector<8x32xf32>
    %cst_236 = arith.constant dense<0.000000e+00> : vector<8x256xf32>
    %289 = tpu.matmul %288, %287, %cst_236 {dimension_numbers = #tpu.dot_dimension_numbers<[1], [0], [0], [1], [0, 0, 1, 1], [], []>} : vector<8x32xf32>, vector<32x256xf32>, vector<8x256xf32> -> vector<8x256xf32>
    %c0_237 = arith.constant 0 : index
    %c0_238 = arith.constant 0 : index
    %290 = vector.load %arg6[%c0_237, %c0_238] : memref<8x256xf32, #tpu.memory_space<vmem>>, vector<8x256xf32>
    %291 = arith.addf %289, %290 : vector<8x256xf32>
    %c0_239 = arith.constant 0 : index
    %c2_240 = arith.constant 2 : index
    %c0_241 = arith.constant 0 : index
    %c0_242 = arith.constant 0 : index
    %292 = vector.load %arg7[%c0_239, %c2_240, %c0_241, %c0_242] : memref<1x3x8x256xf32, #tpu.memory_space<vmem>>, vector<1x1x8x256xf32>
    %293 = vector.shape_cast %292 : vector<1x1x8x256xf32> to vector<8x256xf32>
    %294 = vector.shape_cast %291 : vector<8x256xf32> to vector<1x1x8x256xf32>
    tpu.vector_store %arg7[%c0_239, %c2_240, %c0_241, %c0_242], %294 {strides = array<i32>} : memref<1x3x8x256xf32, #tpu.memory_space<vmem>>, vector<1x1x8x256xf32>,
    return
  }
  func.func @transform_0(%arg0: i32) -> (i32, i32, i32) {
    %c0_i32 = arith.constant 0 : i32
    %c0_i32_0 = arith.constant 0 : i32
    %c0_i32_1 = arith.constant 0 : i32
    return %arg0, %c0_i32, %c0_i32_0 : i32, i32, i32
  }
  func.func @transform_1(%arg0: i32) -> (i32, i32, i32) {
    %c0_i32 = arith.constant 0 : i32
    %c0_i32_0 = arith.constant 0 : i32
    %c0_i32_1 = arith.constant 0 : i32
    %c0_i32_2 = arith.constant 0 : i32
    return %c0_i32, %c0_i32_0, %c0_i32_1 : i32, i32, i32
  }
  func.func @transform_2(%arg0: i32) -> (i32, i32) {
    %c0_i32 = arith.constant 0 : i32
    %c0_i32_0 = arith.constant 0 : i32
    %c0_i32_1 = arith.constant 0 : i32
    return %c0_i32, %c0_i32_0 : i32, i32
  }
  func.func @transform_3(%arg0: i32) -> (i32, i32, i32) {
    %c0_i32 = arith.constant 0 : i32
    %c0_i32_0 = arith.constant 0 : i32
    %c0_i32_1 = arith.constant 0 : i32
    %c0_i32_2 = arith.constant 0 : i32
    return %c0_i32, %c0_i32_0, %c0_i32_1 : i32, i32, i32
  }
  func.func @transform_4(%arg0: i32) -> (i32, i32) {
    %c0_i32 = arith.constant 0 : i32
    %c0_i32_0 = arith.constant 0 : i32
    %c0_i32_1 = arith.constant 0 : i32
    return %c0_i32, %c0_i32_0 : i32, i32
  }
  func.func @transform_5(%arg0: i32) -> (i32, i32) {
    %c0_i32 = arith.constant 0 : i32
    %c0_i32_0 = arith.constant 0 : i32
    %c0_i32_1 = arith.constant 0 : i32
    return %c0_i32, %c0_i32_0 : i32, i32
  }
  func.func @transform_6(%arg0: i32) -> (i32, i32, i32, i32) {
    %c0_i32 = arith.constant 0 : i32
    %c0_i32_0 = arith.constant 0 : i32
    %c0_i32_1 = arith.constant 0 : i32
    %c0_i32_2 = arith.constant 0 : i32
    return %arg0, %c0_i32, %c0_i32_0, %c0_i32_1 : i32, i32, i32, i32
  }
}

</mosaic_0001>

<llo_original>
// kernel: tpu_custom_call.1
$region0: #{tpu_custom_call.1}
  #allocation0 [shape = 'u32[]', space=smem, size = 0x4, offset = 0x4, fixed_abs, tag = 'smem constant byte address 0x4 - core index']
  #allocation1 [shape = 'u32[144,128]{1,0:T(1,128)}', space=vmem, size = 0x12000, scoped, tag = 'internal scratch']
  %s0 = inlined_call_operand.vmem [shape: f32[2,96,256], index: 0, kind: input, shape index: {}]
  %s1 = inlined_call_operand.vmem [shape: f32[9,96,32], index: 1, kind: input, shape index: {}]
  %s2 = inlined_call_operand.vmem [shape: f32[32,256], index: 2, kind: input, shape index: {}]
  %s3 = inlined_call_operand.vmem [shape: f32[9,32,256], index: 3, kind: input, shape index: {}]
  %s4 = inlined_call_operand.vmem [shape: f32[8,32], index: 4, kind: input, shape index: {}]
  %s5 = inlined_call_operand.vmem [shape: f32[8,256], index: 5, kind: input, shape index: {}]
  %s6 = inlined_call_operand.hbm [shape: f32[2,3,8,256], index: 6, kind: output, shape index: {}]
  %s7 = sld [smem:[#allocation0]]
  $region57: #{tpu_custom_call.1} parent=0
    _
  %s9 = ssub.s32 1, %s7
  %s10 = scalar_select 0, %s9, %s7
  $region1: #{tpu_custom_call.1} parent=0
    #allocation2 [shape = 'u8[49152]{0}', space=vmem, size = 0xc000, scoped, tag = 'output window, operand 0']
    #allocation3 [shape = 's32[2]{0}', space=sflag, size = 0x8, scoped, tag = 'scoped memory for tpu_custom_call.1']
    %11 = vsyncpa [#allocation3], 0
    %s12 = scalar_lea.sflag [#allocation3], 1
    %13 = vsyncpa %s12, 0
    loop: start=0, step=1, limit=4
    $region2: #{tpu_custom_call.1} parent=1 // loop_pre_header
      _
    $region3: #{tpu_custom_call.1} parent=1 // loop_header
      %s15 = sphi 0, %s19
      %p16 = scmp.ge.s32.totalorder %s15, 4
      %s25 = sphi 0, %s27
      %s28 = sphi 0, %s25
      %s29 = sphi 0, %s28
      %s45 = sphi 0, %s29
      %s49 = sphi 0, %s49
      %s51 = sphi 0, %s49
      %s52 = sphi 0, %s51
      %s66 = sphi 0, %s52
      %s70 = sphi 0, %s70
      %s72 = sphi 0, %s70
      %s73 = sphi 0, %s72
      %s87 = sphi 0, %s73
      %s91 = sphi 0, %s91
      %s93 = sphi 0, %s91
      %s94 = sphi 0, %s93
      %s108 = sphi 0, %s94
      %s112 = sphi 0, %s112
      %s114 = sphi 0, %s112
      %s115 = sphi 0, %s114
      %s129 = sphi 0, %s115
      %s133 = sphi 0, %s133
      %s135 = sphi 0, %s133
      %s136 = sphi 0, %s135
      %s150 = sphi 0, %s136
      %s156 = sphi 0, %s158
      %s159 = sphi 0, %s156
      %s160 = sphi 0, %s159
      %s176 = sphi 0, %s160
    $region4: #{tpu_custom_call.1} parent=1 // loop_header_branch
      %18 = sbr.rel (%p16) target = $region8
    $region5: #{tpu_custom_call.1} parent=1 // loop_body
      %s20 = ssub.s32 %s15, 1
      %s21 = ssub.s32 %s15, 2
      %s22 = sadd.s32 %s15, 1
      %s23 = ssub.s32 %s15, %s22
      %p24 = scmp.eq.s32.totalorder %s23, 0
      %s26 = sadd.s32 %s25, 1
      %s27 = scalar_select %p24, %s25, %s26
      %p30 = pneg %p24
      %p31 = scmp.eq.s32.totalorder %s15, 1
      %p32 = por %p30, %p31
      %p33 = scmp.ne.s32.totalorder %s25, %s28
      %p34 = scmp.eq.s32.totalorder %s15, 0
      %p35 = por %p33, %p34
      %p36 = scmp.ne.s32.totalorder %s25, %s28
      %p37 = scmp.eq.s32.totalorder %s20, 1
      %p38 = por %p36, %p37
      %p39 = scmp.ne.s32.totalorder %s28, %s29
      %p40 = scmp.eq.s32.totalorder %s20, 0
      %p41 = por %p39, %p40
      %p42 = scmp.ne.s32.totalorder %s28, %s29
      %p43 = scmp.eq.s32.totalorder %s21, 1
      %p44 = por %p42, %p43
      %p46 = scmp.ne.s32.totalorder %s29, %s45
      %p47 = scmp.eq.s32.totalorder %s21, 0
      %p48 = por %p46, %p47
      %s50 = sadd.s32 %s49, 1
      %p53 = scmp.eq.s32.totalorder %s15, 1
      %p54 = scmp.ne.s32.totalorder %s49, %s51
      %p55 = scmp.eq.s32.totalorder %s15, 0
      %p56 = por %p54, %p55
      %p57 = scmp.ne.s32.totalorder %s49, %s51
      %p58 = scmp.eq.s32.totalorder %s20, 1
      %p59 = por %p57, %p58
      %p60 = scmp.ne.s32.totalorder %s51, %s52
      %p61 = scmp.eq.s32.totalorder %s20, 0
      %p62 = por %p60, %p61
      %p63 = scmp.ne.s32.totalorder %s51, %s52
      %p64 = scmp.eq.s32.totalorder %s21, 1
      %p65 = por %p63, %p64
      %p67 = scmp.ne.s32.totalorder %s52, %s66
      %p68 = scmp.eq.s32.totalorder %s21, 0
      %p69 = por %p67, %p68
      %s71 = sadd.s32 %s70, 1
      %p74 = scmp.eq.s32.totalorder %s15, 1
      %p75 = scmp.ne.s32.totalorder %s70, %s72
      %p76 = scmp.eq.s32.totalorder %s15, 0
      %p77 = por %p75, %p76
      %p78 = scmp.ne.s32.totalorder %s70, %s72
      %p79 = scmp.eq.s32.totalorder %s20, 1
      %p80 = por %p78, %p79
      %p81 = scmp.ne.s32.totalorder %s72, %s73
      %p82 = scmp.eq.s32.totalorder %s20, 0
      %p83 = por %p81, %p82
      %p84 = scmp.ne.s32.totalorder %s72, %s73
      %p85 = scmp.eq.s32.totalorder %s21, 1
      %p86 = por %p84, %p85
      %p88 = scmp.ne.s32.totalorder %s73, %s87
      %p89 = scmp.eq.s32.totalorder %s21, 0
      %p90 = por %p88, %p89
      %s92 = sadd.s32 %s91, 1
      %p95 = scmp.eq.s32.totalorder %s15, 1
      %p96 = scmp.ne.s32.totalorder %s91, %s93
      %p97 = scmp.eq.s32.totalorder %s15, 0
      %p98 = por %p96, %p97
      %p99 = scmp.ne.s32.totalorder %s91, %s93
      %p100 = scmp.eq.s32.totalorder %s20, 1
      %p101 = por %p99, %p100
      %p102 = scmp.ne.s32.totalorder %s93, %s94
      %p103 = scmp.eq.s32.totalorder %s20, 0
      %p104 = por %p102, %p103
      %p105 = scmp.ne.s32.totalorder %s93, %s94
      %p106 = scmp.eq.s32.totalorder %s21, 1
      %p107 = por %p105, %p106
      %p109 = scmp.ne.s32.totalorder %s94, %s108
      %p110 = scmp.eq.s32.totalorder %s21, 0
      %p111 = por %p109, %p110
      %s113 = sadd.s32 %s112, 1
      %p116 = scmp.eq.s32.totalorder %s15, 1
      %p117 = scmp.ne.s32.totalorder %s112, %s114
      %p118 = scmp.eq.s32.totalorder %s15, 0
      %p119 = por %p117, %p118
      %p120 = scmp.ne.s32.totalorder %s112, %s114
      %p121 = scmp.eq.s32.totalorder %s20, 1
      %p122 = por %p120, %p121
      %p123 = scmp.ne.s32.totalorder %s114, %s115
      %p124 = scmp.eq.s32.totalorder %s20, 0
      %p125 = por %p123, %p124
      %p126 = scmp.ne.s32.totalorder %s114, %s115
      %p127 = scmp.eq.s32.totalorder %s21, 1
      %p128 = por %p126, %p127
      %p130 = scmp.ne.s32.totalorder %s115, %s129
      %p131 = scmp.eq.s32.totalorder %s21, 0
      %p132 = por %p130, %p131
      %s134 = sadd.s32 %s133, 1
      %p137 = scmp.eq.s32.totalorder %s15, 1
      %p138 = scmp.ne.s32.totalorder %s133, %s135
      %p139 = scmp.eq.s32.totalorder %s15, 0
      %p140 = por %p138, %p139
      %p141 = scmp.ne.s32.totalorder %s133, %s135
      %p142 = scmp.eq.s32.totalorder %s20, 1
      %p143 = por %p141, %p142
      %p144 = scmp.ne.s32.totalorder %s135, %s136
      %p145 = scmp.eq.s32.totalorder %s20, 0
      %p146 = por %p144, %p145
      %p147 = scmp.ne.s32.totalorder %s135, %s136
      %p148 = scmp.eq.s32.totalorder %s21, 1
      %p149 = por %p147, %p148
      %p151 = scmp.ne.s32.totalorder %s136, %s150
      %p152 = scmp.eq.s32.totalorder %s21, 0
      %p153 = por %p151, %p152
      %s154 = ssub.s32 %s15, %s22
      %p155 = scmp.eq.s32.totalorder %s154, 0
      %s157 = sadd.s32 %s156, 1
      %s158 = scalar_select %p155, %s156, %s157
      %p161 = pneg %p155
      %p162 = scmp.eq.s32.totalorder %s15, 1
      %p163 = por %p161, %p162
      %p164 = scmp.ne.s32.totalorder %s156, %s159
      %p165 = scmp.eq.s32.totalorder %s15, 0
      %p166 = por %p164, %p165
      %p167 = scmp.ne.s32.totalorder %s156, %s159
      %p168 = scmp.eq.s32.totalorder %s20, 1
      %p169 = por %p167, %p168
      %p170 = scmp.ne.s32.totalorder %s159, %s160
      %p171 = scmp.eq.s32.totalorder %s20, 0
      %p172 = por %p170, %p171
      %p173 = scmp.ne.s32.totalorder %s159, %s160
      %p174 = scmp.eq.s32.totalorder %s21, 1
      %p175 = por %p173, %p174
      %p177 = scmp.ne.s32.totalorder %s160, %s176
      %p178 = scmp.eq.s32.totalorder %s21, 0
      %p179 = por %p177, %p178
      %p180 = scmp.le.s32.totalorder 1, %s15
      %p181 = scmp.lt.s32.totalorder %s15, 3
      %p182 = pnand %p180, %p181
      %p183 = pneg %p182
      // Predicated region
      $region9: #{tpu_custom_call.1} parent=5 // pred_check
        _
      $region10: #{tpu_custom_call.1} parent=5 // pred_check_branch
        %185 = sbr.rel (%p182) target = $region12
      $region11: #{tpu_custom_call.1} parent=5 // pred_region
        %s186 = ssub.s32 %s15, 1
        // Predicated region
        $region13: #{tpu_custom_call.1} parent=11 // pred_check
          %p187 = pneg %p62
        $region14: #{tpu_custom_call.1} parent=11 // pred_check_branch
          %189 = sbr.rel (%p187) target = $region16
        $region15: #{tpu_custom_call.1} parent=11 // pred_region
          _
        $region16: #{tpu_custom_call.1} parent=11 // pred_fallthru
          _
        // Predicated region
        $region17: #{tpu_custom_call.1} parent=11 // pred_check
          %p190 = pneg %p83
        $region18: #{tpu_custom_call.1} parent=11 // pred_check_branch
          %192 = sbr.rel (%p190) target = $region20
        $region19: #{tpu_custom_call.1} parent=11 // pred_region
          _
        $region20: #{tpu_custom_call.1} parent=11 // pred_fallthru
          _
        // Predicated region
        $region21: #{tpu_custom_call.1} parent=11 // pred_check
          %p193 = pneg %p104
        $region22: #{tpu_custom_call.1} parent=11 // pred_check_branch
          %195 = sbr.rel (%p193) target = $region24
        $region23: #{tpu_custom_call.1} parent=11 // pred_region
          _
        $region24: #{tpu_custom_call.1} parent=11 // pred_fallthru
          _
        // Predicated region
        $region25: #{tpu_custom_call.1} parent=11 // pred_check
          %p196 = pneg %p125
        $region26: #{tpu_custom_call.1} parent=11 // pred_check_branch
          %198 = sbr.rel (%p196) target = $region28
        $region27: #{tpu_custom_call.1} parent=11 // pred_region
          _
        $region28: #{tpu_custom_call.1} parent=11 // pred_fallthru
          _
        // Predicated region
        $region29: #{tpu_custom_call.1} parent=11 // pred_check
          %p199 = pneg %p146
        $region30: #{tpu_custom_call.1} parent=11 // pred_check_branch
          %201 = sbr.rel (%p199) target = $region32
        $region31: #{tpu_custom_call.1} parent=11 // pred_region
          _
        $region32: #{tpu_custom_call.1} parent=11 // pred_fallthru
          _
      $region12: #{tpu_custom_call.1} parent=5 // pred_fallthru
        _
      %p202 = scmp.lt.s32.totalorder %s15, 2
      // Predicated region
      $region33: #{tpu_custom_call.1} parent=5 // pred_check
        %p203 = pneg %p202
      $region34: #{tpu_custom_call.1} parent=5 // pred_check_branch
        %205 = sbr.rel (%p203) target = $region36
      $region35: #{tpu_custom_call.1} parent=5 // pred_region
        // Predicated region
        $region37: #{tpu_custom_call.1} parent=35 // pred_check
          %p206 = pneg %p35
        $region38: #{tpu_custom_call.1} parent=35 // pred_check_branch
          %208 = sbr.rel (%p206) target = $region40
        $region39: #{tpu_custom_call.1} parent=35 // pred_region
          %p209 = scmp.lt.s32.totalorder %s15, 1
          %s210 = scalar_select %p209, %s15, 1
          %s211 = smul.addr %s210, 24
          %s212 = smul.addr %s211, 8
          %s213 = scalar_lea.vmem %s0, %s212
        $region40: #{tpu_custom_call.1} parent=35 // pred_fallthru
          _
      $region36: #{tpu_custom_call.1} parent=5 // pred_fallthru
        _
      %p214 = scmp.le.s32.totalorder 1, %s15
      %p215 = scmp.lt.s32.totalorder %s15, 3
      %p216 = pnand %p214, %p215
      %p217 = pneg %p216
      // Predicated region
      $region41: #{tpu_custom_call.1} parent=5 // pred_check
        _
      $region42: #{tpu_custom_call.1} parent=5 // pred_check_branch
        %219 = sbr.rel (%p216) target = $region44
      $region43: #{tpu_custom_call.1} parent=5 // pred_region
        %s220 = ssub.s32 %s15, 1
        %p221 = scmp.lt.s32.totalorder %s20, 1
        %s222 = scalar_select %p221, %s20, 1
        %s223 = smul.addr %s222, 24
        %s224 = smul.addr %s223, 8
        %s225 = scalar_lea.vmem %s0, %s224
        %p226 = pneg %p41
        %p227 = pneg %p38
        %p228 = pneg %p62
        %p229 = pneg %p59
        %p230 = pneg %p83
        %p231 = pneg %p80
        %p232 = pneg %p104
        %p233 = pneg %p101
        %p234 = pneg %p125
        %p235 = pneg %p122
        %p236 = pneg %p146
        %p237 = pneg %p143
        %p238 = pneg %p172
        %p239 = pneg %p169
        %s240 = sand.u32 %s159, 1
        %s241 = scalar_lea.sflag [#allocation3], %s240
        %s242 = sand.u32 %s159, 1
        %s243 = smul.addr %s242, 48
        %s244 = scalar_lea.vmem [#allocation2], %s243
        %p245 = scmp.lt.s32.totalorder %s20, 1
        %s246 = scalar_select %p245, %s20, 1
        %s247 = smul.addr %s246, 24
        %s248 = smul.addr %s247, 8
        %s249 = scalar_lea.vmem %s0, %s248
        %250 = vrot.lane.b32.xlu0 0.0, 17
        %v251 = vpop.permute.xlu0 %250
        %v252 = vlaneseq
        %v253 = vand.u32 %v252, 127
        %vm254 = vcmp.lt.s32.totalorder %v253, 17
        %v255 = vld [vmem:[%s3] sm:$0xff]
        %v256 = vld [vmem:[%s3 + $0x8] sm:$0xff]
        %v257 = vld [vmem:[%s3 + $0x10] sm:$0xff]
        %v258 = vld [vmem:[%s3 + $0x18] sm:$0xff]
        %v259 = vld [vmem:[%s3 + $0x20] sm:$0xff]
        %v260 = vld [vmem:[%s3 + $0x28] sm:$0xff]
        %v261 = vld [vmem:[%s3 + $0x30] sm:$0xff]
        %v262 = vld [vmem:[%s3 + $0x38] sm:$0xff]
        %v263 = vmul.f32 %v251, %v255
        %v264 = vmul.f32 %v251, %v256
        %v265 = vmul.f32 %v251, %v257
        %v266 = vmul.f32 %v251, %v258
        %v267 = vmul.f32 %v251, %v259
        %v268 = vmul.f32 %v251, %v260
        %v269 = vmul.f32 %v251, %v261
        %v270 = vmul.f32 %v251, %v262
        %v271 = vld [vmem:[%s1] sm:$0xff]
        %v272 = vld [vmem:[%s1 + $0x8] sm:$0xff]
        %v273 = vld [vmem:[%s1 + $0x10] sm:$0xff]
        %v274 = vld [vmem:[%s1 + $0x18] sm:$0xff]
        %v275 = vld [vmem:[%s1 + $0x20] sm:$0xff]
        %v276 = vld [vmem:[%s1 + $0x28] sm:$0xff]
        %v277 = vld [vmem:[%s1 + $0x30] sm:$0xff]
        %v278 = vld [vmem:[%s1 + $0x38] sm:$0xff]
        %v279 = vld [vmem:[%s1 + $0x40] sm:$0xff]
        %v280 = vld [vmem:[%s1 + $0x48] sm:$0xff]
        %v281 = vld [vmem:[%s1 + $0x50] sm:$0xff]
        %v282 = vld [vmem:[%s1 + $0x58] sm:$0xff]
        %283 = vrot.lane.b32.xlu0 0.0, 16
        %v284 = vpop.permute.xlu0 %283
        %vm285 = vcmp.lt.s32.totalorder %v253, 16
        %s286 = scalar_lea.vmem %s3, 64
        %v287 = vld [vmem:[%s286] sm:$0xff]
        %v288 = vld [vmem:[%s286 + $0x8] sm:$0xff]
        %v289 = vld [vmem:[%s286 + $0x10] sm:$0xff]
        %v290 = vld [vmem:[%s286 + $0x18] sm:$0xff]
        %v291 = vld [vmem:[%s286 + $0x20] sm:$0xff]
        %v292 = vld [vmem:[%s286 + $0x28] sm:$0xff]
        %v293 = vld [vmem:[%s286 + $0x30] sm:$0xff]
        %v294 = vld [vmem:[%s286 + $0x38] sm:$0xff]
        %v295 = vmul.f32 %v284, %v287
        %v296 = vmul.f32 %v284, %v288
        %v297 = vmul.f32 %v284, %v289
        %v298 = vmul.f32 %v284, %v290
        %v299 = vmul.f32 %v284, %v291
        %v300 = vmul.f32 %v284, %v292
        %v301 = vmul.f32 %v284, %v293
        %v302 = vmul.f32 %v284, %v294
        %s303 = scalar_lea.vmem %s1, 96
        %v304 = vld [vmem:[%s303] sm:$0xff]
        %v305 = vld [vmem:[%s303 + $0x8] sm:$0xff]
        %v306 = vld [vmem:[%s303 + $0x10] sm:$0xff]
        %v307 = vld [vmem:[%s303 + $0x18] sm:$0xff]
        %v308 = vld [vmem:[%s303 + $0x20] sm:$0xff]
        %v309 = vld [vmem:[%s303 + $0x28] sm:$0xff]
        %v310 = vld [vmem:[%s303 + $0x30] sm:$0xff]
        %v311 = vld [vmem:[%s303 + $0x38] sm:$0xff]
        %v312 = vld [vmem:[%s303 + $0x40] sm:$0xff]
        %v313 = vld [vmem:[%s303 + $0x48] sm:$0xff]
        %v314 = vld [vmem:[%s303 + $0x50] sm:$0xff]
        %v315 = vld [vmem:[%s303 + $0x58] sm:$0xff]
        %vm316 = vcmask 261120
        %v318 = vsel %vm316, %v304, 0
        %v321 = vsel %vm316, %v305, 0
        %v324 = vsel %vm316, %v306, 0
        %v327 = vsel %vm316, %v307, 0
        %v330 = vsel %vm316, %v308, 0
        %v333 = vsel %vm316, %v309, 0
        %v336 = vsel %vm316, %v310, 0
        %v339 = vsel %vm316, %v311, 0
        %v342 = vsel %vm316, %v312, 0
        %v345 = vsel %vm316, %v313, 0
        %v348 = vsel %vm316, %v314, 0
        %v351 = vsel %vm316, %v315, 0
        %353 = vmatprep.subr.mxu0 0.0
        %354 = vmatpush1.msra.mxu0 0.0
        %355 = vmatprep.subr.mxu0 0.0
        %356 = vmatpush1.msra.mxu0 0.0
        %357 = vmatprep.subr.mxu0 0.0
        %358 = vmatpush1.msra.mxu0 0.0
        %359 = vmatprep.subr.mxu0 0.0
        %360 = vmatpush1.msra.mxu0 0.0
        %361 = vmatprep.subr.mxu0 0.0
        %362 = vmatpush1.msra.mxu0 0.0
        %363 = vmatprep.subr.mxu0 0.0
        %364 = vmatpush1.msra.mxu0 0.0
        %365 = vmatprep.subr.mxu0 0.0
        %366 = vmatpush1.msra.mxu0 0.0
        %367 = vmatprep.subr.mxu0 0.0
        %368 = vmatpush1.msra.mxu0 0.0
        %369 = vmatprep.subr.mxu0 0.0
        %370 = vmatpush1.msra.mxu0 0.0
        %371 = vmatprep.subr.mxu0 0.0
        %372 = vmatpush1.msra.mxu0 0.0
        %373 = vmatprep.subr.mxu0 0.0
        %374 = vmatpush1.msra.mxu0 0.0
        %375 = vmatprep.subr.mxu0 0.0
        %376 = vmatpush1.msra.mxu0 0.0
        %377 = vmatprep.subr.mxu0 %v302
        %378 = vmatpush1.msra.mxu0 %v301
        %379 = vmatprep.subr.mxu0 %v300
        %380 = vmatpush1.msra.mxu0 %v299
        %381 = vmatprep.subr.mxu0 %v298
        %382 = vmatpush1.msra.mxu0 %v297
        %383 = vmatprep.subr.mxu0 %v296
        %384 = vmatpush1.msra.mxu0 %v295
        %385 = vmatprep.subr.mxu0 0.0
        %386 = vmatpush2.msra.mxu0 0.0
        %387 = vmatprep.subr.mxu0 0.0
        %388 = vmatpush2.msra.mxu0 0.0
        %389 = vmatprep.subr.mxu0 0.0
        %390 = vmatpush2.msra.mxu0 0.0
        %391 = vmatprep.subr.mxu0 0.0
        %392 = vmatpush2.msra.mxu0 0.0
        %393 = vmatprep.subr.mxu0 0.0
        %394 = vmatpush2.msra.mxu0 0.0
        %395 = vmatprep.subr.mxu0 0.0
        %396 = vmatpush2.msra.mxu0 0.0
        %397 = vmatprep.subr.mxu0 0.0
        %398 = vmatpush2.msra.mxu0 0.0
        %399 = vmatprep.subr.mxu0 0.0
        %400 = vmatpush2.msra.mxu0 0.0
        %401 = vmatprep.subr.mxu0 0.0
        %402 = vmatpush2.msra.mxu0 0.0
        %403 = vmatprep.subr.mxu0 0.0
        %404 = vmatpush2.msra.mxu0 0.0
        %405 = vmatprep.subr.mxu0 0.0
        %406 = vmatpush2.msra.mxu0 0.0
        %407 = vmatprep.subr.mxu0 0.0
        %408 = vmatpush2.msra.mxu0 0.0
        %409 = vmatprep.subr.mxu0 0.0
        %410 = vmatpush2.msra.mxu0 0.0
        %411 = vmatprep.subr.mxu0 0.0
        %412 = vmatpush2.msra.mxu0 0.0
        %413 = vmatprep.subr.mxu0 0.0
        %414 = vmatpush2.msra.mxu0 0.0
        %415 = vmatprep.subr.mxu0 0.0
        %416 = vmatpush2.msra.mxu0 0.0
        %417 = vmatprep.mubr.f32.mxu0 0.0
        %418 = vmatmul.mubr.f32.gmra.mxu0 %v318
        %v419 = vpop.f32.mrf.mxu0
        %v420 = vadd.f32 0.0, %v419
        %v421 = vpop.f32.mrf.mxu0
        %v422 = vadd.f32 0.0, %v421
        %423 = vmatprep.mubr.f32.mxu0 0.0
        %424 = vmatmul.mubr.f32.gmra.mxu0 %v321
        %v425 = vpop.f32.mrf.mxu0
        %v426 = vadd.f32 0.0, %v425
        %v427 = vpop.f32.mrf.mxu0
        %v428 = vadd.f32 0.0, %v427
        %429 = vmatprep.mubr.f32.mxu0 0.0
        %430 = vmatmul.mubr.f32.gmra.mxu0 %v324
        %v431 = vpop.f32.mrf.mxu0
        %v432 = vadd.f32 0.0, %v431
        %v433 = vpop.f32.mrf.mxu0
        %v434 = vadd.f32 0.0, %v433
        %435 = vmatprep.mubr.f32.mxu0 0.0
        %436 = vmatmul.mubr.f32.gmra.mxu0 %v327
        %v437 = vpop.f32.mrf.mxu0
        %v438 = vadd.f32 0.0, %v437
        %v439 = vpop.f32.mrf.mxu0
        %v440 = vadd.f32 0.0, %v439
        %441 = vmatprep.mubr.f32.mxu0 0.0
        %442 = vmatmul.mubr.f32.gmra.mxu0 %v330
        %v443 = vpop.f32.mrf.mxu0
        %v444 = vadd.f32 0.0, %v443
        %v445 = vpop.f32.mrf.mxu0
        %v446 = vadd.f32 0.0, %v445
        %447 = vmatprep.mubr.f32.mxu0 0.0
        %448 = vmatmul.mubr.f32.gmra.mxu0 %v333
        %v449 = vpop.f32.mrf.mxu0
        %v450 = vadd.f32 0.0, %v449
        %v451 = vpop.f32.mrf.mxu0
        %v452 = vadd.f32 0.0, %v451
        %453 = vmatprep.mubr.f32.mxu0 0.0
        %454 = vmatmul.mubr.f32.gmra.mxu0 %v336
        %v455 = vpop.f32.mrf.mxu0
        %v456 = vadd.f32 0.0, %v455
        %v457 = vpop.f32.mrf.mxu0
        %v458 = vadd.f32 0.0, %v457
        %459 = vmatprep.mubr.f32.mxu0 0.0
        %460 = vmatmul.mubr.f32.gmra.mxu0 %v339
        %v461 = vpop.f32.mrf.mxu0
        %v462 = vadd.f32 0.0, %v461
        %v463 = vpop.f32.mrf.mxu0
        %v464 = vadd.f32 0.0, %v463
        %465 = vmatprep.mubr.f32.mxu0 0.0
        %466 = vmatmul.mubr.f32.gmra.mxu0 %v342
        %v467 = vpop.f32.mrf.mxu0
        %v468 = vadd.f32 0.0, %v467
        %v469 = vpop.f32.mrf.mxu0
        %v470 = vadd.f32 0.0, %v469
        %471 = vmatprep.mubr.f32.mxu0 0.0
        %472 = vmatmul.mubr.f32.gmra.mxu0 %v345
        %v473 = vpop.f32.mrf.mxu0
        %v474 = vadd.f32 0.0, %v473
        %v475 = vpop.f32.mrf.mxu0
        %v476 = vadd.f32 0.0, %v475
        %477 = vmatprep.mubr.f32.mxu0 0.0
        %478 = vmatmul.mubr.f32.gmra.mxu0 %v348
        %v479 = vpop.f32.mrf.mxu0
        %v480 = vadd.f32 0.0, %v479
        %v481 = vpop.f32.mrf.mxu0
        %v482 = vadd.f32 0.0, %v481
        %483 = vmatprep.mubr.f32.mxu0 0.0
        %484 = vmatmul.mubr.f32.gmra.mxu0 %v351
        %v485 = vpop.f32.mrf.mxu0
        %v486 = vadd.f32 0.0, %v485
        %v487 = vpop.f32.mrf.mxu0
        %v488 = vadd.f32 0.0, %v487
        %489 = vdwg.mxu0
        %v491 = vsel %vm316, %v271, 0
        %v494 = vsel %vm316, %v272, 0
        %v497 = vsel %vm316, %v273, 0
        %v500 = vsel %vm316, %v274, 0
        %v503 = vsel %vm316, %v275, 0
        %v506 = vsel %vm316, %v276, 0
        %v509 = vsel %vm316, %v277, 0
        %v512 = vsel %vm316, %v278, 0
        %v515 = vsel %vm316, %v279, 0
        %v518 = vsel %vm316, %v280, 0
        %v521 = vsel %vm316, %v281, 0
        %v524 = vsel %vm316, %v282, 0
        %526 = vmatprep.subr.mxu0 0.0
        %527 = vmatpush1.msra.mxu0 0.0
        %528 = vmatprep.subr.mxu0 0.0
        %529 = vmatpush1.msra.mxu0 0.0
        %530 = vmatprep.subr.mxu0 0.0
        %531 = vmatpush1.msra.mxu0 0.0
        %532 = vmatprep.subr.mxu0 0.0
        %533 = vmatpush1.msra.mxu0 0.0
        %534 = vmatprep.subr.mxu0 0.0
        %535 = vmatpush1.msra.mxu0 0.0
        %536 = vmatprep.subr.mxu0 0.0
        %537 = vmatpush1.msra.mxu0 0.0
        %538 = vmatprep.subr.mxu0 0.0
        %539 = vmatpush1.msra.mxu0 0.0
        %540 = vmatprep.subr.mxu0 0.0
        %541 = vmatpush1.msra.mxu0 0.0
        %542 = vmatprep.subr.mxu0 0.0
        %543 = vmatpush1.msra.mxu0 0.0
        %544 = vmatprep.subr.mxu0 0.0
        %545 = vmatpush1.msra.mxu0 0.0
        %546 = vmatprep.subr.mxu0 0.0
        %547 = vmatpush1.msra.mxu0 0.0
        %548 = vmatprep.subr.mxu0 0.0
        %549 = vmatpush1.msra.mxu0 0.0
        %550 = vmatprep.subr.mxu0 %v270
        %551 = vmatpush1.msra.mxu0 %v269
        %552 = vmatprep.subr.mxu0 %v268
        %553 = vmatpush1.msra.mxu0 %v267
        %554 = vmatprep.subr.mxu0 %v266
        %555 = vmatpush1.msra.mxu0 %v265
        %556 = vmatprep.subr.mxu0 %v264
        %557 = vmatpush1.msra.mxu0 %v263
        %558 = vmatprep.subr.mxu0 0.0
        %559 = vmatpush2.msra.mxu0 0.0
        %560 = vmatprep.subr.mxu0 0.0
        %561 = vmatpush2.msra.mxu0 0.0
        %562 = vmatprep.subr.mxu0 0.0
        %563 = vmatpush2.msra.mxu0 0.0
        %564 = vmatprep.subr.mxu0 0.0
        %565 = vmatpush2.msra.mxu0 0.0
        %566 = vmatprep.subr.mxu0 0.0
        %567 = vmatpush2.msra.mxu0 0.0
        %568 = vmatprep.subr.mxu0 0.0
        %569 = vmatpush2.msra.mxu0 0.0
        %570 = vmatprep.subr.mxu0 0.0
        %571 = vmatpush2.msra.mxu0 0.0
        %572 = vmatprep.subr.mxu0 0.0
        %573 = vmatpush2.msra.mxu0 0.0
        %574 = vmatprep.subr.mxu0 0.0
        %575 = vmatpush2.msra.mxu0 0.0
        %576 = vmatprep.subr.mxu0 0.0
        %577 = vmatpush2.msra.mxu0 0.0
        %578 = vmatprep.subr.mxu0 0.0
        %579 = vmatpush2.msra.mxu0 0.0
        %580 = vmatprep.subr.mxu0 0.0
        %581 = vmatpush2.msra.mxu0 0.0
        %582 = vmatprep.subr.mxu0 0.0
        %583 = vmatpush2.msra.mxu0 0.0
        %584 = vmatprep.subr.mxu0 0.0
        %585 = vmatpush2.msra.mxu0 0.0
        %586 = vmatprep.subr.mxu0 0.0
        %587 = vmatpush2.msra.mxu0 0.0
        %588 = vmatprep.subr.mxu0 0.0
        %589 = vmatpush2.msra.mxu0 0.0
        %590 = vmatprep.mubr.f32.mxu0 0.0
        %591 = vmatmul.mubr.f32.gmra.mxu0 %v491
        %v592 = vpop.f32.mrf.mxu0
        %v593 = vadd.f32 %v420, %v592
        %v594 = vpop.f32.mrf.mxu0
        %v595 = vadd.f32 %v422, %v594
        %596 = vmatprep.mubr.f32.mxu0 0.0
        %597 = vmatmul.mubr.f32.gmra.mxu0 %v494
        %v598 = vpop.f32.mrf.mxu0
        %v599 = vadd.f32 %v426, %v598
        %v600 = vpop.f32.mrf.mxu0
        %v601 = vadd.f32 %v428, %v600
        %602 = vmatprep.mubr.f32.mxu0 0.0
        %603 = vmatmul.mubr.f32.gmra.mxu0 %v497
        %v604 = vpop.f32.mrf.mxu0
        %v605 = vadd.f32 %v432, %v604
        %v606 = vpop.f32.mrf.mxu0
        %v607 = vadd.f32 %v434, %v606
        %608 = vmatprep.mubr.f32.mxu0 0.0
        %609 = vmatmul.mubr.f32.gmra.mxu0 %v500
        %v610 = vpop.f32.mrf.mxu0
        %v611 = vadd.f32 %v438, %v610
        %v612 = vpop.f32.mrf.mxu0
        %v613 = vadd.f32 %v440, %v612
        %614 = vmatprep.mubr.f32.mxu0 0.0
        %615 = vmatmul.mubr.f32.gmra.mxu0 %v503
        %v616 = vpop.f32.mrf.mxu0
        %v617 = vadd.f32 %v444, %v616
        %v618 = vpop.f32.mrf.mxu0
        %v619 = vadd.f32 %v446, %v618
        %620 = vmatprep.mubr.f32.mxu0 0.0
        %621 = vmatmul.mubr.f32.gmra.mxu0 %v506
        %v622 = vpop.f32.mrf.mxu0
        %v623 = vadd.f32 %v450, %v622
        %v624 = vpop.f32.mrf.mxu0
        %v625 = vadd.f32 %v452, %v624
        %626 = vmatprep.mubr.f32.mxu0 0.0
        %627 = vmatmul.mubr.f32.gmra.mxu0 %v509
        %v628 = vpop.f32.mrf.mxu0
        %v629 = vadd.f32 %v456, %v628
        %v630 = vpop.f32.mrf.mxu0
        %v631 = vadd.f32 %v458, %v630
        %632 = vmatprep.mubr.f32.mxu0 0.0
        %633 = vmatmul.mubr.f32.gmra.mxu0 %v512
        %v634 = vpop.f32.mrf.mxu0
        %v635 = vadd.f32 %v462, %v634
        %v636 = vpop.f32.mrf.mxu0
        %v637 = vadd.f32 %v464, %v636
        %638 = vmatprep.mubr.f32.mxu0 0.0
        %639 = vmatmul.mubr.f32.gmra.mxu0 %v515
        %v640 = vpop.f32.mrf.mxu0
        %v641 = vadd.f32 %v468, %v640
        %v642 = vpop.f32.mrf.mxu0
        %v643 = vadd.f32 %v470, %v642
        %644 = vmatprep.mubr.f32.mxu0 0.0
        %645 = vmatmul.mubr.f32.gmra.mxu0 %v518
        %v646 = vpop.f32.mrf.mxu0
        %v647 = vadd.f32 %v474, %v646
        %v648 = vpop.f32.mrf.mxu0
        %v649 = vadd.f32 %v476, %v648
        %650 = vmatprep.mubr.f32.mxu0 0.0
        %651 = vmatmul.mubr.f32.gmra.mxu0 %v521
        %v652 = vpop.f32.mrf.mxu0
        %v653 = vadd.f32 %v480, %v652
        %v654 = vpop.f32.mrf.mxu0
        %v655 = vadd.f32 %v482, %v654
        %656 = vmatprep.mubr.f32.mxu0 0.0
        %657 = vmatmul.mubr.f32.gmra.mxu0 %v524
        %v658 = vpop.f32.mrf.mxu0
        %v659 = vadd.f32 %v486, %v658
        %v660 = vpop.f32.mrf.mxu0
        %v661 = vadd.f32 %v488, %v660
        %662 = vdwg.mxu0
        %663 = vrot.lane.b32.xlu0 0.0, 15
        %v664 = vpop.permute.xlu0 %663
        %vm665 = vcmp.lt.s32.totalorder %v253, 15
        %s666 = scalar_lea.vmem %s3, 128
        %v667 = vld [vmem:[%s666] sm:$0xff]
        %v668 = vld [vmem:[%s666 + $0x8] sm:$0xff]
        %v669 = vld [vmem:[%s666 + $0x10] sm:$0xff]
        %v670 = vld [vmem:[%s666 + $0x18] sm:$0xff]
        %v671 = vld [vmem:[%s666 + $0x20] sm:$0xff]
        %v672 = vld [vmem:[%s666 + $0x28] sm:$0xff]
        %v673 = vld [vmem:[%s666 + $0x30] sm:$0xff]
        %v674 = vld [vmem:[%s666 + $0x38] sm:$0xff]
        %v675 = vmul.f32 %v664, %v667
        %v676 = vmul.f32 %v664, %v668
        %v677 = vmul.f32 %v664, %v669
        %v678 = vmul.f32 %v664, %v670
        %v679 = vmul.f32 %v664, %v671
        %v680 = vmul.f32 %v664, %v672
        %v681 = vmul.f32 %v664, %v673
        %v682 = vmul.f32 %v664, %v674
        %s683 = scalar_lea.vmem %s1, 192
        %v684 = vld [vmem:[%s683] sm:$0xff]
        %v685 = vld [vmem:[%s683 + $0x8] sm:$0xff]
        %v686 = vld [vmem:[%s683 + $0x10] sm:$0xff]
        %v687 = vld [vmem:[%s683 + $0x18] sm:$0xff]
        %v688 = vld [vmem:[%s683 + $0x20] sm:$0xff]
        %v689 = vld [vmem:[%s683 + $0x28] sm:$0xff]
        %v690 = vld [vmem:[%s683 + $0x30] sm:$0xff]
        %v691 = vld [vmem:[%s683 + $0x38] sm:$0xff]
        %v692 = vld [vmem:[%s683 + $0x40] sm:$0xff]
        %v693 = vld [vmem:[%s683 + $0x48] sm:$0xff]
        %v694 = vld [vmem:[%s683 + $0x50] sm:$0xff]
        %v695 = vld [vmem:[%s683 + $0x58] sm:$0xff]
        %v697 = vsel %vm316, %v684, 0
        %v700 = vsel %vm316, %v685, 0
        %v703 = vsel %vm316, %v686, 0
        %v706 = vsel %vm316, %v687, 0
        %v709 = vsel %vm316, %v688, 0
        %v712 = vsel %vm316, %v689, 0
        %v715 = vsel %vm316, %v690, 0
        %v718 = vsel %vm316, %v691, 0
        %v721 = vsel %vm316, %v692, 0
        %v724 = vsel %vm316, %v693, 0
        %v727 = vsel %vm316, %v694, 0
        %v730 = vsel %vm316, %v695, 0
        %732 = vmatprep.subr.mxu0 0.0
        %733 = vmatpush1.msra.mxu0 0.0
        %734 = vmatprep.subr.mxu0 0.0
        %735 = vmatpush1.msra.mxu0 0.0
        %736 = vmatprep.subr.mxu0 0.0
        %737 = vmatpush1.msra.mxu0 0.0
        %738 = vmatprep.subr.mxu0 0.0
        %739 = vmatpush1.msra.mxu0 0.0
        %740 = vmatprep.subr.mxu0 0.0
        %741 = vmatpush1.msra.mxu0 0.0
        %742 = vmatprep.subr.mxu0 0.0
        %743 = vmatpush1.msra.mxu0 0.0
        %744 = vmatprep.subr.mxu0 0.0
        %745 = vmatpush1.msra.mxu0 0.0
        %746 = vmatprep.subr.mxu0 0.0
        %747 = vmatpush1.msra.mxu0 0.0
        %748 = vmatprep.subr.mxu0 0.0
        %749 = vmatpush1.msra.mxu0 0.0
        %750 = vmatprep.subr.mxu0 0.0
        %751 = vmatpush1.msra.mxu0 0.0
        %752 = vmatprep.subr.mxu0 0.0
        %753 = vmatpush1.msra.mxu0 0.0
        %754 = vmatprep.subr.mxu0 0.0
        %755 = vmatpush1.msra.mxu0 0.0
        %756 = vmatprep.subr.mxu0 %v682
        %757 = vmatpush1.msra.mxu0 %v681
        %758 = vmatprep.subr.mxu0 %v680
        %759 = vmatpush1.msra.mxu0 %v679
        %760 = vmatprep.subr.mxu0 %v678
        %761 = vmatpush1.msra.mxu0 %v677
        %762 = vmatprep.subr.mxu0 %v676
        %763 = vmatpush1.msra.mxu0 %v675
        %764 = vmatprep.subr.mxu0 0.0
        %765 = vmatpush2.msra.mxu0 0.0
        %766 = vmatprep.subr.mxu0 0.0
        %767 = vmatpush2.msra.mxu0 0.0
        %768 = vmatprep.subr.mxu0 0.0
        %769 = vmatpush2.msra.mxu0 0.0
        %770 = vmatprep.subr.mxu0 0.0
        %771 = vmatpush2.msra.mxu0 0.0
        %772 = vmatprep.subr.mxu0 0.0
        %773 = vmatpush2.msra.mxu0 0.0
        %774 = vmatprep.subr.mxu0 0.0
        %775 = vmatpush2.msra.mxu0 0.0
        %776 = vmatprep.subr.mxu0 0.0
        %777 = vmatpush2.msra.mxu0 0.0
        %778 = vmatprep.subr.mxu0 0.0
        %779 = vmatpush2.msra.mxu0 0.0
        %780 = vmatprep.subr.mxu0 0.0
        %781 = vmatpush2.msra.mxu0 0.0
        %782 = vmatprep.subr.mxu0 0.0
        %783 = vmatpush2.msra.mxu0 0.0
        %784 = vmatprep.subr.mxu0 0.0
        %785 = vmatpush2.msra.mxu0 0.0
        %786 = vmatprep.subr.mxu0 0.0
        %787 = vmatpush2.msra.mxu0 0.0
        %788 = vmatprep.subr.mxu0 0.0
        %789 = vmatpush2.msra.mxu0 0.0
        %790 = vmatprep.subr.mxu0 0.0
        %791 = vmatpush2.msra.mxu0 0.0
        %792 = vmatprep.subr.mxu0 0.0
        %793 = vmatpush2.msra.mxu0 0.0
        %794 = vmatprep.subr.mxu0 0.0
        %795 = vmatpush2.msra.mxu0 0.0
        %796 = vmatprep.mubr.f32.mxu0 0.0
        %797 = vmatmul.mubr.f32.gmra.mxu0 %v697
        %v798 = vpop.f32.mrf.mxu0
        %v799 = vadd.f32 0.0, %v798
        %v800 = vpop.f32.mrf.mxu0
        %v801 = vadd.f32 0.0, %v800
        %802 = vmatprep.mubr.f32.mxu0 0.0
        %803 = vmatmul.mubr.f32.gmra.mxu0 %v700
        %v804 = vpop.f32.mrf.mxu0
        %v805 = vadd.f32 0.0, %v804
        %v806 = vpop.f32.mrf.mxu0
        %v807 = vadd.f32 0.0, %v806
        %808 = vmatprep.mubr.f32.mxu0 0.0
        %809 = vmatmul.mubr.f32.gmra.mxu0 %v703
        %v810 = vpop.f32.mrf.mxu0
        %v811 = vadd.f32 0.0, %v810
        %v812 = vpop.f32.mrf.mxu0
        %v813 = vadd.f32 0.0, %v812
        %814 = vmatprep.mubr.f32.mxu0 0.0
        %815 = vmatmul.mubr.f32.gmra.mxu0 %v706
        %v816 = vpop.f32.mrf.mxu0
        %v817 = vadd.f32 0.0, %v816
        %v818 = vpop.f32.mrf.mxu0
        %v819 = vadd.f32 0.0, %v818
        %820 = vmatprep.mubr.f32.mxu0 0.0
        %821 = vmatmul.mubr.f32.gmra.mxu0 %v709
        %v822 = vpop.f32.mrf.mxu0
        %v823 = vadd.f32 0.0, %v822
        %v824 = vpop.f32.mrf.mxu0
        %v825 = vadd.f32 0.0, %v824
        %826 = vmatprep.mubr.f32.mxu0 0.0
        %827 = vmatmul.mubr.f32.gmra.mxu0 %v712
        %v828 = vpop.f32.mrf.mxu0
        %v829 = vadd.f32 0.0, %v828
        %v830 = vpop.f32.mrf.mxu0
        %v831 = vadd.f32 0.0, %v830
        %832 = vmatprep.mubr.f32.mxu0 0.0
        %833 = vmatmul.mubr.f32.gmra.mxu0 %v715
        %v834 = vpop.f32.mrf.mxu0
        %v835 = vadd.f32 0.0, %v834
        %v836 = vpop.f32.mrf.mxu0
        %v837 = vadd.f32 0.0, %v836
        %838 = vmatprep.mubr.f32.mxu0 0.0
        %839 = vmatmul.mubr.f32.gmra.mxu0 %v718
        %v840 = vpop.f32.mrf.mxu0
        %v841 = vadd.f32 0.0, %v840
        %v842 = vpop.f32.mrf.mxu0
        %v843 = vadd.f32 0.0, %v842
        %844 = vmatprep.mubr.f32.mxu0 0.0
        %845 = vmatmul.mubr.f32.gmra.mxu0 %v721
        %v846 = vpop.f32.mrf.mxu0
        %v847 = vadd.f32 0.0, %v846
        %v848 = vpop.f32.mrf.mxu0
        %v849 = vadd.f32 0.0, %v848
        %850 = vmatprep.mubr.f32.mxu0 0.0
        %851 = vmatmul.mubr.f32.gmra.mxu0 %v724
        %v852 = vpop.f32.mrf.mxu0
        %v853 = vadd.f32 0.0, %v852
        %v854 = vpop.f32.mrf.mxu0
        %v855 = vadd.f32 0.0, %v854
        %856 = vmatprep.mubr.f32.mxu0 0.0
        %857 = vmatmul.mubr.f32.gmra.mxu0 %v727
        %v858 = vpop.f32.mrf.mxu0
        %v859 = vadd.f32 0.0, %v858
        %v860 = vpop.f32.mrf.mxu0
        %v861 = vadd.f32 0.0, %v860
        %862 = vmatprep.mubr.f32.mxu0 0.0
        %863 = vmatmul.mubr.f32.gmra.mxu0 %v730
        %v864 = vpop.f32.mrf.mxu0
        %v865 = vadd.f32 0.0, %v864
        %v866 = vpop.f32.mrf.mxu0
        %v867 = vadd.f32 0.0, %v866
        %868 = vdwg.mxu0
        %v869 = vadd.f32 %v593, %v799
        %v870 = vadd.f32 %v595, %v801
        %v871 = vadd.f32 %v599, %v805
        %v872 = vadd.f32 %v601, %v807
        %v873 = vadd.f32 %v605, %v811
        %v874 = vadd.f32 %v607, %v813
        %v875 = vadd.f32 %v611, %v817
        %v876 = vadd.f32 %v613, %v819
        %v877 = vadd.f32 %v617, %v823
        %v878 = vadd.f32 %v619, %v825
        %v879 = vadd.f32 %v623, %v829
        %v880 = vadd.f32 %v625, %v831
        %v881 = vadd.f32 %v629, %v835
        %v882 = vadd.f32 %v631, %v837
        %v883 = vadd.f32 %v635, %v841
        %v884 = vadd.f32 %v637, %v843
        %v885 = vadd.f32 %v641, %v847
        %v886 = vadd.f32 %v643, %v849
        %v887 = vadd.f32 %v647, %v853
        %v888 = vadd.f32 %v649, %v855
        %v889 = vadd.f32 %v653, %v859
        %v890 = vadd.f32 %v655, %v861
        %v891 = vadd.f32 %v659, %v865
        %v892 = vadd.f32 %v661, %v867
        %893 = vrot.lane.b32.xlu0 0.0, 1
        %v894 = vpop.permute.xlu0 %893
        %vm895 = vcmp.lt.s32.totalorder %v253, 1
        %s896 = scalar_lea.vmem %s3, 192
        %v897 = vld [vmem:[%s896] sm:$0xff]
        %v898 = vld [vmem:[%s896 + $0x8] sm:$0xff]
        %v899 = vld [vmem:[%s896 + $0x10] sm:$0xff]
        %v900 = vld [vmem:[%s896 + $0x18] sm:$0xff]
        %v901 = vld [vmem:[%s896 + $0x20] sm:$0xff]
        %v902 = vld [vmem:[%s896 + $0x28] sm:$0xff]
        %v903 = vld [vmem:[%s896 + $0x30] sm:$0xff]
        %v904 = vld [vmem:[%s896 + $0x38] sm:$0xff]
        %v905 = vmul.f32 %v894, %v897
        %v906 = vmul.f32 %v894, %v898
        %v907 = vmul.f32 %v894, %v899
        %v908 = vmul.f32 %v894, %v900
        %v909 = vmul.f32 %v894, %v901
        %v910 = vmul.f32 %v894, %v902
        %v911 = vmul.f32 %v894, %v903
        %v912 = vmul.f32 %v894, %v904
        %s913 = scalar_lea.vmem %s1, 288
        %v914 = vld [vmem:[%s913] sm:$0xff]
        %v915 = vld [vmem:[%s913 + $0x8] sm:$0xff]
        %v916 = vld [vmem:[%s913 + $0x10] sm:$0xff]
        %v917 = vld [vmem:[%s913 + $0x18] sm:$0xff]
        %v918 = vld [vmem:[%s913 + $0x20] sm:$0xff]
        %v919 = vld [vmem:[%s913 + $0x28] sm:$0xff]
        %v920 = vld [vmem:[%s913 + $0x30] sm:$0xff]
        %v921 = vld [vmem:[%s913 + $0x38] sm:$0xff]
        %v922 = vld [vmem:[%s913 + $0x40] sm:$0xff]
        %v923 = vld [vmem:[%s913 + $0x48] sm:$0xff]
        %v924 = vld [vmem:[%s913 + $0x50] sm:$0xff]
        %v925 = vld [vmem:[%s913 + $0x58] sm:$0xff]
        %v927 = vsel %vm316, %v914, 0
        %v930 = vsel %vm316, %v915, 0
        %v933 = vsel %vm316, %v916, 0
        %v936 = vsel %vm316, %v917, 0
        %v939 = vsel %vm316, %v918, 0
        %v942 = vsel %vm316, %v919, 0
        %v945 = vsel %vm316, %v920, 0
        %v948 = vsel %vm316, %v921, 0
        %v951 = vsel %vm316, %v922, 0
        %v954 = vsel %vm316, %v923, 0
        %v957 = vsel %vm316, %v924, 0
        %v960 = vsel %vm316, %v925, 0
        %962 = vmatprep.subr.mxu0 0.0
        %963 = vmatpush1.msra.mxu0 0.0
        %964 = vmatprep.subr.mxu0 0.0
        %965 = vmatpush1.msra.mxu0 0.0
        %966 = vmatprep.subr.mxu0 0.0
        %967 = vmatpush1.msra.mxu0 0.0
        %968 = vmatprep.subr.mxu0 0.0
        %969 = vmatpush1.msra.mxu0 0.0
        %970 = vmatprep.subr.mxu0 0.0
        %971 = vmatpush1.msra.mxu0 0.0
        %972 = vmatprep.subr.mxu0 0.0
        %973 = vmatpush1.msra.mxu0 0.0
        %974 = vmatprep.subr.mxu0 0.0
        %975 = vmatpush1.msra.mxu0 0.0
        %976 = vmatprep.subr.mxu0 0.0
        %977 = vmatpush1.msra.mxu0 0.0
        %978 = vmatprep.subr.mxu0 0.0
        %979 = vmatpush1.msra.mxu0 0.0
        %980 = vmatprep.subr.mxu0 0.0
        %981 = vmatpush1.msra.mxu0 0.0
        %982 = vmatprep.subr.mxu0 0.0
        %983 = vmatpush1.msra.mxu0 0.0
        %984 = vmatprep.subr.mxu0 0.0
        %985 = vmatpush1.msra.mxu0 0.0
        %986 = vmatprep.subr.mxu0 %v912
        %987 = vmatpush1.msra.mxu0 %v911
        %988 = vmatprep.subr.mxu0 %v910
        %989 = vmatpush1.msra.mxu0 %v909
        %990 = vmatprep.subr.mxu0 %v908
        %991 = vmatpush1.msra.mxu0 %v907
        %992 = vmatprep.subr.mxu0 %v906
        %993 = vmatpush1.msra.mxu0 %v905
        %994 = vmatprep.subr.mxu0 0.0
        %995 = vmatpush2.msra.mxu0 0.0
        %996 = vmatprep.subr.mxu0 0.0
        %997 = vmatpush2.msra.mxu0 0.0
        %998 = vmatprep.subr.mxu0 0.0
        %999 = vmatpush2.msra.mxu0 0.0
        %1000 = vmatprep.subr.mxu0 0.0
        %1001 = vmatpush2.msra.mxu0 0.0
        %1002 = vmatprep.subr.mxu0 0.0
        %1003 = vmatpush2.msra.mxu0 0.0
        %1004 = vmatprep.subr.mxu0 0.0
        %1005 = vmatpush2.msra.mxu0 0.0
        %1006 = vmatprep.subr.mxu0 0.0
        %1007 = vmatpush2.msra.mxu0 0.0
        %1008 = vmatprep.subr.mxu0 0.0
        %1009 = vmatpush2.msra.mxu0 0.0
        %1010 = vmatprep.subr.mxu0 0.0
        %1011 = vmatpush2.msra.mxu0 0.0
        %1012 = vmatprep.subr.mxu0 0.0
        %1013 = vmatpush2.msra.mxu0 0.0
        %1014 = vmatprep.subr.mxu0 0.0
        %1015 = vmatpush2.msra.mxu0 0.0
        %1016 = vmatprep.subr.mxu0 0.0
        %1017 = vmatpush2.msra.mxu0 0.0
        %1018 = vmatprep.subr.mxu0 0.0
        %1019 = vmatpush2.msra.mxu0 0.0
        %1020 = vmatprep.subr.mxu0 0.0
        %1021 = vmatpush2.msra.mxu0 0.0
        %1022 = vmatprep.subr.mxu0 0.0
        %1023 = vmatpush2.msra.mxu0 0.0
        %1024 = vmatprep.subr.mxu0 0.0
        %1025 = vmatpush2.msra.mxu0 0.0
        %1026 = vmatprep.mubr.f32.mxu0 0.0
        %1027 = vmatmul.mubr.f32.gmra.mxu0 %v927
        %v1028 = vpop.f32.mrf.mxu0
        %v1029 = vadd.f32 0.0, %v1028
        %v1030 = vpop.f32.mrf.mxu0
        %v1031 = vadd.f32 0.0, %v1030
        %1032 = vmatprep.mubr.f32.mxu0 0.0
        %1033 = vmatmul.mubr.f32.gmra.mxu0 %v930
        %v1034 = vpop.f32.mrf.mxu0
        %v1035 = vadd.f32 0.0, %v1034
        %v1036 = vpop.f32.mrf.mxu0
        %v1037 = vadd.f32 0.0, %v1036
        %1038 = vmatprep.mubr.f32.mxu0 0.0
        %1039 = vmatmul.mubr.f32.gmra.mxu0 %v933
        %v1040 = vpop.f32.mrf.mxu0
        %v1041 = vadd.f32 0.0, %v1040
        %v1042 = vpop.f32.mrf.mxu0
        %v1043 = vadd.f32 0.0, %v1042
        %1044 = vmatprep.mubr.f32.mxu0 0.0
        %1045 = vmatmul.mubr.f32.gmra.mxu0 %v936
        %v1046 = vpop.f32.mrf.mxu0
        %v1047 = vadd.f32 0.0, %v1046
        %v1048 = vpop.f32.mrf.mxu0
        %v1049 = vadd.f32 0.0, %v1048
        %1050 = vmatprep.mubr.f32.mxu0 0.0
        %1051 = vmatmul.mubr.f32.gmra.mxu0 %v939
        %v1052 = vpop.f32.mrf.mxu0
        %v1053 = vadd.f32 0.0, %v1052
        %v1054 = vpop.f32.mrf.mxu0
        %v1055 = vadd.f32 0.0, %v1054
        %1056 = vmatprep.mubr.f32.mxu0 0.0
        %1057 = vmatmul.mubr.f32.gmra.mxu0 %v942
        %v1058 = vpop.f32.mrf.mxu0
        %v1059 = vadd.f32 0.0, %v1058
        %v1060 = vpop.f32.mrf.mxu0
        %v1061 = vadd.f32 0.0, %v1060
        %1062 = vmatprep.mubr.f32.mxu0 0.0
        %1063 = vmatmul.mubr.f32.gmra.mxu0 %v945
        %v1064 = vpop.f32.mrf.mxu0
        %v1065 = vadd.f32 0.0, %v1064
        %v1066 = vpop.f32.mrf.mxu0
        %v1067 = vadd.f32 0.0, %v1066
        %1068 = vmatprep.mubr.f32.mxu0 0.0
        %1069 = vmatmul.mubr.f32.gmra.mxu0 %v948
        %v1070 = vpop.f32.mrf.mxu0
        %v1071 = vadd.f32 0.0, %v1070
        %v1072 = vpop.f32.mrf.mxu0
        %v1073 = vadd.f32 0.0, %v1072
        %1074 = vmatprep.mubr.f32.mxu0 0.0
        %1075 = vmatmul.mubr.f32.gmra.mxu0 %v951
        %v1076 = vpop.f32.mrf.mxu0
        %v1077 = vadd.f32 0.0, %v1076
        %v1078 = vpop.f32.mrf.mxu0
        %v1079 = vadd.f32 0.0, %v1078
        %1080 = vmatprep.mubr.f32.mxu0 0.0
        %1081 = vmatmul.mubr.f32.gmra.mxu0 %v954
        %v1082 = vpop.f32.mrf.mxu0
        %v1083 = vadd.f32 0.0, %v1082
        %v1084 = vpop.f32.mrf.mxu0
        %v1085 = vadd.f32 0.0, %v1084
        %1086 = vmatprep.mubr.f32.mxu0 0.0
        %1087 = vmatmul.mubr.f32.gmra.mxu0 %v957
        %v1088 = vpop.f32.mrf.mxu0
        %v1089 = vadd.f32 0.0, %v1088
        %v1090 = vpop.f32.mrf.mxu0
        %v1091 = vadd.f32 0.0, %v1090
        %1092 = vmatprep.mubr.f32.mxu0 0.0
        %1093 = vmatmul.mubr.f32.gmra.mxu0 %v960
        %v1094 = vpop.f32.mrf.mxu0
        %v1095 = vadd.f32 0.0, %v1094
        %v1096 = vpop.f32.mrf.mxu0
        %v1097 = vadd.f32 0.0, %v1096
        %1098 = vdwg.mxu0
        %v1099 = vadd.f32 %v869, %v1029
        %v1100 = vadd.f32 %v870, %v1031
        %v1101 = vadd.f32 %v871, %v1035
        %v1102 = vadd.f32 %v872, %v1037
        %v1103 = vadd.f32 %v873, %v1041
        %v1104 = vadd.f32 %v874, %v1043
        %v1105 = vadd.f32 %v875, %v1047
        %v1106 = vadd.f32 %v876, %v1049
        %v1107 = vadd.f32 %v877, %v1053
        %v1108 = vadd.f32 %v878, %v1055
        %v1109 = vadd.f32 %v879, %v1059
        %v1110 = vadd.f32 %v880, %v1061
        %v1111 = vadd.f32 %v881, %v1065
        %v1112 = vadd.f32 %v882, %v1067
        %v1113 = vadd.f32 %v883, %v1071
        %v1114 = vadd.f32 %v884, %v1073
        %v1115 = vadd.f32 %v885, %v1077
        %v1116 = vadd.f32 %v886, %v1079
        %v1117 = vadd.f32 %v887, %v1083
        %v1118 = vadd.f32 %v888, %v1085
        %v1119 = vadd.f32 %v889, %v1089
        %v1120 = vadd.f32 %v890, %v1091
        %v1121 = vadd.f32 %v891, %v1095
        %v1122 = vadd.f32 %v892, %v1097
        %s1123 = scalar_lea.vmem %s1, 384
        %v1124 = vld [vmem:[%s1123] sm:$0xff]
        %v1125 = vld [vmem:[%s1123 + $0x8] sm:$0xff]
        %v1126 = vld [vmem:[%s1123 + $0x10] sm:$0xff]
        %v1127 = vld [vmem:[%s1123 + $0x18] sm:$0xff]
        %v1128 = vld [vmem:[%s1123 + $0x20] sm:$0xff]
        %v1129 = vld [vmem:[%s1123 + $0x28] sm:$0xff]
        %v1130 = vld [vmem:[%s1123 + $0x30] sm:$0xff]
        %v1131 = vld [vmem:[%s1123 + $0x38] sm:$0xff]
        %v1132 = vld [vmem:[%s1123 + $0x40] sm:$0xff]
        %v1133 = vld [vmem:[%s1123 + $0x48] sm:$0xff]
        %v1134 = vld [vmem:[%s1123 + $0x50] sm:$0xff]
        %v1135 = vld [vmem:[%s1123 + $0x58] sm:$0xff]
        %v1137 = vsel %vm316, %v1124, 0
        %v1140 = vsel %vm316, %v1125, 0
        %v1143 = vsel %vm316, %v1126, 0
        %v1146 = vsel %vm316, %v1127, 0
        %v1149 = vsel %vm316, %v1128, 0
        %v1152 = vsel %vm316, %v1129, 0
        %v1155 = vsel %vm316, %v1130, 0
        %v1158 = vsel %vm316, %v1131, 0
        %v1161 = vsel %vm316, %v1132, 0
        %v1164 = vsel %vm316, %v1133, 0
        %v1167 = vsel %vm316, %v1134, 0
        %v1170 = vsel %vm316, %v1135, 0
        %1172 = vmatprep.subr.mxu0 0.0
        %1173 = vmatpush1.msra.mxu0 0.0
        %1174 = vmatprep.subr.mxu0 0.0
        %1175 = vmatpush1.msra.mxu0 0.0
        %1176 = vmatprep.subr.mxu0 0.0
        %1177 = vmatpush1.msra.mxu0 0.0
        %1178 = vmatprep.subr.mxu0 0.0
        %1179 = vmatpush1.msra.mxu0 0.0
        %1180 = vmatprep.subr.mxu0 0.0
        %1181 = vmatpush1.msra.mxu0 0.0
        %1182 = vmatprep.subr.mxu0 0.0
        %1183 = vmatpush1.msra.mxu0 0.0
        %1184 = vmatprep.subr.mxu0 0.0
        %1185 = vmatpush1.msra.mxu0 0.0
        %1186 = vmatprep.subr.mxu0 0.0
        %1187 = vmatpush1.msra.mxu0 0.0
        %1188 = vmatprep.subr.mxu0 0.0
        %1189 = vmatpush1.msra.mxu0 0.0
        %1190 = vmatprep.subr.mxu0 0.0
        %1191 = vmatpush1.msra.mxu0 0.0
        %1192 = vmatprep.subr.mxu0 0.0
        %1193 = vmatpush1.msra.mxu0 0.0
        %1194 = vmatprep.subr.mxu0 0.0
        %1195 = vmatpush1.msra.mxu0 0.0
        %1196 = vmatprep.subr.mxu0 0.0
        %1197 = vmatpush1.msra.mxu0 0.0
        %1198 = vmatprep.subr.mxu0 0.0
        %1199 = vmatpush1.msra.mxu0 0.0
        %1200 = vmatprep.subr.mxu0 0.0
        %1201 = vmatpush1.msra.mxu0 0.0
        %1202 = vmatprep.subr.mxu0 0.0
        %1203 = vmatpush1.msra.mxu0 0.0
        %1204 = vmatprep.subr.mxu0 0.0
        %1205 = vmatpush2.msra.mxu0 0.0
        %1206 = vmatprep.subr.mxu0 0.0
        %1207 = vmatpush2.msra.mxu0 0.0
        %1208 = vmatprep.subr.mxu0 0.0
        %1209 = vmatpush2.msra.mxu0 0.0
        %1210 = vmatprep.subr.mxu0 0.0
        %1211 = vmatpush2.msra.mxu0 0.0
        %1212 = vmatprep.subr.mxu0 0.0
        %1213 = vmatpush2.msra.mxu0 0.0
        %1214 = vmatprep.subr.mxu0 0.0
        %1215 = vmatpush2.msra.mxu0 0.0
        %1216 = vmatprep.subr.mxu0 0.0
        %1217 = vmatpush2.msra.mxu0 0.0
        %1218 = vmatprep.subr.mxu0 0.0
        %1219 = vmatpush2.msra.mxu0 0.0
        %1220 = vmatprep.subr.mxu0 0.0
        %1221 = vmatpush2.msra.mxu0 0.0
        %1222 = vmatprep.subr.mxu0 0.0
        %1223 = vmatpush2.msra.mxu0 0.0
        %1224 = vmatprep.subr.mxu0 0.0
        %1225 = vmatpush2.msra.mxu0 0.0
        %1226 = vmatprep.subr.mxu0 0.0
        %1227 = vmatpush2.msra.mxu0 0.0
        %1228 = vmatprep.subr.mxu0 0.0
        %1229 = vmatpush2.msra.mxu0 0.0
        %1230 = vmatprep.subr.mxu0 0.0
        %1231 = vmatpush2.msra.mxu0 0.0
        %1232 = vmatprep.subr.mxu0 0.0
        %1233 = vmatpush2.msra.mxu0 0.0
        %1234 = vmatprep.subr.mxu0 0.0
        %1235 = vmatpush2.msra.mxu0 0.0
        %1236 = vmatprep.mubr.f32.mxu0 0.0
        %1237 = vmatmul.mubr.f32.gmra.mxu0 %v1137
        %v1238 = vpop.f32.mrf.mxu0
        %v1239 = vadd.f32 0.0, %v1238
        %v1240 = vpop.f32.mrf.mxu0
        %v1241 = vadd.f32 0.0, %v1240
        %1242 = vmatprep.mubr.f32.mxu0 0.0
        %1243 = vmatmul.mubr.f32.gmra.mxu0 %v1140
        %v1244 = vpop.f32.mrf.mxu0
        %v1245 = vadd.f32 0.0, %v1244
        %v1246 = vpop.f32.mrf.mxu0
        %v1247 = vadd.f32 0.0, %v1246
        %1248 = vmatprep.mubr.f32.mxu0 0.0
        %1249 = vmatmul.mubr.f32.gmra.mxu0 %v1143
        %v1250 = vpop.f32.mrf.mxu0
        %v1251 = vadd.f32 0.0, %v1250
        %v1252 = vpop.f32.mrf.mxu0
        %v1253 = vadd.f32 0.0, %v1252
        %1254 = vmatprep.mubr.f32.mxu0 0.0
        %1255 = vmatmul.mubr.f32.gmra.mxu0 %v1146
        %v1256 = vpop.f32.mrf.mxu0
        %v1257 = vadd.f32 0.0, %v1256
        %v1258 = vpop.f32.mrf.mxu0
        %v1259 = vadd.f32 0.0, %v1258
        %1260 = vmatprep.mubr.f32.mxu0 0.0
        %1261 = vmatmul.mubr.f32.gmra.mxu0 %v1149
        %v1262 = vpop.f32.mrf.mxu0
        %v1263 = vadd.f32 0.0, %v1262
        %v1264 = vpop.f32.mrf.mxu0
        %v1265 = vadd.f32 0.0, %v1264
        %1266 = vmatprep.mubr.f32.mxu0 0.0
        %1267 = vmatmul.mubr.f32.gmra.mxu0 %v1152
        %v1268 = vpop.f32.mrf.mxu0
        %v1269 = vadd.f32 0.0, %v1268
        %v1270 = vpop.f32.mrf.mxu0
        %v1271 = vadd.f32 0.0, %v1270
        %1272 = vmatprep.mubr.f32.mxu0 0.0
        %1273 = vmatmul.mubr.f32.gmra.mxu0 %v1155
        %v1274 = vpop.f32.mrf.mxu0
        %v1275 = vadd.f32 0.0, %v1274
        %v1276 = vpop.f32.mrf.mxu0
        %v1277 = vadd.f32 0.0, %v1276
        %1278 = vmatprep.mubr.f32.mxu0 0.0
        %1279 = vmatmul.mubr.f32.gmra.mxu0 %v1158
        %v1280 = vpop.f32.mrf.mxu0
        %v1281 = vadd.f32 0.0, %v1280
        %v1282 = vpop.f32.mrf.mxu0
        %v1283 = vadd.f32 0.0, %v1282
        %1284 = vmatprep.mubr.f32.mxu0 0.0
        %1285 = vmatmul.mubr.f32.gmra.mxu0 %v1161
        %v1286 = vpop.f32.mrf.mxu0
        %v1287 = vadd.f32 0.0, %v1286
        %v1288 = vpop.f32.mrf.mxu0
        %v1289 = vadd.f32 0.0, %v1288
        %1290 = vmatprep.mubr.f32.mxu0 0.0
        %1291 = vmatmul.mubr.f32.gmra.mxu0 %v1164
        %v1292 = vpop.f32.mrf.mxu0
        %v1293 = vadd.f32 0.0, %v1292
        %v1294 = vpop.f32.mrf.mxu0
        %v1295 = vadd.f32 0.0, %v1294
        %1296 = vmatprep.mubr.f32.mxu0 0.0
        %1297 = vmatmul.mubr.f32.gmra.mxu0 %v1167
        %v1298 = vpop.f32.mrf.mxu0
        %v1299 = vadd.f32 0.0, %v1298
        %v1300 = vpop.f32.mrf.mxu0
        %v1301 = vadd.f32 0.0, %v1300
        %1302 = vmatprep.mubr.f32.mxu0 0.0
        %1303 = vmatmul.mubr.f32.gmra.mxu0 %v1170
        %v1304 = vpop.f32.mrf.mxu0
        %v1305 = vadd.f32 0.0, %v1304
        %v1306 = vpop.f32.mrf.mxu0
        %v1307 = vadd.f32 0.0, %v1306
        %1308 = vdwg.mxu0
        %v1309 = vadd.f32 %v1099, %v1239
        %v1310 = vadd.f32 %v1100, %v1241
        %v1311 = vadd.f32 %v1101, %v1245
        %v1312 = vadd.f32 %v1102, %v1247
        %v1313 = vadd.f32 %v1103, %v1251
        %v1314 = vadd.f32 %v1104, %v1253
        %v1315 = vadd.f32 %v1105, %v1257
        %v1316 = vadd.f32 %v1106, %v1259
        %v1317 = vadd.f32 %v1107, %v1263
        %v1318 = vadd.f32 %v1108, %v1265
        %v1319 = vadd.f32 %v1109, %v1269
        %v1320 = vadd.f32 %v1110, %v1271
        %v1321 = vadd.f32 %v1111, %v1275
        %v1322 = vadd.f32 %v1112, %v1277
        %v1323 = vadd.f32 %v1113, %v1281
        %v1324 = vadd.f32 %v1114, %v1283
        %v1325 = vadd.f32 %v1115, %v1287
        %v1326 = vadd.f32 %v1116, %v1289
        %v1327 = vadd.f32 %v1117, %v1293
        %v1328 = vadd.f32 %v1118, %v1295
        %v1329 = vadd.f32 %v1119, %v1299
        %v1330 = vadd.f32 %v1120, %v1301
        %v1331 = vadd.f32 %v1121, %v1305
        %v1332 = vadd.f32 %v1122, %v1307
        %1333 = vrot.lane.b32.xlu0 0.0, 127
        %v1334 = vpop.permute.xlu0 %1333
        %vm1335 = vcmp.lt.s32.totalorder %v253, 127
        %s1336 = scalar_lea.vmem %s3, 320
        %v1337 = vld [vmem:[%s1336] sm:$0xff]
        %v1338 = vld [vmem:[%s1336 + $0x8] sm:$0xff]
        %v1339 = vld [vmem:[%s1336 + $0x10] sm:$0xff]
        %v1340 = vld [vmem:[%s1336 + $0x18] sm:$0xff]
        %v1341 = vld [vmem:[%s1336 + $0x20] sm:$0xff]
        %v1342 = vld [vmem:[%s1336 + $0x28] sm:$0xff]
        %v1343 = vld [vmem:[%s1336 + $0x30] sm:$0xff]
        %v1344 = vld [vmem:[%s1336 + $0x38] sm:$0xff]
        %v1345 = vmul.f32 %v1334, %v1337
        %v1346 = vmul.f32 %v1334, %v1338
        %v1347 = vmul.f32 %v1334, %v1339
        %v1348 = vmul.f32 %v1334, %v1340
        %v1349 = vmul.f32 %v1334, %v1341
        %v1350 = vmul.f32 %v1334, %v1342
        %v1351 = vmul.f32 %v1334, %v1343
        %v1352 = vmul.f32 %v1334, %v1344
        %s1353 = scalar_lea.vmem %s1, 480
        %v1354 = vld [vmem:[%s1353] sm:$0xff]
        %v1355 = vld [vmem:[%s1353 + $0x8] sm:$0xff]
        %v1356 = vld [vmem:[%s1353 + $0x10] sm:$0xff]
        %v1357 = vld [vmem:[%s1353 + $0x18] sm:$0xff]
        %v1358 = vld [vmem:[%s1353 + $0x20] sm:$0xff]
        %v1359 = vld [vmem:[%s1353 + $0x28] sm:$0xff]
        %v1360 = vld [vmem:[%s1353 + $0x30] sm:$0xff]
        %v1361 = vld [vmem:[%s1353 + $0x38] sm:$0xff]
        %v1362 = vld [vmem:[%s1353 + $0x40] sm:$0xff]
        %v1363 = vld [vmem:[%s1353 + $0x48] sm:$0xff]
        %v1364 = vld [vmem:[%s1353 + $0x50] sm:$0xff]
        %v1365 = vld [vmem:[%s1353 + $0x58] sm:$0xff]
        %v1367 = vsel %vm316, %v1354, 0
        %v1370 = vsel %vm316, %v1355, 0
        %v1373 = vsel %vm316, %v1356, 0
        %v1376 = vsel %vm316, %v1357, 0
        %v1379 = vsel %vm316, %v1358, 0
        %v1382 = vsel %vm316, %v1359, 0
        %v1385 = vsel %vm316, %v1360, 0
        %v1388 = vsel %vm316, %v1361, 0
        %v1391 = vsel %vm316, %v1362, 0
        %v1394 = vsel %vm316, %v1363, 0
        %v1397 = vsel %vm316, %v1364, 0
        %v1400 = vsel %vm316, %v1365, 0
        %1402 = vmatprep.subr.mxu0 0.0
        %1403 = vmatpush1.msra.mxu0 0.0
        %1404 = vmatprep.subr.mxu0 0.0
        %1405 = vmatpush1.msra.mxu0 0.0
        %1406 = vmatprep.subr.mxu0 0.0
        %1407 = vmatpush1.msra.mxu0 0.0
        %1408 = vmatprep.subr.mxu0 0.0
        %1409 = vmatpush1.msra.mxu0 0.0
        %1410 = vmatprep.subr.mxu0 0.0
        %1411 = vmatpush1.msra.mxu0 0.0
        %1412 = vmatprep.subr.mxu0 0.0
        %1413 = vmatpush1.msra.mxu0 0.0
        %1414 = vmatprep.subr.mxu0 0.0
        %1415 = vmatpush1.msra.mxu0 0.0
        %1416 = vmatprep.subr.mxu0 0.0
        %1417 = vmatpush1.msra.mxu0 0.0
        %1418 = vmatprep.subr.mxu0 0.0
        %1419 = vmatpush1.msra.mxu0 0.0
        %1420 = vmatprep.subr.mxu0 0.0
        %1421 = vmatpush1.msra.mxu0 0.0
        %1422 = vmatprep.subr.mxu0 0.0
        %1423 = vmatpush1.msra.mxu0 0.0
        %1424 = vmatprep.subr.mxu0 0.0
        %1425 = vmatpush1.msra.mxu0 0.0
        %1426 = vmatprep.subr.mxu0 %v1352
        %1427 = vmatpush1.msra.mxu0 %v1351
        %1428 = vmatprep.subr.mxu0 %v1350
        %1429 = vmatpush1.msra.mxu0 %v1349
        %1430 = vmatprep.subr.mxu0 %v1348
        %1431 = vmatpush1.msra.mxu0 %v1347
        %1432 = vmatprep.subr.mxu0 %v1346
        %1433 = vmatpush1.msra.mxu0 %v1345
        %1434 = vmatprep.subr.mxu0 0.0
        %1435 = vmatpush2.msra.mxu0 0.0
        %1436 = vmatprep.subr.mxu0 0.0
        %1437 = vmatpush2.msra.mxu0 0.0
        %1438 = vmatprep.subr.mxu0 0.0
        %1439 = vmatpush2.msra.mxu0 0.0
        %1440 = vmatprep.subr.mxu0 0.0
        %1441 = vmatpush2.msra.mxu0 0.0
        %1442 = vmatprep.subr.mxu0 0.0
        %1443 = vmatpush2.msra.mxu0 0.0
        %1444 = vmatprep.subr.mxu0 0.0
        %1445 = vmatpush2.msra.mxu0 0.0
        %1446 = vmatprep.subr.mxu0 0.0
        %1447 = vmatpush2.msra.mxu0 0.0
        %1448 = vmatprep.subr.mxu0 0.0
        %1449 = vmatpush2.msra.mxu0 0.0
        %1450 = vmatprep.subr.mxu0 0.0
        %1451 = vmatpush2.msra.mxu0 0.0
        %1452 = vmatprep.subr.mxu0 0.0
        %1453 = vmatpush2.msra.mxu0 0.0
        %1454 = vmatprep.subr.mxu0 0.0
        %1455 = vmatpush2.msra.mxu0 0.0
        %1456 = vmatprep.subr.mxu0 0.0
        %1457 = vmatpush2.msra.mxu0 0.0
        %1458 = vmatprep.subr.mxu0 0.0
        %1459 = vmatpush2.msra.mxu0 0.0
        %1460 = vmatprep.subr.mxu0 0.0
        %1461 = vmatpush2.msra.mxu0 0.0
        %1462 = vmatprep.subr.mxu0 0.0
        %1463 = vmatpush2.msra.mxu0 0.0
        %1464 = vmatprep.subr.mxu0 0.0
        %1465 = vmatpush2.msra.mxu0 0.0
        %1466 = vmatprep.mubr.f32.mxu0 0.0
        %1467 = vmatmul.mubr.f32.gmra.mxu0 %v1367
        %v1468 = vpop.f32.mrf.mxu0
        %v1469 = vadd.f32 0.0, %v1468
        %v1470 = vpop.f32.mrf.mxu0
        %v1471 = vadd.f32 0.0, %v1470
        %1472 = vmatprep.mubr.f32.mxu0 0.0
        %1473 = vmatmul.mubr.f32.gmra.mxu0 %v1370
        %v1474 = vpop.f32.mrf.mxu0
        %v1475 = vadd.f32 0.0, %v1474
        %v1476 = vpop.f32.mrf.mxu0
        %v1477 = vadd.f32 0.0, %v1476
        %1478 = vmatprep.mubr.f32.mxu0 0.0
        %1479 = vmatmul.mubr.f32.gmra.mxu0 %v1373
        %v1480 = vpop.f32.mrf.mxu0
        %v1481 = vadd.f32 0.0, %v1480
        %v1482 = vpop.f32.mrf.mxu0
        %v1483 = vadd.f32 0.0, %v1482
        %1484 = vmatprep.mubr.f32.mxu0 0.0
        %1485 = vmatmul.mubr.f32.gmra.mxu0 %v1376
        %v1486 = vpop.f32.mrf.mxu0
        %v1487 = vadd.f32 0.0, %v1486
        %v1488 = vpop.f32.mrf.mxu0
        %v1489 = vadd.f32 0.0, %v1488
        %1490 = vmatprep.mubr.f32.mxu0 0.0
        %1491 = vmatmul.mubr.f32.gmra.mxu0 %v1379
        %v1492 = vpop.f32.mrf.mxu0
        %v1493 = vadd.f32 0.0, %v1492
        %v1494 = vpop.f32.mrf.mxu0
        %v1495 = vadd.f32 0.0, %v1494
        %1496 = vmatprep.mubr.f32.mxu0 0.0
        %1497 = vmatmul.mubr.f32.gmra.mxu0 %v1382
        %v1498 = vpop.f32.mrf.mxu0
        %v1499 = vadd.f32 0.0, %v1498
        %v1500 = vpop.f32.mrf.mxu0
        %v1501 = vadd.f32 0.0, %v1500
        %1502 = vmatprep.mubr.f32.mxu0 0.0
        %1503 = vmatmul.mubr.f32.gmra.mxu0 %v1385
        %v1504 = vpop.f32.mrf.mxu0
        %v1505 = vadd.f32 0.0, %v1504
        %v1506 = vpop.f32.mrf.mxu0
        %v1507 = vadd.f32 0.0, %v1506
        %1508 = vmatprep.mubr.f32.mxu0 0.0
        %1509 = vmatmul.mubr.f32.gmra.mxu0 %v1388
        %v1510 = vpop.f32.mrf.mxu0
        %v1511 = vadd.f32 0.0, %v1510
        %v1512 = vpop.f32.mrf.mxu0
        %v1513 = vadd.f32 0.0, %v1512
        %1514 = vmatprep.mubr.f32.mxu0 0.0
        %1515 = vmatmul.mubr.f32.gmra.mxu0 %v1391
        %v1516 = vpop.f32.mrf.mxu0
        %v1517 = vadd.f32 0.0, %v1516
        %v1518 = vpop.f32.mrf.mxu0
        %v1519 = vadd.f32 0.0, %v1518
        %1520 = vmatprep.mubr.f32.mxu0 0.0
        %1521 = vmatmul.mubr.f32.gmra.mxu0 %v1394
        %v1522 = vpop.f32.mrf.mxu0
        %v1523 = vadd.f32 0.0, %v1522
        %v1524 = vpop.f32.mrf.mxu0
        %v1525 = vadd.f32 0.0, %v1524
        %1526 = vmatprep.mubr.f32.mxu0 0.0
        %1527 = vmatmul.mubr.f32.gmra.mxu0 %v1397
        %v1528 = vpop.f32.mrf.mxu0
        %v1529 = vadd.f32 0.0, %v1528
        %v1530 = vpop.f32.mrf.mxu0
        %v1531 = vadd.f32 0.0, %v1530
        %1532 = vmatprep.mubr.f32.mxu0 0.0
        %1533 = vmatmul.mubr.f32.gmra.mxu0 %v1400
        %v1534 = vpop.f32.mrf.mxu0
        %v1535 = vadd.f32 0.0, %v1534
        %v1536 = vpop.f32.mrf.mxu0
        %v1537 = vadd.f32 0.0, %v1536
        %1538 = vdwg.mxu0
        %v1539 = vadd.f32 %v1309, %v1469
        %v1540 = vadd.f32 %v1310, %v1471
        %v1541 = vadd.f32 %v1311, %v1475
        %v1542 = vadd.f32 %v1312, %v1477
        %v1543 = vadd.f32 %v1313, %v1481
        %v1544 = vadd.f32 %v1314, %v1483
        %v1545 = vadd.f32 %v1315, %v1487
        %v1546 = vadd.f32 %v1316, %v1489
        %v1547 = vadd.f32 %v1317, %v1493
        %v1548 = vadd.f32 %v1318, %v1495
        %v1549 = vadd.f32 %v1319, %v1499
        %v1550 = vadd.f32 %v1320, %v1501
        %v1551 = vadd.f32 %v1321, %v1505
        %v1552 = vadd.f32 %v1322, %v1507
        %v1553 = vadd.f32 %v1323, %v1511
        %v1554 = vadd.f32 %v1324, %v1513
        %v1555 = vadd.f32 %v1325, %v1517
        %v1556 = vadd.f32 %v1326, %v1519
        %v1557 = vadd.f32 %v1327, %v1523
        %v1558 = vadd.f32 %v1328, %v1525
        %v1559 = vadd.f32 %v1329, %v1529
        %v1560 = vadd.f32 %v1330, %v1531
        %v1561 = vadd.f32 %v1331, %v1535
        %v1562 = vadd.f32 %v1332, %v1537
        %1563 = vrot.lane.b32.xlu0 0.0, 113
        %v1564 = vpop.permute.xlu0 %1563
        %vm1565 = vcmp.lt.s32.totalorder %v253, 113
        %s1566 = scalar_lea.vmem %s3, 384
        %v1567 = vld [vmem:[%s1566] sm:$0xff]
        %v1568 = vld [vmem:[%s1566 + $0x8] sm:$0xff]
        %v1569 = vld [vmem:[%s1566 + $0x10] sm:$0xff]
        %v1570 = vld [vmem:[%s1566 + $0x18] sm:$0xff]
        %v1571 = vld [vmem:[%s1566 + $0x20] sm:$0xff]
        %v1572 = vld [vmem:[%s1566 + $0x28] sm:$0xff]
        %v1573 = vld [vmem:[%s1566 + $0x30] sm:$0xff]
        %v1574 = vld [vmem:[%s1566 + $0x38] sm:$0xff]
        %v1575 = vmul.f32 %v1564, %v1567
        %v1576 = vmul.f32 %v1564, %v1568
        %v1577 = vmul.f32 %v1564, %v1569
        %v1578 = vmul.f32 %v1564, %v1570
        %v1579 = vmul.f32 %v1564, %v1571
        %v1580 = vmul.f32 %v1564, %v1572
        %v1581 = vmul.f32 %v1564, %v1573
        %v1582 = vmul.f32 %v1564, %v1574
        %s1583 = scalar_lea.vmem %s1, 576
        %v1584 = vld [vmem:[%s1583] sm:$0xff]
        %v1585 = vld [vmem:[%s1583 + $0x8] sm:$0xff]
        %v1586 = vld [vmem:[%s1583 + $0x10] sm:$0xff]
        %v1587 = vld [vmem:[%s1583 + $0x18] sm:$0xff]
        %v1588 = vld [vmem:[%s1583 + $0x20] sm:$0xff]
        %v1589 = vld [vmem:[%s1583 + $0x28] sm:$0xff]
        %v1590 = vld [vmem:[%s1583 + $0x30] sm:$0xff]
        %v1591 = vld [vmem:[%s1583 + $0x38] sm:$0xff]
        %v1592 = vld [vmem:[%s1583 + $0x40] sm:$0xff]
        %v1593 = vld [vmem:[%s1583 + $0x48] sm:$0xff]
        %v1594 = vld [vmem:[%s1583 + $0x50] sm:$0xff]
        %v1595 = vld [vmem:[%s1583 + $0x58] sm:$0xff]
        %v1597 = vsel %vm316, %v1584, 0
        %v1600 = vsel %vm316, %v1585, 0
        %v1603 = vsel %vm316, %v1586, 0
        %v1606 = vsel %vm316, %v1587, 0
        %v1609 = vsel %vm316, %v1588, 0
        %v1612 = vsel %vm316, %v1589, 0
        %v1615 = vsel %vm316, %v1590, 0
        %v1618 = vsel %vm316, %v1591, 0
        %v1621 = vsel %vm316, %v1592, 0
        %v1624 = vsel %vm316, %v1593, 0
        %v1627 = vsel %vm316, %v1594, 0
        %v1630 = vsel %vm316, %v1595, 0
        %1632 = vmatprep.subr.mxu0 0.0
        %1633 = vmatpush1.msra.mxu0 0.0
        %1634 = vmatprep.subr.mxu0 0.0
        %1635 = vmatpush1.msra.mxu0 0.0
        %1636 = vmatprep.subr.mxu0 0.0
        %1637 = vmatpush1.msra.mxu0 0.0
        %1638 = vmatprep.subr.mxu0 0.0
        %1639 = vmatpush1.msra.mxu0 0.0
        %1640 = vmatprep.subr.mxu0 0.0
        %1641 = vmatpush1.msra.mxu0 0.0
        %1642 = vmatprep.subr.mxu0 0.0
        %1643 = vmatpush1.msra.mxu0 0.0
        %1644 = vmatprep.subr.mxu0 0.0
        %1645 = vmatpush1.msra.mxu0 0.0
        %1646 = vmatprep.subr.mxu0 0.0
        %1647 = vmatpush1.msra.mxu0 0.0
        %1648 = vmatprep.subr.mxu0 0.0
        %1649 = vmatpush1.msra.mxu0 0.0
        %1650 = vmatprep.subr.mxu0 0.0
        %1651 = vmatpush1.msra.mxu0 0.0
        %1652 = vmatprep.subr.mxu0 0.0
        %1653 = vmatpush1.msra.mxu0 0.0
        %1654 = vmatprep.subr.mxu0 0.0
        %1655 = vmatpush1.msra.mxu0 0.0
        %1656 = vmatprep.subr.mxu0 %v1582
        %1657 = vmatpush1.msra.mxu0 %v1581
        %1658 = vmatprep.subr.mxu0 %v1580
        %1659 = vmatpush1.msra.mxu0 %v1579
        %1660 = vmatprep.subr.mxu0 %v1578
        %1661 = vmatpush1.msra.mxu0 %v1577
        %1662 = vmatprep.subr.mxu0 %v1576
        %1663 = vmatpush1.msra.mxu0 %v1575
        %1664 = vmatprep.subr.mxu0 0.0
        %1665 = vmatpush2.msra.mxu0 0.0
        %1666 = vmatprep.subr.mxu0 0.0
        %1667 = vmatpush2.msra.mxu0 0.0
        %1668 = vmatprep.subr.mxu0 0.0
        %1669 = vmatpush2.msra.mxu0 0.0
        %1670 = vmatprep.subr.mxu0 0.0
        %1671 = vmatpush2.msra.mxu0 0.0
        %1672 = vmatprep.subr.mxu0 0.0
        %1673 = vmatpush2.msra.mxu0 0.0
        %1674 = vmatprep.subr.mxu0 0.0
        %1675 = vmatpush2.msra.mxu0 0.0
        %1676 = vmatprep.subr.mxu0 0.0
        %1677 = vmatpush2.msra.mxu0 0.0
        %1678 = vmatprep.subr.mxu0 0.0
        %1679 = vmatpush2.msra.mxu0 0.0
        %1680 = vmatprep.subr.mxu0 0.0
        %1681 = vmatpush2.msra.mxu0 0.0
        %1682 = vmatprep.subr.mxu0 0.0
        %1683 = vmatpush2.msra.mxu0 0.0
        %1684 = vmatprep.subr.mxu0 0.0
        %1685 = vmatpush2.msra.mxu0 0.0
        %1686 = vmatprep.subr.mxu0 0.0
        %1687 = vmatpush2.msra.mxu0 0.0
        %1688 = vmatprep.subr.mxu0 0.0
        %1689 = vmatpush2.msra.mxu0 0.0
        %1690 = vmatprep.subr.mxu0 0.0
        %1691 = vmatpush2.msra.mxu0 0.0
        %1692 = vmatprep.subr.mxu0 0.0
        %1693 = vmatpush2.msra.mxu0 0.0
        %1694 = vmatprep.subr.mxu0 0.0
        %1695 = vmatpush2.msra.mxu0 0.0
        %1696 = vmatprep.mubr.f32.mxu0 0.0
        %1697 = vmatmul.mubr.f32.gmra.mxu0 %v1597
        %v1698 = vpop.f32.mrf.mxu0
        %v1699 = vadd.f32 0.0, %v1698
        %v1700 = vpop.f32.mrf.mxu0
        %v1701 = vadd.f32 0.0, %v1700
        %1702 = vmatprep.mubr.f32.mxu0 0.0
        %1703 = vmatmul.mubr.f32.gmra.mxu0 %v1600
        %v1704 = vpop.f32.mrf.mxu0
        %v1705 = vadd.f32 0.0, %v1704
        %v1706 = vpop.f32.mrf.mxu0
        %v1707 = vadd.f32 0.0, %v1706
        %1708 = vmatprep.mubr.f32.mxu0 0.0
        %1709 = vmatmul.mubr.f32.gmra.mxu0 %v1603
        %v1710 = vpop.f32.mrf.mxu0
        %v1711 = vadd.f32 0.0, %v1710
        %v1712 = vpop.f32.mrf.mxu0
        %v1713 = vadd.f32 0.0, %v1712
        %1714 = vmatprep.mubr.f32.mxu0 0.0
        %1715 = vmatmul.mubr.f32.gmra.mxu0 %v1606
        %v1716 = vpop.f32.mrf.mxu0
        %v1717 = vadd.f32 0.0, %v1716
        %v1718 = vpop.f32.mrf.mxu0
        %v1719 = vadd.f32 0.0, %v1718
        %1720 = vmatprep.mubr.f32.mxu0 0.0
        %1721 = vmatmul.mubr.f32.gmra.mxu0 %v1609
        %v1722 = vpop.f32.mrf.mxu0
        %v1723 = vadd.f32 0.0, %v1722
        %v1724 = vpop.f32.mrf.mxu0
        %v1725 = vadd.f32 0.0, %v1724
        %1726 = vmatprep.mubr.f32.mxu0 0.0
        %1727 = vmatmul.mubr.f32.gmra.mxu0 %v1612
        %v1728 = vpop.f32.mrf.mxu0
        %v1729 = vadd.f32 0.0, %v1728
        %v1730 = vpop.f32.mrf.mxu0
        %v1731 = vadd.f32 0.0, %v1730
        %1732 = vmatprep.mubr.f32.mxu0 0.0
        %1733 = vmatmul.mubr.f32.gmra.mxu0 %v1615
        %v1734 = vpop.f32.mrf.mxu0
        %v1735 = vadd.f32 0.0, %v1734
        %v1736 = vpop.f32.mrf.mxu0
        %v1737 = vadd.f32 0.0, %v1736
        %1738 = vmatprep.mubr.f32.mxu0 0.0
        %1739 = vmatmul.mubr.f32.gmra.mxu0 %v1618
        %v1740 = vpop.f32.mrf.mxu0
        %v1741 = vadd.f32 0.0, %v1740
        %v1742 = vpop.f32.mrf.mxu0
        %v1743 = vadd.f32 0.0, %v1742
        %1744 = vmatprep.mubr.f32.mxu0 0.0
        %1745 = vmatmul.mubr.f32.gmra.mxu0 %v1621
        %v1746 = vpop.f32.mrf.mxu0
        %v1747 = vadd.f32 0.0, %v1746
        %v1748 = vpop.f32.mrf.mxu0
        %v1749 = vadd.f32 0.0, %v1748
        %1750 = vmatprep.mubr.f32.mxu0 0.0
        %1751 = vmatmul.mubr.f32.gmra.mxu0 %v1624
        %v1752 = vpop.f32.mrf.mxu0
        %v1753 = vadd.f32 0.0, %v1752
        %v1754 = vpop.f32.mrf.mxu0
        %v1755 = vadd.f32 0.0, %v1754
        %1756 = vmatprep.mubr.f32.mxu0 0.0
        %1757 = vmatmul.mubr.f32.gmra.mxu0 %v1627
        %v1758 = vpop.f32.mrf.mxu0
        %v1759 = vadd.f32 0.0, %v1758
        %v1760 = vpop.f32.mrf.mxu0
        %v1761 = vadd.f32 0.0, %v1760
        %1762 = vmatprep.mubr.f32.mxu0 0.0
        %1763 = vmatmul.mubr.f32.gmra.mxu0 %v1630
        %v1764 = vpop.f32.mrf.mxu0
        %v1765 = vadd.f32 0.0, %v1764
        %v1766 = vpop.f32.mrf.mxu0
        %v1767 = vadd.f32 0.0, %v1766
        %1768 = vdwg.mxu0
        %v1769 = vadd.f32 %v1539, %v1699
        %v1770 = vadd.f32 %v1540, %v1701
        %v1771 = vadd.f32 %v1541, %v1705
        %v1772 = vadd.f32 %v1542, %v1707
        %v1773 = vadd.f32 %v1543, %v1711
        %v1774 = vadd.f32 %v1544, %v1713
        %v1775 = vadd.f32 %v1545, %v1717
        %v1776 = vadd.f32 %v1546, %v1719
        %v1777 = vadd.f32 %v1547, %v1723
        %v1778 = vadd.f32 %v1548, %v1725
        %v1779 = vadd.f32 %v1549, %v1729
        %v1780 = vadd.f32 %v1550, %v1731
        %v1781 = vadd.f32 %v1551, %v1735
        %v1782 = vadd.f32 %v1552, %v1737
        %v1783 = vadd.f32 %v1553, %v1741
        %v1784 = vadd.f32 %v1554, %v1743
        %v1785 = vadd.f32 %v1555, %v1747
        %v1786 = vadd.f32 %v1556, %v1749
        %v1787 = vadd.f32 %v1557, %v1753
        %v1788 = vadd.f32 %v1558, %v1755
        %v1789 = vadd.f32 %v1559, %v1759
        %v1790 = vadd.f32 %v1560, %v1761
        %v1791 = vadd.f32 %v1561, %v1765
        %v1792 = vadd.f32 %v1562, %v1767
        %1793 = vrot.lane.b32.xlu0 0.0, 112
        %v1794 = vpop.permute.xlu0 %1793
        %vm1795 = vcmp.lt.s32.totalorder %v253, 112
        %s1796 = scalar_lea.vmem %s3, 448
        %v1797 = vld [vmem:[%s1796] sm:$0xff]
        %v1798 = vld [vmem:[%s1796 + $0x8] sm:$0xff]
        %v1799 = vld [vmem:[%s1796 + $0x10] sm:$0xff]
        %v1800 = vld [vmem:[%s1796 + $0x18] sm:$0xff]
        %v1801 = vld [vmem:[%s1796 + $0x20] sm:$0xff]
        %v1802 = vld [vmem:[%s1796 + $0x28] sm:$0xff]
        %v1803 = vld [vmem:[%s1796 + $0x30] sm:$0xff]
        %v1804 = vld [vmem:[%s1796 + $0x38] sm:$0xff]
        %v1805 = vmul.f32 %v1794, %v1797
        %v1806 = vmul.f32 %v1794, %v1798
        %v1807 = vmul.f32 %v1794, %v1799
        %v1808 = vmul.f32 %v1794, %v1800
        %v1809 = vmul.f32 %v1794, %v1801
        %v1810 = vmul.f32 %v1794, %v1802
        %v1811 = vmul.f32 %v1794, %v1803
        %v1812 = vmul.f32 %v1794, %v1804
        %s1813 = scalar_lea.vmem %s1, 672
        %v1814 = vld [vmem:[%s1813] sm:$0xff]
        %v1815 = vld [vmem:[%s1813 + $0x8] sm:$0xff]
        %v1816 = vld [vmem:[%s1813 + $0x10] sm:$0xff]
        %v1817 = vld [vmem:[%s1813 + $0x18] sm:$0xff]
        %v1818 = vld [vmem:[%s1813 + $0x20] sm:$0xff]
        %v1819 = vld [vmem:[%s1813 + $0x28] sm:$0xff]
        %v1820 = vld [vmem:[%s1813 + $0x30] sm:$0xff]
        %v1821 = vld [vmem:[%s1813 + $0x38] sm:$0xff]
        %v1822 = vld [vmem:[%s1813 + $0x40] sm:$0xff]
        %v1823 = vld [vmem:[%s1813 + $0x48] sm:$0xff]
        %v1824 = vld [vmem:[%s1813 + $0x50] sm:$0xff]
        %v1825 = vld [vmem:[%s1813 + $0x58] sm:$0xff]
        %v1827 = vsel %vm316, %v1814, 0
        %v1830 = vsel %vm316, %v1815, 0
        %v1833 = vsel %vm316, %v1816, 0
        %v1836 = vsel %vm316, %v1817, 0
        %v1839 = vsel %vm316, %v1818, 0
        %v1842 = vsel %vm316, %v1819, 0
        %v1845 = vsel %vm316, %v1820, 0
        %v1848 = vsel %vm316, %v1821, 0
        %v1851 = vsel %vm316, %v1822, 0
        %v1854 = vsel %vm316, %v1823, 0
        %v1857 = vsel %vm316, %v1824, 0
        %v1860 = vsel %vm316, %v1825, 0
        %1862 = vmatprep.subr.mxu0 0.0
        %1863 = vmatpush1.msra.mxu0 0.0
        %1864 = vmatprep.subr.mxu0 0.0
        %1865 = vmatpush1.msra.mxu0 0.0
        %1866 = vmatprep.subr.mxu0 0.0
        %1867 = vmatpush1.msra.mxu0 0.0
        %1868 = vmatprep.subr.mxu0 0.0
        %1869 = vmatpush1.msra.mxu0 0.0
        %1870 = vmatprep.subr.mxu0 0.0
        %1871 = vmatpush1.msra.mxu0 0.0
        %1872 = vmatprep.subr.mxu0 0.0
        %1873 = vmatpush1.msra.mxu0 0.0
        %1874 = vmatprep.subr.mxu0 0.0
        %1875 = vmatpush1.msra.mxu0 0.0
        %1876 = vmatprep.subr.mxu0 0.0
        %1877 = vmatpush1.msra.mxu0 0.0
        %1878 = vmatprep.subr.mxu0 0.0
        %1879 = vmatpush1.msra.mxu0 0.0
        %1880 = vmatprep.subr.mxu0 0.0
        %1881 = vmatpush1.msra.mxu0 0.0
        %1882 = vmatprep.subr.mxu0 0.0
        %1883 = vmatpush1.msra.mxu0 0.0
        %1884 = vmatprep.subr.mxu0 0.0
        %1885 = vmatpush1.msra.mxu0 0.0
        %1886 = vmatprep.subr.mxu0 %v1812
        %1887 = vmatpush1.msra.mxu0 %v1811
        %1888 = vmatprep.subr.mxu0 %v1810
        %1889 = vmatpush1.msra.mxu0 %v1809
        %1890 = vmatprep.subr.mxu0 %v1808
        %1891 = vmatpush1.msra.mxu0 %v1807
        %1892 = vmatprep.subr.mxu0 %v1806
        %1893 = vmatpush1.msra.mxu0 %v1805
        %1894 = vmatprep.subr.mxu0 0.0
        %1895 = vmatpush2.msra.mxu0 0.0
        %1896 = vmatprep.subr.mxu0 0.0
        %1897 = vmatpush2.msra.mxu0 0.0
        %1898 = vmatprep.subr.mxu0 0.0
        %1899 = vmatpush2.msra.mxu0 0.0
        %1900 = vmatprep.subr.mxu0 0.0
        %1901 = vmatpush2.msra.mxu0 0.0
        %1902 = vmatprep.subr.mxu0 0.0
        %1903 = vmatpush2.msra.mxu0 0.0
        %1904 = vmatprep.subr.mxu0 0.0
        %1905 = vmatpush2.msra.mxu0 0.0
        %1906 = vmatprep.subr.mxu0 0.0
        %1907 = vmatpush2.msra.mxu0 0.0
        %1908 = vmatprep.subr.mxu0 0.0
        %1909 = vmatpush2.msra.mxu0 0.0
        %1910 = vmatprep.subr.mxu0 0.0
        %1911 = vmatpush2.msra.mxu0 0.0
        %1912 = vmatprep.subr.mxu0 0.0
        %1913 = vmatpush2.msra.mxu0 0.0
        %1914 = vmatprep.subr.mxu0 0.0
        %1915 = vmatpush2.msra.mxu0 0.0
        %1916 = vmatprep.subr.mxu0 0.0
        %1917 = vmatpush2.msra.mxu0 0.0
        %1918 = vmatprep.subr.mxu0 0.0
        %1919 = vmatpush2.msra.mxu0 0.0
        %1920 = vmatprep.subr.mxu0 0.0
        %1921 = vmatpush2.msra.mxu0 0.0
        %1922 = vmatprep.subr.mxu0 0.0
        %1923 = vmatpush2.msra.mxu0 0.0
        %1924 = vmatprep.subr.mxu0 0.0
        %1925 = vmatpush2.msra.mxu0 0.0
        %1926 = vmatprep.mubr.f32.mxu0 0.0
        %1927 = vmatmul.mubr.f32.gmra.mxu0 %v1827
        %v1928 = vpop.f32.mrf.mxu0
        %v1929 = vadd.f32 0.0, %v1928
        %v1930 = vpop.f32.mrf.mxu0
        %v1931 = vadd.f32 0.0, %v1930
        %1932 = vmatprep.mubr.f32.mxu0 0.0
        %1933 = vmatmul.mubr.f32.gmra.mxu0 %v1830
        %v1934 = vpop.f32.mrf.mxu0
        %v1935 = vadd.f32 0.0, %v1934
        %v1936 = vpop.f32.mrf.mxu0
        %v1937 = vadd.f32 0.0, %v1936
        %1938 = vmatprep.mubr.f32.mxu0 0.0
        %1939 = vmatmul.mubr.f32.gmra.mxu0 %v1833
        %v1940 = vpop.f32.mrf.mxu0
        %v1941 = vadd.f32 0.0, %v1940
        %v1942 = vpop.f32.mrf.mxu0
        %v1943 = vadd.f32 0.0, %v1942
        %1944 = vmatprep.mubr.f32.mxu0 0.0
        %1945 = vmatmul.mubr.f32.gmra.mxu0 %v1836
        %v1946 = vpop.f32.mrf.mxu0
        %v1947 = vadd.f32 0.0, %v1946
        %v1948 = vpop.f32.mrf.mxu0
        %v1949 = vadd.f32 0.0, %v1948
        %1950 = vmatprep.mubr.f32.mxu0 0.0
        %1951 = vmatmul.mubr.f32.gmra.mxu0 %v1839
        %v1952 = vpop.f32.mrf.mxu0
        %v1953 = vadd.f32 0.0, %v1952
        %v1954 = vpop.f32.mrf.mxu0
        %v1955 = vadd.f32 0.0, %v1954
        %1956 = vmatprep.mubr.f32.mxu0 0.0
        %1957 = vmatmul.mubr.f32.gmra.mxu0 %v1842
        %v1958 = vpop.f32.mrf.mxu0
        %v1959 = vadd.f32 0.0, %v1958
        %v1960 = vpop.f32.mrf.mxu0
        %v1961 = vadd.f32 0.0, %v1960
        %1962 = vmatprep.mubr.f32.mxu0 0.0
        %1963 = vmatmul.mubr.f32.gmra.mxu0 %v1845
        %v1964 = vpop.f32.mrf.mxu0
        %v1965 = vadd.f32 0.0, %v1964
        %v1966 = vpop.f32.mrf.mxu0
        %v1967 = vadd.f32 0.0, %v1966
        %1968 = vmatprep.mubr.f32.mxu0 0.0
        %1969 = vmatmul.mubr.f32.gmra.mxu0 %v1848
        %v1970 = vpop.f32.mrf.mxu0
        %v1971 = vadd.f32 0.0, %v1970
        %v1972 = vpop.f32.mrf.mxu0
        %v1973 = vadd.f32 0.0, %v1972
        %1974 = vmatprep.mubr.f32.mxu0 0.0
        %1975 = vmatmul.mubr.f32.gmra.mxu0 %v1851
        %v1976 = vpop.f32.mrf.mxu0
        %v1977 = vadd.f32 0.0, %v1976
        %v1978 = vpop.f32.mrf.mxu0
        %v1979 = vadd.f32 0.0, %v1978
        %1980 = vmatprep.mubr.f32.mxu0 0.0
        %1981 = vmatmul.mubr.f32.gmra.mxu0 %v1854
        %v1982 = vpop.f32.mrf.mxu0
        %v1983 = vadd.f32 0.0, %v1982
        %v1984 = vpop.f32.mrf.mxu0
        %v1985 = vadd.f32 0.0, %v1984
        %1986 = vmatprep.mubr.f32.mxu0 0.0
        %1987 = vmatmul.mubr.f32.gmra.mxu0 %v1857
        %v1988 = vpop.f32.mrf.mxu0
        %v1989 = vadd.f32 0.0, %v1988
        %v1990 = vpop.f32.mrf.mxu0
        %v1991 = vadd.f32 0.0, %v1990
        %1992 = vmatprep.mubr.f32.mxu0 0.0
        %1993 = vmatmul.mubr.f32.gmra.mxu0 %v1860
        %v1994 = vpop.f32.mrf.mxu0
        %v1995 = vadd.f32 0.0, %v1994
        %v1996 = vpop.f32.mrf.mxu0
        %v1997 = vadd.f32 0.0, %v1996
        %1998 = vdwg.mxu0
        %v1999 = vadd.f32 %v1769, %v1929
        %v2000 = vadd.f32 %v1770, %v1931
        %v2001 = vadd.f32 %v1771, %v1935
        %v2002 = vadd.f32 %v1772, %v1937
        %v2003 = vadd.f32 %v1773, %v1941
        %v2004 = vadd.f32 %v1774, %v1943
        %v2005 = vadd.f32 %v1775, %v1947
        %v2006 = vadd.f32 %v1776, %v1949
        %v2007 = vadd.f32 %v1777, %v1953
        %v2008 = vadd.f32 %v1778, %v1955
        %v2009 = vadd.f32 %v1779, %v1959
        %v2010 = vadd.f32 %v1780, %v1961
        %v2011 = vadd.f32 %v1781, %v1965
        %v2012 = vadd.f32 %v1782, %v1967
        %v2013 = vadd.f32 %v1783, %v1971
        %v2014 = vadd.f32 %v1784, %v1973
        %v2015 = vadd.f32 %v1785, %v1977
        %v2016 = vadd.f32 %v1786, %v1979
        %v2017 = vadd.f32 %v1787, %v1983
        %v2018 = vadd.f32 %v1788, %v1985
        %v2019 = vadd.f32 %v1789, %v1989
        %v2020 = vadd.f32 %v1790, %v1991
        %v2021 = vadd.f32 %v1791, %v1995
        %v2022 = vadd.f32 %v1792, %v1997
        %2023 = vrot.lane.b32.xlu0 0.0, 111
        %v2024 = vpop.permute.xlu0 %2023
        %vm2025 = vcmp.lt.s32.totalorder %v253, 111
        %s2026 = scalar_lea.vmem %s3, 512
        %v2027 = vld [vmem:[%s2026] sm:$0xff]
        %v2028 = vld [vmem:[%s2026 + $0x8] sm:$0xff]
        %v2029 = vld [vmem:[%s2026 + $0x10] sm:$0xff]
        %v2030 = vld [vmem:[%s2026 + $0x18] sm:$0xff]
        %v2031 = vld [vmem:[%s2026 + $0x20] sm:$0xff]
        %v2032 = vld [vmem:[%s2026 + $0x28] sm:$0xff]
        %v2033 = vld [vmem:[%s2026 + $0x30] sm:$0xff]
        %v2034 = vld [vmem:[%s2026 + $0x38] sm:$0xff]
        %v2035 = vmul.f32 %v2024, %v2027
        %v2036 = vmul.f32 %v2024, %v2028
        %v2037 = vmul.f32 %v2024, %v2029
        %v2038 = vmul.f32 %v2024, %v2030
        %v2039 = vmul.f32 %v2024, %v2031
        %v2040 = vmul.f32 %v2024, %v2032
        %v2041 = vmul.f32 %v2024, %v2033
        %v2042 = vmul.f32 %v2024, %v2034
        %s2043 = scalar_lea.vmem %s1, 768
        %v2044 = vld [vmem:[%s2043] sm:$0xff]
        %v2045 = vld [vmem:[%s2043 + $0x8] sm:$0xff]
        %v2046 = vld [vmem:[%s2043 + $0x10] sm:$0xff]
        %v2047 = vld [vmem:[%s2043 + $0x18] sm:$0xff]
        %v2048 = vld [vmem:[%s2043 + $0x20] sm:$0xff]
        %v2049 = vld [vmem:[%s2043 + $0x28] sm:$0xff]
        %v2050 = vld [vmem:[%s2043 + $0x30] sm:$0xff]
        %v2051 = vld [vmem:[%s2043 + $0x38] sm:$0xff]
        %v2052 = vld [vmem:[%s2043 + $0x40] sm:$0xff]
        %v2053 = vld [vmem:[%s2043 + $0x48] sm:$0xff]
        %v2054 = vld [vmem:[%s2043 + $0x50] sm:$0xff]
        %v2055 = vld [vmem:[%s2043 + $0x58] sm:$0xff]
        %v2057 = vsel %vm316, %v2044, 0
        %v2060 = vsel %vm316, %v2045, 0
        %v2063 = vsel %vm316, %v2046, 0
        %v2066 = vsel %vm316, %v2047, 0
        %v2069 = vsel %vm316, %v2048, 0
        %v2072 = vsel %vm316, %v2049, 0
        %v2075 = vsel %vm316, %v2050, 0
        %v2078 = vsel %vm316, %v2051, 0
        %v2081 = vsel %vm316, %v2052, 0
        %v2084 = vsel %vm316, %v2053, 0
        %v2087 = vsel %vm316, %v2054, 0
        %v2090 = vsel %vm316, %v2055, 0
        %2092 = vmatprep.subr.mxu0 0.0
        %2093 = vmatpush1.msra.mxu0 0.0
        %2094 = vmatprep.subr.mxu0 0.0
        %2095 = vmatpush1.msra.mxu0 0.0
        %2096 = vmatprep.subr.mxu0 0.0
        %2097 = vmatpush1.msra.mxu0 0.0
        %2098 = vmatprep.subr.mxu0 0.0
        %2099 = vmatpush1.msra.mxu0 0.0
        %2100 = vmatprep.subr.mxu0 0.0
        %2101 = vmatpush1.msra.mxu0 0.0
        %2102 = vmatprep.subr.mxu0 0.0
        %2103 = vmatpush1.msra.mxu0 0.0
        %2104 = vmatprep.subr.mxu0 0.0
        %2105 = vmatpush1.msra.mxu0 0.0
        %2106 = vmatprep.subr.mxu0 0.0
        %2107 = vmatpush1.msra.mxu0 0.0
        %2108 = vmatprep.subr.mxu0 0.0
        %2109 = vmatpush1.msra.mxu0 0.0
        %2110 = vmatprep.subr.mxu0 0.0
        %2111 = vmatpush1.msra.mxu0 0.0
        %2112 = vmatprep.subr.mxu0 0.0
        %2113 = vmatpush1.msra.mxu0 0.0
        %2114 = vmatprep.subr.mxu0 0.0
        %2115 = vmatpush1.msra.mxu0 0.0
        %2116 = vmatprep.subr.mxu0 %v2042
        %2117 = vmatpush1.msra.mxu0 %v2041
        %2118 = vmatprep.subr.mxu0 %v2040
        %2119 = vmatpush1.msra.mxu0 %v2039
        %2120 = vmatprep.subr.mxu0 %v2038
        %2121 = vmatpush1.msra.mxu0 %v2037
        %2122 = vmatprep.subr.mxu0 %v2036
        %2123 = vmatpush1.msra.mxu0 %v2035
        %2124 = vmatprep.subr.mxu0 0.0
        %2125 = vmatpush2.msra.mxu0 0.0
        %2126 = vmatprep.subr.mxu0 0.0
        %2127 = vmatpush2.msra.mxu0 0.0
        %2128 = vmatprep.subr.mxu0 0.0
        %2129 = vmatpush2.msra.mxu0 0.0
        %2130 = vmatprep.subr.mxu0 0.0
        %2131 = vmatpush2.msra.mxu0 0.0
        %2132 = vmatprep.subr.mxu0 0.0
        %2133 = vmatpush2.msra.mxu0 0.0
        %2134 = vmatprep.subr.mxu0 0.0
        %2135 = vmatpush2.msra.mxu0 0.0
        %2136 = vmatprep.subr.mxu0 0.0
        %2137 = vmatpush2.msra.mxu0 0.0
        %2138 = vmatprep.subr.mxu0 0.0
        %2139 = vmatpush2.msra.mxu0 0.0
        %2140 = vmatprep.subr.mxu0 0.0
        %2141 = vmatpush2.msra.mxu0 0.0
        %2142 = vmatprep.subr.mxu0 0.0
        %2143 = vmatpush2.msra.mxu0 0.0
        %2144 = vmatprep.subr.mxu0 0.0
        %2145 = vmatpush2.msra.mxu0 0.0
        %2146 = vmatprep.subr.mxu0 0.0
        %2147 = vmatpush2.msra.mxu0 0.0
        %2148 = vmatprep.subr.mxu0 0.0
        %2149 = vmatpush2.msra.mxu0 0.0
        %2150 = vmatprep.subr.mxu0 0.0
        %2151 = vmatpush2.msra.mxu0 0.0
        %2152 = vmatprep.subr.mxu0 0.0
        %2153 = vmatpush2.msra.mxu0 0.0
        %2154 = vmatprep.subr.mxu0 0.0
        %2155 = vmatpush2.msra.mxu0 0.0
        %2156 = vmatprep.mubr.f32.mxu0 0.0
        %2157 = vmatmul.mubr.f32.gmra.mxu0 %v2057
        %v2158 = vpop.f32.mrf.mxu0
        %v2159 = vadd.f32 0.0, %v2158
        %v2160 = vpop.f32.mrf.mxu0
        %v2161 = vadd.f32 0.0, %v2160
        %2162 = vmatprep.mubr.f32.mxu0 0.0
        %2163 = vmatmul.mubr.f32.gmra.mxu0 %v2060
        %v2164 = vpop.f32.mrf.mxu0
        %v2165 = vadd.f32 0.0, %v2164
        %v2166 = vpop.f32.mrf.mxu0
        %v2167 = vadd.f32 0.0, %v2166
        %2168 = vmatprep.mubr.f32.mxu0 0.0
        %2169 = vmatmul.mubr.f32.gmra.mxu0 %v2063
        %v2170 = vpop.f32.mrf.mxu0
        %v2171 = vadd.f32 0.0, %v2170
        %v2172 = vpop.f32.mrf.mxu0
        %v2173 = vadd.f32 0.0, %v2172
        %2174 = vmatprep.mubr.f32.mxu0 0.0
        %2175 = vmatmul.mubr.f32.gmra.mxu0 %v2066
        %v2176 = vpop.f32.mrf.mxu0
        %v2177 = vadd.f32 0.0, %v2176
        %v2178 = vpop.f32.mrf.mxu0
        %v2179 = vadd.f32 0.0, %v2178
        %2180 = vmatprep.mubr.f32.mxu0 0.0
        %2181 = vmatmul.mubr.f32.gmra.mxu0 %v2069
        %v2182 = vpop.f32.mrf.mxu0
        %v2183 = vadd.f32 0.0, %v2182
        %v2184 = vpop.f32.mrf.mxu0
        %v2185 = vadd.f32 0.0, %v2184
        %2186 = vmatprep.mubr.f32.mxu0 0.0
        %2187 = vmatmul.mubr.f32.gmra.mxu0 %v2072
        %v2188 = vpop.f32.mrf.mxu0
        %v2189 = vadd.f32 0.0, %v2188
        %v2190 = vpop.f32.mrf.mxu0
        %v2191 = vadd.f32 0.0, %v2190
        %2192 = vmatprep.mubr.f32.mxu0 0.0
        %2193 = vmatmul.mubr.f32.gmra.mxu0 %v2075
        %v2194 = vpop.f32.mrf.mxu0
        %v2195 = vadd.f32 0.0, %v2194
        %v2196 = vpop.f32.mrf.mxu0
        %v2197 = vadd.f32 0.0, %v2196
        %2198 = vmatprep.mubr.f32.mxu0 0.0
        %2199 = vmatmul.mubr.f32.gmra.mxu0 %v2078
        %v2200 = vpop.f32.mrf.mxu0
        %v2201 = vadd.f32 0.0, %v2200
        %v2202 = vpop.f32.mrf.mxu0
        %v2203 = vadd.f32 0.0, %v2202
        %2204 = vmatprep.mubr.f32.mxu0 0.0
        %2205 = vmatmul.mubr.f32.gmra.mxu0 %v2081
        %v2206 = vpop.f32.mrf.mxu0
        %v2207 = vadd.f32 0.0, %v2206
        %v2208 = vpop.f32.mrf.mxu0
        %v2209 = vadd.f32 0.0, %v2208
        %2210 = vmatprep.mubr.f32.mxu0 0.0
        %2211 = vmatmul.mubr.f32.gmra.mxu0 %v2084
        %v2212 = vpop.f32.mrf.mxu0
        %v2213 = vadd.f32 0.0, %v2212
        %v2214 = vpop.f32.mrf.mxu0
        %v2215 = vadd.f32 0.0, %v2214
        %2216 = vmatprep.mubr.f32.mxu0 0.0
        %2217 = vmatmul.mubr.f32.gmra.mxu0 %v2087
        %v2218 = vpop.f32.mrf.mxu0
        %v2219 = vadd.f32 0.0, %v2218
        %v2220 = vpop.f32.mrf.mxu0
        %v2221 = vadd.f32 0.0, %v2220
        %2222 = vmatprep.mubr.f32.mxu0 0.0
        %2223 = vmatmul.mubr.f32.gmra.mxu0 %v2090
        %v2224 = vpop.f32.mrf.mxu0
        %v2225 = vadd.f32 0.0, %v2224
        %v2226 = vpop.f32.mrf.mxu0
        %v2227 = vadd.f32 0.0, %v2226
        %2228 = vdwg.mxu0
        %v2229 = vadd.f32 %v1999, %v2159
        %v2230 = vadd.f32 %v2000, %v2161
        %v2231 = vadd.f32 %v2001, %v2165
        %v2232 = vadd.f32 %v2002, %v2167
        %v2233 = vadd.f32 %v2003, %v2171
        %v2234 = vadd.f32 %v2004, %v2173
        %v2235 = vadd.f32 %v2005, %v2177
        %v2236 = vadd.f32 %v2006, %v2179
        %v2237 = vadd.f32 %v2007, %v2183
        %v2238 = vadd.f32 %v2008, %v2185
        %v2239 = vadd.f32 %v2009, %v2189
        %v2240 = vadd.f32 %v2010, %v2191
        %v2241 = vadd.f32 %v2011, %v2195
        %v2242 = vadd.f32 %v2012, %v2197
        %v2243 = vadd.f32 %v2013, %v2201
        %v2244 = vadd.f32 %v2014, %v2203
        %v2245 = vadd.f32 %v2015, %v2207
        %v2246 = vadd.f32 %v2016, %v2209
        %v2247 = vadd.f32 %v2017, %v2213
        %v2248 = vadd.f32 %v2018, %v2215
        %v2249 = vadd.f32 %v2019, %v2219
        %v2250 = vadd.f32 %v2020, %v2221
        %v2251 = vadd.f32 %v2021, %v2225
        %v2252 = vadd.f32 %v2022, %v2227
        %v2253 = vld [vmem:[%s249] sm:$0xff]
        %v2254 = vld [vmem:[%s249 + $0x8] sm:$0xff]
        %v2255 = vld [vmem:[%s249 + $0x10] sm:$0xff]
        %v2256 = vld [vmem:[%s249 + $0x18] sm:$0xff]
        %v2257 = vld [vmem:[%s249 + $0x20] sm:$0xff]
        %v2258 = vld [vmem:[%s249 + $0x28] sm:$0xff]
        %v2259 = vld [vmem:[%s249 + $0x30] sm:$0xff]
        %v2260 = vld [vmem:[%s249 + $0x38] sm:$0xff]
        %v2261 = vld [vmem:[%s249 + $0x40] sm:$0xff]
        %v2262 = vld [vmem:[%s249 + $0x48] sm:$0xff]
        %v2263 = vld [vmem:[%s249 + $0x50] sm:$0xff]
        %v2264 = vld [vmem:[%s249 + $0x58] sm:$0xff]
        %v2265 = vld [vmem:[%s249 + $0x60] sm:$0xff]
        %v2266 = vld [vmem:[%s249 + $0x68] sm:$0xff]
        %v2267 = vld [vmem:[%s249 + $0x70] sm:$0xff]
        %v2268 = vld [vmem:[%s249 + $0x78] sm:$0xff]
        %v2269 = vadd.f32 %v2253, %v2229
        %v2270 = vadd.f32 %v2254, %v2230
        %v2271 = vadd.f32 %v2255, %v2231
        %v2272 = vadd.f32 %v2256, %v2232
        %v2273 = vadd.f32 %v2257, %v2233
        %v2274 = vadd.f32 %v2258, %v2234
        %v2275 = vadd.f32 %v2259, %v2235
        %v2276 = vadd.f32 %v2260, %v2236
        %v2277 = vadd.f32 %v2261, %v2237
        %v2278 = vadd.f32 %v2262, %v2238
        %v2279 = vadd.f32 %v2263, %v2239
        %v2280 = vadd.f32 %v2264, %v2240
        %v2281 = vadd.f32 %v2265, %v2241
        %v2282 = vadd.f32 %v2266, %v2242
        %v2283 = vadd.f32 %v2267, %v2243
        %v2284 = vadd.f32 %v2268, %v2244
        %v2285 = vxor.u32 %v2269, 2147483648
        %v2286 = vxor.u32 %v2270, 2147483648
        %v2287 = vxor.u32 %v2271, 2147483648
        %v2288 = vxor.u32 %v2272, 2147483648
        %v2289 = vxor.u32 %v2273, 2147483648
        %v2290 = vxor.u32 %v2274, 2147483648
        %v2291 = vxor.u32 %v2275, 2147483648
        %v2292 = vxor.u32 %v2276, 2147483648
        %v2293 = vxor.u32 %v2277, 2147483648
        %v2294 = vxor.u32 %v2278, 2147483648
        %v2295 = vxor.u32 %v2279, 2147483648
        %v2296 = vxor.u32 %v2280, 2147483648
        %v2297 = vxor.u32 %v2281, 2147483648
        %v2298 = vxor.u32 %v2282, 2147483648
        %v2299 = vxor.u32 %v2283, 2147483648
        %v2300 = vxor.u32 %v2284, 2147483648
        %v2301 = vmul.f32 %v2285, 1.442695
        %v2302 = vpow.pop %v2301
        %v2303 = vmul.f32 %v2286, 1.442695
        %v2304 = vpow.pop %v2303
        %v2305 = vmul.f32 %v2287, 1.442695
        %v2306 = vpow.pop %v2305
        %v2307 = vmul.f32 %v2288, 1.442695
        %v2308 = vpow.pop %v2307
        %v2309 = vmul.f32 %v2289, 1.442695
        %v2310 = vpow.pop %v2309
        %v2311 = vmul.f32 %v2290, 1.442695
        %v2312 = vpow.pop %v2311
        %v2313 = vmul.f32 %v2291, 1.442695
        %v2314 = vpow.pop %v2313
        %v2315 = vmul.f32 %v2292, 1.442695
        %v2316 = vpow.pop %v2315
        %v2317 = vmul.f32 %v2293, 1.442695
        %v2318 = vpow.pop %v2317
        %v2319 = vmul.f32 %v2294, 1.442695
        %v2320 = vpow.pop %v2319
        %v2321 = vmul.f32 %v2295, 1.442695
        %v2322 = vpow.pop %v2321
        %v2323 = vmul.f32 %v2296, 1.442695
        %v2324 = vpow.pop %v2323
        %v2325 = vmul.f32 %v2297, 1.442695
        %v2326 = vpow.pop %v2325
        %v2327 = vmul.f32 %v2298, 1.442695
        %v2328 = vpow.pop %v2327
        %v2329 = vmul.f32 %v2299, 1.442695
        %v2330 = vpow.pop %v2329
        %v2331 = vmul.f32 %v2300, 1.442695
        %v2332 = vpow.pop %v2331
        %v2333 = vadd.f32 %v2302, 1.0
        %v2334 = vadd.f32 %v2304, 1.0
        %v2335 = vadd.f32 %v2306, 1.0
        %v2336 = vadd.f32 %v2308, 1.0
        %v2337 = vadd.f32 %v2310, 1.0
        %v2338 = vadd.f32 %v2312, 1.0
        %v2339 = vadd.f32 %v2314, 1.0
        %v2340 = vadd.f32 %v2316, 1.0
        %v2341 = vadd.f32 %v2318, 1.0
        %v2342 = vadd.f32 %v2320, 1.0
        %v2343 = vadd.f32 %v2322, 1.0
        %v2344 = vadd.f32 %v2324, 1.0
        %v2345 = vadd.f32 %v2326, 1.0
        %v2346 = vadd.f32 %v2328, 1.0
        %v2347 = vadd.f32 %v2330, 1.0
        %v2348 = vadd.f32 %v2332, 1.0
        %v2349 = vrcp.pop %v2333
        %v2350 = vmul.f32 1.0, %v2349
        %v2351 = vrcp.pop %v2334
        %v2352 = vmul.f32 1.0, %v2351
        %v2353 = vrcp.pop %v2335
        %v2354 = vmul.f32 1.0, %v2353
        %v2355 = vrcp.pop %v2336
        %v2356 = vmul.f32 1.0, %v2355
        %v2357 = vrcp.pop %v2337
        %v2358 = vmul.f32 1.0, %v2357
        %v2359 = vrcp.pop %v2338
        %v2360 = vmul.f32 1.0, %v2359
        %v2361 = vrcp.pop %v2339
        %v2362 = vmul.f32 1.0, %v2361
        %v2363 = vrcp.pop %v2340
        %v2364 = vmul.f32 1.0, %v2363
        %v2365 = vrcp.pop %v2341
        %v2366 = vmul.f32 1.0, %v2365
        %v2367 = vrcp.pop %v2342
        %v2368 = vmul.f32 1.0, %v2367
        %v2369 = vrcp.pop %v2343
        %v2370 = vmul.f32 1.0, %v2369
        %v2371 = vrcp.pop %v2344
        %v2372 = vmul.f32 1.0, %v2371
        %v2373 = vrcp.pop %v2345
        %v2374 = vmul.f32 1.0, %v2373
        %v2375 = vrcp.pop %v2346
        %v2376 = vmul.f32 1.0, %v2375
        %v2377 = vrcp.pop %v2347
        %v2378 = vmul.f32 1.0, %v2377
        %v2379 = vrcp.pop %v2348
        %v2380 = vmul.f32 1.0, %v2379
        %v2381 = vld [vmem:[%s249 + $0x80] sm:$0xff]
        %v2382 = vld [vmem:[%s249 + $0x88] sm:$0xff]
        %v2383 = vld [vmem:[%s249 + $0x90] sm:$0xff]
        %v2384 = vld [vmem:[%s249 + $0x98] sm:$0xff]
        %v2385 = vld [vmem:[%s249 + $0xa0] sm:$0xff]
        %v2386 = vld [vmem:[%s249 + $0xa8] sm:$0xff]
        %v2387 = vld [vmem:[%s249 + $0xb0] sm:$0xff]
        %v2388 = vld [vmem:[%s249 + $0xb8] sm:$0xff]
        %v2389 = vld [vmem:[%s2] sm:$0xff]
        %v2390 = vld [vmem:[%s2 + $0x8] sm:$0xff]
        %v2391 = vld [vmem:[%s2 + $0x10] sm:$0xff]
        %v2392 = vld [vmem:[%s2 + $0x18] sm:$0xff]
        %v2393 = vld [vmem:[%s2 + $0x20] sm:$0xff]
        %v2394 = vld [vmem:[%s2 + $0x28] sm:$0xff]
        %v2395 = vld [vmem:[%s2 + $0x30] sm:$0xff]
        %v2396 = vld [vmem:[%s2 + $0x38] sm:$0xff]
        %v2397 = vadd.f32 %v2245, %v2389
        %v2398 = vadd.f32 %v2246, %v2390
        %v2399 = vadd.f32 %v2247, %v2391
        %v2400 = vadd.f32 %v2248, %v2392
        %v2401 = vadd.f32 %v2249, %v2393
        %v2402 = vadd.f32 %v2250, %v2394
        %v2403 = vadd.f32 %v2251, %v2395
        %v2404 = vadd.f32 %v2252, %v2396
        %v2405 = vmul.f32 %v2366, %v2397
        %v2406 = vmul.f32 %v2368, %v2398
        %v2407 = vmul.f32 %v2370, %v2399
        %v2408 = vmul.f32 %v2372, %v2400
        %v2409 = vmul.f32 %v2374, %v2401
        %v2410 = vmul.f32 %v2376, %v2402
        %v2411 = vmul.f32 %v2378, %v2403
        %v2412 = vmul.f32 %v2380, %v2404
        %v2413 = vadd.f32 %v2381, %v2405
        %v2414 = vadd.f32 %v2382, %v2406
        %v2415 = vadd.f32 %v2383, %v2407
        %v2416 = vadd.f32 %v2384, %v2408
        %v2417 = vadd.f32 %v2385, %v2409
        %v2418 = vadd.f32 %v2386, %v2410
        %v2419 = vadd.f32 %v2387, %v2411
        %v2420 = vadd.f32 %v2388, %v2412
        %v2421 = vtanh.pop %v2413
        %v2422 = vtanh.pop %v2414
        %v2423 = vtanh.pop %v2415
        %v2424 = vtanh.pop %v2416
        %v2425 = vtanh.pop %v2417
        %v2426 = vtanh.pop %v2418
        %v2427 = vtanh.pop %v2419
        %v2428 = vtanh.pop %v2420
        %v2429 = vsub.f32 1.0, %v2350
        %v2430 = vsub.f32 1.0, %v2352
        %v2431 = vsub.f32 1.0, %v2354
        %v2432 = vsub.f32 1.0, %v2356
        %v2433 = vsub.f32 1.0, %v2358
        %v2434 = vsub.f32 1.0, %v2360
        %v2435 = vsub.f32 1.0, %v2362
        %v2436 = vsub.f32 1.0, %v2364
        %v2437 = vmul.f32 %v2429, %v2421
        %v2438 = vmul.f32 %v2430, %v2422
        %v2439 = vmul.f32 %v2431, %v2423
        %v2440 = vmul.f32 %v2432, %v2424
        %v2441 = vmul.f32 %v2433, %v2425
        %v2442 = vmul.f32 %v2434, %v2426
        %v2443 = vmul.f32 %v2435, %v2427
        %v2444 = vmul.f32 %v2436, %v2428
        %v2445 = vmul.f32 %v2350, 0.0
        %v2446 = vmul.f32 %v2352, 0.0
        %v2447 = vmul.f32 %v2354, 0.0
        %v2448 = vmul.f32 %v2356, 0.0
        %v2449 = vmul.f32 %v2358, 0.0
        %v2450 = vmul.f32 %v2360, 0.0
        %v2451 = vmul.f32 %v2362, 0.0
        %v2452 = vmul.f32 %v2364, 0.0
        %v2453 = vadd.f32 %v2437, %v2445
        %v2454 = vadd.f32 %v2438, %v2446
        %v2455 = vadd.f32 %v2439, %v2447
        %v2456 = vadd.f32 %v2440, %v2448
        %v2457 = vadd.f32 %v2441, %v2449
        %v2458 = vadd.f32 %v2442, %v2450
        %v2459 = vadd.f32 %v2443, %v2451
        %v2460 = vadd.f32 %v2444, %v2452
        %v2461 = vld [vmem:[%s4] sm:$0xff]
        %v2462 = vld [vmem:[%s5] sm:$0xff]
        %v2463 = vld [vmem:[%s5 + $0x8] sm:$0xff]
        %v2465 = vsel %vm316, %v2461, 0
        %2467 = vmatprep.subr.mxu0 0.0
        %2468 = vmatpush1.msra.mxu0 0.0
        %2469 = vmatprep.subr.mxu0 0.0
        %2470 = vmatpush1.msra.mxu0 0.0
        %2471 = vmatprep.subr.mxu0 0.0
        %2472 = vmatpush1.msra.mxu0 0.0
        %2473 = vmatprep.subr.mxu0 0.0
        %2474 = vmatpush1.msra.mxu0 0.0
        %2475 = vmatprep.subr.mxu0 0.0
        %2476 = vmatpush1.msra.mxu0 0.0
        %2477 = vmatprep.subr.mxu0 0.0
        %2478 = vmatpush1.msra.mxu0 0.0
        %2479 = vmatprep.subr.mxu0 0.0
        %2480 = vmatpush1.msra.mxu0 0.0
        %2481 = vmatprep.subr.mxu0 0.0
        %2482 = vmatpush1.msra.mxu0 0.0
        %2483 = vmatprep.subr.mxu0 0.0
        %2484 = vmatpush1.msra.mxu0 0.0
        %2485 = vmatprep.subr.mxu0 0.0
        %2486 = vmatpush1.msra.mxu0 0.0
        %2487 = vmatprep.subr.mxu0 0.0
        %2488 = vmatpush1.msra.mxu0 0.0
        %2489 = vmatprep.subr.mxu0 0.0
        %2490 = vmatpush1.msra.mxu0 0.0
        %2491 = vmatprep.subr.mxu0 %v2460
        %2492 = vmatpush1.msra.mxu0 %v2459
        %2493 = vmatprep.subr.mxu0 %v2458
        %2494 = vmatpush1.msra.mxu0 %v2457
        %2495 = vmatprep.subr.mxu0 %v2456
        %2496 = vmatpush1.msra.mxu0 %v2455
        %2497 = vmatprep.subr.mxu0 %v2454
        %2498 = vmatpush1.msra.mxu0 %v2453
        %2499 = vmatprep.subr.mxu0 0.0
        %2500 = vmatpush2.msra.mxu0 0.0
        %2501 = vmatprep.subr.mxu0 0.0
        %2502 = vmatpush2.msra.mxu0 0.0
        %2503 = vmatprep.subr.mxu0 0.0
        %2504 = vmatpush2.msra.mxu0 0.0
        %2505 = vmatprep.subr.mxu0 0.0
        %2506 = vmatpush2.msra.mxu0 0.0
        %2507 = vmatprep.subr.mxu0 0.0
        %2508 = vmatpush2.msra.mxu0 0.0
        %2509 = vmatprep.subr.mxu0 0.0
        %2510 = vmatpush2.msra.mxu0 0.0
        %2511 = vmatprep.subr.mxu0 0.0
        %2512 = vmatpush2.msra.mxu0 0.0
        %2513 = vmatprep.subr.mxu0 0.0
        %2514 = vmatpush2.msra.mxu0 0.0
        %2515 = vmatprep.subr.mxu0 0.0
        %2516 = vmatpush2.msra.mxu0 0.0
        %2517 = vmatprep.subr.mxu0 0.0
        %2518 = vmatpush2.msra.mxu0 0.0
        %2519 = vmatprep.subr.mxu0 0.0
        %2520 = vmatpush2.msra.mxu0 0.0
        %2521 = vmatprep.subr.mxu0 0.0
        %2522 = vmatpush2.msra.mxu0 0.0
        %2523 = vmatprep.subr.mxu0 0.0
        %2524 = vmatpush2.msra.mxu0 0.0
        %2525 = vmatprep.subr.mxu0 0.0
        %2526 = vmatpush2.msra.mxu0 0.0
        %2527 = vmatprep.subr.mxu0 0.0
        %2528 = vmatpush2.msra.mxu0 0.0
        %2529 = vmatprep.subr.mxu0 0.0
        %2530 = vmatpush2.msra.mxu0 0.0
        %2531 = vmatprep.mubr.f32.mxu0 0.0
        %2532 = vmatmul.mubr.f32.gmra.mxu0 %v2465
        %v2533 = vpop.f32.mrf.mxu0
        %v2534 = vadd.f32 %v2462, %v2533
        %v2535 = vpop.f32.mrf.mxu0
        %v2536 = vadd.f32 %v2463, %v2535
        %2537 = vdwg.mxu0
        %2538 = vst [vmem:[%s244] sm:$0xff] %v2534
        %2539 = vst [vmem:[%s244 + $0x8] sm:$0xff] %v2536
        %2540 = vrot.lane.b32.xlu0 %v2453, 17
        %v2541 = vpop.permute.xlu0 %2540
        %2542 = vrot.lane.b32.xlu0 %v2455, 17
        %v2543 = vpop.permute.xlu0 %2542
        %2544 = vrot.lane.b32.xlu0 %v2457, 17
        %v2545 = vpop.permute.xlu0 %2544
        %2546 = vrot.lane.b32.xlu0 %v2459, 17
        %v2547 = vpop.permute.xlu0 %2546
        %2548 = vrot.lane.b32.xlu0 %v2454, 17
        %v2549 = vpop.permute.xlu0 %2548
        %2550 = vrot.lane.b32.xlu0 %v2456, 17
        %v2551 = vpop.permute.xlu0 %2550
        %2552 = vrot.lane.b32.xlu0 %v2458, 17
        %v2553 = vpop.permute.xlu0 %2552
        %2554 = vrot.lane.b32.xlu0 %v2460, 17
        %v2555 = vpop.permute.xlu0 %2554
        %v2556 = vsel %vm254, %v2541, %v2549
        %v2557 = vsel %vm254, %v2543, %v2551
        %v2558 = vsel %vm254, %v2545, %v2553
        %v2559 = vsel %vm254, %v2547, %v2555
        %v2560 = vsel %vm254, %v2549, %v2541
        %v2561 = vsel %vm254, %v2551, %v2543
        %v2562 = vsel %vm254, %v2553, %v2545
        %v2563 = vsel %vm254, %v2555, %v2547
        %v2564 = vld [vmem:[%s3] sm:$0xff]
        %v2565 = vld [vmem:[%s3 + $0x8] sm:$0xff]
        %v2566 = vld [vmem:[%s3 + $0x10] sm:$0xff]
        %v2567 = vld [vmem:[%s3 + $0x18] sm:$0xff]
        %v2568 = vld [vmem:[%s3 + $0x20] sm:$0xff]
        %v2569 = vld [vmem:[%s3 + $0x28] sm:$0xff]
        %v2570 = vld [vmem:[%s3 + $0x30] sm:$0xff]
        %v2571 = vld [vmem:[%s3 + $0x38] sm:$0xff]
        %v2572 = vmul.f32 %v2560, %v2564
        %v2573 = vmul.f32 %v2556, %v2565
        %v2574 = vmul.f32 %v2561, %v2566
        %v2575 = vmul.f32 %v2557, %v2567
        %v2576 = vmul.f32 %v2562, %v2568
        %v2577 = vmul.f32 %v2558, %v2569
        %v2578 = vmul.f32 %v2563, %v2570
        %v2579 = vmul.f32 %v2559, %v2571
        %v2580 = vld [vmem:[%s1] sm:$0xff]
        %v2581 = vld [vmem:[%s1 + $0x8] sm:$0xff]
        %v2582 = vld [vmem:[%s1 + $0x10] sm:$0xff]
        %v2583 = vld [vmem:[%s1 + $0x18] sm:$0xff]
        %v2584 = vld [vmem:[%s1 + $0x20] sm:$0xff]
        %v2585 = vld [vmem:[%s1 + $0x28] sm:$0xff]
        %v2586 = vld [vmem:[%s1 + $0x30] sm:$0xff]
        %v2587 = vld [vmem:[%s1 + $0x38] sm:$0xff]
        %v2588 = vld [vmem:[%s1 + $0x40] sm:$0xff]
        %v2589 = vld [vmem:[%s1 + $0x48] sm:$0xff]
        %v2590 = vld [vmem:[%s1 + $0x50] sm:$0xff]
        %v2591 = vld [vmem:[%s1 + $0x58] sm:$0xff]
        %2592 = vrot.lane.b32.xlu0 %v2453, 16
        %v2593 = vpop.permute.xlu0 %2592
        %2594 = vrot.lane.b32.xlu0 %v2455, 16
        %v2595 = vpop.permute.xlu0 %2594
        %2596 = vrot.lane.b32.xlu0 %v2457, 16
        %v2597 = vpop.permute.xlu0 %2596
        %2598 = vrot.lane.b32.xlu0 %v2459, 16
        %v2599 = vpop.permute.xlu0 %2598
        %2600 = vrot.lane.b32.xlu0 %v2454, 16
        %v2601 = vpop.permute.xlu0 %2600
        %2602 = vrot.lane.b32.xlu0 %v2456, 16
        %v2603 = vpop.permute.xlu0 %2602
        %2604 = vrot.lane.b32.xlu0 %v2458, 16
        %v2605 = vpop.permute.xlu0 %2604
        %2606 = vrot.lane.b32.xlu0 %v2460, 16
        %v2607 = vpop.permute.xlu0 %2606
        %v2608 = vsel %vm285, %v2593, %v2601
        %v2609 = vsel %vm285, %v2595, %v2603
        %v2610 = vsel %vm285, %v2597, %v2605
        %v2611 = vsel %vm285, %v2599, %v2607
        %v2612 = vsel %vm285, %v2601, %v2593
        %v2613 = vsel %vm285, %v2603, %v2595
        %v2614 = vsel %vm285, %v2605, %v2597
        %v2615 = vsel %vm285, %v2607, %v2599
        %v2616 = vld [vmem:[%s286] sm:$0xff]
        %v2617 = vld [vmem:[%s286 + $0x8] sm:$0xff]
        %v2618 = vld [vmem:[%s286 + $0x10] sm:$0xff]
        %v2619 = vld [vmem:[%s286 + $0x18] sm:$0xff]
        %v2620 = vld [vmem:[%s286 + $0x20] sm:$0xff]
        %v2621 = vld [vmem:[%s286 + $0x28] sm:$0xff]
        %v2622 = vld [vmem:[%s286 + $0x30] sm:$0xff]
        %v2623 = vld [vmem:[%s286 + $0x38] sm:$0xff]
        %v2624 = vmul.f32 %v2612, %v2616
        %v2625 = vmul.f32 %v2608, %v2617
        %v2626 = vmul.f32 %v2613, %v2618
        %v2627 = vmul.f32 %v2609, %v2619
        %v2628 = vmul.f32 %v2614, %v2620
        %v2629 = vmul.f32 %v2610, %v2621
        %v2630 = vmul.f32 %v2615, %v2622
        %v2631 = vmul.f32 %v2611, %v2623
        %v2632 = vld [vmem:[%s303] sm:$0xff]
        %v2633 = vld [vmem:[%s303 + $0x8] sm:$0xff]
        %v2634 = vld [vmem:[%s303 + $0x10] sm:$0xff]
        %v2635 = vld [vmem:[%s303 + $0x18] sm:$0xff]
        %v2636 = vld [vmem:[%s303 + $0x20] sm:$0xff]
        %v2637 = vld [vmem:[%s303 + $0x28] sm:$0xff]
        %v2638 = vld [vmem:[%s303 + $0x30] sm:$0xff]
        %v2639 = vld [vmem:[%s303 + $0x38] sm:$0xff]
        %v2640 = vld [vmem:[%s303 + $0x40] sm:$0xff]
        %v2641 = vld [vmem:[%s303 + $0x48] sm:$0xff]
        %v2642 = vld [vmem:[%s303 + $0x50] sm:$0xff]
        %v2643 = vld [vmem:[%s303 + $0x58] sm:$0xff]
        %v2645 = vsel %vm316, %v2632, 0
        %v2648 = vsel %vm316, %v2633, 0
        %v2651 = vsel %vm316, %v2634, 0
        %v2654 = vsel %vm316, %v2635, 0
        %v2657 = vsel %vm316, %v2636, 0
        %v2660 = vsel %vm316, %v2637, 0
        %v2663 = vsel %vm316, %v2638, 0
        %v2666 = vsel %vm316, %v2639, 0
        %v2669 = vsel %vm316, %v2640, 0
        %v2672 = vsel %vm316, %v2641, 0
        %v2675 = vsel %vm316, %v2642, 0
        %v2678 = vsel %vm316, %v2643, 0
        %2680 = vmatprep.subr.mxu0 0.0
        %2681 = vmatpush1.msra.mxu0 0.0
        %2682 = vmatprep.subr.mxu0 0.0
        %2683 = vmatpush1.msra.mxu0 0.0
        %2684 = vmatprep.subr.mxu0 0.0
        %2685 = vmatpush1.msra.mxu0 0.0
        %2686 = vmatprep.subr.mxu0 0.0
        %2687 = vmatpush1.msra.mxu0 0.0
        %2688 = vmatprep.subr.mxu0 0.0
        %2689 = vmatpush1.msra.mxu0 0.0
        %2690 = vmatprep.subr.mxu0 0.0
        %2691 = vmatpush1.msra.mxu0 0.0
        %2692 = vmatprep.subr.mxu0 0.0
        %2693 = vmatpush1.msra.mxu0 0.0
        %2694 = vmatprep.subr.mxu0 0.0
        %2695 = vmatpush1.msra.mxu0 0.0
        %2696 = vmatprep.subr.mxu0 0.0
        %2697 = vmatpush1.msra.mxu0 0.0
        %2698 = vmatprep.subr.mxu0 0.0
        %2699 = vmatpush1.msra.mxu0 0.0
        %2700 = vmatprep.subr.mxu0 0.0
        %2701 = vmatpush1.msra.mxu0 0.0
        %2702 = vmatprep.subr.mxu0 0.0
        %2703 = vmatpush1.msra.mxu0 0.0
        %2704 = vmatprep.subr.mxu0 %v2631
        %2705 = vmatpush1.msra.mxu0 %v2630
        %2706 = vmatprep.subr.mxu0 %v2629
        %2707 = vmatpush1.msra.mxu0 %v2628
        %2708 = vmatprep.subr.mxu0 %v2627
        %2709 = vmatpush1.msra.mxu0 %v2626
        %2710 = vmatprep.subr.mxu0 %v2625
        %2711 = vmatpush1.msra.mxu0 %v2624
        %2712 = vmatprep.subr.mxu0 0.0
        %2713 = vmatpush2.msra.mxu0 0.0
        %2714 = vmatprep.subr.mxu0 0.0
        %2715 = vmatpush2.msra.mxu0 0.0
        %2716 = vmatprep.subr.mxu0 0.0
        %2717 = vmatpush2.msra.mxu0 0.0
        %2718 = vmatprep.subr.mxu0 0.0
        %2719 = vmatpush2.msra.mxu0 0.0
        %2720 = vmatprep.subr.mxu0 0.0
        %2721 = vmatpush2.msra.mxu0 0.0
        %2722 = vmatprep.subr.mxu0 0.0
        %2723 = vmatpush2.msra.mxu0 0.0
        %2724 = vmatprep.subr.mxu0 0.0
        %2725 = vmatpush2.msra.mxu0 0.0
        %2726 = vmatprep.subr.mxu0 0.0
        %2727 = vmatpush2.msra.mxu0 0.0
        %2728 = vmatprep.subr.mxu0 0.0
        %2729 = vmatpush2.msra.mxu0 0.0
        %2730 = vmatprep.subr.mxu0 0.0
        %2731 = vmatpush2.msra.mxu0 0.0
        %2732 = vmatprep.subr.mxu0 0.0
        %2733 = vmatpush2.msra.mxu0 0.0
        %2734 = vmatprep.subr.mxu0 0.0
        %2735 = vmatpush2.msra.mxu0 0.0
        %2736 = vmatprep.subr.mxu0 0.0
        %2737 = vmatpush2.msra.mxu0 0.0
        %2738 = vmatprep.subr.mxu0 0.0
        %2739 = vmatpush2.msra.mxu0 0.0
        %2740 = vmatprep.subr.mxu0 0.0
        %2741 = vmatpush2.msra.mxu0 0.0
        %2742 = vmatprep.subr.mxu0 0.0
        %2743 = vmatpush2.msra.mxu0 0.0
        %2744 = vmatprep.mubr.f32.mxu0 0.0
        %2745 = vmatmul.mubr.f32.gmra.mxu0 %v2645
        %v2746 = vpop.f32.mrf.mxu0
        %v2747 = vadd.f32 0.0, %v2746
        %v2748 = vpop.f32.mrf.mxu0
        %v2749 = vadd.f32 0.0, %v2748
        %2750 = vmatprep.mubr.f32.mxu0 0.0
        %2751 = vmatmul.mubr.f32.gmra.mxu0 %v2648
        %v2752 = vpop.f32.mrf.mxu0
        %v2753 = vadd.f32 0.0, %v2752
        %v2754 = vpop.f32.mrf.mxu0
        %v2755 = vadd.f32 0.0, %v2754
        %2756 = vmatprep.mubr.f32.mxu0 0.0
        %2757 = vmatmul.mubr.f32.gmra.mxu0 %v2651
        %v2758 = vpop.f32.mrf.mxu0
        %v2759 = vadd.f32 0.0, %v2758
        %v2760 = vpop.f32.mrf.mxu0
        %v2761 = vadd.f32 0.0, %v2760
        %2762 = vmatprep.mubr.f32.mxu0 0.0
        %2763 = vmatmul.mubr.f32.gmra.mxu0 %v2654
        %v2764 = vpop.f32.mrf.mxu0
        %v2765 = vadd.f32 0.0, %v2764
        %v2766 = vpop.f32.mrf.mxu0
        %v2767 = vadd.f32 0.0, %v2766
        %2768 = vmatprep.mubr.f32.mxu0 0.0
        %2769 = vmatmul.mubr.f32.gmra.mxu0 %v2657
        %v2770 = vpop.f32.mrf.mxu0
        %v2771 = vadd.f32 0.0, %v2770
        %v2772 = vpop.f32.mrf.mxu0
        %v2773 = vadd.f32 0.0, %v2772
        %2774 = vmatprep.mubr.f32.mxu0 0.0
        %2775 = vmatmul.mubr.f32.gmra.mxu0 %v2660
        %v2776 = vpop.f32.mrf.mxu0
        %v2777 = vadd.f32 0.0, %v2776
        %v2778 = vpop.f32.mrf.mxu0
        %v2779 = vadd.f32 0.0, %v2778
        %2780 = vmatprep.mubr.f32.mxu0 0.0
        %2781 = vmatmul.mubr.f32.gmra.mxu0 %v2663
        %v2782 = vpop.f32.mrf.mxu0
        %v2783 = vadd.f32 0.0, %v2782
        %v2784 = vpop.f32.mrf.mxu0
        %v2785 = vadd.f32 0.0, %v2784
        %2786 = vmatprep.mubr.f32.mxu0 0.0
        %2787 = vmatmul.mubr.f32.gmra.mxu0 %v2666
        %v2788 = vpop.f32.mrf.mxu0
        %v2789 = vadd.f32 0.0, %v2788
        %v2790 = vpop.f32.mrf.mxu0
        %v2791 = vadd.f32 0.0, %v2790
        %2792 = vmatprep.mubr.f32.mxu0 0.0
        %2793 = vmatmul.mubr.f32.gmra.mxu0 %v2669
        %v2794 = vpop.f32.mrf.mxu0
        %v2795 = vadd.f32 0.0, %v2794
        %v2796 = vpop.f32.mrf.mxu0
        %v2797 = vadd.f32 0.0, %v2796
        %2798 = vmatprep.mubr.f32.mxu0 0.0
        %2799 = vmatmul.mubr.f32.gmra.mxu0 %v2672
        %v2800 = vpop.f32.mrf.mxu0
        %v2801 = vadd.f32 0.0, %v2800
        %v2802 = vpop.f32.mrf.mxu0
        %v2803 = vadd.f32 0.0, %v2802
        %2804 = vmatprep.mubr.f32.mxu0 0.0
        %2805 = vmatmul.mubr.f32.gmra.mxu0 %v2675
        %v2806 = vpop.f32.mrf.mxu0
        %v2807 = vadd.f32 0.0, %v2806
        %v2808 = vpop.f32.mrf.mxu0
        %v2809 = vadd.f32 0.0, %v2808
        %2810 = vmatprep.mubr.f32.mxu0 0.0
        %2811 = vmatmul.mubr.f32.gmra.mxu0 %v2678
        %v2812 = vpop.f32.mrf.mxu0
        %v2813 = vadd.f32 0.0, %v2812
        %v2814 = vpop.f32.mrf.mxu0
        %v2815 = vadd.f32 0.0, %v2814
        %2816 = vdwg.mxu0
        %v2818 = vsel %vm316, %v2580, 0
        %v2821 = vsel %vm316, %v2581, 0
        %v2824 = vsel %vm316, %v2582, 0
        %v2827 = vsel %vm316, %v2583, 0
        %v2830 = vsel %vm316, %v2584, 0
        %v2833 = vsel %vm316, %v2585, 0
        %v2836 = vsel %vm316, %v2586, 0
        %v2839 = vsel %vm316, %v2587, 0
        %v2842 = vsel %vm316, %v2588, 0
        %v2845 = vsel %vm316, %v2589, 0
        %v2848 = vsel %vm316, %v2590, 0
        %v2851 = vsel %vm316, %v2591, 0
        %2853 = vmatprep.subr.mxu0 0.0
        %2854 = vmatpush1.msra.mxu0 0.0
        %2855 = vmatprep.subr.mxu0 0.0
        %2856 = vmatpush1.msra.mxu0 0.0
        %2857 = vmatprep.subr.mxu0 0.0
        %2858 = vmatpush1.msra.mxu0 0.0
        %2859 = vmatprep.subr.mxu0 0.0
        %2860 = vmatpush1.msra.mxu0 0.0
        %2861 = vmatprep.subr.mxu0 0.0
        %2862 = vmatpush1.msra.mxu0 0.0
        %2863 = vmatprep.subr.mxu0 0.0
        %2864 = vmatpush1.msra.mxu0 0.0
        %2865 = vmatprep.subr.mxu0 0.0
        %2866 = vmatpush1.msra.mxu0 0.0
        %2867 = vmatprep.subr.mxu0 0.0
        %2868 = vmatpush1.msra.mxu0 0.0
        %2869 = vmatprep.subr.mxu0 0.0
        %2870 = vmatpush1.msra.mxu0 0.0
        %2871 = vmatprep.subr.mxu0 0.0
        %2872 = vmatpush1.msra.mxu0 0.0
        %2873 = vmatprep.subr.mxu0 0.0
        %2874 = vmatpush1.msra.mxu0 0.0
        %2875 = vmatprep.subr.mxu0 0.0
        %2876 = vmatpush1.msra.mxu0 0.0
        %2877 = vmatprep.subr.mxu0 %v2579
        %2878 = vmatpush1.msra.mxu0 %v2578
        %2879 = vmatprep.subr.mxu0 %v2577
        %2880 = vmatpush1.msra.mxu0 %v2576
        %2881 = vmatprep.subr.mxu0 %v2575
        %2882 = vmatpush1.msra.mxu0 %v2574
        %2883 = vmatprep.subr.mxu0 %v2573
        %2884 = vmatpush1.msra.mxu0 %v2572
        %2885 = vmatprep.subr.mxu0 0.0
        %2886 = vmatpush2.msra.mxu0 0.0
        %2887 = vmatprep.subr.mxu0 0.0
        %2888 = vmatpush2.msra.mxu0 0.0
        %2889 = vmatprep.subr.mxu0 0.0
        %2890 = vmatpush2.msra.mxu0 0.0
        %2891 = vmatprep.subr.mxu0 0.0
        %2892 = vmatpush2.msra.mxu0 0.0
        %2893 = vmatprep.subr.mxu0 0.0
        %2894 = vmatpush2.msra.mxu0 0.0
        %2895 = vmatprep.subr.mxu0 0.0
        %2896 = vmatpush2.msra.mxu0 0.0
        %2897 = vmatprep.subr.mxu0 0.0
        %2898 = vmatpush2.msra.mxu0 0.0
        %2899 = vmatprep.subr.mxu0 0.0
        %2900 = vmatpush2.msra.mxu0 0.0
        %2901 = vmatprep.subr.mxu0 0.0
        %2902 = vmatpush2.msra.mxu0 0.0
        %2903 = vmatprep.subr.mxu0 0.0
        %2904 = vmatpush2.msra.mxu0 0.0
        %2905 = vmatprep.subr.mxu0 0.0
        %2906 = vmatpush2.msra.mxu0 0.0
        %2907 = vmatprep.subr.mxu0 0.0
        %2908 = vmatpush2.msra.mxu0 0.0
        %2909 = vmatprep.subr.mxu0 0.0
        %2910 = vmatpush2.msra.mxu0 0.0
        %2911 = vmatprep.subr.mxu0 0.0
        %2912 = vmatpush2.msra.mxu0 0.0
        %2913 = vmatprep.subr.mxu0 0.0
        %2914 = vmatpush2.msra.mxu0 0.0
        %2915 = vmatprep.subr.mxu0 0.0
        %2916 = vmatpush2.msra.mxu0 0.0
        %2917 = vmatprep.mubr.f32.mxu0 0.0
        %2918 = vmatmul.mubr.f32.gmra.mxu0 %v2818
        %v2919 = vpop.f32.mrf.mxu0
        %v2920 = vadd.f32 %v2747, %v2919
        %v2921 = vpop.f32.mrf.mxu0
        %v2922 = vadd.f32 %v2749, %v2921
        %2923 = vmatprep.mubr.f32.mxu0 0.0
        %2924 = vmatmul.mubr.f32.gmra.mxu0 %v2821
        %v2925 = vpop.f32.mrf.mxu0
        %v2926 = vadd.f32 %v2753, %v2925
        %v2927 = vpop.f32.mrf.mxu0
        %v2928 = vadd.f32 %v2755, %v2927
        %2929 = vmatprep.mubr.f32.mxu0 0.0
        %2930 = vmatmul.mubr.f32.gmra.mxu0 %v2824
        %v2931 = vpop.f32.mrf.mxu0
        %v2932 = vadd.f32 %v2759, %v2931
        %v2933 = vpop.f32.mrf.mxu0
        %v2934 = vadd.f32 %v2761, %v2933
        %2935 = vmatprep.mubr.f32.mxu0 0.0
        %2936 = vmatmul.mubr.f32.gmra.mxu0 %v2827
        %v2937 = vpop.f32.mrf.mxu0
        %v2938 = vadd.f32 %v2765, %v2937
        %v2939 = vpop.f32.mrf.mxu0
        %v2940 = vadd.f32 %v2767, %v2939
        %2941 = vmatprep.mubr.f32.mxu0 0.0
        %2942 = vmatmul.mubr.f32.gmra.mxu0 %v2830
        %v2943 = vpop.f32.mrf.mxu0
        %v2944 = vadd.f32 %v2771, %v2943
        %v2945 = vpop.f32.mrf.mxu0
        %v2946 = vadd.f32 %v2773, %v2945
        %2947 = vmatprep.mubr.f32.mxu0 0.0
        %2948 = vmatmul.mubr.f32.gmra.mxu0 %v2833
        %v2949 = vpop.f32.mrf.mxu0
        %v2950 = vadd.f32 %v2777, %v2949
        %v2951 = vpop.f32.mrf.mxu0
        %v2952 = vadd.f32 %v2779, %v2951
        %2953 = vmatprep.mubr.f32.mxu0 0.0
        %2954 = vmatmul.mubr.f32.gmra.mxu0 %v2836
        %v2955 = vpop.f32.mrf.mxu0
        %v2956 = vadd.f32 %v2783, %v2955
        %v2957 = vpop.f32.mrf.mxu0
        %v2958 = vadd.f32 %v2785, %v2957
        %2959 = vmatprep.mubr.f32.mxu0 0.0
        %2960 = vmatmul.mubr.f32.gmra.mxu0 %v2839
        %v2961 = vpop.f32.mrf.mxu0
        %v2962 = vadd.f32 %v2789, %v2961
        %v2963 = vpop.f32.mrf.mxu0
        %v2964 = vadd.f32 %v2791, %v2963
        %2965 = vmatprep.mubr.f32.mxu0 0.0
        %2966 = vmatmul.mubr.f32.gmra.mxu0 %v2842
        %v2967 = vpop.f32.mrf.mxu0
        %v2968 = vadd.f32 %v2795, %v2967
        %v2969 = vpop.f32.mrf.mxu0
        %v2970 = vadd.f32 %v2797, %v2969
        %2971 = vmatprep.mubr.f32.mxu0 0.0
        %2972 = vmatmul.mubr.f32.gmra.mxu0 %v2845
        %v2973 = vpop.f32.mrf.mxu0
        %v2974 = vadd.f32 %v2801, %v2973
        %v2975 = vpop.f32.mrf.mxu0
        %v2976 = vadd.f32 %v2803, %v2975
        %2977 = vmatprep.mubr.f32.mxu0 0.0
        %2978 = vmatmul.mubr.f32.gmra.mxu0 %v2848
        %v2979 = vpop.f32.mrf.mxu0
        %v2980 = vadd.f32 %v2807, %v2979
        %v2981 = vpop.f32.mrf.mxu0
        %v2982 = vadd.f32 %v2809, %v2981
        %2983 = vmatprep.mubr.f32.mxu0 0.0
        %2984 = vmatmul.mubr.f32.gmra.mxu0 %v2851
        %v2985 = vpop.f32.mrf.mxu0
        %v2986 = vadd.f32 %v2813, %v2985
        %v2987 = vpop.f32.mrf.mxu0
        %v2988 = vadd.f32 %v2815, %v2987
        %2989 = vdwg.mxu0
        %2990 = vrot.lane.b32.xlu0 %v2453, 15
        %v2991 = vpop.permute.xlu0 %2990
        %2992 = vrot.lane.b32.xlu0 %v2455, 15
        %v2993 = vpop.permute.xlu0 %2992
        %2994 = vrot.lane.b32.xlu0 %v2457, 15
        %v2995 = vpop.permute.xlu0 %2994
        %2996 = vrot.lane.b32.xlu0 %v2459, 15
        %v2997 = vpop.permute.xlu0 %2996
        %2998 = vrot.lane.b32.xlu0 %v2454, 15
        %v2999 = vpop.permute.xlu0 %2998
        %3000 = vrot.lane.b32.xlu0 %v2456, 15
        %v3001 = vpop.permute.xlu0 %3000
        %3002 = vrot.lane.b32.xlu0 %v2458, 15
        %v3003 = vpop.permute.xlu0 %3002
        %3004 = vrot.lane.b32.xlu0 %v2460, 15
        %v3005 = vpop.permute.xlu0 %3004
        %v3006 = vsel %vm665, %v2991, %v2999
        %v3007 = vsel %vm665, %v2993, %v3001
        %v3008 = vsel %vm665, %v2995, %v3003
        %v3009 = vsel %vm665, %v2997, %v3005
        %v3010 = vsel %vm665, %v2999, %v2991
        %v3011 = vsel %vm665, %v3001, %v2993
        %v3012 = vsel %vm665, %v3003, %v2995
        %v3013 = vsel %vm665, %v3005, %v2997
        %v3014 = vld [vmem:[%s666] sm:$0xff]
        %v3015 = vld [vmem:[%s666 + $0x8] sm:$0xff]
        %v3016 = vld [vmem:[%s666 + $0x10] sm:$0xff]
        %v3017 = vld [vmem:[%s666 + $0x18] sm:$0xff]
        %v3018 = vld [vmem:[%s666 + $0x20] sm:$0xff]
        %v3019 = vld [vmem:[%s666 + $0x28] sm:$0xff]
        %v3020 = vld [vmem:[%s666 + $0x30] sm:$0xff]
        %v3021 = vld [vmem:[%s666 + $0x38] sm:$0xff]
        %v3022 = vmul.f32 %v3010, %v3014
        %v3023 = vmul.f32 %v3006, %v3015
        %v3024 = vmul.f32 %v3011, %v3016
        %v3025 = vmul.f32 %v3007, %v3017
        %v3026 = vmul.f32 %v3012, %v3018
        %v3027 = vmul.f32 %v3008, %v3019
        %v3028 = vmul.f32 %v3013, %v3020
        %v3029 = vmul.f32 %v3009, %v3021
        %v3030 = vld [vmem:[%s683] sm:$0xff]
        %v3031 = vld [vmem:[%s683 + $0x8] sm:$0xff]
        %v3032 = vld [vmem:[%s683 + $0x10] sm:$0xff]
        %v3033 = vld [vmem:[%s683 + $0x18] sm:$0xff]
        %v3034 = vld [vmem:[%s683 + $0x20] sm:$0xff]
        %v3035 = vld [vmem:[%s683 + $0x28] sm:$0xff]
        %v3036 = vld [vmem:[%s683 + $0x30] sm:$0xff]
        %v3037 = vld [vmem:[%s683 + $0x38] sm:$0xff]
        %v3038 = vld [vmem:[%s683 + $0x40] sm:$0xff]
        %v3039 = vld [vmem:[%s683 + $0x48] sm:$0xff]
        %v3040 = vld [vmem:[%s683 + $0x50] sm:$0xff]
        %v3041 = vld [vmem:[%s683 + $0x58] sm:$0xff]
        %v3043 = vsel %vm316, %v3030, 0
        %v3046 = vsel %vm316, %v3031, 0
        %v3049 = vsel %vm316, %v3032, 0
        %v3052 = vsel %vm316, %v3033, 0
        %v3055 = vsel %vm316, %v3034, 0
        %v3058 = vsel %vm316, %v3035, 0
        %v3061 = vsel %vm316, %v3036, 0
        %v3064 = vsel %vm316, %v3037, 0
        %v3067 = vsel %vm316, %v3038, 0
        %v3070 = vsel %vm316, %v3039, 0
        %v3073 = vsel %vm316, %v3040, 0
        %v3076 = vsel %vm316, %v3041, 0
        %3078 = vmatprep.subr.mxu0 0.0
        %3079 = vmatpush1.msra.mxu0 0.0
        %3080 = vmatprep.subr.mxu0 0.0
        %3081 = vmatpush1.msra.mxu0 0.0
        %3082 = vmatprep.subr.mxu0 0.0
        %3083 = vmatpush1.msra.mxu0 0.0
        %3084 = vmatprep.subr.mxu0 0.0
        %3085 = vmatpush1.msra.mxu0 0.0
        %3086 = vmatprep.subr.mxu0 0.0
        %3087 = vmatpush1.msra.mxu0 0.0
        %3088 = vmatprep.subr.mxu0 0.0
        %3089 = vmatpush1.msra.mxu0 0.0
        %3090 = vmatprep.subr.mxu0 0.0
        %3091 = vmatpush1.msra.mxu0 0.0
        %3092 = vmatprep.subr.mxu0 0.0
        %3093 = vmatpush1.msra.mxu0 0.0
        %3094 = vmatprep.subr.mxu0 0.0
        %3095 = vmatpush1.msra.mxu0 0.0
        %3096 = vmatprep.subr.mxu0 0.0
        %3097 = vmatpush1.msra.mxu0 0.0
        %3098 = vmatprep.subr.mxu0 0.0
        %3099 = vmatpush1.msra.mxu0 0.0
        %3100 = vmatprep.subr.mxu0 0.0
        %3101 = vmatpush1.msra.mxu0 0.0
        %3102 = vmatprep.subr.mxu0 %v3029
        %3103 = vmatpush1.msra.mxu0 %v3028
        %3104 = vmatprep.subr.mxu0 %v3027
        %3105 = vmatpush1.msra.mxu0 %v3026
        %3106 = vmatprep.subr.mxu0 %v3025
        %3107 = vmatpush1.msra.mxu0 %v3024
        %3108 = vmatprep.subr.mxu0 %v3023
        %3109 = vmatpush1.msra.mxu0 %v3022
        %3110 = vmatprep.subr.mxu0 0.0
        %3111 = vmatpush2.msra.mxu0 0.0
        %3112 = vmatprep.subr.mxu0 0.0
        %3113 = vmatpush2.msra.mxu0 0.0
        %3114 = vmatprep.subr.mxu0 0.0
        %3115 = vmatpush2.msra.mxu0 0.0
        %3116 = vmatprep.subr.mxu0 0.0
        %3117 = vmatpush2.msra.mxu0 0.0
        %3118 = vmatprep.subr.mxu0 0.0
        %3119 = vmatpush2.msra.mxu0 0.0
        %3120 = vmatprep.subr.mxu0 0.0
        %3121 = vmatpush2.msra.mxu0 0.0
        %3122 = vmatprep.subr.mxu0 0.0
        %3123 = vmatpush2.msra.mxu0 0.0
        %3124 = vmatprep.subr.mxu0 0.0
        %3125 = vmatpush2.msra.mxu0 0.0
        %3126 = vmatprep.subr.mxu0 0.0
        %3127 = vmatpush2.msra.mxu0 0.0
        %3128 = vmatprep.subr.mxu0 0.0
        %3129 = vmatpush2.msra.mxu0 0.0
        %3130 = vmatprep.subr.mxu0 0.0
        %3131 = vmatpush2.msra.mxu0 0.0
        %3132 = vmatprep.subr.mxu0 0.0
        %3133 = vmatpush2.msra.mxu0 0.0
        %3134 = vmatprep.subr.mxu0 0.0
        %3135 = vmatpush2.msra.mxu0 0.0
        %3136 = vmatprep.subr.mxu0 0.0
        %3137 = vmatpush2.msra.mxu0 0.0
        %3138 = vmatprep.subr.mxu0 0.0
        %3139 = vmatpush2.msra.mxu0 0.0
        %3140 = vmatprep.subr.mxu0 0.0
        %3141 = vmatpush2.msra.mxu0 0.0
        %3142 = vmatprep.mubr.f32.mxu0 0.0
        %3143 = vmatmul.mubr.f32.gmra.mxu0 %v3043
        %v3144 = vpop.f32.mrf.mxu0
        %v3145 = vadd.f32 0.0, %v3144
        %v3146 = vpop.f32.mrf.mxu0
        %v3147 = vadd.f32 0.0, %v3146
        %3148 = vmatprep.mubr.f32.mxu0 0.0
        %3149 = vmatmul.mubr.f32.gmra.mxu0 %v3046
        %v3150 = vpop.f32.mrf.mxu0
        %v3151 = vadd.f32 0.0, %v3150
        %v3152 = vpop.f32.mrf.mxu0
        %v3153 = vadd.f32 0.0, %v3152
        %3154 = vmatprep.mubr.f32.mxu0 0.0
        %3155 = vmatmul.mubr.f32.gmra.mxu0 %v3049
        %v3156 = vpop.f32.mrf.mxu0
        %v3157 = vadd.f32 0.0, %v3156
        %v3158 = vpop.f32.mrf.mxu0
        %v3159 = vadd.f32 0.0, %v3158
        %3160 = vmatprep.mubr.f32.mxu0 0.0
        %3161 = vmatmul.mubr.f32.gmra.mxu0 %v3052
        %v3162 = vpop.f32.mrf.mxu0
        %v3163 = vadd.f32 0.0, %v3162
        %v3164 = vpop.f32.mrf.mxu0
        %v3165 = vadd.f32 0.0, %v3164
        %3166 = vmatprep.mubr.f32.mxu0 0.0
        %3167 = vmatmul.mubr.f32.gmra.mxu0 %v3055
        %v3168 = vpop.f32.mrf.mxu0
        %v3169 = vadd.f32 0.0, %v3168
        %v3170 = vpop.f32.mrf.mxu0
        %v3171 = vadd.f32 0.0, %v3170
        %3172 = vmatprep.mubr.f32.mxu0 0.0
        %3173 = vmatmul.mubr.f32.gmra.mxu0 %v3058
        %v3174 = vpop.f32.mrf.mxu0
        %v3175 = vadd.f32 0.0, %v3174
        %v3176 = vpop.f32.mrf.mxu0
        %v3177 = vadd.f32 0.0, %v3176
        %3178 = vmatprep.mubr.f32.mxu0 0.0
        %3179 = vmatmul.mubr.f32.gmra.mxu0 %v3061
        %v3180 = vpop.f32.mrf.mxu0
        %v3181 = vadd.f32 0.0, %v3180
        %v3182 = vpop.f32.mrf.mxu0
        %v3183 = vadd.f32 0.0, %v3182
        %3184 = vmatprep.mubr.f32.mxu0 0.0
        %3185 = vmatmul.mubr.f32.gmra.mxu0 %v3064
        %v3186 = vpop.f32.mrf.mxu0
        %v3187 = vadd.f32 0.0, %v3186
        %v3188 = vpop.f32.mrf.mxu0
        %v3189 = vadd.f32 0.0, %v3188
        %3190 = vmatprep.mubr.f32.mxu0 0.0
        %3191 = vmatmul.mubr.f32.gmra.mxu0 %v3067
        %v3192 = vpop.f32.mrf.mxu0
        %v3193 = vadd.f32 0.0, %v3192
        %v3194 = vpop.f32.mrf.mxu0
        %v3195 = vadd.f32 0.0, %v3194
        %3196 = vmatprep.mubr.f32.mxu0 0.0
        %3197 = vmatmul.mubr.f32.gmra.mxu0 %v3070
        %v3198 = vpop.f32.mrf.mxu0
        %v3199 = vadd.f32 0.0, %v3198
        %v3200 = vpop.f32.mrf.mxu0
        %v3201 = vadd.f32 0.0, %v3200
        %3202 = vmatprep.mubr.f32.mxu0 0.0
        %3203 = vmatmul.mubr.f32.gmra.mxu0 %v3073
        %v3204 = vpop.f32.mrf.mxu0
        %v3205 = vadd.f32 0.0, %v3204
        %v3206 = vpop.f32.mrf.mxu0
        %v3207 = vadd.f32 0.0, %v3206
        %3208 = vmatprep.mubr.f32.mxu0 0.0
        %3209 = vmatmul.mubr.f32.gmra.mxu0 %v3076
        %v3210 = vpop.f32.mrf.mxu0
        %v3211 = vadd.f32 0.0, %v3210
        %v3212 = vpop.f32.mrf.mxu0
        %v3213 = vadd.f32 0.0, %v3212
        %3214 = vdwg.mxu0
        %v3215 = vadd.f32 %v2920, %v3145
        %v3216 = vadd.f32 %v2922, %v3147
        %v3217 = vadd.f32 %v2926, %v3151
        %v3218 = vadd.f32 %v2928, %v3153
        %v3219 = vadd.f32 %v2932, %v3157
        %v3220 = vadd.f32 %v2934, %v3159
        %v3221 = vadd.f32 %v2938, %v3163
        %v3222 = vadd.f32 %v2940, %v3165
        %v3223 = vadd.f32 %v2944, %v3169
        %v3224 = vadd.f32 %v2946, %v3171
        %v3225 = vadd.f32 %v2950, %v3175
        %v3226 = vadd.f32 %v2952, %v3177
        %v3227 = vadd.f32 %v2956, %v3181
        %v3228 = vadd.f32 %v2958, %v3183
        %v3229 = vadd.f32 %v2962, %v3187
        %v3230 = vadd.f32 %v2964, %v3189
        %v3231 = vadd.f32 %v2968, %v3193
        %v3232 = vadd.f32 %v2970, %v3195
        %v3233 = vadd.f32 %v2974, %v3199
        %v3234 = vadd.f32 %v2976, %v3201
        %v3235 = vadd.f32 %v2980, %v3205
        %v3236 = vadd.f32 %v2982, %v3207
        %v3237 = vadd.f32 %v2986, %v3211
        %v3238 = vadd.f32 %v2988, %v3213
        %3239 = vrot.lane.b32.xlu0 %v2453, 1
        %v3240 = vpop.permute.xlu0 %3239
        %3241 = vrot.lane.b32.xlu0 %v2455, 1
        %v3242 = vpop.permute.xlu0 %3241
        %3243 = vrot.lane.b32.xlu0 %v2457, 1
        %v3244 = vpop.permute.xlu0 %3243
        %3245 = vrot.lane.b32.xlu0 %v2459, 1
        %v3246 = vpop.permute.xlu0 %3245
        %3247 = vrot.lane.b32.xlu0 %v2454, 1
        %v3248 = vpop.permute.xlu0 %3247
        %3249 = vrot.lane.b32.xlu0 %v2456, 1
        %v3250 = vpop.permute.xlu0 %3249
        %3251 = vrot.lane.b32.xlu0 %v2458, 1
        %v3252 = vpop.permute.xlu0 %3251
        %3253 = vrot.lane.b32.xlu0 %v2460, 1
        %v3254 = vpop.permute.xlu0 %3253
        %v3255 = vsel %vm895, %v3240, %v3248
        %v3256 = vsel %vm895, %v3242, %v3250
        %v3257 = vsel %vm895, %v3244, %v3252
        %v3258 = vsel %vm895, %v3246, %v3254
        %v3259 = vsel %vm895, %v3248, %v3240
        %v3260 = vsel %vm895, %v3250, %v3242
        %v3261 = vsel %vm895, %v3252, %v3244
        %v3262 = vsel %vm895, %v3254, %v3246
        %v3263 = vld [vmem:[%s896] sm:$0xff]
        %v3264 = vld [vmem:[%s896 + $0x8] sm:$0xff]
        %v3265 = vld [vmem:[%s896 + $0x10] sm:$0xff]
        %v3266 = vld [vmem:[%s896 + $0x18] sm:$0xff]
        %v3267 = vld [vmem:[%s896 + $0x20] sm:$0xff]
        %v3268 = vld [vmem:[%s896 + $0x28] sm:$0xff]
        %v3269 = vld [vmem:[%s896 + $0x30] sm:$0xff]
        %v3270 = vld [vmem:[%s896 + $0x38] sm:$0xff]
        %v3271 = vmul.f32 %v3259, %v3263
        %v3272 = vmul.f32 %v3255, %v3264
        %v3273 = vmul.f32 %v3260, %v3265
        %v3274 = vmul.f32 %v3256, %v3266
        %v3275 = vmul.f32 %v3261, %v3267
        %v3276 = vmul.f32 %v3257, %v3268
        %v3277 = vmul.f32 %v3262, %v3269
        %v3278 = vmul.f32 %v3258, %v3270
        %v3279 = vld [vmem:[%s913] sm:$0xff]
        %v3280 = vld [vmem:[%s913 + $0x8] sm:$0xff]
        %v3281 = vld [vmem:[%s913 + $0x10] sm:$0xff]
        %v3282 = vld [vmem:[%s913 + $0x18] sm:$0xff]
        %v3283 = vld [vmem:[%s913 + $0x20] sm:$0xff]
        %v3284 = vld [vmem:[%s913 + $0x28] sm:$0xff]
        %v3285 = vld [vmem:[%s913 + $0x30] sm:$0xff]
        %v3286 = vld [vmem:[%s913 + $0x38] sm:$0xff]
        %v3287 = vld [vmem:[%s913 + $0x40] sm:$0xff]
        %v3288 = vld [vmem:[%s913 + $0x48] sm:$0xff]
        %v3289 = vld [vmem:[%s913 + $0x50] sm:$0xff]
        %v3290 = vld [vmem:[%s913 + $0x58] sm:$0xff]
        %v3292 = vsel %vm316, %v3279, 0
        %v3295 = vsel %vm316, %v3280, 0
        %v3298 = vsel %vm316, %v3281, 0
        %v3301 = vsel %vm316, %v3282, 0
        %v3304 = vsel %vm316, %v3283, 0
        %v3307 = vsel %vm316, %v3284, 0
        %v3310 = vsel %vm316, %v3285, 0
        %v3313 = vsel %vm316, %v3286, 0
        %v3316 = vsel %vm316, %v3287, 0
        %v3319 = vsel %vm316, %v3288, 0
        %v3322 = vsel %vm316, %v3289, 0
        %v3325 = vsel %vm316, %v3290, 0
        %3327 = vmatprep.subr.mxu0 0.0
        %3328 = vmatpush1.msra.mxu0 0.0
        %3329 = vmatprep.subr.mxu0 0.0
        %3330 = vmatpush1.msra.mxu0 0.0
        %3331 = vmatprep.subr.mxu0 0.0
        %3332 = vmatpush1.msra.mxu0 0.0
        %3333 = vmatprep.subr.mxu0 0.0
        %3334 = vmatpush1.msra.mxu0 0.0
        %3335 = vmatprep.subr.mxu0 0.0
        %3336 = vmatpush1.msra.mxu0 0.0
        %3337 = vmatprep.subr.mxu0 0.0
        %3338 = vmatpush1.msra.mxu0 0.0
        %3339 = vmatprep.subr.mxu0 0.0
        %3340 = vmatpush1.msra.mxu0 0.0
        %3341 = vmatprep.subr.mxu0 0.0
        %3342 = vmatpush1.msra.mxu0 0.0
        %3343 = vmatprep.subr.mxu0 0.0
        %3344 = vmatpush1.msra.mxu0 0.0
        %3345 = vmatprep.subr.mxu0 0.0
        %3346 = vmatpush1.msra.mxu0 0.0
        %3347 = vmatprep.subr.mxu0 0.0
        %3348 = vmatpush1.msra.mxu0 0.0
        %3349 = vmatprep.subr.mxu0 0.0
        %3350 = vmatpush1.msra.mxu0 0.0
        %3351 = vmatprep.subr.mxu0 %v3278
        %3352 = vmatpush1.msra.mxu0 %v3277
        %3353 = vmatprep.subr.mxu0 %v3276
        %3354 = vmatpush1.msra.mxu0 %v3275
        %3355 = vmatprep.subr.mxu0 %v3274
        %3356 = vmatpush1.msra.mxu0 %v3273
        %3357 = vmatprep.subr.mxu0 %v3272
        %3358 = vmatpush1.msra.mxu0 %v3271
        %3359 = vmatprep.subr.mxu0 0.0
        %3360 = vmatpush2.msra.mxu0 0.0
        %3361 = vmatprep.subr.mxu0 0.0
        %3362 = vmatpush2.msra.mxu0 0.0
        %3363 = vmatprep.subr.mxu0 0.0
        %3364 = vmatpush2.msra.mxu0 0.0
        %3365 = vmatprep.subr.mxu0 0.0
        %3366 = vmatpush2.msra.mxu0 0.0
        %3367 = vmatprep.subr.mxu0 0.0
        %3368 = vmatpush2.msra.mxu0 0.0
        %3369 = vmatprep.subr.mxu0 0.0
        %3370 = vmatpush2.msra.mxu0 0.0
        %3371 = vmatprep.subr.mxu0 0.0
        %3372 = vmatpush2.msra.mxu0 0.0
        %3373 = vmatprep.subr.mxu0 0.0
        %3374 = vmatpush2.msra.mxu0 0.0
        %3375 = vmatprep.subr.mxu0 0.0
        %3376 = vmatpush2.msra.mxu0 0.0
        %3377 = vmatprep.subr.mxu0 0.0
        %3378 = vmatpush2.msra.mxu0 0.0
        %3379 = vmatprep.subr.mxu0 0.0
        %3380 = vmatpush2.msra.mxu0 0.0
        %3381 = vmatprep.subr.mxu0 0.0
        %3382 = vmatpush2.msra.mxu0 0.0
        %3383 = vmatprep.subr.mxu0 0.0
        %3384 = vmatpush2.msra.mxu0 0.0
        %3385 = vmatprep.subr.mxu0 0.0
        %3386 = vmatpush2.msra.mxu0 0.0
        %3387 = vmatprep.subr.mxu0 0.0
        %3388 = vmatpush2.msra.mxu0 0.0
        %3389 = vmatprep.subr.mxu0 0.0
        %3390 = vmatpush2.msra.mxu0 0.0
        %3391 = vmatprep.mubr.f32.mxu0 0.0
        %3392 = vmatmul.mubr.f32.gmra.mxu0 %v3292
        %v3393 = vpop.f32.mrf.mxu0
        %v3394 = vadd.f32 0.0, %v3393
        %v3395 = vpop.f32.mrf.mxu0
        %v3396 = vadd.f32 0.0, %v3395
        %3397 = vmatprep.mubr.f32.mxu0 0.0
        %3398 = vmatmul.mubr.f32.gmra.mxu0 %v3295
        %v3399 = vpop.f32.mrf.mxu0
        %v3400 = vadd.f32 0.0, %v3399
        %v3401 = vpop.f32.mrf.mxu0
        %v3402 = vadd.f32 0.0, %v3401
        %3403 = vmatprep.mubr.f32.mxu0 0.0
        %3404 = vmatmul.mubr.f32.gmra.mxu0 %v3298
        %v3405 = vpop.f32.mrf.mxu0
        %v3406 = vadd.f32 0.0, %v3405
        %v3407 = vpop.f32.mrf.mxu0
        %v3408 = vadd.f32 0.0, %v3407
        %3409 = vmatprep.mubr.f32.mxu0 0.0
        %3410 = vmatmul.mubr.f32.gmra.mxu0 %v3301
        %v3411 = vpop.f32.mrf.mxu0
        %v3412 = vadd.f32 0.0, %v3411
        %v3413 = vpop.f32.mrf.mxu0
        %v3414 = vadd.f32 0.0, %v3413
        %3415 = vmatprep.mubr.f32.mxu0 0.0
        %3416 = vmatmul.mubr.f32.gmra.mxu0 %v3304
        %v3417 = vpop.f32.mrf.mxu0
        %v3418 = vadd.f32 0.0, %v3417
        %v3419 = vpop.f32.mrf.mxu0
        %v3420 = vadd.f32 0.0, %v3419
        %3421 = vmatprep.mubr.f32.mxu0 0.0
        %3422 = vmatmul.mubr.f32.gmra.mxu0 %v3307
        %v3423 = vpop.f32.mrf.mxu0
        %v3424 = vadd.f32 0.0, %v3423
        %v3425 = vpop.f32.mrf.mxu0
        %v3426 = vadd.f32 0.0, %v3425
        %3427 = vmatprep.mubr.f32.mxu0 0.0
        %3428 = vmatmul.mubr.f32.gmra.mxu0 %v3310
        %v3429 = vpop.f32.mrf.mxu0
        %v3430 = vadd.f32 0.0, %v3429
        %v3431 = vpop.f32.mrf.mxu0
        %v3432 = vadd.f32 0.0, %v3431
        %3433 = vmatprep.mubr.f32.mxu0 0.0
        %3434 = vmatmul.mubr.f32.gmra.mxu0 %v3313
        %v3435 = vpop.f32.mrf.mxu0
        %v3436 = vadd.f32 0.0, %v3435
        %v3437 = vpop.f32.mrf.mxu0
        %v3438 = vadd.f32 0.0, %v3437
        %3439 = vmatprep.mubr.f32.mxu0 0.0
        %3440 = vmatmul.mubr.f32.gmra.mxu0 %v3316
        %v3441 = vpop.f32.mrf.mxu0
        %v3442 = vadd.f32 0.0, %v3441
        %v3443 = vpop.f32.mrf.mxu0
        %v3444 = vadd.f32 0.0, %v3443
        %3445 = vmatprep.mubr.f32.mxu0 0.0
        %3446 = vmatmul.mubr.f32.gmra.mxu0 %v3319
        %v3447 = vpop.f32.mrf.mxu0
        %v3448 = vadd.f32 0.0, %v3447
        %v3449 = vpop.f32.mrf.mxu0
        %v3450 = vadd.f32 0.0, %v3449
        %3451 = vmatprep.mubr.f32.mxu0 0.0
        %3452 = vmatmul.mubr.f32.gmra.mxu0 %v3322
        %v3453 = vpop.f32.mrf.mxu0
        %v3454 = vadd.f32 0.0, %v3453
        %v3455 = vpop.f32.mrf.mxu0
        %v3456 = vadd.f32 0.0, %v3455
        %3457 = vmatprep.mubr.f32.mxu0 0.0
        %3458 = vmatmul.mubr.f32.gmra.mxu0 %v3325
        %v3459 = vpop.f32.mrf.mxu0
        %v3460 = vadd.f32 0.0, %v3459
        %v3461 = vpop.f32.mrf.mxu0
        %v3462 = vadd.f32 0.0, %v3461
        %3463 = vdwg.mxu0
        %v3464 = vadd.f32 %v3215, %v3394
        %v3465 = vadd.f32 %v3216, %v3396
        %v3466 = vadd.f32 %v3217, %v3400
        %v3467 = vadd.f32 %v3218, %v3402
        %v3468 = vadd.f32 %v3219, %v3406
        %v3469 = vadd.f32 %v3220, %v3408
        %v3470 = vadd.f32 %v3221, %v3412
        %v3471 = vadd.f32 %v3222, %v3414
        %v3472 = vadd.f32 %v3223, %v3418
        %v3473 = vadd.f32 %v3224, %v3420
        %v3474 = vadd.f32 %v3225, %v3424
        %v3475 = vadd.f32 %v3226, %v3426
        %v3476 = vadd.f32 %v3227, %v3430
        %v3477 = vadd.f32 %v3228, %v3432
        %v3478 = vadd.f32 %v3229, %v3436
        %v3479 = vadd.f32 %v3230, %v3438
        %v3480 = vadd.f32 %v3231, %v3442
        %v3481 = vadd.f32 %v3232, %v3444
        %v3482 = vadd.f32 %v3233, %v3448
        %v3483 = vadd.f32 %v3234, %v3450
        %v3484 = vadd.f32 %v3235, %v3454
        %v3485 = vadd.f32 %v3236, %v3456
        %v3486 = vadd.f32 %v3237, %v3460
        %v3487 = vadd.f32 %v3238, %v3462
        %v3488 = vld [vmem:[%s1123] sm:$0xff]
        %v3489 = vld [vmem:[%s1123 + $0x8] sm:$0xff]
        %v3490 = vld [vmem:[%s1123 + $0x10] sm:$0xff]
        %v3491 = vld [vmem:[%s1123 + $0x18] sm:$0xff]
        %v3492 = vld [vmem:[%s1123 + $0x20] sm:$0xff]
        %v3493 = vld [vmem:[%s1123 + $0x28] sm:$0xff]
        %v3494 = vld [vmem:[%s1123 + $0x30] sm:$0xff]
        %v3495 = vld [vmem:[%s1123 + $0x38] sm:$0xff]
        %v3496 = vld [vmem:[%s1123 + $0x40] sm:$0xff]
        %v3497 = vld [vmem:[%s1123 + $0x48] sm:$0xff]
        %v3498 = vld [vmem:[%s1123 + $0x50] sm:$0xff]
        %v3499 = vld [vmem:[%s1123 + $0x58] sm:$0xff]
        %v3501 = vsel %vm316, %v3488, 0
        %v3504 = vsel %vm316, %v3489, 0
        %v3507 = vsel %vm316, %v3490, 0
        %v3510 = vsel %vm316, %v3491, 0
        %v3513 = vsel %vm316, %v3492, 0
        %v3516 = vsel %vm316, %v3493, 0
        %v3519 = vsel %vm316, %v3494, 0
        %v3522 = vsel %vm316, %v3495, 0
        %v3525 = vsel %vm316, %v3496, 0
        %v3528 = vsel %vm316, %v3497, 0
        %v3531 = vsel %vm316, %v3498, 0
        %v3534 = vsel %vm316, %v3499, 0
        %3536 = vmatprep.subr.mxu0 0.0
        %3537 = vmatpush1.msra.mxu0 0.0
        %3538 = vmatprep.subr.mxu0 0.0
        %3539 = vmatpush1.msra.mxu0 0.0
        %3540 = vmatprep.subr.mxu0 0.0
        %3541 = vmatpush1.msra.mxu0 0.0
        %3542 = vmatprep.subr.mxu0 0.0
        %3543 = vmatpush1.msra.mxu0 0.0
        %3544 = vmatprep.subr.mxu0 0.0
        %3545 = vmatpush1.msra.mxu0 0.0
        %3546 = vmatprep.subr.mxu0 0.0
        %3547 = vmatpush1.msra.mxu0 0.0
        %3548 = vmatprep.subr.mxu0 0.0
        %3549 = vmatpush1.msra.mxu0 0.0
        %3550 = vmatprep.subr.mxu0 0.0
        %3551 = vmatpush1.msra.mxu0 0.0
        %3552 = vmatprep.subr.mxu0 0.0
        %3553 = vmatpush1.msra.mxu0 0.0
        %3554 = vmatprep.subr.mxu0 0.0
        %3555 = vmatpush1.msra.mxu0 0.0
        %3556 = vmatprep.subr.mxu0 0.0
        %3557 = vmatpush1.msra.mxu0 0.0
        %3558 = vmatprep.subr.mxu0 0.0
        %3559 = vmatpush1.msra.mxu0 0.0
        %3560 = vmatprep.subr.mxu0 %v2460
        %3561 = vmatpush1.msra.mxu0 %v2459
        %3562 = vmatprep.subr.mxu0 %v2458
        %3563 = vmatpush1.msra.mxu0 %v2457
        %3564 = vmatprep.subr.mxu0 %v2456
        %3565 = vmatpush1.msra.mxu0 %v2455
        %3566 = vmatprep.subr.mxu0 %v2454
        %3567 = vmatpush1.msra.mxu0 %v2453
        %3568 = vmatprep.subr.mxu0 0.0
        %3569 = vmatpush2.msra.mxu0 0.0
        %3570 = vmatprep.subr.mxu0 0.0
        %3571 = vmatpush2.msra.mxu0 0.0
        %3572 = vmatprep.subr.mxu0 0.0
        %3573 = vmatpush2.msra.mxu0 0.0
        %3574 = vmatprep.subr.mxu0 0.0
        %3575 = vmatpush2.msra.mxu0 0.0
        %3576 = vmatprep.subr.mxu0 0.0
        %3577 = vmatpush2.msra.mxu0 0.0
        %3578 = vmatprep.subr.mxu0 0.0
        %3579 = vmatpush2.msra.mxu0 0.0
        %3580 = vmatprep.subr.mxu0 0.0
        %3581 = vmatpush2.msra.mxu0 0.0
        %3582 = vmatprep.subr.mxu0 0.0
        %3583 = vmatpush2.msra.mxu0 0.0
        %3584 = vmatprep.subr.mxu0 0.0
        %3585 = vmatpush2.msra.mxu0 0.0
        %3586 = vmatprep.subr.mxu0 0.0
        %3587 = vmatpush2.msra.mxu0 0.0
        %3588 = vmatprep.subr.mxu0 0.0
        %3589 = vmatpush2.msra.mxu0 0.0
        %3590 = vmatprep.subr.mxu0 0.0
        %3591 = vmatpush2.msra.mxu0 0.0
        %3592 = vmatprep.subr.mxu0 0.0
        %3593 = vmatpush2.msra.mxu0 0.0
        %3594 = vmatprep.subr.mxu0 0.0
        %3595 = vmatpush2.msra.mxu0 0.0
        %3596 = vmatprep.subr.mxu0 0.0
        %3597 = vmatpush2.msra.mxu0 0.0
        %3598 = vmatprep.subr.mxu0 0.0
        %3599 = vmatpush2.msra.mxu0 0.0
        %3600 = vmatprep.mubr.f32.mxu0 0.0
        %3601 = vmatmul.mubr.f32.gmra.mxu0 %v3501
        %v3602 = vpop.f32.mrf.mxu0
        %v3603 = vadd.f32 0.0, %v3602
        %v3604 = vpop.f32.mrf.mxu0
        %v3605 = vadd.f32 0.0, %v3604
        %3606 = vmatprep.mubr.f32.mxu0 0.0
        %3607 = vmatmul.mubr.f32.gmra.mxu0 %v3504
        %v3608 = vpop.f32.mrf.mxu0
        %v3609 = vadd.f32 0.0, %v3608
        %v3610 = vpop.f32.mrf.mxu0
        %v3611 = vadd.f32 0.0, %v3610
        %3612 = vmatprep.mubr.f32.mxu0 0.0
        %3613 = vmatmul.mubr.f32.gmra.mxu0 %v3507
        %v3614 = vpop.f32.mrf.mxu0
        %v3615 = vadd.f32 0.0, %v3614
        %v3616 = vpop.f32.mrf.mxu0
        %v3617 = vadd.f32 0.0, %v3616
        %3618 = vmatprep.mubr.f32.mxu0 0.0
        %3619 = vmatmul.mubr.f32.gmra.mxu0 %v3510
        %v3620 = vpop.f32.mrf.mxu0
        %v3621 = vadd.f32 0.0, %v3620
        %v3622 = vpop.f32.mrf.mxu0
        %v3623 = vadd.f32 0.0, %v3622
        %3624 = vmatprep.mubr.f32.mxu0 0.0
        %3625 = vmatmul.mubr.f32.gmra.mxu0 %v3513
        %v3626 = vpop.f32.mrf.mxu0
        %v3627 = vadd.f32 0.0, %v3626
        %v3628 = vpop.f32.mrf.mxu0
        %v3629 = vadd.f32 0.0, %v3628
        %3630 = vmatprep.mubr.f32.mxu0 0.0
        %3631 = vmatmul.mubr.f32.gmra.mxu0 %v3516
        %v3632 = vpop.f32.mrf.mxu0
        %v3633 = vadd.f32 0.0, %v3632
        %v3634 = vpop.f32.mrf.mxu0
        %v3635 = vadd.f32 0.0, %v3634
        %3636 = vmatprep.mubr.f32.mxu0 0.0
        %3637 = vmatmul.mubr.f32.gmra.mxu0 %v3519
        %v3638 = vpop.f32.mrf.mxu0
        %v3639 = vadd.f32 0.0, %v3638
        %v3640 = vpop.f32.mrf.mxu0
        %v3641 = vadd.f32 0.0, %v3640
        %3642 = vmatprep.mubr.f32.mxu0 0.0
        %3643 = vmatmul.mubr.f32.gmra.mxu0 %v3522
        %v3644 = vpop.f32.mrf.mxu0
        %v3645 = vadd.f32 0.0, %v3644
        %v3646 = vpop.f32.mrf.mxu0
        %v3647 = vadd.f32 0.0, %v3646
        %3648 = vmatprep.mubr.f32.mxu0 0.0
        %3649 = vmatmul.mubr.f32.gmra.mxu0 %v3525
        %v3650 = vpop.f32.mrf.mxu0
        %v3651 = vadd.f32 0.0, %v3650
        %v3652 = vpop.f32.mrf.mxu0
        %v3653 = vadd.f32 0.0, %v3652
        %3654 = vmatprep.mubr.f32.mxu0 0.0
        %3655 = vmatmul.mubr.f32.gmra.mxu0 %v3528
        %v3656 = vpop.f32.mrf.mxu0
        %v3657 = vadd.f32 0.0, %v3656
        %v3658 = vpop.f32.mrf.mxu0
        %v3659 = vadd.f32 0.0, %v3658
        %3660 = vmatprep.mubr.f32.mxu0 0.0
        %3661 = vmatmul.mubr.f32.gmra.mxu0 %v3531
        %v3662 = vpop.f32.mrf.mxu0
        %v3663 = vadd.f32 0.0, %v3662
        %v3664 = vpop.f32.mrf.mxu0
        %v3665 = vadd.f32 0.0, %v3664
        %3666 = vmatprep.mubr.f32.mxu0 0.0
        %3667 = vmatmul.mubr.f32.gmra.mxu0 %v3534
        %v3668 = vpop.f32.mrf.mxu0
        %v3669 = vadd.f32 0.0, %v3668
        %v3670 = vpop.f32.mrf.mxu0
        %v3671 = vadd.f32 0.0, %v3670
        %3672 = vdwg.mxu0
        %v3673 = vadd.f32 %v3464, %v3603
        %v3674 = vadd.f32 %v3465, %v3605
        %v3675 = vadd.f32 %v3466, %v3609
        %v3676 = vadd.f32 %v3467, %v3611
        %v3677 = vadd.f32 %v3468, %v3615
        %v3678 = vadd.f32 %v3469, %v3617
        %v3679 = vadd.f32 %v3470, %v3621
        %v3680 = vadd.f32 %v3471, %v3623
        %v3681 = vadd.f32 %v3472, %v3627
        %v3682 = vadd.f32 %v3473, %v3629
        %v3683 = vadd.f32 %v3474, %v3633
        %v3684 = vadd.f32 %v3475, %v3635
        %v3685 = vadd.f32 %v3476, %v3639
        %v3686 = vadd.f32 %v3477, %v3641
        %v3687 = vadd.f32 %v3478, %v3645
        %v3688 = vadd.f32 %v3479, %v3647
        %v3689 = vadd.f32 %v3480, %v3651
        %v3690 = vadd.f32 %v3481, %v3653
        %v3691 = vadd.f32 %v3482, %v3657
        %v3692 = vadd.f32 %v3483, %v3659
        %v3693 = vadd.f32 %v3484, %v3663
        %v3694 = vadd.f32 %v3485, %v3665
        %v3695 = vadd.f32 %v3486, %v3669
        %v3696 = vadd.f32 %v3487, %v3671
        %3697 = vrot.lane.b32.xlu0 %v2453, 127
        %v3698 = vpop.permute.xlu0 %3697
        %3699 = vrot.lane.b32.xlu0 %v2455, 127
        %v3700 = vpop.permute.xlu0 %3699
        %3701 = vrot.lane.b32.xlu0 %v2457, 127
        %v3702 = vpop.permute.xlu0 %3701
        %3703 = vrot.lane.b32.xlu0 %v2459, 127
        %v3704 = vpop.permute.xlu0 %3703
        %3705 = vrot.lane.b32.xlu0 %v2454, 127
        %v3706 = vpop.permute.xlu0 %3705
        %3707 = vrot.lane.b32.xlu0 %v2456, 127
        %v3708 = vpop.permute.xlu0 %3707
        %3709 = vrot.lane.b32.xlu0 %v2458, 127
        %v3710 = vpop.permute.xlu0 %3709
        %3711 = vrot.lane.b32.xlu0 %v2460, 127
        %v3712 = vpop.permute.xlu0 %3711
        %v3713 = vsel %vm1335, %v3698, %v3706
        %v3714 = vsel %vm1335, %v3700, %v3708
        %v3715 = vsel %vm1335, %v3702, %v3710
        %v3716 = vsel %vm1335, %v3704, %v3712
        %v3717 = vsel %vm1335, %v3706, %v3698
        %v3718 = vsel %vm1335, %v3708, %v3700
        %v3719 = vsel %vm1335, %v3710, %v3702
        %v3720 = vsel %vm1335, %v3712, %v3704
        %v3721 = vld [vmem:[%s1336] sm:$0xff]
        %v3722 = vld [vmem:[%s1336 + $0x8] sm:$0xff]
        %v3723 = vld [vmem:[%s1336 + $0x10] sm:$0xff]
        %v3724 = vld [vmem:[%s1336 + $0x18] sm:$0xff]
        %v3725 = vld [vmem:[%s1336 + $0x20] sm:$0xff]
        %v3726 = vld [vmem:[%s1336 + $0x28] sm:$0xff]
        %v3727 = vld [vmem:[%s1336 + $0x30] sm:$0xff]
        %v3728 = vld [vmem:[%s1336 + $0x38] sm:$0xff]
        %v3729 = vmul.f32 %v3713, %v3721
        %v3730 = vmul.f32 %v3717, %v3722
        %v3731 = vmul.f32 %v3714, %v3723
        %v3732 = vmul.f32 %v3718, %v3724
        %v3733 = vmul.f32 %v3715, %v3725
        %v3734 = vmul.f32 %v3719, %v3726
        %v3735 = vmul.f32 %v3716, %v3727
        %v3736 = vmul.f32 %v3720, %v3728
        %v3737 = vld [vmem:[%s1353] sm:$0xff]
        %v3738 = vld [vmem:[%s1353 + $0x8] sm:$0xff]
        %v3739 = vld [vmem:[%s1353 + $0x10] sm:$0xff]
        %v3740 = vld [vmem:[%s1353 + $0x18] sm:$0xff]
        %v3741 = vld [vmem:[%s1353 + $0x20] sm:$0xff]
        %v3742 = vld [vmem:[%s1353 + $0x28] sm:$0xff]
        %v3743 = vld [vmem:[%s1353 + $0x30] sm:$0xff]
        %v3744 = vld [vmem:[%s1353 + $0x38] sm:$0xff]
        %v3745 = vld [vmem:[%s1353 + $0x40] sm:$0xff]
        %v3746 = vld [vmem:[%s1353 + $0x48] sm:$0xff]
        %v3747 = vld [vmem:[%s1353 + $0x50] sm:$0xff]
        %v3748 = vld [vmem:[%s1353 + $0x58] sm:$0xff]
        %v3750 = vsel %vm316, %v3737, 0
        %v3753 = vsel %vm316, %v3738, 0
        %v3756 = vsel %vm316, %v3739, 0
        %v3759 = vsel %vm316, %v3740, 0
        %v3762 = vsel %vm316, %v3741, 0
        %v3765 = vsel %vm316, %v3742, 0
        %v3768 = vsel %vm316, %v3743, 0
        %v3771 = vsel %vm316, %v3744, 0
        %v3774 = vsel %vm316, %v3745, 0
        %v3777 = vsel %vm316, %v3746, 0
        %v3780 = vsel %vm316, %v3747, 0
        %v3783 = vsel %vm316, %v3748, 0
        %3785 = vmatprep.subr.mxu0 0.0
        %3786 = vmatpush1.msra.mxu0 0.0
        %3787 = vmatprep.subr.mxu0 0.0
        %3788 = vmatpush1.msra.mxu0 0.0
        %3789 = vmatprep.subr.mxu0 0.0
        %3790 = vmatpush1.msra.mxu0 0.0
        %3791 = vmatprep.subr.mxu0 0.0
        %3792 = vmatpush1.msra.mxu0 0.0
        %3793 = vmatprep.subr.mxu0 0.0
        %3794 = vmatpush1.msra.mxu0 0.0
        %3795 = vmatprep.subr.mxu0 0.0
        %3796 = vmatpush1.msra.mxu0 0.0
        %3797 = vmatprep.subr.mxu0 0.0
        %3798 = vmatpush1.msra.mxu0 0.0
        %3799 = vmatprep.subr.mxu0 0.0
        %3800 = vmatpush1.msra.mxu0 0.0
        %3801 = vmatprep.subr.mxu0 0.0
        %3802 = vmatpush1.msra.mxu0 0.0
        %3803 = vmatprep.subr.mxu0 0.0
        %3804 = vmatpush1.msra.mxu0 0.0
        %3805 = vmatprep.subr.mxu0 0.0
        %3806 = vmatpush1.msra.mxu0 0.0
        %3807 = vmatprep.subr.mxu0 0.0
        %3808 = vmatpush1.msra.mxu0 0.0
        %3809 = vmatprep.subr.mxu0 %v3736
        %3810 = vmatpush1.msra.mxu0 %v3735
        %3811 = vmatprep.subr.mxu0 %v3734
        %3812 = vmatpush1.msra.mxu0 %v3733
        %3813 = vmatprep.subr.mxu0 %v3732
        %3814 = vmatpush1.msra.mxu0 %v3731
        %3815 = vmatprep.subr.mxu0 %v3730
        %3816 = vmatpush1.msra.mxu0 %v3729
        %3817 = vmatprep.subr.mxu0 0.0
        %3818 = vmatpush2.msra.mxu0 0.0
        %3819 = vmatprep.subr.mxu0 0.0
        %3820 = vmatpush2.msra.mxu0 0.0
        %3821 = vmatprep.subr.mxu0 0.0
        %3822 = vmatpush2.msra.mxu0 0.0
        %3823 = vmatprep.subr.mxu0 0.0
        %3824 = vmatpush2.msra.mxu0 0.0
        %3825 = vmatprep.subr.mxu0 0.0
        %3826 = vmatpush2.msra.mxu0 0.0
        %3827 = vmatprep.subr.mxu0 0.0
        %3828 = vmatpush2.msra.mxu0 0.0
        %3829 = vmatprep.subr.mxu0 0.0
        %3830 = vmatpush2.msra.mxu0 0.0
        %3831 = vmatprep.subr.mxu0 0.0
        %3832 = vmatpush2.msra.mxu0 0.0
        %3833 = vmatprep.subr.mxu0 0.0
        %3834 = vmatpush2.msra.mxu0 0.0
        %3835 = vmatprep.subr.mxu0 0.0
        %3836 = vmatpush2.msra.mxu0 0.0
        %3837 = vmatprep.subr.mxu0 0.0
        %3838 = vmatpush2.msra.mxu0 0.0
        %3839 = vmatprep.subr.mxu0 0.0
        %3840 = vmatpush2.msra.mxu0 0.0
        %3841 = vmatprep.subr.mxu0 0.0
        %3842 = vmatpush2.msra.mxu0 0.0
        %3843 = vmatprep.subr.mxu0 0.0
        %3844 = vmatpush2.msra.mxu0 0.0
        %3845 = vmatprep.subr.mxu0 0.0
        %3846 = vmatpush2.msra.mxu0 0.0
        %3847 = vmatprep.subr.mxu0 0.0
        %3848 = vmatpush2.msra.mxu0 0.0
        %3849 = vmatprep.mubr.f32.mxu0 0.0
        %3850 = vmatmul.mubr.f32.gmra.mxu0 %v3750
        %v3851 = vpop.f32.mrf.mxu0
        %v3852 = vadd.f32 0.0, %v3851
        %v3853 = vpop.f32.mrf.mxu0
        %v3854 = vadd.f32 0.0, %v3853
        %3855 = vmatprep.mubr.f32.mxu0 0.0
        %3856 = vmatmul.mubr.f32.gmra.mxu0 %v3753
        %v3857 = vpop.f32.mrf.mxu0
        %v3858 = vadd.f32 0.0, %v3857
        %v3859 = vpop.f32.mrf.mxu0
        %v3860 = vadd.f32 0.0, %v3859
        %3861 = vmatprep.mubr.f32.mxu0 0.0
        %3862 = vmatmul.mubr.f32.gmra.mxu0 %v3756
        %v3863 = vpop.f32.mrf.mxu0
        %v3864 = vadd.f32 0.0, %v3863
        %v3865 = vpop.f32.mrf.mxu0
        %v3866 = vadd.f32 0.0, %v3865
        %3867 = vmatprep.mubr.f32.mxu0 0.0
        %3868 = vmatmul.mubr.f32.gmra.mxu0 %v3759
        %v3869 = vpop.f32.mrf.mxu0
        %v3870 = vadd.f32 0.0, %v3869
        %v3871 = vpop.f32.mrf.mxu0
        %v3872 = vadd.f32 0.0, %v3871
        %3873 = vmatprep.mubr.f32.mxu0 0.0
        %3874 = vmatmul.mubr.f32.gmra.mxu0 %v3762
        %v3875 = vpop.f32.mrf.mxu0
        %v3876 = vadd.f32 0.0, %v3875
        %v3877 = vpop.f32.mrf.mxu0
        %v3878 = vadd.f32 0.0, %v3877
        %3879 = vmatprep.mubr.f32.mxu0 0.0
        %3880 = vmatmul.mubr.f32.gmra.mxu0 %v3765
        %v3881 = vpop.f32.mrf.mxu0
        %v3882 = vadd.f32 0.0, %v3881
        %v3883 = vpop.f32.mrf.mxu0
        %v3884 = vadd.f32 0.0, %v3883
        %3885 = vmatprep.mubr.f32.mxu0 0.0
        %3886 = vmatmul.mubr.f32.gmra.mxu0 %v3768
        %v3887 = vpop.f32.mrf.mxu0
        %v3888 = vadd.f32 0.0, %v3887
        %v3889 = vpop.f32.mrf.mxu0
        %v3890 = vadd.f32 0.0, %v3889
        %3891 = vmatprep.mubr.f32.mxu0 0.0
        %3892 = vmatmul.mubr.f32.gmra.mxu0 %v3771
        %v3893 = vpop.f32.mrf.mxu0
        %v3894 = vadd.f32 0.0, %v3893
        %v3895 = vpop.f32.mrf.mxu0
        %v3896 = vadd.f32 0.0, %v3895
        %3897 = vmatprep.mubr.f32.mxu0 0.0
        %3898 = vmatmul.mubr.f32.gmra.mxu0 %v3774
        %v3899 = vpop.f32.mrf.mxu0
        %v3900 = vadd.f32 0.0, %v3899
        %v3901 = vpop.f32.mrf.mxu0
        %v3902 = vadd.f32 0.0, %v3901
        %3903 = vmatprep.mubr.f32.mxu0 0.0
        %3904 = vmatmul.mubr.f32.gmra.mxu0 %v3777
        %v3905 = vpop.f32.mrf.mxu0
        %v3906 = vadd.f32 0.0, %v3905
        %v3907 = vpop.f32.mrf.mxu0
        %v3908 = vadd.f32 0.0, %v3907
        %3909 = vmatprep.mubr.f32.mxu0 0.0
        %3910 = vmatmul.mubr.f32.gmra.mxu0 %v3780
        %v3911 = vpop.f32.mrf.mxu0
        %v3912 = vadd.f32 0.0, %v3911
        %v3913 = vpop.f32.mrf.mxu0
        %v3914 = vadd.f32 0.0, %v3913
        %3915 = vmatprep.mubr.f32.mxu0 0.0
        %3916 = vmatmul.mubr.f32.gmra.mxu0 %v3783
        %v3917 = vpop.f32.mrf.mxu0
        %v3918 = vadd.f32 0.0, %v3917
        %v3919 = vpop.f32.mrf.mxu0
        %v3920 = vadd.f32 0.0, %v3919
        %3921 = vdwg.mxu0
        %v3922 = vadd.f32 %v3673, %v3852
        %v3923 = vadd.f32 %v3674, %v3854
        %v3924 = vadd.f32 %v3675, %v3858
        %v3925 = vadd.f32 %v3676, %v3860
        %v3926 = vadd.f32 %v3677, %v3864
        %v3927 = vadd.f32 %v3678, %v3866
        %v3928 = vadd.f32 %v3679, %v3870
        %v3929 = vadd.f32 %v3680, %v3872
        %v3930 = vadd.f32 %v3681, %v3876
        %v3931 = vadd.f32 %v3682, %v3878
        %v3932 = vadd.f32 %v3683, %v3882
        %v3933 = vadd.f32 %v3684, %v3884
        %v3934 = vadd.f32 %v3685, %v3888
        %v3935 = vadd.f32 %v3686, %v3890
        %v3936 = vadd.f32 %v3687, %v3894
        %v3937 = vadd.f32 %v3688, %v3896
        %v3938 = vadd.f32 %v3689, %v3900
        %v3939 = vadd.f32 %v3690, %v3902
        %v3940 = vadd.f32 %v3691, %v3906
        %v3941 = vadd.f32 %v3692, %v3908
        %v3942 = vadd.f32 %v3693, %v3912
        %v3943 = vadd.f32 %v3694, %v3914
        %v3944 = vadd.f32 %v3695, %v3918
        %v3945 = vadd.f32 %v3696, %v3920
        %3946 = vrot.lane.b32.xlu0 %v2453, 113
        %v3947 = vpop.permute.xlu0 %3946
        %3948 = vrot.lane.b32.xlu0 %v2455, 113
        %v3949 = vpop.permute.xlu0 %3948
        %3950 = vrot.lane.b32.xlu0 %v2457, 113
        %v3951 = vpop.permute.xlu0 %3950
        %3952 = vrot.lane.b32.xlu0 %v2459, 113
        %v3953 = vpop.permute.xlu0 %3952
        %3954 = vrot.lane.b32.xlu0 %v2454, 113
        %v3955 = vpop.permute.xlu0 %3954
        %3956 = vrot.lane.b32.xlu0 %v2456, 113
        %v3957 = vpop.permute.xlu0 %3956
        %3958 = vrot.lane.b32.xlu0 %v2458, 113
        %v3959 = vpop.permute.xlu0 %3958
        %3960 = vrot.lane.b32.xlu0 %v2460, 113
        %v3961 = vpop.permute.xlu0 %3960
        %v3962 = vsel %vm1565, %v3947, %v3955
        %v3963 = vsel %vm1565, %v3949, %v3957
        %v3964 = vsel %vm1565, %v3951, %v3959
        %v3965 = vsel %vm1565, %v3953, %v3961
        %v3966 = vsel %vm1565, %v3955, %v3947
        %v3967 = vsel %vm1565, %v3957, %v3949
        %v3968 = vsel %vm1565, %v3959, %v3951
        %v3969 = vsel %vm1565, %v3961, %v3953
        %v3970 = vld [vmem:[%s1566] sm:$0xff]
        %v3971 = vld [vmem:[%s1566 + $0x8] sm:$0xff]
        %v3972 = vld [vmem:[%s1566 + $0x10] sm:$0xff]
        %v3973 = vld [vmem:[%s1566 + $0x18] sm:$0xff]
        %v3974 = vld [vmem:[%s1566 + $0x20] sm:$0xff]
        %v3975 = vld [vmem:[%s1566 + $0x28] sm:$0xff]
        %v3976 = vld [vmem:[%s1566 + $0x30] sm:$0xff]
        %v3977 = vld [vmem:[%s1566 + $0x38] sm:$0xff]
        %v3978 = vmul.f32 %v3962, %v3970
        %v3979 = vmul.f32 %v3966, %v3971
        %v3980 = vmul.f32 %v3963, %v3972
        %v3981 = vmul.f32 %v3967, %v3973
        %v3982 = vmul.f32 %v3964, %v3974
        %v3983 = vmul.f32 %v3968, %v3975
        %v3984 = vmul.f32 %v3965, %v3976
        %v3985 = vmul.f32 %v3969, %v3977
        %v3986 = vld [vmem:[%s1583] sm:$0xff]
        %v3987 = vld [vmem:[%s1583 + $0x8] sm:$0xff]
        %v3988 = vld [vmem:[%s1583 + $0x10] sm:$0xff]
        %v3989 = vld [vmem:[%s1583 + $0x18] sm:$0xff]
        %v3990 = vld [vmem:[%s1583 + $0x20] sm:$0xff]
        %v3991 = vld [vmem:[%s1583 + $0x28] sm:$0xff]
        %v3992 = vld [vmem:[%s1583 + $0x30] sm:$0xff]
        %v3993 = vld [vmem:[%s1583 + $0x38] sm:$0xff]
        %v3994 = vld [vmem:[%s1583 + $0x40] sm:$0xff]
        %v3995 = vld [vmem:[%s1583 + $0x48] sm:$0xff]
        %v3996 = vld [vmem:[%s1583 + $0x50] sm:$0xff]
        %v3997 = vld [vmem:[%s1583 + $0x58] sm:$0xff]
        %v3999 = vsel %vm316, %v3986, 0
        %v4002 = vsel %vm316, %v3987, 0
        %v4005 = vsel %vm316, %v3988, 0
        %v4008 = vsel %vm316, %v3989, 0
        %v4011 = vsel %vm316, %v3990, 0
        %v4014 = vsel %vm316, %v3991, 0
        %v4017 = vsel %vm316, %v3992, 0
        %v4020 = vsel %vm316, %v3993, 0
        %v4023 = vsel %vm316, %v3994, 0
        %v4026 = vsel %vm316, %v3995, 0
        %v4029 = vsel %vm316, %v3996, 0
        %v4032 = vsel %vm316, %v3997, 0
        %4034 = vmatprep.subr.mxu0 0.0
        %4035 = vmatpush1.msra.mxu0 0.0
        %4036 = vmatprep.subr.mxu0 0.0
        %4037 = vmatpush1.msra.mxu0 0.0
        %4038 = vmatprep.subr.mxu0 0.0
        %4039 = vmatpush1.msra.mxu0 0.0
        %4040 = vmatprep.subr.mxu0 0.0
        %4041 = vmatpush1.msra.mxu0 0.0
        %4042 = vmatprep.subr.mxu0 0.0
        %4043 = vmatpush1.msra.mxu0 0.0
        %4044 = vmatprep.subr.mxu0 0.0
        %4045 = vmatpush1.msra.mxu0 0.0
        %4046 = vmatprep.subr.mxu0 0.0
        %4047 = vmatpush1.msra.mxu0 0.0
        %4048 = vmatprep.subr.mxu0 0.0
        %4049 = vmatpush1.msra.mxu0 0.0
        %4050 = vmatprep.subr.mxu0 0.0
        %4051 = vmatpush1.msra.mxu0 0.0
        %4052 = vmatprep.subr.mxu0 0.0
        %4053 = vmatpush1.msra.mxu0 0.0
        %4054 = vmatprep.subr.mxu0 0.0
        %4055 = vmatpush1.msra.mxu0 0.0
        %4056 = vmatprep.subr.mxu0 0.0
        %4057 = vmatpush1.msra.mxu0 0.0
        %4058 = vmatprep.subr.mxu0 %v3985
        %4059 = vmatpush1.msra.mxu0 %v3984
        %4060 = vmatprep.subr.mxu0 %v3983
        %4061 = vmatpush1.msra.mxu0 %v3982
        %4062 = vmatprep.subr.mxu0 %v3981
        %4063 = vmatpush1.msra.mxu0 %v3980
        %4064 = vmatprep.subr.mxu0 %v3979
        %4065 = vmatpush1.msra.mxu0 %v3978
        %4066 = vmatprep.subr.mxu0 0.0
        %4067 = vmatpush2.msra.mxu0 0.0
        %4068 = vmatprep.subr.mxu0 0.0
        %4069 = vmatpush2.msra.mxu0 0.0
        %4070 = vmatprep.subr.mxu0 0.0
        %4071 = vmatpush2.msra.mxu0 0.0
        %4072 = vmatprep.subr.mxu0 0.0
        %4073 = vmatpush2.msra.mxu0 0.0
        %4074 = vmatprep.subr.mxu0 0.0
        %4075 = vmatpush2.msra.mxu0 0.0
        %4076 = vmatprep.subr.mxu0 0.0
        %4077 = vmatpush2.msra.mxu0 0.0
        %4078 = vmatprep.subr.mxu0 0.0
        %4079 = vmatpush2.msra.mxu0 0.0
        %4080 = vmatprep.subr.mxu0 0.0
        %4081 = vmatpush2.msra.mxu0 0.0
        %4082 = vmatprep.subr.mxu0 0.0
        %4083 = vmatpush2.msra.mxu0 0.0
        %4084 = vmatprep.subr.mxu0 0.0
        %4085 = vmatpush2.msra.mxu0 0.0
        %4086 = vmatprep.subr.mxu0 0.0
        %4087 = vmatpush2.msra.mxu0 0.0
        %4088 = vmatprep.subr.mxu0 0.0
        %4089 = vmatpush2.msra.mxu0 0.0
        %4090 = vmatprep.subr.mxu0 0.0
        %4091 = vmatpush2.msra.mxu0 0.0
        %4092 = vmatprep.subr.mxu0 0.0
        %4093 = vmatpush2.msra.mxu0 0.0
        %4094 = vmatprep.subr.mxu0 0.0
        %4095 = vmatpush2.msra.mxu0 0.0
        %4096 = vmatprep.subr.mxu0 0.0
        %4097 = vmatpush2.msra.mxu0 0.0
        %4098 = vmatprep.mubr.f32.mxu0 0.0
        %4099 = vmatmul.mubr.f32.gmra.mxu0 %v3999
        %v4100 = vpop.f32.mrf.mxu0
        %v4101 = vadd.f32 0.0, %v4100
        %v4102 = vpop.f32.mrf.mxu0
        %v4103 = vadd.f32 0.0, %v4102
        %4104 = vmatprep.mubr.f32.mxu0 0.0
        %4105 = vmatmul.mubr.f32.gmra.mxu0 %v4002
        %v4106 = vpop.f32.mrf.mxu0
        %v4107 = vadd.f32 0.0, %v4106
        %v4108 = vpop.f32.mrf.mxu0
        %v4109 = vadd.f32 0.0, %v4108
        %4110 = vmatprep.mubr.f32.mxu0 0.0
        %4111 = vmatmul.mubr.f32.gmra.mxu0 %v4005
        %v4112 = vpop.f32.mrf.mxu0
        %v4113 = vadd.f32 0.0, %v4112
        %v4114 = vpop.f32.mrf.mxu0
        %v4115 = vadd.f32 0.0, %v4114
        %4116 = vmatprep.mubr.f32.mxu0 0.0
        %4117 = vmatmul.mubr.f32.gmra.mxu0 %v4008
        %v4118 = vpop.f32.mrf.mxu0
        %v4119 = vadd.f32 0.0, %v4118
        %v4120 = vpop.f32.mrf.mxu0
        %v4121 = vadd.f32 0.0, %v4120
        %4122 = vmatprep.mubr.f32.mxu0 0.0
        %4123 = vmatmul.mubr.f32.gmra.mxu0 %v4011
        %v4124 = vpop.f32.mrf.mxu0
        %v4125 = vadd.f32 0.0, %v4124
        %v4126 = vpop.f32.mrf.mxu0
        %v4127 = vadd.f32 0.0, %v4126
        %4128 = vmatprep.mubr.f32.mxu0 0.0
        %4129 = vmatmul.mubr.f32.gmra.mxu0 %v4014
        %v4130 = vpop.f32.mrf.mxu0
        %v4131 = vadd.f32 0.0, %v4130
        %v4132 = vpop.f32.mrf.mxu0
        %v4133 = vadd.f32 0.0, %v4132
        %4134 = vmatprep.mubr.f32.mxu0 0.0
        %4135 = vmatmul.mubr.f32.gmra.mxu0 %v4017
        %v4136 = vpop.f32.mrf.mxu0
        %v4137 = vadd.f32 0.0, %v4136
        %v4138 = vpop.f32.mrf.mxu0
        %v4139 = vadd.f32 0.0, %v4138
        %4140 = vmatprep.mubr.f32.mxu0 0.0
        %4141 = vmatmul.mubr.f32.gmra.mxu0 %v4020
        %v4142 = vpop.f32.mrf.mxu0
        %v4143 = vadd.f32 0.0, %v4142
        %v4144 = vpop.f32.mrf.mxu0
        %v4145 = vadd.f32 0.0, %v4144
        %4146 = vmatprep.mubr.f32.mxu0 0.0
        %4147 = vmatmul.mubr.f32.gmra.mxu0 %v4023
        %v4148 = vpop.f32.mrf.mxu0
        %v4149 = vadd.f32 0.0, %v4148
        %v4150 = vpop.f32.mrf.mxu0
        %v4151 = vadd.f32 0.0, %v4150
        %4152 = vmatprep.mubr.f32.mxu0 0.0
        %4153 = vmatmul.mubr.f32.gmra.mxu0 %v4026
        %v4154 = vpop.f32.mrf.mxu0
        %v4155 = vadd.f32 0.0, %v4154
        %v4156 = vpop.f32.mrf.mxu0
        %v4157 = vadd.f32 0.0, %v4156
        %4158 = vmatprep.mubr.f32.mxu0 0.0
        %4159 = vmatmul.mubr.f32.gmra.mxu0 %v4029
        %v4160 = vpop.f32.mrf.mxu0
        %v4161 = vadd.f32 0.0, %v4160
        %v4162 = vpop.f32.mrf.mxu0
        %v4163 = vadd.f32 0.0, %v4162
        %4164 = vmatprep.mubr.f32.mxu0 0.0
        %4165 = vmatmul.mubr.f32.gmra.mxu0 %v4032
        %v4166 = vpop.f32.mrf.mxu0
        %v4167 = vadd.f32 0.0, %v4166
        %v4168 = vpop.f32.mrf.mxu0
        %v4169 = vadd.f32 0.0, %v4168
        %4170 = vdwg.mxu0
        %v4171 = vadd.f32 %v3922, %v4101
        %v4172 = vadd.f32 %v3923, %v4103
        %v4173 = vadd.f32 %v3924, %v4107
        %v4174 = vadd.f32 %v3925, %v4109
        %v4175 = vadd.f32 %v3926, %v4113
        %v4176 = vadd.f32 %v3927, %v4115
        %v4177 = vadd.f32 %v3928, %v4119
        %v4178 = vadd.f32 %v3929, %v4121
        %v4179 = vadd.f32 %v3930, %v4125
        %v4180 = vadd.f32 %v3931, %v4127
        %v4181 = vadd.f32 %v3932, %v4131
        %v4182 = vadd.f32 %v3933, %v4133
        %v4183 = vadd.f32 %v3934, %v4137
        %v4184 = vadd.f32 %v3935, %v4139
        %v4185 = vadd.f32 %v3936, %v4143
        %v4186 = vadd.f32 %v3937, %v4145
        %v4187 = vadd.f32 %v3938, %v4149
        %v4188 = vadd.f32 %v3939, %v4151
        %v4189 = vadd.f32 %v3940, %v4155
        %v4190 = vadd.f32 %v3941, %v4157
        %v4191 = vadd.f32 %v3942, %v4161
        %v4192 = vadd.f32 %v3943, %v4163
        %v4193 = vadd.f32 %v3944, %v4167
        %v4194 = vadd.f32 %v3945, %v4169
        %4195 = vrot.lane.b32.xlu0 %v2453, 112
        %v4196 = vpop.permute.xlu0 %4195
        %4197 = vrot.lane.b32.xlu0 %v2455, 112
        %v4198 = vpop.permute.xlu0 %4197
        %4199 = vrot.lane.b32.xlu0 %v2457, 112
        %v4200 = vpop.permute.xlu0 %4199
        %4201 = vrot.lane.b32.xlu0 %v2459, 112
        %v4202 = vpop.permute.xlu0 %4201
        %4203 = vrot.lane.b32.xlu0 %v2454, 112
        %v4204 = vpop.permute.xlu0 %4203
        %4205 = vrot.lane.b32.xlu0 %v2456, 112
        %v4206 = vpop.permute.xlu0 %4205
        %4207 = vrot.lane.b32.xlu0 %v2458, 112
        %v4208 = vpop.permute.xlu0 %4207
        %4209 = vrot.lane.b32.xlu0 %v2460, 112
        %v4210 = vpop.permute.xlu0 %4209
        %v4211 = vsel %vm1795, %v4196, %v4204
        %v4212 = vsel %vm1795, %v4198, %v4206
        %v4213 = vsel %vm1795, %v4200, %v4208
        %v4214 = vsel %vm1795, %v4202, %v4210
        %v4215 = vsel %vm1795, %v4204, %v4196
        %v4216 = vsel %vm1795, %v4206, %v4198
        %v4217 = vsel %vm1795, %v4208, %v4200
        %v4218 = vsel %vm1795, %v4210, %v4202
        %v4219 = vld [vmem:[%s1796] sm:$0xff]
        %v4220 = vld [vmem:[%s1796 + $0x8] sm:$0xff]
        %v4221 = vld [vmem:[%s1796 + $0x10] sm:$0xff]
        %v4222 = vld [vmem:[%s1796 + $0x18] sm:$0xff]
        %v4223 = vld [vmem:[%s1796 + $0x20] sm:$0xff]
        %v4224 = vld [vmem:[%s1796 + $0x28] sm:$0xff]
        %v4225 = vld [vmem:[%s1796 + $0x30] sm:$0xff]
        %v4226 = vld [vmem:[%s1796 + $0x38] sm:$0xff]
        %v4227 = vmul.f32 %v4211, %v4219
        %v4228 = vmul.f32 %v4215, %v4220
        %v4229 = vmul.f32 %v4212, %v4221
        %v4230 = vmul.f32 %v4216, %v4222
        %v4231 = vmul.f32 %v4213, %v4223
        %v4232 = vmul.f32 %v4217, %v4224
        %v4233 = vmul.f32 %v4214, %v4225
        %v4234 = vmul.f32 %v4218, %v4226
        %v4235 = vld [vmem:[%s1813] sm:$0xff]
        %v4236 = vld [vmem:[%s1813 + $0x8] sm:$0xff]
        %v4237 = vld [vmem:[%s1813 + $0x10] sm:$0xff]
        %v4238 = vld [vmem:[%s1813 + $0x18] sm:$0xff]
        %v4239 = vld [vmem:[%s1813 + $0x20] sm:$0xff]
        %v4240 = vld [vmem:[%s1813 + $0x28] sm:$0xff]
        %v4241 = vld [vmem:[%s1813 + $0x30] sm:$0xff]
        %v4242 = vld [vmem:[%s1813 + $0x38] sm:$0xff]
        %v4243 = vld [vmem:[%s1813 + $0x40] sm:$0xff]
        %v4244 = vld [vmem:[%s1813 + $0x48] sm:$0xff]
        %v4245 = vld [vmem:[%s1813 + $0x50] sm:$0xff]
        %v4246 = vld [vmem:[%s1813 + $0x58] sm:$0xff]
        %v4248 = vsel %vm316, %v4235, 0
        %v4251 = vsel %vm316, %v4236, 0
        %v4254 = vsel %vm316, %v4237, 0
        %v4257 = vsel %vm316, %v4238, 0
        %v4260 = vsel %vm316, %v4239, 0
        %v4263 = vsel %vm316, %v4240, 0
        %v4266 = vsel %vm316, %v4241, 0
        %v4269 = vsel %vm316, %v4242, 0
        %v4272 = vsel %vm316, %v4243, 0
        %v4275 = vsel %vm316, %v4244, 0
        %v4278 = vsel %vm316, %v4245, 0
        %v4281 = vsel %vm316, %v4246, 0
        %4283 = vmatprep.subr.mxu0 0.0
        %4284 = vmatpush1.msra.mxu0 0.0
        %4285 = vmatprep.subr.mxu0 0.0
        %4286 = vmatpush1.msra.mxu0 0.0
        %4287 = vmatprep.subr.mxu0 0.0
        %4288 = vmatpush1.msra.mxu0 0.0
        %4289 = vmatprep.subr.mxu0 0.0
        %4290 = vmatpush1.msra.mxu0 0.0
        %4291 = vmatprep.subr.mxu0 0.0
        %4292 = vmatpush1.msra.mxu0 0.0
        %4293 = vmatprep.subr.mxu0 0.0
        %4294 = vmatpush1.msra.mxu0 0.0
        %4295 = vmatprep.subr.mxu0 0.0
        %4296 = vmatpush1.msra.mxu0 0.0
        %4297 = vmatprep.subr.mxu0 0.0
        %4298 = vmatpush1.msra.mxu0 0.0
        %4299 = vmatprep.subr.mxu0 0.0
        %4300 = vmatpush1.msra.mxu0 0.0
        %4301 = vmatprep.subr.mxu0 0.0
        %4302 = vmatpush1.msra.mxu0 0.0
        %4303 = vmatprep.subr.mxu0 0.0
        %4304 = vmatpush1.msra.mxu0 0.0
        %4305 = vmatprep.subr.mxu0 0.0
        %4306 = vmatpush1.msra.mxu0 0.0
        %4307 = vmatprep.subr.mxu0 %v4234
        %4308 = vmatpush1.msra.mxu0 %v4233
        %4309 = vmatprep.subr.mxu0 %v4232
        %4310 = vmatpush1.msra.mxu0 %v4231
        %4311 = vmatprep.subr.mxu0 %v4230
        %4312 = vmatpush1.msra.mxu0 %v4229
        %4313 = vmatprep.subr.mxu0 %v4228
        %4314 = vmatpush1.msra.mxu0 %v4227
        %4315 = vmatprep.subr.mxu0 0.0
        %4316 = vmatpush2.msra.mxu0 0.0
        %4317 = vmatprep.subr.mxu0 0.0
        %4318 = vmatpush2.msra.mxu0 0.0
        %4319 = vmatprep.subr.mxu0 0.0
        %4320 = vmatpush2.msra.mxu0 0.0
        %4321 = vmatprep.subr.mxu0 0.0
        %4322 = vmatpush2.msra.mxu0 0.0
        %4323 = vmatprep.subr.mxu0 0.0
        %4324 = vmatpush2.msra.mxu0 0.0
        %4325 = vmatprep.subr.mxu0 0.0
        %4326 = vmatpush2.msra.mxu0 0.0
        %4327 = vmatprep.subr.mxu0 0.0
        %4328 = vmatpush2.msra.mxu0 0.0
        %4329 = vmatprep.subr.mxu0 0.0
        %4330 = vmatpush2.msra.mxu0 0.0
        %4331 = vmatprep.subr.mxu0 0.0
        %4332 = vmatpush2.msra.mxu0 0.0
        %4333 = vmatprep.subr.mxu0 0.0
        %4334 = vmatpush2.msra.mxu0 0.0
        %4335 = vmatprep.subr.mxu0 0.0
        %4336 = vmatpush2.msra.mxu0 0.0
        %4337 = vmatprep.subr.mxu0 0.0
        %4338 = vmatpush2.msra.mxu0 0.0
        %4339 = vmatprep.subr.mxu0 0.0
        %4340 = vmatpush2.msra.mxu0 0.0
        %4341 = vmatprep.subr.mxu0 0.0
        %4342 = vmatpush2.msra.mxu0 0.0
        %4343 = vmatprep.subr.mxu0 0.0
        %4344 = vmatpush2.msra.mxu0 0.0
        %4345 = vmatprep.subr.mxu0 0.0
        %4346 = vmatpush2.msra.mxu0 0.0
        %4347 = vmatprep.mubr.f32.mxu0 0.0
        %4348 = vmatmul.mubr.f32.gmra.mxu0 %v4248
        %v4349 = vpop.f32.mrf.mxu0
        %v4350 = vadd.f32 0.0, %v4349
        %v4351 = vpop.f32.mrf.mxu0
        %v4352 = vadd.f32 0.0, %v4351
        %4353 = vmatprep.mubr.f32.mxu0 0.0
        %4354 = vmatmul.mubr.f32.gmra.mxu0 %v4251
        %v4355 = vpop.f32.mrf.mxu0
        %v4356 = vadd.f32 0.0, %v4355
        %v4357 = vpop.f32.mrf.mxu0
        %v4358 = vadd.f32 0.0, %v4357
        %4359 = vmatprep.mubr.f32.mxu0 0.0
        %4360 = vmatmul.mubr.f32.gmra.mxu0 %v4254
        %v4361 = vpop.f32.mrf.mxu0
        %v4362 = vadd.f32 0.0, %v4361
        %v4363 = vpop.f32.mrf.mxu0
        %v4364 = vadd.f32 0.0, %v4363
        %4365 = vmatprep.mubr.f32.mxu0 0.0
        %4366 = vmatmul.mubr.f32.gmra.mxu0 %v4257
        %v4367 = vpop.f32.mrf.mxu0
        %v4368 = vadd.f32 0.0, %v4367
        %v4369 = vpop.f32.mrf.mxu0
        %v4370 = vadd.f32 0.0, %v4369
        %4371 = vmatprep.mubr.f32.mxu0 0.0
        %4372 = vmatmul.mubr.f32.gmra.mxu0 %v4260
        %v4373 = vpop.f32.mrf.mxu0
        %v4374 = vadd.f32 0.0, %v4373
        %v4375 = vpop.f32.mrf.mxu0
        %v4376 = vadd.f32 0.0, %v4375
        %4377 = vmatprep.mubr.f32.mxu0 0.0
        %4378 = vmatmul.mubr.f32.gmra.mxu0 %v4263
        %v4379 = vpop.f32.mrf.mxu0
        %v4380 = vadd.f32 0.0, %v4379
        %v4381 = vpop.f32.mrf.mxu0
        %v4382 = vadd.f32 0.0, %v4381
        %4383 = vmatprep.mubr.f32.mxu0 0.0
        %4384 = vmatmul.mubr.f32.gmra.mxu0 %v4266
        %v4385 = vpop.f32.mrf.mxu0
        %v4386 = vadd.f32 0.0, %v4385
        %v4387 = vpop.f32.mrf.mxu0
        %v4388 = vadd.f32 0.0, %v4387
        %4389 = vmatprep.mubr.f32.mxu0 0.0
        %4390 = vmatmul.mubr.f32.gmra.mxu0 %v4269
        %v4391 = vpop.f32.mrf.mxu0
        %v4392 = vadd.f32 0.0, %v4391
        %v4393 = vpop.f32.mrf.mxu0
        %v4394 = vadd.f32 0.0, %v4393
        %4395 = vmatprep.mubr.f32.mxu0 0.0
        %4396 = vmatmul.mubr.f32.gmra.mxu0 %v4272
        %v4397 = vpop.f32.mrf.mxu0
        %v4398 = vadd.f32 0.0, %v4397
        %v4399 = vpop.f32.mrf.mxu0
        %v4400 = vadd.f32 0.0, %v4399
        %4401 = vmatprep.mubr.f32.mxu0 0.0
        %4402 = vmatmul.mubr.f32.gmra.mxu0 %v4275
        %v4403 = vpop.f32.mrf.mxu0
        %v4404 = vadd.f32 0.0, %v4403
        %v4405 = vpop.f32.mrf.mxu0
        %v4406 = vadd.f32 0.0, %v4405
        %4407 = vmatprep.mubr.f32.mxu0 0.0
        %4408 = vmatmul.mubr.f32.gmra.mxu0 %v4278
        %v4409 = vpop.f32.mrf.mxu0
        %v4410 = vadd.f32 0.0, %v4409
        %v4411 = vpop.f32.mrf.mxu0
        %v4412 = vadd.f32 0.0, %v4411
        %4413 = vmatprep.mubr.f32.mxu0 0.0
        %4414 = vmatmul.mubr.f32.gmra.mxu0 %v4281
        %v4415 = vpop.f32.mrf.mxu0
        %v4416 = vadd.f32 0.0, %v4415
        %v4417 = vpop.f32.mrf.mxu0
        %v4418 = vadd.f32 0.0, %v4417
        %4419 = vdwg.mxu0
        %v4420 = vadd.f32 %v4171, %v4350
        %v4421 = vadd.f32 %v4172, %v4352
        %v4422 = vadd.f32 %v4173, %v4356
        %v4423 = vadd.f32 %v4174, %v4358
        %v4424 = vadd.f32 %v4175, %v4362
        %v4425 = vadd.f32 %v4176, %v4364
        %v4426 = vadd.f32 %v4177, %v4368
        %v4427 = vadd.f32 %v4178, %v4370
        %v4428 = vadd.f32 %v4179, %v4374
        %v4429 = vadd.f32 %v4180, %v4376
        %v4430 = vadd.f32 %v4181, %v4380
        %v4431 = vadd.f32 %v4182, %v4382
        %v4432 = vadd.f32 %v4183, %v4386
        %v4433 = vadd.f32 %v4184, %v4388
        %v4434 = vadd.f32 %v4185, %v4392
        %v4435 = vadd.f32 %v4186, %v4394
        %v4436 = vadd.f32 %v4187, %v4398
        %v4437 = vadd.f32 %v4188, %v4400
        %v4438 = vadd.f32 %v4189, %v4404
        %v4439 = vadd.f32 %v4190, %v4406
        %v4440 = vadd.f32 %v4191, %v4410
        %v4441 = vadd.f32 %v4192, %v4412
        %v4442 = vadd.f32 %v4193, %v4416
        %v4443 = vadd.f32 %v4194, %v4418
        %4444 = vrot.lane.b32.xlu0 %v2453, 111
        %v4445 = vpop.permute.xlu0 %4444
        %4446 = vrot.lane.b32.xlu0 %v2455, 111
        %v4447 = vpop.permute.xlu0 %4446
        %4448 = vrot.lane.b32.xlu0 %v2457, 111
        %v4449 = vpop.permute.xlu0 %4448
        %4450 = vrot.lane.b32.xlu0 %v2459, 111
        %v4451 = vpop.permute.xlu0 %4450
        %4452 = vrot.lane.b32.xlu0 %v2454, 111
        %v4453 = vpop.permute.xlu0 %4452
        %4454 = vrot.lane.b32.xlu0 %v2456, 111
        %v4455 = vpop.permute.xlu0 %4454
        %4456 = vrot.lane.b32.xlu0 %v2458, 111
        %v4457 = vpop.permute.xlu0 %4456
        %4458 = vrot.lane.b32.xlu0 %v2460, 111
        %v4459 = vpop.permute.xlu0 %4458
        %v4460 = vsel %vm2025, %v4445, %v4453
        %v4461 = vsel %vm2025, %v4447, %v4455
        %v4462 = vsel %vm2025, %v4449, %v4457
        %v4463 = vsel %vm2025, %v4451, %v4459
        %v4464 = vsel %vm2025, %v4453, %v4445
        %v4465 = vsel %vm2025, %v4455, %v4447
        %v4466 = vsel %vm2025, %v4457, %v4449
        %v4467 = vsel %vm2025, %v4459, %v4451
        %v4468 = vld [vmem:[%s2026] sm:$0xff]
        %v4469 = vld [vmem:[%s2026 + $0x8] sm:$0xff]
        %v4470 = vld [vmem:[%s2026 + $0x10] sm:$0xff]
        %v4471 = vld [vmem:[%s2026 + $0x18] sm:$0xff]
        %v4472 = vld [vmem:[%s2026 + $0x20] sm:$0xff]
        %v4473 = vld [vmem:[%s2026 + $0x28] sm:$0xff]
        %v4474 = vld [vmem:[%s2026 + $0x30] sm:$0xff]
        %v4475 = vld [vmem:[%s2026 + $0x38] sm:$0xff]
        %v4476 = vmul.f32 %v4460, %v4468
        %v4477 = vmul.f32 %v4464, %v4469
        %v4478 = vmul.f32 %v4461, %v4470
        %v4479 = vmul.f32 %v4465, %v4471
        %v4480 = vmul.f32 %v4462, %v4472
        %v4481 = vmul.f32 %v4466, %v4473
        %v4482 = vmul.f32 %v4463, %v4474
        %v4483 = vmul.f32 %v4467, %v4475
        %v4484 = vld [vmem:[%s2043] sm:$0xff]
        %v4485 = vld [vmem:[%s2043 + $0x8] sm:$0xff]
        %v4486 = vld [vmem:[%s2043 + $0x10] sm:$0xff]
        %v4487 = vld [vmem:[%s2043 + $0x18] sm:$0xff]
        %v4488 = vld [vmem:[%s2043 + $0x20] sm:$0xff]
        %v4489 = vld [vmem:[%s2043 + $0x28] sm:$0xff]
        %v4490 = vld [vmem:[%s2043 + $0x30] sm:$0xff]
        %v4491 = vld [vmem:[%s2043 + $0x38] sm:$0xff]
        %v4492 = vld [vmem:[%s2043 + $0x40] sm:$0xff]
        %v4493 = vld [vmem:[%s2043 + $0x48] sm:$0xff]
        %v4494 = vld [vmem:[%s2043 + $0x50] sm:$0xff]
        %v4495 = vld [vmem:[%s2043 + $0x58] sm:$0xff]
        %v4497 = vsel %vm316, %v4484, 0
        %v4500 = vsel %vm316, %v4485, 0
        %v4503 = vsel %vm316, %v4486, 0
        %v4506 = vsel %vm316, %v4487, 0
        %v4509 = vsel %vm316, %v4488, 0
        %v4512 = vsel %vm316, %v4489, 0
        %v4515 = vsel %vm316, %v4490, 0
        %v4518 = vsel %vm316, %v4491, 0
        %v4521 = vsel %vm316, %v4492, 0
        %v4524 = vsel %vm316, %v4493, 0
        %v4527 = vsel %vm316, %v4494, 0
        %v4530 = vsel %vm316, %v4495, 0
        %4532 = vmatprep.subr.mxu0 0.0
        %4533 = vmatpush1.msra.mxu0 0.0
        %4534 = vmatprep.subr.mxu0 0.0
        %4535 = vmatpush1.msra.mxu0 0.0
        %4536 = vmatprep.subr.mxu0 0.0
        %4537 = vmatpush1.msra.mxu0 0.0
        %4538 = vmatprep.subr.mxu0 0.0
        %4539 = vmatpush1.msra.mxu0 0.0
        %4540 = vmatprep.subr.mxu0 0.0
        %4541 = vmatpush1.msra.mxu0 0.0
        %4542 = vmatprep.subr.mxu0 0.0
        %4543 = vmatpush1.msra.mxu0 0.0
        %4544 = vmatprep.subr.mxu0 0.0
        %4545 = vmatpush1.msra.mxu0 0.0
        %4546 = vmatprep.subr.mxu0 0.0
        %4547 = vmatpush1.msra.mxu0 0.0
        %4548 = vmatprep.subr.mxu0 0.0
        %4549 = vmatpush1.msra.mxu0 0.0
        %4550 = vmatprep.subr.mxu0 0.0
        %4551 = vmatpush1.msra.mxu0 0.0
        %4552 = vmatprep.subr.mxu0 0.0
        %4553 = vmatpush1.msra.mxu0 0.0
        %4554 = vmatprep.subr.mxu0 0.0
        %4555 = vmatpush1.msra.mxu0 0.0
        %4556 = vmatprep.subr.mxu0 %v4483
        %4557 = vmatpush1.msra.mxu0 %v4482
        %4558 = vmatprep.subr.mxu0 %v4481
        %4559 = vmatpush1.msra.mxu0 %v4480
        %4560 = vmatprep.subr.mxu0 %v4479
        %4561 = vmatpush1.msra.mxu0 %v4478
        %4562 = vmatprep.subr.mxu0 %v4477
        %4563 = vmatpush1.msra.mxu0 %v4476
        %4564 = vmatprep.subr.mxu0 0.0
        %4565 = vmatpush2.msra.mxu0 0.0
        %4566 = vmatprep.subr.mxu0 0.0
        %4567 = vmatpush2.msra.mxu0 0.0
        %4568 = vmatprep.subr.mxu0 0.0
        %4569 = vmatpush2.msra.mxu0 0.0
        %4570 = vmatprep.subr.mxu0 0.0
        %4571 = vmatpush2.msra.mxu0 0.0
        %4572 = vmatprep.subr.mxu0 0.0
        %4573 = vmatpush2.msra.mxu0 0.0
        %4574 = vmatprep.subr.mxu0 0.0
        %4575 = vmatpush2.msra.mxu0 0.0
        %4576 = vmatprep.subr.mxu0 0.0
        %4577 = vmatpush2.msra.mxu0 0.0
        %4578 = vmatprep.subr.mxu0 0.0
        %4579 = vmatpush2.msra.mxu0 0.0
        %4580 = vmatprep.subr.mxu0 0.0
        %4581 = vmatpush2.msra.mxu0 0.0
        %4582 = vmatprep.subr.mxu0 0.0
        %4583 = vmatpush2.msra.mxu0 0.0
        %4584 = vmatprep.subr.mxu0 0.0
        %4585 = vmatpush2.msra.mxu0 0.0
        %4586 = vmatprep.subr.mxu0 0.0
        %4587 = vmatpush2.msra.mxu0 0.0
        %4588 = vmatprep.subr.mxu0 0.0
        %4589 = vmatpush2.msra.mxu0 0.0
        %4590 = vmatprep.subr.mxu0 0.0
        %4591 = vmatpush2.msra.mxu0 0.0
        %4592 = vmatprep.subr.mxu0 0.0
        %4593 = vmatpush2.msra.mxu0 0.0
        %4594 = vmatprep.subr.mxu0 0.0
        %4595 = vmatpush2.msra.mxu0 0.0
        %4596 = vmatprep.mubr.f32.mxu0 0.0
        %4597 = vmatmul.mubr.f32.gmra.mxu0 %v4497
        %v4598 = vpop.f32.mrf.mxu0
        %v4599 = vadd.f32 0.0, %v4598
        %v4600 = vpop.f32.mrf.mxu0
        %v4601 = vadd.f32 0.0, %v4600
        %4602 = vmatprep.mubr.f32.mxu0 0.0
        %4603 = vmatmul.mubr.f32.gmra.mxu0 %v4500
        %v4604 = vpop.f32.mrf.mxu0
        %v4605 = vadd.f32 0.0, %v4604
        %v4606 = vpop.f32.mrf.mxu0
        %v4607 = vadd.f32 0.0, %v4606
        %4608 = vmatprep.mubr.f32.mxu0 0.0
        %4609 = vmatmul.mubr.f32.gmra.mxu0 %v4503
        %v4610 = vpop.f32.mrf.mxu0
        %v4611 = vadd.f32 0.0, %v4610
        %v4612 = vpop.f32.mrf.mxu0
        %v4613 = vadd.f32 0.0, %v4612
        %4614 = vmatprep.mubr.f32.mxu0 0.0
        %4615 = vmatmul.mubr.f32.gmra.mxu0 %v4506
        %v4616 = vpop.f32.mrf.mxu0
        %v4617 = vadd.f32 0.0, %v4616
        %v4618 = vpop.f32.mrf.mxu0
        %v4619 = vadd.f32 0.0, %v4618
        %4620 = vmatprep.mubr.f32.mxu0 0.0
        %4621 = vmatmul.mubr.f32.gmra.mxu0 %v4509
        %v4622 = vpop.f32.mrf.mxu0
        %v4623 = vadd.f32 0.0, %v4622
        %v4624 = vpop.f32.mrf.mxu0
        %v4625 = vadd.f32 0.0, %v4624
        %4626 = vmatprep.mubr.f32.mxu0 0.0
        %4627 = vmatmul.mubr.f32.gmra.mxu0 %v4512
        %v4628 = vpop.f32.mrf.mxu0
        %v4629 = vadd.f32 0.0, %v4628
        %v4630 = vpop.f32.mrf.mxu0
        %v4631 = vadd.f32 0.0, %v4630
        %4632 = vmatprep.mubr.f32.mxu0 0.0
        %4633 = vmatmul.mubr.f32.gmra.mxu0 %v4515
        %v4634 = vpop.f32.mrf.mxu0
        %v4635 = vadd.f32 0.0, %v4634
        %v4636 = vpop.f32.mrf.mxu0
        %v4637 = vadd.f32 0.0, %v4636
        %4638 = vmatprep.mubr.f32.mxu0 0.0
        %4639 = vmatmul.mubr.f32.gmra.mxu0 %v4518
        %v4640 = vpop.f32.mrf.mxu0
        %v4641 = vadd.f32 0.0, %v4640
        %v4642 = vpop.f32.mrf.mxu0
        %v4643 = vadd.f32 0.0, %v4642
        %4644 = vmatprep.mubr.f32.mxu0 0.0
        %4645 = vmatmul.mubr.f32.gmra.mxu0 %v4521
        %v4646 = vpop.f32.mrf.mxu0
        %v4647 = vadd.f32 0.0, %v4646
        %v4648 = vpop.f32.mrf.mxu0
        %v4649 = vadd.f32 0.0, %v4648
        %4650 = vmatprep.mubr.f32.mxu0 0.0
        %4651 = vmatmul.mubr.f32.gmra.mxu0 %v4524
        %v4652 = vpop.f32.mrf.mxu0
        %v4653 = vadd.f32 0.0, %v4652
        %v4654 = vpop.f32.mrf.mxu0
        %v4655 = vadd.f32 0.0, %v4654
        %4656 = vmatprep.mubr.f32.mxu0 0.0
        %4657 = vmatmul.mubr.f32.gmra.mxu0 %v4527
        %v4658 = vpop.f32.mrf.mxu0
        %v4659 = vadd.f32 0.0, %v4658
        %v4660 = vpop.f32.mrf.mxu0
        %v4661 = vadd.f32 0.0, %v4660
        %4662 = vmatprep.mubr.f32.mxu0 0.0
        %4663 = vmatmul.mubr.f32.gmra.mxu0 %v4530
        %v4664 = vpop.f32.mrf.mxu0
        %v4665 = vadd.f32 0.0, %v4664
        %v4666 = vpop.f32.mrf.mxu0
        %v4667 = vadd.f32 0.0, %v4666
        %4668 = vdwg.mxu0
        %v4669 = vadd.f32 %v4420, %v4599
        %v4670 = vadd.f32 %v4421, %v4601
        %v4671 = vadd.f32 %v4422, %v4605
        %v4672 = vadd.f32 %v4423, %v4607
        %v4673 = vadd.f32 %v4424, %v4611
        %v4674 = vadd.f32 %v4425, %v4613
        %v4675 = vadd.f32 %v4426, %v4617
        %v4676 = vadd.f32 %v4427, %v4619
        %v4677 = vadd.f32 %v4428, %v4623
        %v4678 = vadd.f32 %v4429, %v4625
        %v4679 = vadd.f32 %v4430, %v4629
        %v4680 = vadd.f32 %v4431, %v4631
        %v4681 = vadd.f32 %v4432, %v4635
        %v4682 = vadd.f32 %v4433, %v4637
        %v4683 = vadd.f32 %v4434, %v4641
        %v4684 = vadd.f32 %v4435, %v4643
        %v4685 = vadd.f32 %v4436, %v4647
        %v4686 = vadd.f32 %v4437, %v4649
        %v4687 = vadd.f32 %v4438, %v4653
        %v4688 = vadd.f32 %v4439, %v4655
        %v4689 = vadd.f32 %v4440, %v4659
        %v4690 = vadd.f32 %v4441, %v4661
        %v4691 = vadd.f32 %v4442, %v4665
        %v4692 = vadd.f32 %v4443, %v4667
        %v4693 = vld [vmem:[%s249] sm:$0xff]
        %v4694 = vld [vmem:[%s249 + $0x8] sm:$0xff]
        %v4695 = vld [vmem:[%s249 + $0x10] sm:$0xff]
        %v4696 = vld [vmem:[%s249 + $0x18] sm:$0xff]
        %v4697 = vld [vmem:[%s249 + $0x20] sm:$0xff]
        %v4698 = vld [vmem:[%s249 + $0x28] sm:$0xff]
        %v4699 = vld [vmem:[%s249 + $0x30] sm:$0xff]
        %v4700 = vld [vmem:[%s249 + $0x38] sm:$0xff]
        %v4701 = vld [vmem:[%s249 + $0x40] sm:$0xff]
        %v4702 = vld [vmem:[%s249 + $0x48] sm:$0xff]
        %v4703 = vld [vmem:[%s249 + $0x50] sm:$0xff]
        %v4704 = vld [vmem:[%s249 + $0x58] sm:$0xff]
        %v4705 = vld [vmem:[%s249 + $0x60] sm:$0xff]
        %v4706 = vld [vmem:[%s249 + $0x68] sm:$0xff]
        %v4707 = vld [vmem:[%s249 + $0x70] sm:$0xff]
        %v4708 = vld [vmem:[%s249 + $0x78] sm:$0xff]
        %v4709 = vadd.f32 %v4693, %v4669
        %v4710 = vadd.f32 %v4694, %v4670
        %v4711 = vadd.f32 %v4695, %v4671
        %v4712 = vadd.f32 %v4696, %v4672
        %v4713 = vadd.f32 %v4697, %v4673
        %v4714 = vadd.f32 %v4698, %v4674
        %v4715 = vadd.f32 %v4699, %v4675
        %v4716 = vadd.f32 %v4700, %v4676
        %v4717 = vadd.f32 %v4701, %v4677
        %v4718 = vadd.f32 %v4702, %v4678
        %v4719 = vadd.f32 %v4703, %v4679
        %v4720 = vadd.f32 %v4704, %v4680
        %v4721 = vadd.f32 %v4705, %v4681
        %v4722 = vadd.f32 %v4706, %v4682
        %v4723 = vadd.f32 %v4707, %v4683
        %v4724 = vadd.f32 %v4708, %v4684
        %v4725 = vxor.u32 %v4709, 2147483648
        %v4726 = vxor.u32 %v4710, 2147483648
        %v4727 = vxor.u32 %v4711, 2147483648
        %v4728 = vxor.u32 %v4712, 2147483648
        %v4729 = vxor.u32 %v4713, 2147483648
        %v4730 = vxor.u32 %v4714, 2147483648
        %v4731 = vxor.u32 %v4715, 2147483648
        %v4732 = vxor.u32 %v4716, 2147483648
        %v4733 = vxor.u32 %v4717, 2147483648
        %v4734 = vxor.u32 %v4718, 2147483648
        %v4735 = vxor.u32 %v4719, 2147483648
        %v4736 = vxor.u32 %v4720, 2147483648
        %v4737 = vxor.u32 %v4721, 2147483648
        %v4738 = vxor.u32 %v4722, 2147483648
        %v4739 = vxor.u32 %v4723, 2147483648
        %v4740 = vxor.u32 %v4724, 2147483648
        %v4741 = vmul.f32 %v4725, 1.442695
        %v4742 = vpow.pop %v4741
        %v4743 = vmul.f32 %v4726, 1.442695
        %v4744 = vpow.pop %v4743
        %v4745 = vmul.f32 %v4727, 1.442695
        %v4746 = vpow.pop %v4745
        %v4747 = vmul.f32 %v4728, 1.442695
        %v4748 = vpow.pop %v4747
        %v4749 = vmul.f32 %v4729, 1.442695
        %v4750 = vpow.pop %v4749
        %v4751 = vmul.f32 %v4730, 1.442695
        %v4752 = vpow.pop %v4751
        %v4753 = vmul.f32 %v4731, 1.442695
        %v4754 = vpow.pop %v4753
        %v4755 = vmul.f32 %v4732, 1.442695
        %v4756 = vpow.pop %v4755
        %v4757 = vmul.f32 %v4733, 1.442695
        %v4758 = vpow.pop %v4757
        %v4759 = vmul.f32 %v4734, 1.442695
        %v4760 = vpow.pop %v4759
        %v4761 = vmul.f32 %v4735, 1.442695
        %v4762 = vpow.pop %v4761
        %v4763 = vmul.f32 %v4736, 1.442695
        %v4764 = vpow.pop %v4763
        %v4765 = vmul.f32 %v4737, 1.442695
        %v4766 = vpow.pop %v4765
        %v4767 = vmul.f32 %v4738, 1.442695
        %v4768 = vpow.pop %v4767
        %v4769 = vmul.f32 %v4739, 1.442695
        %v4770 = vpow.pop %v4769
        %v4771 = vmul.f32 %v4740, 1.442695
        %v4772 = vpow.pop %v4771
        %v4773 = vadd.f32 %v4742, 1.0
        %v4774 = vadd.f32 %v4744, 1.0
        %v4775 = vadd.f32 %v4746, 1.0
        %v4776 = vadd.f32 %v4748, 1.0
        %v4777 = vadd.f32 %v4750, 1.0
        %v4778 = vadd.f32 %v4752, 1.0
        %v4779 = vadd.f32 %v4754, 1.0
        %v4780 = vadd.f32 %v4756, 1.0
        %v4781 = vadd.f32 %v4758, 1.0
        %v4782 = vadd.f32 %v4760, 1.0
        %v4783 = vadd.f32 %v4762, 1.0
        %v4784 = vadd.f32 %v4764, 1.0
        %v4785 = vadd.f32 %v4766, 1.0
        %v4786 = vadd.f32 %v4768, 1.0
        %v4787 = vadd.f32 %v4770, 1.0
        %v4788 = vadd.f32 %v4772, 1.0
        %v4789 = vrcp.pop %v4773
        %v4790 = vmul.f32 1.0, %v4789
        %v4791 = vrcp.pop %v4774
        %v4792 = vmul.f32 1.0, %v4791
        %v4793 = vrcp.pop %v4775
        %v4794 = vmul.f32 1.0, %v4793
        %v4795 = vrcp.pop %v4776
        %v4796 = vmul.f32 1.0, %v4795
        %v4797 = vrcp.pop %v4777
        %v4798 = vmul.f32 1.0, %v4797
        %v4799 = vrcp.pop %v4778
        %v4800 = vmul.f32 1.0, %v4799
        %v4801 = vrcp.pop %v4779
        %v4802 = vmul.f32 1.0, %v4801
        %v4803 = vrcp.pop %v4780
        %v4804 = vmul.f32 1.0, %v4803
        %v4805 = vrcp.pop %v4781
        %v4806 = vmul.f32 1.0, %v4805
        %v4807 = vrcp.pop %v4782
        %v4808 = vmul.f32 1.0, %v4807
        %v4809 = vrcp.pop %v4783
        %v4810 = vmul.f32 1.0, %v4809
        %v4811 = vrcp.pop %v4784
        %v4812 = vmul.f32 1.0, %v4811
        %v4813 = vrcp.pop %v4785
        %v4814 = vmul.f32 1.0, %v4813
        %v4815 = vrcp.pop %v4786
        %v4816 = vmul.f32 1.0, %v4815
        %v4817 = vrcp.pop %v4787
        %v4818 = vmul.f32 1.0, %v4817
        %v4819 = vrcp.pop %v4788
        %v4820 = vmul.f32 1.0, %v4819
        %v4821 = vld [vmem:[%s249 + $0x80] sm:$0xff]
        %v4822 = vld [vmem:[%s249 + $0x88] sm:$0xff]
        %v4823 = vld [vmem:[%s249 + $0x90] sm:$0xff]
        %v4824 = vld [vmem:[%s249 + $0x98] sm:$0xff]
        %v4825 = vld [vmem:[%s249 + $0xa0] sm:$0xff]
        %v4826 = vld [vmem:[%s249 + $0xa8] sm:$0xff]
        %v4827 = vld [vmem:[%s249 + $0xb0] sm:$0xff]
        %v4828 = vld [vmem:[%s249 + $0xb8] sm:$0xff]
        %v4829 = vld [vmem:[%s2] sm:$0xff]
        %v4830 = vld [vmem:[%s2 + $0x8] sm:$0xff]
        %v4831 = vld [vmem:[%s2 + $0x10] sm:$0xff]
        %v4832 = vld [vmem:[%s2 + $0x18] sm:$0xff]
        %v4833 = vld [vmem:[%s2 + $0x20] sm:$0xff]
        %v4834 = vld [vmem:[%s2 + $0x28] sm:$0xff]
        %v4835 = vld [vmem:[%s2 + $0x30] sm:$0xff]
        %v4836 = vld [vmem:[%s2 + $0x38] sm:$0xff]
        %v4837 = vadd.f32 %v4685, %v4829
        %v4838 = vadd.f32 %v4686, %v4830
        %v4839 = vadd.f32 %v4687, %v4831
        %v4840 = vadd.f32 %v4688, %v4832
        %v4841 = vadd.f32 %v4689, %v4833
        %v4842 = vadd.f32 %v4690, %v4834
        %v4843 = vadd.f32 %v4691, %v4835
        %v4844 = vadd.f32 %v4692, %v4836
        %v4845 = vmul.f32 %v4806, %v4837
        %v4846 = vmul.f32 %v4808, %v4838
        %v4847 = vmul.f32 %v4810, %v4839
        %v4848 = vmul.f32 %v4812, %v4840
        %v4849 = vmul.f32 %v4814, %v4841
        %v4850 = vmul.f32 %v4816, %v4842
        %v4851 = vmul.f32 %v4818, %v4843
        %v4852 = vmul.f32 %v4820, %v4844
        %v4853 = vadd.f32 %v4821, %v4845
        %v4854 = vadd.f32 %v4822, %v4846
        %v4855 = vadd.f32 %v4823, %v4847
        %v4856 = vadd.f32 %v4824, %v4848
        %v4857 = vadd.f32 %v4825, %v4849
        %v4858 = vadd.f32 %v4826, %v4850
        %v4859 = vadd.f32 %v4827, %v4851
        %v4860 = vadd.f32 %v4828, %v4852
        %v4861 = vtanh.pop %v4853
        %v4862 = vtanh.pop %v4854
        %v4863 = vtanh.pop %v4855
        %v4864 = vtanh.pop %v4856
        %v4865 = vtanh.pop %v4857
        %v4866 = vtanh.pop %v4858
        %v4867 = vtanh.pop %v4859
        %v4868 = vtanh.pop %v4860
        %v4869 = vsub.f32 1.0, %v4790
        %v4870 = vsub.f32 1.0, %v4792
        %v4871 = vsub.f32 1.0, %v4794
        %v4872 = vsub.f32 1.0, %v4796
        %v4873 = vsub.f32 1.0, %v4798
        %v4874 = vsub.f32 1.0, %v4800
        %v4875 = vsub.f32 1.0, %v4802
        %v4876 = vsub.f32 1.0, %v4804
        %v4877 = vmul.f32 %v4869, %v4861
        %v4878 = vmul.f32 %v4870, %v4862
        %v4879 = vmul.f32 %v4871, %v4863
        %v4880 = vmul.f32 %v4872, %v4864
        %v4881 = vmul.f32 %v4873, %v4865
        %v4882 = vmul.f32 %v4874, %v4866
        %v4883 = vmul.f32 %v4875, %v4867
        %v4884 = vmul.f32 %v4876, %v4868
        %v4885 = vmul.f32 %v4790, %v2453
        %v4886 = vmul.f32 %v4792, %v2454
        %v4887 = vmul.f32 %v4794, %v2455
        %v4888 = vmul.f32 %v4796, %v2456
        %v4889 = vmul.f32 %v4798, %v2457
        %v4890 = vmul.f32 %v4800, %v2458
        %v4891 = vmul.f32 %v4802, %v2459
        %v4892 = vmul.f32 %v4804, %v2460
        %v4893 = vadd.f32 %v4877, %v4885
        %v4894 = vadd.f32 %v4878, %v4886
        %v4895 = vadd.f32 %v4879, %v4887
        %v4896 = vadd.f32 %v4880, %v4888
        %v4897 = vadd.f32 %v4881, %v4889
        %v4898 = vadd.f32 %v4882, %v4890
        %v4899 = vadd.f32 %v4883, %v4891
        %v4900 = vadd.f32 %v4884, %v4892
        %v4901 = vld [vmem:[%s4] sm:$0xff]
        %v4902 = vld [vmem:[%s5] sm:$0xff]
        %v4903 = vld [vmem:[%s5 + $0x8] sm:$0xff]
        %v4905 = vsel %vm316, %v4901, 0
        %4907 = vmatprep.subr.mxu0 0.0
        %4908 = vmatpush1.msra.mxu0 0.0
        %4909 = vmatprep.subr.mxu0 0.0
        %4910 = vmatpush1.msra.mxu0 0.0
        %4911 = vmatprep.subr.mxu0 0.0
        %4912 = vmatpush1.msra.mxu0 0.0
        %4913 = vmatprep.subr.mxu0 0.0
        %4914 = vmatpush1.msra.mxu0 0.0
        %4915 = vmatprep.subr.mxu0 0.0
        %4916 = vmatpush1.msra.mxu0 0.0
        %4917 = vmatprep.subr.mxu0 0.0
        %4918 = vmatpush1.msra.mxu0 0.0
        %4919 = vmatprep.subr.mxu0 0.0
        %4920 = vmatpush1.msra.mxu0 0.0
        %4921 = vmatprep.subr.mxu0 0.0
        %4922 = vmatpush1.msra.mxu0 0.0
        %4923 = vmatprep.subr.mxu0 0.0
        %4924 = vmatpush1.msra.mxu0 0.0
        %4925 = vmatprep.subr.mxu0 0.0
        %4926 = vmatpush1.msra.mxu0 0.0
        %4927 = vmatprep.subr.mxu0 0.0
        %4928 = vmatpush1.msra.mxu0 0.0
        %4929 = vmatprep.subr.mxu0 0.0
        %4930 = vmatpush1.msra.mxu0 0.0
        %4931 = vmatprep.subr.mxu0 %v4900
        %4932 = vmatpush1.msra.mxu0 %v4899
        %4933 = vmatprep.subr.mxu0 %v4898
        %4934 = vmatpush1.msra.mxu0 %v4897
        %4935 = vmatprep.subr.mxu0 %v4896
        %4936 = vmatpush1.msra.mxu0 %v4895
        %4937 = vmatprep.subr.mxu0 %v4894
        %4938 = vmatpush1.msra.mxu0 %v4893
        %4939 = vmatprep.subr.mxu0 0.0
        %4940 = vmatpush2.msra.mxu0 0.0
        %4941 = vmatprep.subr.mxu0 0.0
        %4942 = vmatpush2.msra.mxu0 0.0
        %4943 = vmatprep.subr.mxu0 0.0
        %4944 = vmatpush2.msra.mxu0 0.0
        %4945 = vmatprep.subr.mxu0 0.0
        %4946 = vmatpush2.msra.mxu0 0.0
        %4947 = vmatprep.subr.mxu0 0.0
        %4948 = vmatpush2.msra.mxu0 0.0
        %4949 = vmatprep.subr.mxu0 0.0
        %4950 = vmatpush2.msra.mxu0 0.0
        %4951 = vmatprep.subr.mxu0 0.0
        %4952 = vmatpush2.msra.mxu0 0.0
        %4953 = vmatprep.subr.mxu0 0.0
        %4954 = vmatpush2.msra.mxu0 0.0
        %4955 = vmatprep.subr.mxu0 0.0
        %4956 = vmatpush2.msra.mxu0 0.0
        %4957 = vmatprep.subr.mxu0 0.0
        %4958 = vmatpush2.msra.mxu0 0.0
        %4959 = vmatprep.subr.mxu0 0.0
        %4960 = vmatpush2.msra.mxu0 0.0
        %4961 = vmatprep.subr.mxu0 0.0
        %4962 = vmatpush2.msra.mxu0 0.0
        %4963 = vmatprep.subr.mxu0 0.0
        %4964 = vmatpush2.msra.mxu0 0.0
        %4965 = vmatprep.subr.mxu0 0.0
        %4966 = vmatpush2.msra.mxu0 0.0
        %4967 = vmatprep.subr.mxu0 0.0
        %4968 = vmatpush2.msra.mxu0 0.0
        %4969 = vmatprep.subr.mxu0 0.0
        %4970 = vmatpush2.msra.mxu0 0.0
        %4971 = vmatprep.mubr.f32.mxu0 0.0
        %4972 = vmatmul.mubr.f32.gmra.mxu0 %v4905
        %v4973 = vpop.f32.mrf.mxu0
        %v4974 = vadd.f32 %v4902, %v4973
        %v4975 = vpop.f32.mrf.mxu0
        %v4976 = vadd.f32 %v4903, %v4975
        %4977 = vdwg.mxu0
        %s4978 = scalar_lea.vmem %s244, 16 [#allocation2]
        %4979 = vst [vmem:[%s4978] sm:$0xff] %v4974
        %4980 = vst [vmem:[%s4978 + $0x8] sm:$0xff] %v4976
        %4981 = vrot.lane.b32.xlu0 %v4893, 17
        %v4982 = vpop.permute.xlu0 %4981
        %4983 = vrot.lane.b32.xlu0 %v4895, 17
        %v4984 = vpop.permute.xlu0 %4983
        %4985 = vrot.lane.b32.xlu0 %v4897, 17
        %v4986 = vpop.permute.xlu0 %4985
        %4987 = vrot.lane.b32.xlu0 %v4899, 17
        %v4988 = vpop.permute.xlu0 %4987
        %4989 = vrot.lane.b32.xlu0 %v4894, 17
        %v4990 = vpop.permute.xlu0 %4989
        %4991 = vrot.lane.b32.xlu0 %v4896, 17
        %v4992 = vpop.permute.xlu0 %4991
        %4993 = vrot.lane.b32.xlu0 %v4898, 17
        %v4994 = vpop.permute.xlu0 %4993
        %4995 = vrot.lane.b32.xlu0 %v4900, 17
        %v4996 = vpop.permute.xlu0 %4995
        %v4997 = vsel %vm254, %v4982, %v4990
        %v4998 = vsel %vm254, %v4984, %v4992
        %v4999 = vsel %vm254, %v4986, %v4994
        %v5000 = vsel %vm254, %v4988, %v4996
        %v5001 = vsel %vm254, %v4990, %v4982
        %v5002 = vsel %vm254, %v4992, %v4984
        %v5003 = vsel %vm254, %v4994, %v4986
        %v5004 = vsel %vm254, %v4996, %v4988
        %v5005 = vld [vmem:[%s3] sm:$0xff]
        %v5006 = vld [vmem:[%s3 + $0x8] sm:$0xff]
        %v5007 = vld [vmem:[%s3 + $0x10] sm:$0xff]
        %v5008 = vld [vmem:[%s3 + $0x18] sm:$0xff]
        %v5009 = vld [vmem:[%s3 + $0x20] sm:$0xff]
        %v5010 = vld [vmem:[%s3 + $0x28] sm:$0xff]
        %v5011 = vld [vmem:[%s3 + $0x30] sm:$0xff]
        %v5012 = vld [vmem:[%s3 + $0x38] sm:$0xff]
        %v5013 = vmul.f32 %v5001, %v5005
        %v5014 = vmul.f32 %v4997, %v5006
        %v5015 = vmul.f32 %v5002, %v5007
        %v5016 = vmul.f32 %v4998, %v5008
        %v5017 = vmul.f32 %v5003, %v5009
        %v5018 = vmul.f32 %v4999, %v5010
        %v5019 = vmul.f32 %v5004, %v5011
        %v5020 = vmul.f32 %v5000, %v5012
        %v5021 = vld [vmem:[%s1] sm:$0xff]
        %v5022 = vld [vmem:[%s1 + $0x8] sm:$0xff]
        %v5023 = vld [vmem:[%s1 + $0x10] sm:$0xff]
        %v5024 = vld [vmem:[%s1 + $0x18] sm:$0xff]
        %v5025 = vld [vmem:[%s1 + $0x20] sm:$0xff]
        %v5026 = vld [vmem:[%s1 + $0x28] sm:$0xff]
        %v5027 = vld [vmem:[%s1 + $0x30] sm:$0xff]
        %v5028 = vld [vmem:[%s1 + $0x38] sm:$0xff]
        %v5029 = vld [vmem:[%s1 + $0x40] sm:$0xff]
        %v5030 = vld [vmem:[%s1 + $0x48] sm:$0xff]
        %v5031 = vld [vmem:[%s1 + $0x50] sm:$0xff]
        %v5032 = vld [vmem:[%s1 + $0x58] sm:$0xff]
        %5033 = vrot.lane.b32.xlu0 %v4893, 16
        %v5034 = vpop.permute.xlu0 %5033
        %5035 = vrot.lane.b32.xlu0 %v4895, 16
        %v5036 = vpop.permute.xlu0 %5035
        %5037 = vrot.lane.b32.xlu0 %v4897, 16
        %v5038 = vpop.permute.xlu0 %5037
        %5039 = vrot.lane.b32.xlu0 %v4899, 16
        %v5040 = vpop.permute.xlu0 %5039
        %5041 = vrot.lane.b32.xlu0 %v4894, 16
        %v5042 = vpop.permute.xlu0 %5041
        %5043 = vrot.lane.b32.xlu0 %v4896, 16
        %v5044 = vpop.permute.xlu0 %5043
        %5045 = vrot.lane.b32.xlu0 %v4898, 16
        %v5046 = vpop.permute.xlu0 %5045
        %5047 = vrot.lane.b32.xlu0 %v4900, 16
        %v5048 = vpop.permute.xlu0 %5047
        %v5049 = vsel %vm285, %v5034, %v5042
        %v5050 = vsel %vm285, %v5036, %v5044
        %v5051 = vsel %vm285, %v5038, %v5046
        %v5052 = vsel %vm285, %v5040, %v5048
        %v5053 = vsel %vm285, %v5042, %v5034
        %v5054 = vsel %vm285, %v5044, %v5036
        %v5055 = vsel %vm285, %v5046, %v5038
        %v5056 = vsel %vm285, %v5048, %v5040
        %v5057 = vld [vmem:[%s286] sm:$0xff]
        %v5058 = vld [vmem:[%s286 + $0x8] sm:$0xff]
        %v5059 = vld [vmem:[%s286 + $0x10] sm:$0xff]
        %v5060 = vld [vmem:[%s286 + $0x18] sm:$0xff]
        %v5061 = vld [vmem:[%s286 + $0x20] sm:$0xff]
        %v5062 = vld [vmem:[%s286 + $0x28] sm:$0xff]
        %v5063 = vld [vmem:[%s286 + $0x30] sm:$0xff]
        %v5064 = vld [vmem:[%s286 + $0x38] sm:$0xff]
        %v5065 = vmul.f32 %v5053, %v5057
        %v5066 = vmul.f32 %v5049, %v5058
        %v5067 = vmul.f32 %v5054, %v5059
        %v5068 = vmul.f32 %v5050, %v5060
        %v5069 = vmul.f32 %v5055, %v5061
        %v5070 = vmul.f32 %v5051, %v5062
        %v5071 = vmul.f32 %v5056, %v5063
        %v5072 = vmul.f32 %v5052, %v5064
        %v5073 = vld [vmem:[%s303] sm:$0xff]
        %v5074 = vld [vmem:[%s303 + $0x8] sm:$0xff]
        %v5075 = vld [vmem:[%s303 + $0x10] sm:$0xff]
        %v5076 = vld [vmem:[%s303 + $0x18] sm:$0xff]
        %v5077 = vld [vmem:[%s303 + $0x20] sm:$0xff]
        %v5078 = vld [vmem:[%s303 + $0x28] sm:$0xff]
        %v5079 = vld [vmem:[%s303 + $0x30] sm:$0xff]
        %v5080 = vld [vmem:[%s303 + $0x38] sm:$0xff]
        %v5081 = vld [vmem:[%s303 + $0x40] sm:$0xff]
        %v5082 = vld [vmem:[%s303 + $0x48] sm:$0xff]
        %v5083 = vld [vmem:[%s303 + $0x50] sm:$0xff]
        %v5084 = vld [vmem:[%s303 + $0x58] sm:$0xff]
        %v5086 = vsel %vm316, %v5073, 0
        %v5089 = vsel %vm316, %v5074, 0
        %v5092 = vsel %vm316, %v5075, 0
        %v5095 = vsel %vm316, %v5076, 0
        %v5098 = vsel %vm316, %v5077, 0
        %v5101 = vsel %vm316, %v5078, 0
        %v5104 = vsel %vm316, %v5079, 0
        %v5107 = vsel %vm316, %v5080, 0
        %v5110 = vsel %vm316, %v5081, 0
        %v5113 = vsel %vm316, %v5082, 0
        %v5116 = vsel %vm316, %v5083, 0
        %v5119 = vsel %vm316, %v5084, 0
        %5121 = vmatprep.subr.mxu0 0.0
        %5122 = vmatpush1.msra.mxu0 0.0
        %5123 = vmatprep.subr.mxu0 0.0
        %5124 = vmatpush1.msra.mxu0 0.0
        %5125 = vmatprep.subr.mxu0 0.0
        %5126 = vmatpush1.msra.mxu0 0.0
        %5127 = vmatprep.subr.mxu0 0.0
        %5128 = vmatpush1.msra.mxu0 0.0
        %5129 = vmatprep.subr.mxu0 0.0
        %5130 = vmatpush1.msra.mxu0 0.0
        %5131 = vmatprep.subr.mxu0 0.0
        %5132 = vmatpush1.msra.mxu0 0.0
        %5133 = vmatprep.subr.mxu0 0.0
        %5134 = vmatpush1.msra.mxu0 0.0
        %5135 = vmatprep.subr.mxu0 0.0
        %5136 = vmatpush1.msra.mxu0 0.0
        %5137 = vmatprep.subr.mxu0 0.0
        %5138 = vmatpush1.msra.mxu0 0.0
        %5139 = vmatprep.subr.mxu0 0.0
        %5140 = vmatpush1.msra.mxu0 0.0
        %5141 = vmatprep.subr.mxu0 0.0
        %5142 = vmatpush1.msra.mxu0 0.0
        %5143 = vmatprep.subr.mxu0 0.0
        %5144 = vmatpush1.msra.mxu0 0.0
        %5145 = vmatprep.subr.mxu0 %v5072
        %5146 = vmatpush1.msra.mxu0 %v5071
        %5147 = vmatprep.subr.mxu0 %v5070
        %5148 = vmatpush1.msra.mxu0 %v5069
        %5149 = vmatprep.subr.mxu0 %v5068
        %5150 = vmatpush1.msra.mxu0 %v5067
        %5151 = vmatprep.subr.mxu0 %v5066
        %5152 = vmatpush1.msra.mxu0 %v5065
        %5153 = vmatprep.subr.mxu0 0.0
        %5154 = vmatpush2.msra.mxu0 0.0
        %5155 = vmatprep.subr.mxu0 0.0
        %5156 = vmatpush2.msra.mxu0 0.0
        %5157 = vmatprep.subr.mxu0 0.0
        %5158 = vmatpush2.msra.mxu0 0.0
        %5159 = vmatprep.subr.mxu0 0.0
        %5160 = vmatpush2.msra.mxu0 0.0
        %5161 = vmatprep.subr.mxu0 0.0
        %5162 = vmatpush2.msra.mxu0 0.0
        %5163 = vmatprep.subr.mxu0 0.0
        %5164 = vmatpush2.msra.mxu0 0.0
        %5165 = vmatprep.subr.mxu0 0.0
        %5166 = vmatpush2.msra.mxu0 0.0
        %5167 = vmatprep.subr.mxu0 0.0
        %5168 = vmatpush2.msra.mxu0 0.0
        %5169 = vmatprep.subr.mxu0 0.0
        %5170 = vmatpush2.msra.mxu0 0.0
        %5171 = vmatprep.subr.mxu0 0.0
        %5172 = vmatpush2.msra.mxu0 0.0
        %5173 = vmatprep.subr.mxu0 0.0
        %5174 = vmatpush2.msra.mxu0 0.0
        %5175 = vmatprep.subr.mxu0 0.0
        %5176 = vmatpush2.msra.mxu0 0.0
        %5177 = vmatprep.subr.mxu0 0.0
        %5178 = vmatpush2.msra.mxu0 0.0
        %5179 = vmatprep.subr.mxu0 0.0
        %5180 = vmatpush2.msra.mxu0 0.0
        %5181 = vmatprep.subr.mxu0 0.0
        %5182 = vmatpush2.msra.mxu0 0.0
        %5183 = vmatprep.subr.mxu0 0.0
        %5184 = vmatpush2.msra.mxu0 0.0
        %5185 = vmatprep.mubr.f32.mxu0 0.0
        %5186 = vmatmul.mubr.f32.gmra.mxu0 %v5086
        %v5187 = vpop.f32.mrf.mxu0
        %v5188 = vadd.f32 0.0, %v5187
        %v5189 = vpop.f32.mrf.mxu0
        %v5190 = vadd.f32 0.0, %v5189
        %5191 = vmatprep.mubr.f32.mxu0 0.0
        %5192 = vmatmul.mubr.f32.gmra.mxu0 %v5089
        %v5193 = vpop.f32.mrf.mxu0
        %v5194 = vadd.f32 0.0, %v5193
        %v5195 = vpop.f32.mrf.mxu0
        %v5196 = vadd.f32 0.0, %v5195
        %5197 = vmatprep.mubr.f32.mxu0 0.0
        %5198 = vmatmul.mubr.f32.gmra.mxu0 %v5092
        %v5199 = vpop.f32.mrf.mxu0
        %v5200 = vadd.f32 0.0, %v5199
        %v5201 = vpop.f32.mrf.mxu0
        %v5202 = vadd.f32 0.0, %v5201
        %5203 = vmatprep.mubr.f32.mxu0 0.0
        %5204 = vmatmul.mubr.f32.gmra.mxu0 %v5095
        %v5205 = vpop.f32.mrf.mxu0
        %v5206 = vadd.f32 0.0, %v5205
        %v5207 = vpop.f32.mrf.mxu0
        %v5208 = vadd.f32 0.0, %v5207
        %5209 = vmatprep.mubr.f32.mxu0 0.0
        %5210 = vmatmul.mubr.f32.gmra.mxu0 %v5098
        %v5211 = vpop.f32.mrf.mxu0
        %v5212 = vadd.f32 0.0, %v5211
        %v5213 = vpop.f32.mrf.mxu0
        %v5214 = vadd.f32 0.0, %v5213
        %5215 = vmatprep.mubr.f32.mxu0 0.0
        %5216 = vmatmul.mubr.f32.gmra.mxu0 %v5101
        %v5217 = vpop.f32.mrf.mxu0
        %v5218 = vadd.f32 0.0, %v5217
        %v5219 = vpop.f32.mrf.mxu0
        %v5220 = vadd.f32 0.0, %v5219
        %5221 = vmatprep.mubr.f32.mxu0 0.0
        %5222 = vmatmul.mubr.f32.gmra.mxu0 %v5104
        %v5223 = vpop.f32.mrf.mxu0
        %v5224 = vadd.f32 0.0, %v5223
        %v5225 = vpop.f32.mrf.mxu0
        %v5226 = vadd.f32 0.0, %v5225
        %5227 = vmatprep.mubr.f32.mxu0 0.0
        %5228 = vmatmul.mubr.f32.gmra.mxu0 %v5107
        %v5229 = vpop.f32.mrf.mxu0
        %v5230 = vadd.f32 0.0, %v5229
        %v5231 = vpop.f32.mrf.mxu0
        %v5232 = vadd.f32 0.0, %v5231
        %5233 = vmatprep.mubr.f32.mxu0 0.0
        %5234 = vmatmul.mubr.f32.gmra.mxu0 %v5110
        %v5235 = vpop.f32.mrf.mxu0
        %v5236 = vadd.f32 0.0, %v5235
        %v5237 = vpop.f32.mrf.mxu0
        %v5238 = vadd.f32 0.0, %v5237
        %5239 = vmatprep.mubr.f32.mxu0 0.0
        %5240 = vmatmul.mubr.f32.gmra.mxu0 %v5113
        %v5241 = vpop.f32.mrf.mxu0
        %v5242 = vadd.f32 0.0, %v5241
        %v5243 = vpop.f32.mrf.mxu0
        %v5244 = vadd.f32 0.0, %v5243
        %5245 = vmatprep.mubr.f32.mxu0 0.0
        %5246 = vmatmul.mubr.f32.gmra.mxu0 %v5116
        %v5247 = vpop.f32.mrf.mxu0
        %v5248 = vadd.f32 0.0, %v5247
        %v5249 = vpop.f32.mrf.mxu0
        %v5250 = vadd.f32 0.0, %v5249
        %5251 = vmatprep.mubr.f32.mxu0 0.0
        %5252 = vmatmul.mubr.f32.gmra.mxu0 %v5119
        %v5253 = vpop.f32.mrf.mxu0
        %v5254 = vadd.f32 0.0, %v5253
        %v5255 = vpop.f32.mrf.mxu0
        %v5256 = vadd.f32 0.0, %v5255
        %5257 = vdwg.mxu0
        %v5259 = vsel %vm316, %v5021, 0
        %v5262 = vsel %vm316, %v5022, 0
        %v5265 = vsel %vm316, %v5023, 0
        %v5268 = vsel %vm316, %v5024, 0
        %v5271 = vsel %vm316, %v5025, 0
        %v5274 = vsel %vm316, %v5026, 0
        %v5277 = vsel %vm316, %v5027, 0
        %v5280 = vsel %vm316, %v5028, 0
        %v5283 = vsel %vm316, %v5029, 0
        %v5286 = vsel %vm316, %v5030, 0
        %v5289 = vsel %vm316, %v5031, 0
        %v5292 = vsel %vm316, %v5032, 0
        %5294 = vmatprep.subr.mxu0 0.0
        %5295 = vmatpush1.msra.mxu0 0.0
        %5296 = vmatprep.subr.mxu0 0.0
        %5297 = vmatpush1.msra.mxu0 0.0
        %5298 = vmatprep.subr.mxu0 0.0
        %5299 = vmatpush1.msra.mxu0 0.0
        %5300 = vmatprep.subr.mxu0 0.0
        %5301 = vmatpush1.msra.mxu0 0.0
        %5302 = vmatprep.subr.mxu0 0.0
        %5303 = vmatpush1.msra.mxu0 0.0
        %5304 = vmatprep.subr.mxu0 0.0
        %5305 = vmatpush1.msra.mxu0 0.0
        %5306 = vmatprep.subr.mxu0 0.0
        %5307 = vmatpush1.msra.mxu0 0.0
        %5308 = vmatprep.subr.mxu0 0.0
        %5309 = vmatpush1.msra.mxu0 0.0
        %5310 = vmatprep.subr.mxu0 0.0
        %5311 = vmatpush1.msra.mxu0 0.0
        %5312 = vmatprep.subr.mxu0 0.0
        %5313 = vmatpush1.msra.mxu0 0.0
        %5314 = vmatprep.subr.mxu0 0.0
        %5315 = vmatpush1.msra.mxu0 0.0
        %5316 = vmatprep.subr.mxu0 0.0
        %5317 = vmatpush1.msra.mxu0 0.0
        %5318 = vmatprep.subr.mxu0 %v5020
        %5319 = vmatpush1.msra.mxu0 %v5019
        %5320 = vmatprep.subr.mxu0 %v5018
        %5321 = vmatpush1.msra.mxu0 %v5017
        %5322 = vmatprep.subr.mxu0 %v5016
        %5323 = vmatpush1.msra.mxu0 %v5015
        %5324 = vmatprep.subr.mxu0 %v5014
        %5325 = vmatpush1.msra.mxu0 %v5013
        %5326 = vmatprep.subr.mxu0 0.0
        %5327 = vmatpush2.msra.mxu0 0.0
        %5328 = vmatprep.subr.mxu0 0.0
        %5329 = vmatpush2.msra.mxu0 0.0
        %5330 = vmatprep.subr.mxu0 0.0
        %5331 = vmatpush2.msra.mxu0 0.0
        %5332 = vmatprep.subr.mxu0 0.0
        %5333 = vmatpush2.msra.mxu0 0.0
        %5334 = vmatprep.subr.mxu0 0.0
        %5335 = vmatpush2.msra.mxu0 0.0
        %5336 = vmatprep.subr.mxu0 0.0
        %5337 = vmatpush2.msra.mxu0 0.0
        %5338 = vmatprep.subr.mxu0 0.0
        %5339 = vmatpush2.msra.mxu0 0.0
        %5340 = vmatprep.subr.mxu0 0.0
        %5341 = vmatpush2.msra.mxu0 0.0
        %5342 = vmatprep.subr.mxu0 0.0
        %5343 = vmatpush2.msra.mxu0 0.0
        %5344 = vmatprep.subr.mxu0 0.0
        %5345 = vmatpush2.msra.mxu0 0.0
        %5346 = vmatprep.subr.mxu0 0.0
        %5347 = vmatpush2.msra.mxu0 0.0
        %5348 = vmatprep.subr.mxu0 0.0
        %5349 = vmatpush2.msra.mxu0 0.0
        %5350 = vmatprep.subr.mxu0 0.0
        %5351 = vmatpush2.msra.mxu0 0.0
        %5352 = vmatprep.subr.mxu0 0.0
        %5353 = vmatpush2.msra.mxu0 0.0
        %5354 = vmatprep.subr.mxu0 0.0
        %5355 = vmatpush2.msra.mxu0 0.0
        %5356 = vmatprep.subr.mxu0 0.0
        %5357 = vmatpush2.msra.mxu0 0.0
        %5358 = vmatprep.mubr.f32.mxu0 0.0
        %5359 = vmatmul.mubr.f32.gmra.mxu0 %v5259
        %v5360 = vpop.f32.mrf.mxu0
        %v5361 = vadd.f32 %v5188, %v5360
        %v5362 = vpop.f32.mrf.mxu0
        %v5363 = vadd.f32 %v5190, %v5362
        %5364 = vmatprep.mubr.f32.mxu0 0.0
        %5365 = vmatmul.mubr.f32.gmra.mxu0 %v5262
        %v5366 = vpop.f32.mrf.mxu0
        %v5367 = vadd.f32 %v5194, %v5366
        %v5368 = vpop.f32.mrf.mxu0
        %v5369 = vadd.f32 %v5196, %v5368
        %5370 = vmatprep.mubr.f32.mxu0 0.0
        %5371 = vmatmul.mubr.f32.gmra.mxu0 %v5265
        %v5372 = vpop.f32.mrf.mxu0
        %v5373 = vadd.f32 %v5200, %v5372
        %v5374 = vpop.f32.mrf.mxu0
        %v5375 = vadd.f32 %v5202, %v5374
        %5376 = vmatprep.mubr.f32.mxu0 0.0
        %5377 = vmatmul.mubr.f32.gmra.mxu0 %v5268
        %v5378 = vpop.f32.mrf.mxu0
        %v5379 = vadd.f32 %v5206, %v5378
        %v5380 = vpop.f32.mrf.mxu0
        %v5381 = vadd.f32 %v5208, %v5380
        %5382 = vmatprep.mubr.f32.mxu0 0.0
        %5383 = vmatmul.mubr.f32.gmra.mxu0 %v5271
        %v5384 = vpop.f32.mrf.mxu0
        %v5385 = vadd.f32 %v5212, %v5384
        %v5386 = vpop.f32.mrf.mxu0
        %v5387 = vadd.f32 %v5214, %v5386
        %5388 = vmatprep.mubr.f32.mxu0 0.0
        %5389 = vmatmul.mubr.f32.gmra.mxu0 %v5274
        %v5390 = vpop.f32.mrf.mxu0
        %v5391 = vadd.f32 %v5218, %v5390
        %v5392 = vpop.f32.mrf.mxu0
        %v5393 = vadd.f32 %v5220, %v5392
        %5394 = vmatprep.mubr.f32.mxu0 0.0
        %5395 = vmatmul.mubr.f32.gmra.mxu0 %v5277
        %v5396 = vpop.f32.mrf.mxu0
        %v5397 = vadd.f32 %v5224, %v5396
        %v5398 = vpop.f32.mrf.mxu0
        %v5399 = vadd.f32 %v5226, %v5398
        %5400 = vmatprep.mubr.f32.mxu0 0.0
        %5401 = vmatmul.mubr.f32.gmra.mxu0 %v5280
        %v5402 = vpop.f32.mrf.mxu0
        %v5403 = vadd.f32 %v5230, %v5402
        %v5404 = vpop.f32.mrf.mxu0
        %v5405 = vadd.f32 %v5232, %v5404
        %5406 = vmatprep.mubr.f32.mxu0 0.0
        %5407 = vmatmul.mubr.f32.gmra.mxu0 %v5283
        %v5408 = vpop.f32.mrf.mxu0
        %v5409 = vadd.f32 %v5236, %v5408
        %v5410 = vpop.f32.mrf.mxu0
        %v5411 = vadd.f32 %v5238, %v5410
        %5412 = vmatprep.mubr.f32.mxu0 0.0
        %5413 = vmatmul.mubr.f32.gmra.mxu0 %v5286
        %v5414 = vpop.f32.mrf.mxu0
        %v5415 = vadd.f32 %v5242, %v5414
        %v5416 = vpop.f32.mrf.mxu0
        %v5417 = vadd.f32 %v5244, %v5416
        %5418 = vmatprep.mubr.f32.mxu0 0.0
        %5419 = vmatmul.mubr.f32.gmra.mxu0 %v5289
        %v5420 = vpop.f32.mrf.mxu0
        %v5421 = vadd.f32 %v5248, %v5420
        %v5422 = vpop.f32.mrf.mxu0
        %v5423 = vadd.f32 %v5250, %v5422
        %5424 = vmatprep.mubr.f32.mxu0 0.0
        %5425 = vmatmul.mubr.f32.gmra.mxu0 %v5292
        %v5426 = vpop.f32.mrf.mxu0
        %v5427 = vadd.f32 %v5254, %v5426
        %v5428 = vpop.f32.mrf.mxu0
        %v5429 = vadd.f32 %v5256, %v5428
        %5430 = vdwg.mxu0
        %5431 = vrot.lane.b32.xlu0 %v4893, 15
        %v5432 = vpop.permute.xlu0 %5431
        %5433 = vrot.lane.b32.xlu0 %v4895, 15
        %v5434 = vpop.permute.xlu0 %5433
        %5435 = vrot.lane.b32.xlu0 %v4897, 15
        %v5436 = vpop.permute.xlu0 %5435
        %5437 = vrot.lane.b32.xlu0 %v4899, 15
        %v5438 = vpop.permute.xlu0 %5437
        %5439 = vrot.lane.b32.xlu0 %v4894, 15
        %v5440 = vpop.permute.xlu0 %5439
        %5441 = vrot.lane.b32.xlu0 %v4896, 15
        %v5442 = vpop.permute.xlu0 %5441
        %5443 = vrot.lane.b32.xlu0 %v4898, 15
        %v5444 = vpop.permute.xlu0 %5443
        %5445 = vrot.lane.b32.xlu0 %v4900, 15
        %v5446 = vpop.permute.xlu0 %5445
        %v5447 = vsel %vm665, %v5432, %v5440
        %v5448 = vsel %vm665, %v5434, %v5442
        %v5449 = vsel %vm665, %v5436, %v5444
        %v5450 = vsel %vm665, %v5438, %v5446
        %v5451 = vsel %vm665, %v5440, %v5432
        %v5452 = vsel %vm665, %v5442, %v5434
        %v5453 = vsel %vm665, %v5444, %v5436
        %v5454 = vsel %vm665, %v5446, %v5438
        %v5455 = vld [vmem:[%s666] sm:$0xff]
        %v5456 = vld [vmem:[%s666 + $0x8] sm:$0xff]
        %v5457 = vld [vmem:[%s666 + $0x10] sm:$0xff]
        %v5458 = vld [vmem:[%s666 + $0x18] sm:$0xff]
        %v5459 = vld [vmem:[%s666 + $0x20] sm:$0xff]
        %v5460 = vld [vmem:[%s666 + $0x28] sm:$0xff]
        %v5461 = vld [vmem:[%s666 + $0x30] sm:$0xff]
        %v5462 = vld [vmem:[%s666 + $0x38] sm:$0xff]
        %v5463 = vmul.f32 %v5451, %v5455
        %v5464 = vmul.f32 %v5447, %v5456
        %v5465 = vmul.f32 %v5452, %v5457
        %v5466 = vmul.f32 %v5448, %v5458
        %v5467 = vmul.f32 %v5453, %v5459
        %v5468 = vmul.f32 %v5449, %v5460
        %v5469 = vmul.f32 %v5454, %v5461
        %v5470 = vmul.f32 %v5450, %v5462
        %v5471 = vld [vmem:[%s683] sm:$0xff]
        %v5472 = vld [vmem:[%s683 + $0x8] sm:$0xff]
        %v5473 = vld [vmem:[%s683 + $0x10] sm:$0xff]
        %v5474 = vld [vmem:[%s683 + $0x18] sm:$0xff]
        %v5475 = vld [vmem:[%s683 + $0x20] sm:$0xff]
        %v5476 = vld [vmem:[%s683 + $0x28] sm:$0xff]
        %v5477 = vld [vmem:[%s683 + $0x30] sm:$0xff]
        %v5478 = vld [vmem:[%s683 + $0x38] sm:$0xff]
        %v5479 = vld [vmem:[%s683 + $0x40] sm:$0xff]
        %v5480 = vld [vmem:[%s683 + $0x48] sm:$0xff]
        %v5481 = vld [vmem:[%s683 + $0x50] sm:$0xff]
        %v5482 = vld [vmem:[%s683 + $0x58] sm:$0xff]
        %v5484 = vsel %vm316, %v5471, 0
        %v5487 = vsel %vm316, %v5472, 0
        %v5490 = vsel %vm316, %v5473, 0
        %v5493 = vsel %vm316, %v5474, 0
        %v5496 = vsel %vm316, %v5475, 0
        %v5499 = vsel %vm316, %v5476, 0
        %v5502 = vsel %vm316, %v5477, 0
        %v5505 = vsel %vm316, %v5478, 0
        %v5508 = vsel %vm316, %v5479, 0
        %v5511 = vsel %vm316, %v5480, 0
        %v5514 = vsel %vm316, %v5481, 0
        %v5517 = vsel %vm316, %v5482, 0
        %5519 = vmatprep.subr.mxu0 0.0
        %5520 = vmatpush1.msra.mxu0 0.0
        %5521 = vmatprep.subr.mxu0 0.0
        %5522 = vmatpush1.msra.mxu0 0.0
        %5523 = vmatprep.subr.mxu0 0.0
        %5524 = vmatpush1.msra.mxu0 0.0
        %5525 = vmatprep.subr.mxu0 0.0
        %5526 = vmatpush1.msra.mxu0 0.0
        %5527 = vmatprep.subr.mxu0 0.0
        %5528 = vmatpush1.msra.mxu0 0.0
        %5529 = vmatprep.subr.mxu0 0.0
        %5530 = vmatpush1.msra.mxu0 0.0
        %5531 = vmatprep.subr.mxu0 0.0
        %5532 = vmatpush1.msra.mxu0 0.0
        %5533 = vmatprep.subr.mxu0 0.0
        %5534 = vmatpush1.msra.mxu0 0.0
        %5535 = vmatprep.subr.mxu0 0.0
        %5536 = vmatpush1.msra.mxu0 0.0
        %5537 = vmatprep.subr.mxu0 0.0
        %5538 = vmatpush1.msra.mxu0 0.0
        %5539 = vmatprep.subr.mxu0 0.0
        %5540 = vmatpush1.msra.mxu0 0.0
        %5541 = vmatprep.subr.mxu0 0.0
        %5542 = vmatpush1.msra.mxu0 0.0
        %5543 = vmatprep.subr.mxu0 %v5470
        %5544 = vmatpush1.msra.mxu0 %v5469
        %5545 = vmatprep.subr.mxu0 %v5468
        %5546 = vmatpush1.msra.mxu0 %v5467
        %5547 = vmatprep.subr.mxu0 %v5466
        %5548 = vmatpush1.msra.mxu0 %v5465
        %5549 = vmatprep.subr.mxu0 %v5464
        %5550 = vmatpush1.msra.mxu0 %v5463
        %5551 = vmatprep.subr.mxu0 0.0
        %5552 = vmatpush2.msra.mxu0 0.0
        %5553 = vmatprep.subr.mxu0 0.0
        %5554 = vmatpush2.msra.mxu0 0.0
        %5555 = vmatprep.subr.mxu0 0.0
        %5556 = vmatpush2.msra.mxu0 0.0
        %5557 = vmatprep.subr.mxu0 0.0
        %5558 = vmatpush2.msra.mxu0 0.0
        %5559 = vmatprep.subr.mxu0 0.0
        %5560 = vmatpush2.msra.mxu0 0.0
        %5561 = vmatprep.subr.mxu0 0.0
        %5562 = vmatpush2.msra.mxu0 0.0
        %5563 = vmatprep.subr.mxu0 0.0
        %5564 = vmatpush2.msra.mxu0 0.0
        %5565 = vmatprep.subr.mxu0 0.0
        %5566 = vmatpush2.msra.mxu0 0.0
        %5567 = vmatprep.subr.mxu0 0.0
        %5568 = vmatpush2.msra.mxu0 0.0
        %5569 = vmatprep.subr.mxu0 0.0
        %5570 = vmatpush2.msra.mxu0 0.0
        %5571 = vmatprep.subr.mxu0 0.0
        %5572 = vmatpush2.msra.mxu0 0.0
        %5573 = vmatprep.subr.mxu0 0.0
        %5574 = vmatpush2.msra.mxu0 0.0
        %5575 = vmatprep.subr.mxu0 0.0
        %5576 = vmatpush2.msra.mxu0 0.0
        %5577 = vmatprep.subr.mxu0 0.0
        %5578 = vmatpush2.msra.mxu0 0.0
        %5579 = vmatprep.subr.mxu0 0.0
        %5580 = vmatpush2.msra.mxu0 0.0
        %5581 = vmatprep.subr.mxu0 0.0
        %5582 = vmatpush2.msra.mxu0 0.0
        %5583 = vmatprep.mubr.f32.mxu0 0.0
        %5584 = vmatmul.mubr.f32.gmra.mxu0 %v5484
        %v5585 = vpop.f32.mrf.mxu0
        %v5586 = vadd.f32 0.0, %v5585
        %v5587 = vpop.f32.mrf.mxu0
        %v5588 = vadd.f32 0.0, %v5587
        %5589 = vmatprep.mubr.f32.mxu0 0.0
        %5590 = vmatmul.mubr.f32.gmra.mxu0 %v5487
        %v5591 = vpop.f32.mrf.mxu0
        %v5592 = vadd.f32 0.0, %v5591
        %v5593 = vpop.f32.mrf.mxu0
        %v5594 = vadd.f32 0.0, %v5593
        %5595 = vmatprep.mubr.f32.mxu0 0.0
        %5596 = vmatmul.mubr.f32.gmra.mxu0 %v5490
        %v5597 = vpop.f32.mrf.mxu0
        %v5598 = vadd.f32 0.0, %v5597
        %v5599 = vpop.f32.mrf.mxu0
        %v5600 = vadd.f32 0.0, %v5599
        %5601 = vmatprep.mubr.f32.mxu0 0.0
        %5602 = vmatmul.mubr.f32.gmra.mxu0 %v5493
        %v5603 = vpop.f32.mrf.mxu0
        %v5604 = vadd.f32 0.0, %v5603
        %v5605 = vpop.f32.mrf.mxu0
        %v5606 = vadd.f32 0.0, %v5605
        %5607 = vmatprep.mubr.f32.mxu0 0.0
        %5608 = vmatmul.mubr.f32.gmra.mxu0 %v5496
        %v5609 = vpop.f32.mrf.mxu0
        %v5610 = vadd.f32 0.0, %v5609
        %v5611 = vpop.f32.mrf.mxu0
        %v5612 = vadd.f32 0.0, %v5611
        %5613 = vmatprep.mubr.f32.mxu0 0.0
        %5614 = vmatmul.mubr.f32.gmra.mxu0 %v5499
        %v5615 = vpop.f32.mrf.mxu0
        %v5616 = vadd.f32 0.0, %v5615
        %v5617 = vpop.f32.mrf.mxu0
        %v5618 = vadd.f32 0.0, %v5617
        %5619 = vmatprep.mubr.f32.mxu0 0.0
        %5620 = vmatmul.mubr.f32.gmra.mxu0 %v5502
        %v5621 = vpop.f32.mrf.mxu0
        %v5622 = vadd.f32 0.0, %v5621
        %v5623 = vpop.f32.mrf.mxu0
        %v5624 = vadd.f32 0.0, %v5623
        %5625 = vmatprep.mubr.f32.mxu0 0.0
        %5626 = vmatmul.mubr.f32.gmra.mxu0 %v5505
        %v5627 = vpop.f32.mrf.mxu0
        %v5628 = vadd.f32 0.0, %v5627
        %v5629 = vpop.f32.mrf.mxu0
        %v5630 = vadd.f32 0.0, %v5629
        %5631 = vmatprep.mubr.f32.mxu0 0.0
        %5632 = vmatmul.mubr.f32.gmra.mxu0 %v5508
        %v5633 = vpop.f32.mrf.mxu0
        %v5634 = vadd.f32 0.0, %v5633
        %v5635 = vpop.f32.mrf.mxu0
        %v5636 = vadd.f32 0.0, %v5635
        %5637 = vmatprep.mubr.f32.mxu0 0.0
        %5638 = vmatmul.mubr.f32.gmra.mxu0 %v5511
        %v5639 = vpop.f32.mrf.mxu0
        %v5640 = vadd.f32 0.0, %v5639
        %v5641 = vpop.f32.mrf.mxu0
        %v5642 = vadd.f32 0.0, %v5641
        %5643 = vmatprep.mubr.f32.mxu0 0.0
        %5644 = vmatmul.mubr.f32.gmra.mxu0 %v5514
        %v5645 = vpop.f32.mrf.mxu0
        %v5646 = vadd.f32 0.0, %v5645
        %v5647 = vpop.f32.mrf.mxu0
        %v5648 = vadd.f32 0.0, %v5647
        %5649 = vmatprep.mubr.f32.mxu0 0.0
        %5650 = vmatmul.mubr.f32.gmra.mxu0 %v5517
        %v5651 = vpop.f32.mrf.mxu0
        %v5652 = vadd.f32 0.0, %v5651
        %v5653 = vpop.f32.mrf.mxu0
        %v5654 = vadd.f32 0.0, %v5653
        %5655 = vdwg.mxu0
        %v5656 = vadd.f32 %v5361, %v5586
        %v5657 = vadd.f32 %v5363, %v5588
        %v5658 = vadd.f32 %v5367, %v5592
        %v5659 = vadd.f32 %v5369, %v5594
        %v5660 = vadd.f32 %v5373, %v5598
        %v5661 = vadd.f32 %v5375, %v5600
        %v5662 = vadd.f32 %v5379, %v5604
        %v5663 = vadd.f32 %v5381, %v5606
        %v5664 = vadd.f32 %v5385, %v5610
        %v5665 = vadd.f32 %v5387, %v5612
        %v5666 = vadd.f32 %v5391, %v5616
        %v5667 = vadd.f32 %v5393, %v5618
        %v5668 = vadd.f32 %v5397, %v5622
        %v5669 = vadd.f32 %v5399, %v5624
        %v5670 = vadd.f32 %v5403, %v5628
        %v5671 = vadd.f32 %v5405, %v5630
        %v5672 = vadd.f32 %v5409, %v5634
        %v5673 = vadd.f32 %v5411, %v5636
        %v5674 = vadd.f32 %v5415, %v5640
        %v5675 = vadd.f32 %v5417, %v5642
        %v5676 = vadd.f32 %v5421, %v5646
        %v5677 = vadd.f32 %v5423, %v5648
        %v5678 = vadd.f32 %v5427, %v5652
        %v5679 = vadd.f32 %v5429, %v5654
        %5680 = vrot.lane.b32.xlu0 %v4893, 1
        %v5681 = vpop.permute.xlu0 %5680
        %5682 = vrot.lane.b32.xlu0 %v4895, 1
        %v5683 = vpop.permute.xlu0 %5682
        %5684 = vrot.lane.b32.xlu0 %v4897, 1
        %v5685 = vpop.permute.xlu0 %5684
        %5686 = vrot.lane.b32.xlu0 %v4899, 1
        %v5687 = vpop.permute.xlu0 %5686
        %5688 = vrot.lane.b32.xlu0 %v4894, 1
        %v5689 = vpop.permute.xlu0 %5688
        %5690 = vrot.lane.b32.xlu0 %v4896, 1
        %v5691 = vpop.permute.xlu0 %5690
        %5692 = vrot.lane.b32.xlu0 %v4898, 1
        %v5693 = vpop.permute.xlu0 %5692
        %5694 = vrot.lane.b32.xlu0 %v4900, 1
        %v5695 = vpop.permute.xlu0 %5694
        %v5696 = vsel %vm895, %v5681, %v5689
        %v5697 = vsel %vm895, %v5683, %v5691
        %v5698 = vsel %vm895, %v5685, %v5693
        %v5699 = vsel %vm895, %v5687, %v5695
        %v5700 = vsel %vm895, %v5689, %v5681
        %v5701 = vsel %vm895, %v5691, %v5683
        %v5702 = vsel %vm895, %v5693, %v5685
        %v5703 = vsel %vm895, %v5695, %v5687
        %v5704 = vld [vmem:[%s896] sm:$0xff]
        %v5705 = vld [vmem:[%s896 + $0x8] sm:$0xff]
        %v5706 = vld [vmem:[%s896 + $0x10] sm:$0xff]
        %v5707 = vld [vmem:[%s896 + $0x18] sm:$0xff]
        %v5708 = vld [vmem:[%s896 + $0x20] sm:$0xff]
        %v5709 = vld [vmem:[%s896 + $0x28] sm:$0xff]
        %v5710 = vld [vmem:[%s896 + $0x30] sm:$0xff]
        %v5711 = vld [vmem:[%s896 + $0x38] sm:$0xff]
        %v5712 = vmul.f32 %v5700, %v5704
        %v5713 = vmul.f32 %v5696, %v5705
        %v5714 = vmul.f32 %v5701, %v5706
        %v5715 = vmul.f32 %v5697, %v5707
        %v5716 = vmul.f32 %v5702, %v5708
        %v5717 = vmul.f32 %v5698, %v5709
        %v5718 = vmul.f32 %v5703, %v5710
        %v5719 = vmul.f32 %v5699, %v5711
        %v5720 = vld [vmem:[%s913] sm:$0xff]
        %v5721 = vld [vmem:[%s913 + $0x8] sm:$0xff]
        %v5722 = vld [vmem:[%s913 + $0x10] sm:$0xff]
        %v5723 = vld [vmem:[%s913 + $0x18] sm:$0xff]
        %v5724 = vld [vmem:[%s913 + $0x20] sm:$0xff]
        %v5725 = vld [vmem:[%s913 + $0x28] sm:$0xff]
        %v5726 = vld [vmem:[%s913 + $0x30] sm:$0xff]
        %v5727 = vld [vmem:[%s913 + $0x38] sm:$0xff]
        %v5728 = vld [vmem:[%s913 + $0x40] sm:$0xff]
        %v5729 = vld [vmem:[%s913 + $0x48] sm:$0xff]
        %v5730 = vld [vmem:[%s913 + $0x50] sm:$0xff]
        %v5731 = vld [vmem:[%s913 + $0x58] sm:$0xff]
        %v5733 = vsel %vm316, %v5720, 0
        %v5736 = vsel %vm316, %v5721, 0
        %v5739 = vsel %vm316, %v5722, 0
        %v5742 = vsel %vm316, %v5723, 0
        %v5745 = vsel %vm316, %v5724, 0
        %v5748 = vsel %vm316, %v5725, 0
        %v5751 = vsel %vm316, %v5726, 0
        %v5754 = vsel %vm316, %v5727, 0
        %v5757 = vsel %vm316, %v5728, 0
        %v5760 = vsel %vm316, %v5729, 0
        %v5763 = vsel %vm316, %v5730, 0
        %v5766 = vsel %vm316, %v5731, 0
        %5768 = vmatprep.subr.mxu0 0.0
        %5769 = vmatpush1.msra.mxu0 0.0
        %5770 = vmatprep.subr.mxu0 0.0
        %5771 = vmatpush1.msra.mxu0 0.0
        %5772 = vmatprep.subr.mxu0 0.0
        %5773 = vmatpush1.msra.mxu0 0.0
        %5774 = vmatprep.subr.mxu0 0.0
        %5775 = vmatpush1.msra.mxu0 0.0
        %5776 = vmatprep.subr.mxu0 0.0
        %5777 = vmatpush1.msra.mxu0 0.0
        %5778 = vmatprep.subr.mxu0 0.0
        %5779 = vmatpush1.msra.mxu0 0.0
        %5780 = vmatprep.subr.mxu0 0.0
        %5781 = vmatpush1.msra.mxu0 0.0
        %5782 = vmatprep.subr.mxu0 0.0
        %5783 = vmatpush1.msra.mxu0 0.0
        %5784 = vmatprep.subr.mxu0 0.0
        %5785 = vmatpush1.msra.mxu0 0.0
        %5786 = vmatprep.subr.mxu0 0.0
        %5787 = vmatpush1.msra.mxu0 0.0
        %5788 = vmatprep.subr.mxu0 0.0
        %5789 = vmatpush1.msra.mxu0 0.0
        %5790 = vmatprep.subr.mxu0 0.0
        %5791 = vmatpush1.msra.mxu0 0.0
        %5792 = vmatprep.subr.mxu0 %v5719
        %5793 = vmatpush1.msra.mxu0 %v5718
        %5794 = vmatprep.subr.mxu0 %v5717
        %5795 = vmatpush1.msra.mxu0 %v5716
        %5796 = vmatprep.subr.mxu0 %v5715
        %5797 = vmatpush1.msra.mxu0 %v5714
        %5798 = vmatprep.subr.mxu0 %v5713
        %5799 = vmatpush1.msra.mxu0 %v5712
        %5800 = vmatprep.subr.mxu0 0.0
        %5801 = vmatpush2.msra.mxu0 0.0
        %5802 = vmatprep.subr.mxu0 0.0
        %5803 = vmatpush2.msra.mxu0 0.0
        %5804 = vmatprep.subr.mxu0 0.0
        %5805 = vmatpush2.msra.mxu0 0.0
        %5806 = vmatprep.subr.mxu0 0.0
        %5807 = vmatpush2.msra.mxu0 0.0
        %5808 = vmatprep.subr.mxu0 0.0
        %5809 = vmatpush2.msra.mxu0 0.0
        %5810 = vmatprep.subr.mxu0 0.0
        %5811 = vmatpush2.msra.mxu0 0.0
        %5812 = vmatprep.subr.mxu0 0.0
        %5813 = vmatpush2.msra.mxu0 0.0
        %5814 = vmatprep.subr.mxu0 0.0
        %5815 = vmatpush2.msra.mxu0 0.0
        %5816 = vmatprep.subr.mxu0 0.0
        %5817 = vmatpush2.msra.mxu0 0.0
        %5818 = vmatprep.subr.mxu0 0.0
        %5819 = vmatpush2.msra.mxu0 0.0
        %5820 = vmatprep.subr.mxu0 0.0
        %5821 = vmatpush2.msra.mxu0 0.0
        %5822 = vmatprep.subr.mxu0 0.0
        %5823 = vmatpush2.msra.mxu0 0.0
        %5824 = vmatprep.subr.mxu0 0.0
        %5825 = vmatpush2.msra.mxu0 0.0
        %5826 = vmatprep.subr.mxu0 0.0
        %5827 = vmatpush2.msra.mxu0 0.0
        %5828 = vmatprep.subr.mxu0 0.0
        %5829 = vmatpush2.msra.mxu0 0.0
        %5830 = vmatprep.subr.mxu0 0.0
        %5831 = vmatpush2.msra.mxu0 0.0
        %5832 = vmatprep.mubr.f32.mxu0 0.0
        %5833 = vmatmul.mubr.f32.gmra.mxu0 %v5733
        %v5834 = vpop.f32.mrf.mxu0
        %v5835 = vadd.f32 0.0, %v5834
        %v5836 = vpop.f32.mrf.mxu0
        %v5837 = vadd.f32 0.0, %v5836
        %5838 = vmatprep.mubr.f32.mxu0 0.0
        %5839 = vmatmul.mubr.f32.gmra.mxu0 %v5736
        %v5840 = vpop.f32.mrf.mxu0
        %v5841 = vadd.f32 0.0, %v5840
        %v5842 = vpop.f32.mrf.mxu0
        %v5843 = vadd.f32 0.0, %v5842
        %5844 = vmatprep.mubr.f32.mxu0 0.0
        %5845 = vmatmul.mubr.f32.gmra.mxu0 %v5739
        %v5846 = vpop.f32.mrf.mxu0
        %v5847 = vadd.f32 0.0, %v5846
        %v5848 = vpop.f32.mrf.mxu0
        %v5849 = vadd.f32 0.0, %v5848
        %5850 = vmatprep.mubr.f32.mxu0 0.0
        %5851 = vmatmul.mubr.f32.gmra.mxu0 %v5742
        %v5852 = vpop.f32.mrf.mxu0
        %v5853 = vadd.f32 0.0, %v5852
        %v5854 = vpop.f32.mrf.mxu0
        %v5855 = vadd.f32 0.0, %v5854
        %5856 = vmatprep.mubr.f32.mxu0 0.0
        %5857 = vmatmul.mubr.f32.gmra.mxu0 %v5745
        %v5858 = vpop.f32.mrf.mxu0
        %v5859 = vadd.f32 0.0, %v5858
        %v5860 = vpop.f32.mrf.mxu0
        %v5861 = vadd.f32 0.0, %v5860
        %5862 = vmatprep.mubr.f32.mxu0 0.0
        %5863 = vmatmul.mubr.f32.gmra.mxu0 %v5748
        %v5864 = vpop.f32.mrf.mxu0
        %v5865 = vadd.f32 0.0, %v5864
        %v5866 = vpop.f32.mrf.mxu0
        %v5867 = vadd.f32 0.0, %v5866
        %5868 = vmatprep.mubr.f32.mxu0 0.0
        %5869 = vmatmul.mubr.f32.gmra.mxu0 %v5751
        %v5870 = vpop.f32.mrf.mxu0
        %v5871 = vadd.f32 0.0, %v5870
        %v5872 = vpop.f32.mrf.mxu0
        %v5873 = vadd.f32 0.0, %v5872
        %5874 = vmatprep.mubr.f32.mxu0 0.0
        %5875 = vmatmul.mubr.f32.gmra.mxu0 %v5754
        %v5876 = vpop.f32.mrf.mxu0
        %v5877 = vadd.f32 0.0, %v5876
        %v5878 = vpop.f32.mrf.mxu0
        %v5879 = vadd.f32 0.0, %v5878
        %5880 = vmatprep.mubr.f32.mxu0 0.0
        %5881 = vmatmul.mubr.f32.gmra.mxu0 %v5757
        %v5882 = vpop.f32.mrf.mxu0
        %v5883 = vadd.f32 0.0, %v5882
        %v5884 = vpop.f32.mrf.mxu0
        %v5885 = vadd.f32 0.0, %v5884
        %5886 = vmatprep.mubr.f32.mxu0 0.0
        %5887 = vmatmul.mubr.f32.gmra.mxu0 %v5760
        %v5888 = vpop.f32.mrf.mxu0
        %v5889 = vadd.f32 0.0, %v5888
        %v5890 = vpop.f32.mrf.mxu0
        %v5891 = vadd.f32 0.0, %v5890
        %5892 = vmatprep.mubr.f32.mxu0 0.0
        %5893 = vmatmul.mubr.f32.gmra.mxu0 %v5763
        %v5894 = vpop.f32.mrf.mxu0
        %v5895 = vadd.f32 0.0, %v5894
        %v5896 = vpop.f32.mrf.mxu0
        %v5897 = vadd.f32 0.0, %v5896
        %5898 = vmatprep.mubr.f32.mxu0 0.0
        %5899 = vmatmul.mubr.f32.gmra.mxu0 %v5766
        %v5900 = vpop.f32.mrf.mxu0
        %v5901 = vadd.f32 0.0, %v5900
        %v5902 = vpop.f32.mrf.mxu0
        %v5903 = vadd.f32 0.0, %v5902
        %5904 = vdwg.mxu0
        %v5905 = vadd.f32 %v5656, %v5835
        %v5906 = vadd.f32 %v5657, %v5837
        %v5907 = vadd.f32 %v5658, %v5841
        %v5908 = vadd.f32 %v5659, %v5843
        %v5909 = vadd.f32 %v5660, %v5847
        %v5910 = vadd.f32 %v5661, %v5849
        %v5911 = vadd.f32 %v5662, %v5853
        %v5912 = vadd.f32 %v5663, %v5855
        %v5913 = vadd.f32 %v5664, %v5859
        %v5914 = vadd.f32 %v5665, %v5861
        %v5915 = vadd.f32 %v5666, %v5865
        %v5916 = vadd.f32 %v5667, %v5867
        %v5917 = vadd.f32 %v5668, %v5871
        %v5918 = vadd.f32 %v5669, %v5873
        %v5919 = vadd.f32 %v5670, %v5877
        %v5920 = vadd.f32 %v5671, %v5879
        %v5921 = vadd.f32 %v5672, %v5883
        %v5922 = vadd.f32 %v5673, %v5885
        %v5923 = vadd.f32 %v5674, %v5889
        %v5924 = vadd.f32 %v5675, %v5891
        %v5925 = vadd.f32 %v5676, %v5895
        %v5926 = vadd.f32 %v5677, %v5897
        %v5927 = vadd.f32 %v5678, %v5901
        %v5928 = vadd.f32 %v5679, %v5903
        %v5929 = vld [vmem:[%s1123] sm:$0xff]
        %v5930 = vld [vmem:[%s1123 + $0x8] sm:$0xff]
        %v5931 = vld [vmem:[%s1123 + $0x10] sm:$0xff]
        %v5932 = vld [vmem:[%s1123 + $0x18] sm:$0xff]
        %v5933 = vld [vmem:[%s1123 + $0x20] sm:$0xff]
        %v5934 = vld [vmem:[%s1123 + $0x28] sm:$0xff]
        %v5935 = vld [vmem:[%s1123 + $0x30] sm:$0xff]
        %v5936 = vld [vmem:[%s1123 + $0x38] sm:$0xff]
        %v5937 = vld [vmem:[%s1123 + $0x40] sm:$0xff]
        %v5938 = vld [vmem:[%s1123 + $0x48] sm:$0xff]
        %v5939 = vld [vmem:[%s1123 + $0x50] sm:$0xff]
        %v5940 = vld [vmem:[%s1123 + $0x58] sm:$0xff]
        %v5942 = vsel %vm316, %v5929, 0
        %v5945 = vsel %vm316, %v5930, 0
        %v5948 = vsel %vm316, %v5931, 0
        %v5951 = vsel %vm316, %v5932, 0
        %v5954 = vsel %vm316, %v5933, 0
        %v5957 = vsel %vm316, %v5934, 0
        %v5960 = vsel %vm316, %v5935, 0
        %v5963 = vsel %vm316, %v5936, 0
        %v5966 = vsel %vm316, %v5937, 0
        %v5969 = vsel %vm316, %v5938, 0
        %v5972 = vsel %vm316, %v5939, 0
        %v5975 = vsel %vm316, %v5940, 0
        %5977 = vmatprep.subr.mxu0 0.0
        %5978 = vmatpush1.msra.mxu0 0.0
        %5979 = vmatprep.subr.mxu0 0.0
        %5980 = vmatpush1.msra.mxu0 0.0
        %5981 = vmatprep.subr.mxu0 0.0
        %5982 = vmatpush1.msra.mxu0 0.0
        %5983 = vmatprep.subr.mxu0 0.0
        %5984 = vmatpush1.msra.mxu0 0.0
        %5985 = vmatprep.subr.mxu0 0.0
        %5986 = vmatpush1.msra.mxu0 0.0
        %5987 = vmatprep.subr.mxu0 0.0
        %5988 = vmatpush1.msra.mxu0 0.0
        %5989 = vmatprep.subr.mxu0 0.0
        %5990 = vmatpush1.msra.mxu0 0.0
        %5991 = vmatprep.subr.mxu0 0.0
        %5992 = vmatpush1.msra.mxu0 0.0
        %5993 = vmatprep.subr.mxu0 0.0
        %5994 = vmatpush1.msra.mxu0 0.0
        %5995 = vmatprep.subr.mxu0 0.0
        %5996 = vmatpush1.msra.mxu0 0.0
        %5997 = vmatprep.subr.mxu0 0.0
        %5998 = vmatpush1.msra.mxu0 0.0
        %5999 = vmatprep.subr.mxu0 0.0
        %6000 = vmatpush1.msra.mxu0 0.0
        %6001 = vmatprep.subr.mxu0 %v4900
        %6002 = vmatpush1.msra.mxu0 %v4899
        %6003 = vmatprep.subr.mxu0 %v4898
        %6004 = vmatpush1.msra.mxu0 %v4897
        %6005 = vmatprep.subr.mxu0 %v4896
        %6006 = vmatpush1.msra.mxu0 %v4895
        %6007 = vmatprep.subr.mxu0 %v4894
        %6008 = vmatpush1.msra.mxu0 %v4893
        %6009 = vmatprep.subr.mxu0 0.0
        %6010 = vmatpush2.msra.mxu0 0.0
        %6011 = vmatprep.subr.mxu0 0.0
        %6012 = vmatpush2.msra.mxu0 0.0
        %6013 = vmatprep.subr.mxu0 0.0
        %6014 = vmatpush2.msra.mxu0 0.0
        %6015 = vmatprep.subr.mxu0 0.0
        %6016 = vmatpush2.msra.mxu0 0.0
        %6017 = vmatprep.subr.mxu0 0.0
        %6018 = vmatpush2.msra.mxu0 0.0
        %6019 = vmatprep.subr.mxu0 0.0
        %6020 = vmatpush2.msra.mxu0 0.0
        %6021 = vmatprep.subr.mxu0 0.0
        %6022 = vmatpush2.msra.mxu0 0.0
        %6023 = vmatprep.subr.mxu0 0.0
        %6024 = vmatpush2.msra.mxu0 0.0
        %6025 = vmatprep.subr.mxu0 0.0
        %6026 = vmatpush2.msra.mxu0 0.0
        %6027 = vmatprep.subr.mxu0 0.0
        %6028 = vmatpush2.msra.mxu0 0.0
        %6029 = vmatprep.subr.mxu0 0.0
        %6030 = vmatpush2.msra.mxu0 0.0
        %6031 = vmatprep.subr.mxu0 0.0
        %6032 = vmatpush2.msra.mxu0 0.0
        %6033 = vmatprep.subr.mxu0 0.0
        %6034 = vmatpush2.msra.mxu0 0.0
        %6035 = vmatprep.subr.mxu0 0.0
        %6036 = vmatpush2.msra.mxu0 0.0
        %6037 = vmatprep.subr.mxu0 0.0
        %6038 = vmatpush2.msra.mxu0 0.0
        %6039 = vmatprep.subr.mxu0 0.0
        %6040 = vmatpush2.msra.mxu0 0.0
        %6041 = vmatprep.mubr.f32.mxu0 0.0
        %6042 = vmatmul.mubr.f32.gmra.mxu0 %v5942
        %v6043 = vpop.f32.mrf.mxu0
        %v6044 = vadd.f32 0.0, %v6043
        %v6045 = vpop.f32.mrf.mxu0
        %v6046 = vadd.f32 0.0, %v6045
        %6047 = vmatprep.mubr.f32.mxu0 0.0
        %6048 = vmatmul.mubr.f32.gmra.mxu0 %v5945
        %v6049 = vpop.f32.mrf.mxu0
        %v6050 = vadd.f32 0.0, %v6049
        %v6051 = vpop.f32.mrf.mxu0
        %v6052 = vadd.f32 0.0, %v6051
        %6053 = vmatprep.mubr.f32.mxu0 0.0
        %6054 = vmatmul.mubr.f32.gmra.mxu0 %v5948
        %v6055 = vpop.f32.mrf.mxu0
        %v6056 = vadd.f32 0.0, %v6055
        %v6057 = vpop.f32.mrf.mxu0
        %v6058 = vadd.f32 0.0, %v6057
        %6059 = vmatprep.mubr.f32.mxu0 0.0
        %6060 = vmatmul.mubr.f32.gmra.mxu0 %v5951
        %v6061 = vpop.f32.mrf.mxu0
        %v6062 = vadd.f32 0.0, %v6061
        %v6063 = vpop.f32.mrf.mxu0
        %v6064 = vadd.f32 0.0, %v6063
        %6065 = vmatprep.mubr.f32.mxu0 0.0
        %6066 = vmatmul.mubr.f32.gmra.mxu0 %v5954
        %v6067 = vpop.f32.mrf.mxu0
        %v6068 = vadd.f32 0.0, %v6067
        %v6069 = vpop.f32.mrf.mxu0
        %v6070 = vadd.f32 0.0, %v6069
        %6071 = vmatprep.mubr.f32.mxu0 0.0
        %6072 = vmatmul.mubr.f32.gmra.mxu0 %v5957
        %v6073 = vpop.f32.mrf.mxu0
        %v6074 = vadd.f32 0.0, %v6073
        %v6075 = vpop.f32.mrf.mxu0
        %v6076 = vadd.f32 0.0, %v6075
        %6077 = vmatprep.mubr.f32.mxu0 0.0
        %6078 = vmatmul.mubr.f32.gmra.mxu0 %v5960
        %v6079 = vpop.f32.mrf.mxu0
        %v6080 = vadd.f32 0.0, %v6079
        %v6081 = vpop.f32.mrf.mxu0
        %v6082 = vadd.f32 0.0, %v6081
        %6083 = vmatprep.mubr.f32.mxu0 0.0
        %6084 = vmatmul.mubr.f32.gmra.mxu0 %v5963
        %v6085 = vpop.f32.mrf.mxu0
        %v6086 = vadd.f32 0.0, %v6085
        %v6087 = vpop.f32.mrf.mxu0
        %v6088 = vadd.f32 0.0, %v6087
        %6089 = vmatprep.mubr.f32.mxu0 0.0
        %6090 = vmatmul.mubr.f32.gmra.mxu0 %v5966
        %v6091 = vpop.f32.mrf.mxu0
        %v6092 = vadd.f32 0.0, %v6091
        %v6093 = vpop.f32.mrf.mxu0
        %v6094 = vadd.f32 0.0, %v6093
        %6095 = vmatprep.mubr.f32.mxu0 0.0
        %6096 = vmatmul.mubr.f32.gmra.mxu0 %v5969
        %v6097 = vpop.f32.mrf.mxu0
        %v6098 = vadd.f32 0.0, %v6097
        %v6099 = vpop.f32.mrf.mxu0
        %v6100 = vadd.f32 0.0, %v6099
        %6101 = vmatprep.mubr.f32.mxu0 0.0
        %6102 = vmatmul.mubr.f32.gmra.mxu0 %v5972
        %v6103 = vpop.f32.mrf.mxu0
        %v6104 = vadd.f32 0.0, %v6103
        %v6105 = vpop.f32.mrf.mxu0
        %v6106 = vadd.f32 0.0, %v6105
        %6107 = vmatprep.mubr.f32.mxu0 0.0
        %6108 = vmatmul.mubr.f32.gmra.mxu0 %v5975
        %v6109 = vpop.f32.mrf.mxu0
        %v6110 = vadd.f32 0.0, %v6109
        %v6111 = vpop.f32.mrf.mxu0
        %v6112 = vadd.f32 0.0, %v6111
        %6113 = vdwg.mxu0
        %v6114 = vadd.f32 %v5905, %v6044
        %v6115 = vadd.f32 %v5906, %v6046
        %v6116 = vadd.f32 %v5907, %v6050
        %v6117 = vadd.f32 %v5908, %v6052
        %v6118 = vadd.f32 %v5909, %v6056
        %v6119 = vadd.f32 %v5910, %v6058
        %v6120 = vadd.f32 %v5911, %v6062
        %v6121 = vadd.f32 %v5912, %v6064
        %v6122 = vadd.f32 %v5913, %v6068
        %v6123 = vadd.f32 %v5914, %v6070
        %v6124 = vadd.f32 %v5915, %v6074
        %v6125 = vadd.f32 %v5916, %v6076
        %v6126 = vadd.f32 %v5917, %v6080
        %v6127 = vadd.f32 %v5918, %v6082
        %v6128 = vadd.f32 %v5919, %v6086
        %v6129 = vadd.f32 %v5920, %v6088
        %v6130 = vadd.f32 %v5921, %v6092
        %v6131 = vadd.f32 %v5922, %v6094
        %v6132 = vadd.f32 %v5923, %v6098
        %v6133 = vadd.f32 %v5924, %v6100
        %v6134 = vadd.f32 %v5925, %v6104
        %v6135 = vadd.f32 %v5926, %v6106
        %v6136 = vadd.f32 %v5927, %v6110
        %v6137 = vadd.f32 %v5928, %v6112
        %6138 = vrot.lane.b32.xlu0 %v4893, 127
        %v6139 = vpop.permute.xlu0 %6138
        %6140 = vrot.lane.b32.xlu0 %v4895, 127
        %v6141 = vpop.permute.xlu0 %6140
        %6142 = vrot.lane.b32.xlu0 %v4897, 127
        %v6143 = vpop.permute.xlu0 %6142
        %6144 = vrot.lane.b32.xlu0 %v4899, 127
        %v6145 = vpop.permute.xlu0 %6144
        %6146 = vrot.lane.b32.xlu0 %v4894, 127
        %v6147 = vpop.permute.xlu0 %6146
        %6148 = vrot.lane.b32.xlu0 %v4896, 127
        %v6149 = vpop.permute.xlu0 %6148
        %6150 = vrot.lane.b32.xlu0 %v4898, 127
        %v6151 = vpop.permute.xlu0 %6150
        %6152 = vrot.lane.b32.xlu0 %v4900, 127
        %v6153 = vpop.permute.xlu0 %6152
        %v6154 = vsel %vm1335, %v6139, %v6147
        %v6155 = vsel %vm1335, %v6141, %v6149
        %v6156 = vsel %vm1335, %v6143, %v6151
        %v6157 = vsel %vm1335, %v6145, %v6153
        %v6158 = vsel %vm1335, %v6147, %v6139
        %v6159 = vsel %vm1335, %v6149, %v6141
        %v6160 = vsel %vm1335, %v6151, %v6143
        %v6161 = vsel %vm1335, %v6153, %v6145
        %v6162 = vld [vmem:[%s1336] sm:$0xff]
        %v6163 = vld [vmem:[%s1336 + $0x8] sm:$0xff]
        %v6164 = vld [vmem:[%s1336 + $0x10] sm:$0xff]
        %v6165 = vld [vmem:[%s1336 + $0x18] sm:$0xff]
        %v6166 = vld [vmem:[%s1336 + $0x20] sm:$0xff]
        %v6167 = vld [vmem:[%s1336 + $0x28] sm:$0xff]
        %v6168 = vld [vmem:[%s1336 + $0x30] sm:$0xff]
        %v6169 = vld [vmem:[%s1336 + $0x38] sm:$0xff]
        %v6170 = vmul.f32 %v6154, %v6162
        %v6171 = vmul.f32 %v6158, %v6163
        %v6172 = vmul.f32 %v6155, %v6164
        %v6173 = vmul.f32 %v6159, %v6165
        %v6174 = vmul.f32 %v6156, %v6166
        %v6175 = vmul.f32 %v6160, %v6167
        %v6176 = vmul.f32 %v6157, %v6168
        %v6177 = vmul.f32 %v6161, %v6169
        %v6178 = vld [vmem:[%s1353] sm:$0xff]
        %v6179 = vld [vmem:[%s1353 + $0x8] sm:$0xff]
        %v6180 = vld [vmem:[%s1353 + $0x10] sm:$0xff]
        %v6181 = vld [vmem:[%s1353 + $0x18] sm:$0xff]
        %v6182 = vld [vmem:[%s1353 + $0x20] sm:$0xff]
        %v6183 = vld [vmem:[%s1353 + $0x28] sm:$0xff]
        %v6184 = vld [vmem:[%s1353 + $0x30] sm:$0xff]
        %v6185 = vld [vmem:[%s1353 + $0x38] sm:$0xff]
        %v6186 = vld [vmem:[%s1353 + $0x40] sm:$0xff]
        %v6187 = vld [vmem:[%s1353 + $0x48] sm:$0xff]
        %v6188 = vld [vmem:[%s1353 + $0x50] sm:$0xff]
        %v6189 = vld [vmem:[%s1353 + $0x58] sm:$0xff]
        %v6191 = vsel %vm316, %v6178, 0
        %v6194 = vsel %vm316, %v6179, 0
        %v6197 = vsel %vm316, %v6180, 0
        %v6200 = vsel %vm316, %v6181, 0
        %v6203 = vsel %vm316, %v6182, 0
        %v6206 = vsel %vm316, %v6183, 0
        %v6209 = vsel %vm316, %v6184, 0
        %v6212 = vsel %vm316, %v6185, 0
        %v6215 = vsel %vm316, %v6186, 0
        %v6218 = vsel %vm316, %v6187, 0
        %v6221 = vsel %vm316, %v6188, 0
        %v6224 = vsel %vm316, %v6189, 0
        %6226 = vmatprep.subr.mxu0 0.0
        %6227 = vmatpush1.msra.mxu0 0.0
        %6228 = vmatprep.subr.mxu0 0.0
        %6229 = vmatpush1.msra.mxu0 0.0
        %6230 = vmatprep.subr.mxu0 0.0
        %6231 = vmatpush1.msra.mxu0 0.0
        %6232 = vmatprep.subr.mxu0 0.0
        %6233 = vmatpush1.msra.mxu0 0.0
        %6234 = vmatprep.subr.mxu0 0.0
        %6235 = vmatpush1.msra.mxu0 0.0
        %6236 = vmatprep.subr.mxu0 0.0
        %6237 = vmatpush1.msra.mxu0 0.0
        %6238 = vmatprep.subr.mxu0 0.0
        %6239 = vmatpush1.msra.mxu0 0.0
        %6240 = vmatprep.subr.mxu0 0.0
        %6241 = vmatpush1.msra.mxu0 0.0
        %6242 = vmatprep.subr.mxu0 0.0
        %6243 = vmatpush1.msra.mxu0 0.0
        %6244 = vmatprep.subr.mxu0 0.0
        %6245 = vmatpush1.msra.mxu0 0.0
        %6246 = vmatprep.subr.mxu0 0.0
        %6247 = vmatpush1.msra.mxu0 0.0
        %6248 = vmatprep.subr.mxu0 0.0
        %6249 = vmatpush1.msra.mxu0 0.0
        %6250 = vmatprep.subr.mxu0 %v6177
        %6251 = vmatpush1.msra.mxu0 %v6176
        %6252 = vmatprep.subr.mxu0 %v6175
        %6253 = vmatpush1.msra.mxu0 %v6174
        %6254 = vmatprep.subr.mxu0 %v6173
        %6255 = vmatpush1.msra.mxu0 %v6172
        %6256 = vmatprep.subr.mxu0 %v6171
        %6257 = vmatpush1.msra.mxu0 %v6170
        %6258 = vmatprep.subr.mxu0 0.0
        %6259 = vmatpush2.msra.mxu0 0.0
        %6260 = vmatprep.subr.mxu0 0.0
        %6261 = vmatpush2.msra.mxu0 0.0
        %6262 = vmatprep.subr.mxu0 0.0
        %6263 = vmatpush2.msra.mxu0 0.0
        %6264 = vmatprep.subr.mxu0 0.0
        %6265 = vmatpush2.msra.mxu0 0.0
        %6266 = vmatprep.subr.mxu0 0.0
        %6267 = vmatpush2.msra.mxu0 0.0
        %6268 = vmatprep.subr.mxu0 0.0
        %6269 = vmatpush2.msra.mxu0 0.0
        %6270 = vmatprep.subr.mxu0 0.0
        %6271 = vmatpush2.msra.mxu0 0.0
        %6272 = vmatprep.subr.mxu0 0.0
        %6273 = vmatpush2.msra.mxu0 0.0
        %6274 = vmatprep.subr.mxu0 0.0
        %6275 = vmatpush2.msra.mxu0 0.0
        %6276 = vmatprep.subr.mxu0 0.0
        %6277 = vmatpush2.msra.mxu0 0.0
        %6278 = vmatprep.subr.mxu0 0.0
        %6279 = vmatpush2.msra.mxu0 0.0
        %6280 = vmatprep.subr.mxu0 0.0
        %6281 = vmatpush2.msra.mxu0 0.0
        %6282 = vmatprep.subr.mxu0 0.0
        %6283 = vmatpush2.msra.mxu0 0.0
        %6284 = vmatprep.subr.mxu0 0.0
        %6285 = vmatpush2.msra.mxu0 0.0
        %6286 = vmatprep.subr.mxu0 0.0
        %6287 = vmatpush2.msra.mxu0 0.0
        %6288 = vmatprep.subr.mxu0 0.0
        %6289 = vmatpush2.msra.mxu0 0.0
        %6290 = vmatprep.mubr.f32.mxu0 0.0
        %6291 = vmatmul.mubr.f32.gmra.mxu0 %v6191
        %v6292 = vpop.f32.mrf.mxu0
        %v6293 = vadd.f32 0.0, %v6292
        %v6294 = vpop.f32.mrf.mxu0
        %v6295 = vadd.f32 0.0, %v6294
        %6296 = vmatprep.mubr.f32.mxu0 0.0
        %6297 = vmatmul.mubr.f32.gmra.mxu0 %v6194
        %v6298 = vpop.f32.mrf.mxu0
        %v6299 = vadd.f32 0.0, %v6298
        %v6300 = vpop.f32.mrf.mxu0
        %v6301 = vadd.f32 0.0, %v6300
        %6302 = vmatprep.mubr.f32.mxu0 0.0
        %6303 = vmatmul.mubr.f32.gmra.mxu0 %v6197
        %v6304 = vpop.f32.mrf.mxu0
        %v6305 = vadd.f32 0.0, %v6304
        %v6306 = vpop.f32.mrf.mxu0
        %v6307 = vadd.f32 0.0, %v6306
        %6308 = vmatprep.mubr.f32.mxu0 0.0
        %6309 = vmatmul.mubr.f32.gmra.mxu0 %v6200
        %v6310 = vpop.f32.mrf.mxu0
        %v6311 = vadd.f32 0.0, %v6310
        %v6312 = vpop.f32.mrf.mxu0
        %v6313 = vadd.f32 0.0, %v6312
        %6314 = vmatprep.mubr.f32.mxu0 0.0
        %6315 = vmatmul.mubr.f32.gmra.mxu0 %v6203
        %v6316 = vpop.f32.mrf.mxu0
        %v6317 = vadd.f32 0.0, %v6316
        %v6318 = vpop.f32.mrf.mxu0
        %v6319 = vadd.f32 0.0, %v6318
        %6320 = vmatprep.mubr.f32.mxu0 0.0
        %6321 = vmatmul.mubr.f32.gmra.mxu0 %v6206
        %v6322 = vpop.f32.mrf.mxu0
        %v6323 = vadd.f32 0.0, %v6322
        %v6324 = vpop.f32.mrf.mxu0
        %v6325 = vadd.f32 0.0, %v6324
        %6326 = vmatprep.mubr.f32.mxu0 0.0
        %6327 = vmatmul.mubr.f32.gmra.mxu0 %v6209
        %v6328 = vpop.f32.mrf.mxu0
        %v6329 = vadd.f32 0.0, %v6328
        %v6330 = vpop.f32.mrf.mxu0
        %v6331 = vadd.f32 0.0, %v6330
        %6332 = vmatprep.mubr.f32.mxu0 0.0
        %6333 = vmatmul.mubr.f32.gmra.mxu0 %v6212
        %v6334 = vpop.f32.mrf.mxu0
        %v6335 = vadd.f32 0.0, %v6334
        %v6336 = vpop.f32.mrf.mxu0
        %v6337 = vadd.f32 0.0, %v6336
        %6338 = vmatprep.mubr.f32.mxu0 0.0
        %6339 = vmatmul.mubr.f32.gmra.mxu0 %v6215
        %v6340 = vpop.f32.mrf.mxu0
        %v6341 = vadd.f32 0.0, %v6340
        %v6342 = vpop.f32.mrf.mxu0
        %v6343 = vadd.f32 0.0, %v6342
        %6344 = vmatprep.mubr.f32.mxu0 0.0
        %6345 = vmatmul.mubr.f32.gmra.mxu0 %v6218
        %v6346 = vpop.f32.mrf.mxu0
        %v6347 = vadd.f32 0.0, %v6346
        %v6348 = vpop.f32.mrf.mxu0
        %v6349 = vadd.f32 0.0, %v6348
        %6350 = vmatprep.mubr.f32.mxu0 0.0
        %6351 = vmatmul.mubr.f32.gmra.mxu0 %v6221
        %v6352 = vpop.f32.mrf.mxu0
        %v6353 = vadd.f32 0.0, %v6352
        %v6354 = vpop.f32.mrf.mxu0
        %v6355 = vadd.f32 0.0, %v6354
        %6356 = vmatprep.mubr.f32.mxu0 0.0
        %6357 = vmatmul.mubr.f32.gmra.mxu0 %v6224
        %v6358 = vpop.f32.mrf.mxu0
        %v6359 = vadd.f32 0.0, %v6358
        %v6360 = vpop.f32.mrf.mxu0
        %v6361 = vadd.f32 0.0, %v6360
        %6362 = vdwg.mxu0
        %v6363 = vadd.f32 %v6114, %v6293
        %v6364 = vadd.f32 %v6115, %v6295
        %v6365 = vadd.f32 %v6116, %v6299
        %v6366 = vadd.f32 %v6117, %v6301
        %v6367 = vadd.f32 %v6118, %v6305
        %v6368 = vadd.f32 %v6119, %v6307
        %v6369 = vadd.f32 %v6120, %v6311
        %v6370 = vadd.f32 %v6121, %v6313
        %v6371 = vadd.f32 %v6122, %v6317
        %v6372 = vadd.f32 %v6123, %v6319
        %v6373 = vadd.f32 %v6124, %v6323
        %v6374 = vadd.f32 %v6125, %v6325
        %v6375 = vadd.f32 %v6126, %v6329
        %v6376 = vadd.f32 %v6127, %v6331
        %v6377 = vadd.f32 %v6128, %v6335
        %v6378 = vadd.f32 %v6129, %v6337
        %v6379 = vadd.f32 %v6130, %v6341
        %v6380 = vadd.f32 %v6131, %v6343
        %v6381 = vadd.f32 %v6132, %v6347
        %v6382 = vadd.f32 %v6133, %v6349
        %v6383 = vadd.f32 %v6134, %v6353
        %v6384 = vadd.f32 %v6135, %v6355
        %v6385 = vadd.f32 %v6136, %v6359
        %v6386 = vadd.f32 %v6137, %v6361
        %6387 = vrot.lane.b32.xlu0 %v4893, 113
        %v6388 = vpop.permute.xlu0 %6387
        %6389 = vrot.lane.b32.xlu0 %v4895, 113
        %v6390 = vpop.permute.xlu0 %6389
        %6391 = vrot.lane.b32.xlu0 %v4897, 113
        %v6392 = vpop.permute.xlu0 %6391
        %6393 = vrot.lane.b32.xlu0 %v4899, 113
        %v6394 = vpop.permute.xlu0 %6393
        %6395 = vrot.lane.b32.xlu0 %v4894, 113
        %v6396 = vpop.permute.xlu0 %6395
        %6397 = vrot.lane.b32.xlu0 %v4896, 113
        %v6398 = vpop.permute.xlu0 %6397
        %6399 = vrot.lane.b32.xlu0 %v4898, 113
        %v6400 = vpop.permute.xlu0 %6399
        %6401 = vrot.lane.b32.xlu0 %v4900, 113
        %v6402 = vpop.permute.xlu0 %6401
        %v6403 = vsel %vm1565, %v6388, %v6396
        %v6404 = vsel %vm1565, %v6390, %v6398
        %v6405 = vsel %vm1565, %v6392, %v6400
        %v6406 = vsel %vm1565, %v6394, %v6402
        %v6407 = vsel %vm1565, %v6396, %v6388
        %v6408 = vsel %vm1565, %v6398, %v6390
        %v6409 = vsel %vm1565, %v6400, %v6392
        %v6410 = vsel %vm1565, %v6402, %v6394
        %v6411 = vld [vmem:[%s1566] sm:$0xff]
        %v6412 = vld [vmem:[%s1566 + $0x8] sm:$0xff]
        %v6413 = vld [vmem:[%s1566 + $0x10] sm:$0xff]
        %v6414 = vld [vmem:[%s1566 + $0x18] sm:$0xff]
        %v6415 = vld [vmem:[%s1566 + $0x20] sm:$0xff]
        %v6416 = vld [vmem:[%s1566 + $0x28] sm:$0xff]
        %v6417 = vld [vmem:[%s1566 + $0x30] sm:$0xff]
        %v6418 = vld [vmem:[%s1566 + $0x38] sm:$0xff]
        %v6419 = vmul.f32 %v6403, %v6411
        %v6420 = vmul.f32 %v6407, %v6412
        %v6421 = vmul.f32 %v6404, %v6413
        %v6422 = vmul.f32 %v6408, %v6414
        %v6423 = vmul.f32 %v6405, %v6415
        %v6424 = vmul.f32 %v6409, %v6416
        %v6425 = vmul.f32 %v6406, %v6417
        %v6426 = vmul.f32 %v6410, %v6418
        %v6427 = vld [vmem:[%s1583] sm:$0xff]
        %v6428 = vld [vmem:[%s1583 + $0x8] sm:$0xff]
        %v6429 = vld [vmem:[%s1583 + $0x10] sm:$0xff]
        %v6430 = vld [vmem:[%s1583 + $0x18] sm:$0xff]
        %v6431 = vld [vmem:[%s1583 + $0x20] sm:$0xff]
        %v6432 = vld [vmem:[%s1583 + $0x28] sm:$0xff]
        %v6433 = vld [vmem:[%s1583 + $0x30] sm:$0xff]
        %v6434 = vld [vmem:[%s1583 + $0x38] sm:$0xff]
        %v6435 = vld [vmem:[%s1583 + $0x40] sm:$0xff]
        %v6436 = vld [vmem:[%s1583 + $0x48] sm:$0xff]
        %v6437 = vld [vmem:[%s1583 + $0x50] sm:$0xff]
        %v6438 = vld [vmem:[%s1583 + $0x58] sm:$0xff]
        %v6440 = vsel %vm316, %v6427, 0
        %v6443 = vsel %vm316, %v6428, 0
        %v6446 = vsel %vm316, %v6429, 0
        %v6449 = vsel %vm316, %v6430, 0
        %v6452 = vsel %vm316, %v6431, 0
        %v6455 = vsel %vm316, %v6432, 0
        %v6458 = vsel %vm316, %v6433, 0
        %v6461 = vsel %vm316, %v6434, 0
        %v6464 = vsel %vm316, %v6435, 0
        %v6467 = vsel %vm316, %v6436, 0
        %v6470 = vsel %vm316, %v6437, 0
        %v6473 = vsel %vm316, %v6438, 0
        %6475 = vmatprep.subr.mxu0 0.0
        %6476 = vmatpush1.msra.mxu0 0.0
        %6477 = vmatprep.subr.mxu0 0.0
        %6478 = vmatpush1.msra.mxu0 0.0
        %6479 = vmatprep.subr.mxu0 0.0
        %6480 = vmatpush1.msra.mxu0 0.0
        %6481 = vmatprep.subr.mxu0 0.0
        %6482 = vmatpush1.msra.mxu0 0.0
        %6483 = vmatprep.subr.mxu0 0.0
        %6484 = vmatpush1.msra.mxu0 0.0
        %6485 = vmatprep.subr.mxu0 0.0
        %6486 = vmatpush1.msra.mxu0 0.0
        %6487 = vmatprep.subr.mxu0 0.0
        %6488 = vmatpush1.msra.mxu0 0.0
        %6489 = vmatprep.subr.mxu0 0.0
        %6490 = vmatpush1.msra.mxu0 0.0
        %6491 = vmatprep.subr.mxu0 0.0
        %6492 = vmatpush1.msra.mxu0 0.0
        %6493 = vmatprep.subr.mxu0 0.0
        %6494 = vmatpush1.msra.mxu0 0.0
        %6495 = vmatprep.subr.mxu0 0.0
        %6496 = vmatpush1.msra.mxu0 0.0
        %6497 = vmatprep.subr.mxu0 0.0
        %6498 = vmatpush1.msra.mxu0 0.0
        %6499 = vmatprep.subr.mxu0 %v6426
        %6500 = vmatpush1.msra.mxu0 %v6425
        %6501 = vmatprep.subr.mxu0 %v6424
        %6502 = vmatpush1.msra.mxu0 %v6423
        %6503 = vmatprep.subr.mxu0 %v6422
        %6504 = vmatpush1.msra.mxu0 %v6421
        %6505 = vmatprep.subr.mxu0 %v6420
        %6506 = vmatpush1.msra.mxu0 %v6419
        %6507 = vmatprep.subr.mxu0 0.0
        %6508 = vmatpush2.msra.mxu0 0.0
        %6509 = vmatprep.subr.mxu0 0.0
        %6510 = vmatpush2.msra.mxu0 0.0
        %6511 = vmatprep.subr.mxu0 0.0
        %6512 = vmatpush2.msra.mxu0 0.0
        %6513 = vmatprep.subr.mxu0 0.0
        %6514 = vmatpush2.msra.mxu0 0.0
        %6515 = vmatprep.subr.mxu0 0.0
        %6516 = vmatpush2.msra.mxu0 0.0
        %6517 = vmatprep.subr.mxu0 0.0
        %6518 = vmatpush2.msra.mxu0 0.0
        %6519 = vmatprep.subr.mxu0 0.0
        %6520 = vmatpush2.msra.mxu0 0.0
        %6521 = vmatprep.subr.mxu0 0.0
        %6522 = vmatpush2.msra.mxu0 0.0
        %6523 = vmatprep.subr.mxu0 0.0
        %6524 = vmatpush2.msra.mxu0 0.0
        %6525 = vmatprep.subr.mxu0 0.0
        %6526 = vmatpush2.msra.mxu0 0.0
        %6527 = vmatprep.subr.mxu0 0.0
        %6528 = vmatpush2.msra.mxu0 0.0
        %6529 = vmatprep.subr.mxu0 0.0
        %6530 = vmatpush2.msra.mxu0 0.0
        %6531 = vmatprep.subr.mxu0 0.0
        %6532 = vmatpush2.msra.mxu0 0.0
        %6533 = vmatprep.subr.mxu0 0.0
        %6534 = vmatpush2.msra.mxu0 0.0
        %6535 = vmatprep.subr.mxu0 0.0
        %6536 = vmatpush2.msra.mxu0 0.0
        %6537 = vmatprep.subr.mxu0 0.0
        %6538 = vmatpush2.msra.mxu0 0.0
        %6539 = vmatprep.mubr.f32.mxu0 0.0
        %6540 = vmatmul.mubr.f32.gmra.mxu0 %v6440
        %v6541 = vpop.f32.mrf.mxu0
        %v6542 = vadd.f32 0.0, %v6541
        %v6543 = vpop.f32.mrf.mxu0
        %v6544 = vadd.f32 0.0, %v6543
        %6545 = vmatprep.mubr.f32.mxu0 0.0
        %6546 = vmatmul.mubr.f32.gmra.mxu0 %v6443
        %v6547 = vpop.f32.mrf.mxu0
        %v6548 = vadd.f32 0.0, %v6547
        %v6549 = vpop.f32.mrf.mxu0
        %v6550 = vadd.f32 0.0, %v6549
        %6551 = vmatprep.mubr.f32.mxu0 0.0
        %6552 = vmatmul.mubr.f32.gmra.mxu0 %v6446
        %v6553 = vpop.f32.mrf.mxu0
        %v6554 = vadd.f32 0.0, %v6553
        %v6555 = vpop.f32.mrf.mxu0
        %v6556 = vadd.f32 0.0, %v6555
        %6557 = vmatprep.mubr.f32.mxu0 0.0
        %6558 = vmatmul.mubr.f32.gmra.mxu0 %v6449
        %v6559 = vpop.f32.mrf.mxu0
        %v6560 = vadd.f32 0.0, %v6559
        %v6561 = vpop.f32.mrf.mxu0
        %v6562 = vadd.f32 0.0, %v6561
        %6563 = vmatprep.mubr.f32.mxu0 0.0
        %6564 = vmatmul.mubr.f32.gmra.mxu0 %v6452
        %v6565 = vpop.f32.mrf.mxu0
        %v6566 = vadd.f32 0.0, %v6565
        %v6567 = vpop.f32.mrf.mxu0
        %v6568 = vadd.f32 0.0, %v6567
        %6569 = vmatprep.mubr.f32.mxu0 0.0
        %6570 = vmatmul.mubr.f32.gmra.mxu0 %v6455
        %v6571 = vpop.f32.mrf.mxu0
        %v6572 = vadd.f32 0.0, %v6571
        %v6573 = vpop.f32.mrf.mxu0
        %v6574 = vadd.f32 0.0, %v6573
        %6575 = vmatprep.mubr.f32.mxu0 0.0
        %6576 = vmatmul.mubr.f32.gmra.mxu0 %v6458
        %v6577 = vpop.f32.mrf.mxu0
        %v6578 = vadd.f32 0.0, %v6577
        %v6579 = vpop.f32.mrf.mxu0
        %v6580 = vadd.f32 0.0, %v6579
        %6581 = vmatprep.mubr.f32.mxu0 0.0
        %6582 = vmatmul.mubr.f32.gmra.mxu0 %v6461
        %v6583 = vpop.f32.mrf.mxu0
        %v6584 = vadd.f32 0.0, %v6583
        %v6585 = vpop.f32.mrf.mxu0
        %v6586 = vadd.f32 0.0, %v6585
        %6587 = vmatprep.mubr.f32.mxu0 0.0
        %6588 = vmatmul.mubr.f32.gmra.mxu0 %v6464
        %v6589 = vpop.f32.mrf.mxu0
        %v6590 = vadd.f32 0.0, %v6589
        %v6591 = vpop.f32.mrf.mxu0
        %v6592 = vadd.f32 0.0, %v6591
        %6593 = vmatprep.mubr.f32.mxu0 0.0
        %6594 = vmatmul.mubr.f32.gmra.mxu0 %v6467
        %v6595 = vpop.f32.mrf.mxu0
        %v6596 = vadd.f32 0.0, %v6595
        %v6597 = vpop.f32.mrf.mxu0
        %v6598 = vadd.f32 0.0, %v6597
        %6599 = vmatprep.mubr.f32.mxu0 0.0
        %6600 = vmatmul.mubr.f32.gmra.mxu0 %v6470
        %v6601 = vpop.f32.mrf.mxu0
        %v6602 = vadd.f32 0.0, %v6601
        %v6603 = vpop.f32.mrf.mxu0
        %v6604 = vadd.f32 0.0, %v6603
        %6605 = vmatprep.mubr.f32.mxu0 0.0
        %6606 = vmatmul.mubr.f32.gmra.mxu0 %v6473
        %v6607 = vpop.f32.mrf.mxu0
        %v6608 = vadd.f32 0.0, %v6607
        %v6609 = vpop.f32.mrf.mxu0
        %v6610 = vadd.f32 0.0, %v6609
        %6611 = vdwg.mxu0
        %v6612 = vadd.f32 %v6363, %v6542
        %v6613 = vadd.f32 %v6364, %v6544
        %v6614 = vadd.f32 %v6365, %v6548
        %v6615 = vadd.f32 %v6366, %v6550
        %v6616 = vadd.f32 %v6367, %v6554
        %v6617 = vadd.f32 %v6368, %v6556
        %v6618 = vadd.f32 %v6369, %v6560
        %v6619 = vadd.f32 %v6370, %v6562
        %v6620 = vadd.f32 %v6371, %v6566
        %v6621 = vadd.f32 %v6372, %v6568
        %v6622 = vadd.f32 %v6373, %v6572
        %v6623 = vadd.f32 %v6374, %v6574
        %v6624 = vadd.f32 %v6375, %v6578
        %v6625 = vadd.f32 %v6376, %v6580
        %v6626 = vadd.f32 %v6377, %v6584
        %v6627 = vadd.f32 %v6378, %v6586
        %v6628 = vadd.f32 %v6379, %v6590
        %v6629 = vadd.f32 %v6380, %v6592
        %v6630 = vadd.f32 %v6381, %v6596
        %v6631 = vadd.f32 %v6382, %v6598
        %v6632 = vadd.f32 %v6383, %v6602
        %v6633 = vadd.f32 %v6384, %v6604
        %v6634 = vadd.f32 %v6385, %v6608
        %v6635 = vadd.f32 %v6386, %v6610
        %6636 = vrot.lane.b32.xlu0 %v4893, 112
        %v6637 = vpop.permute.xlu0 %6636
        %6638 = vrot.lane.b32.xlu0 %v4895, 112
        %v6639 = vpop.permute.xlu0 %6638
        %6640 = vrot.lane.b32.xlu0 %v4897, 112
        %v6641 = vpop.permute.xlu0 %6640
        %6642 = vrot.lane.b32.xlu0 %v4899, 112
        %v6643 = vpop.permute.xlu0 %6642
        %6644 = vrot.lane.b32.xlu0 %v4894, 112
        %v6645 = vpop.permute.xlu0 %6644
        %6646 = vrot.lane.b32.xlu0 %v4896, 112
        %v6647 = vpop.permute.xlu0 %6646
        %6648 = vrot.lane.b32.xlu0 %v4898, 112
        %v6649 = vpop.permute.xlu0 %6648
        %6650 = vrot.lane.b32.xlu0 %v4900, 112
        %v6651 = vpop.permute.xlu0 %6650
        %v6652 = vsel %vm1795, %v6637, %v6645
        %v6653 = vsel %vm1795, %v6639, %v6647
        %v6654 = vsel %vm1795, %v6641, %v6649
        %v6655 = vsel %vm1795, %v6643, %v6651
        %v6656 = vsel %vm1795, %v6645, %v6637
        %v6657 = vsel %vm1795, %v6647, %v6639
        %v6658 = vsel %vm1795, %v6649, %v6641
        %v6659 = vsel %vm1795, %v6651, %v6643
        %v6660 = vld [vmem:[%s1796] sm:$0xff]
        %v6661 = vld [vmem:[%s1796 + $0x8] sm:$0xff]
        %v6662 = vld [vmem:[%s1796 + $0x10] sm:$0xff]
        %v6663 = vld [vmem:[%s1796 + $0x18] sm:$0xff]
        %v6664 = vld [vmem:[%s1796 + $0x20] sm:$0xff]
        %v6665 = vld [vmem:[%s1796 + $0x28] sm:$0xff]
        %v6666 = vld [vmem:[%s1796 + $0x30] sm:$0xff]
        %v6667 = vld [vmem:[%s1796 + $0x38] sm:$0xff]
        %v6668 = vmul.f32 %v6652, %v6660
        %v6669 = vmul.f32 %v6656, %v6661
        %v6670 = vmul.f32 %v6653, %v6662
        %v6671 = vmul.f32 %v6657, %v6663
        %v6672 = vmul.f32 %v6654, %v6664
        %v6673 = vmul.f32 %v6658, %v6665
        %v6674 = vmul.f32 %v6655, %v6666
        %v6675 = vmul.f32 %v6659, %v6667
        %v6676 = vld [vmem:[%s1813] sm:$0xff]
        %v6677 = vld [vmem:[%s1813 + $0x8] sm:$0xff]
        %v6678 = vld [vmem:[%s1813 + $0x10] sm:$0xff]
        %v6679 = vld [vmem:[%s1813 + $0x18] sm:$0xff]
        %v6680 = vld [vmem:[%s1813 + $0x20] sm:$0xff]
        %v6681 = vld [vmem:[%s1813 + $0x28] sm:$0xff]
        %v6682 = vld [vmem:[%s1813 + $0x30] sm:$0xff]
        %v6683 = vld [vmem:[%s1813 + $0x38] sm:$0xff]
        %v6684 = vld [vmem:[%s1813 + $0x40] sm:$0xff]
        %v6685 = vld [vmem:[%s1813 + $0x48] sm:$0xff]
        %v6686 = vld [vmem:[%s1813 + $0x50] sm:$0xff]
        %v6687 = vld [vmem:[%s1813 + $0x58] sm:$0xff]
        %v6689 = vsel %vm316, %v6676, 0
        %v6692 = vsel %vm316, %v6677, 0
        %v6695 = vsel %vm316, %v6678, 0
        %v6698 = vsel %vm316, %v6679, 0
        %v6701 = vsel %vm316, %v6680, 0
        %v6704 = vsel %vm316, %v6681, 0
        %v6707 = vsel %vm316, %v6682, 0
        %v6710 = vsel %vm316, %v6683, 0
        %v6713 = vsel %vm316, %v6684, 0
        %v6716 = vsel %vm316, %v6685, 0
        %v6719 = vsel %vm316, %v6686, 0
        %v6722 = vsel %vm316, %v6687, 0
        %6724 = vmatprep.subr.mxu0 0.0
        %6725 = vmatpush1.msra.mxu0 0.0
        %6726 = vmatprep.subr.mxu0 0.0
        %6727 = vmatpush1.msra.mxu0 0.0
        %6728 = vmatprep.subr.mxu0 0.0
        %6729 = vmatpush1.msra.mxu0 0.0
        %6730 = vmatprep.subr.mxu0 0.0
        %6731 = vmatpush1.msra.mxu0 0.0
        %6732 = vmatprep.subr.mxu0 0.0
        %6733 = vmatpush1.msra.mxu0 0.0
        %6734 = vmatprep.subr.mxu0 0.0
        %6735 = vmatpush1.msra.mxu0 0.0
        %6736 = vmatprep.subr.mxu0 0.0
        %6737 = vmatpush1.msra.mxu0 0.0
        %6738 = vmatprep.subr.mxu0 0.0
        %6739 = vmatpush1.msra.mxu0 0.0
        %6740 = vmatprep.subr.mxu0 0.0
        %6741 = vmatpush1.msra.mxu0 0.0
        %6742 = vmatprep.subr.mxu0 0.0
        %6743 = vmatpush1.msra.mxu0 0.0
        %6744 = vmatprep.subr.mxu0 0.0
        %6745 = vmatpush1.msra.mxu0 0.0
        %6746 = vmatprep.subr.mxu0 0.0
        %6747 = vmatpush1.msra.mxu0 0.0
        %6748 = vmatprep.subr.mxu0 %v6675
        %6749 = vmatpush1.msra.mxu0 %v6674
        %6750 = vmatprep.subr.mxu0 %v6673
        %6751 = vmatpush1.msra.mxu0 %v6672
        %6752 = vmatprep.subr.mxu0 %v6671
        %6753 = vmatpush1.msra.mxu0 %v6670
        %6754 = vmatprep.subr.mxu0 %v6669
        %6755 = vmatpush1.msra.mxu0 %v6668
        %6756 = vmatprep.subr.mxu0 0.0
        %6757 = vmatpush2.msra.mxu0 0.0
        %6758 = vmatprep.subr.mxu0 0.0
        %6759 = vmatpush2.msra.mxu0 0.0
        %6760 = vmatprep.subr.mxu0 0.0
        %6761 = vmatpush2.msra.mxu0 0.0
        %6762 = vmatprep.subr.mxu0 0.0
        %6763 = vmatpush2.msra.mxu0 0.0
        %6764 = vmatprep.subr.mxu0 0.0
        %6765 = vmatpush2.msra.mxu0 0.0
        %6766 = vmatprep.subr.mxu0 0.0
        %6767 = vmatpush2.msra.mxu0 0.0
        %6768 = vmatprep.subr.mxu0 0.0
        %6769 = vmatpush2.msra.mxu0 0.0
        %6770 = vmatprep.subr.mxu0 0.0
        %6771 = vmatpush2.msra.mxu0 0.0
        %6772 = vmatprep.subr.mxu0 0.0
        %6773 = vmatpush2.msra.mxu0 0.0
        %6774 = vmatprep.subr.mxu0 0.0
        %6775 = vmatpush2.msra.mxu0 0.0
        %6776 = vmatprep.subr.mxu0 0.0
        %6777 = vmatpush2.msra.mxu0 0.0
        %6778 = vmatprep.subr.mxu0 0.0
        %6779 = vmatpush2.msra.mxu0 0.0
        %6780 = vmatprep.subr.mxu0 0.0
        %6781 = vmatpush2.msra.mxu0 0.0
        %6782 = vmatprep.subr.mxu0 0.0
        %6783 = vmatpush2.msra.mxu0 0.0
        %6784 = vmatprep.subr.mxu0 0.0
        %6785 = vmatpush2.msra.mxu0 0.0
        %6786 = vmatprep.subr.mxu0 0.0
        %6787 = vmatpush2.msra.mxu0 0.0
        %6788 = vmatprep.mubr.f32.mxu0 0.0
        %6789 = vmatmul.mubr.f32.gmra.mxu0 %v6689
        %v6790 = vpop.f32.mrf.mxu0
        %v6791 = vadd.f32 0.0, %v6790
        %v6792 = vpop.f32.mrf.mxu0
        %v6793 = vadd.f32 0.0, %v6792
        %6794 = vmatprep.mubr.f32.mxu0 0.0
        %6795 = vmatmul.mubr.f32.gmra.mxu0 %v6692
        %v6796 = vpop.f32.mrf.mxu0
        %v6797 = vadd.f32 0.0, %v6796
        %v6798 = vpop.f32.mrf.mxu0
        %v6799 = vadd.f32 0.0, %v6798
        %6800 = vmatprep.mubr.f32.mxu0 0.0
        %6801 = vmatmul.mubr.f32.gmra.mxu0 %v6695
        %v6802 = vpop.f32.mrf.mxu0
        %v6803 = vadd.f32 0.0, %v6802
        %v6804 = vpop.f32.mrf.mxu0
        %v6805 = vadd.f32 0.0, %v6804
        %6806 = vmatprep.mubr.f32.mxu0 0.0
        %6807 = vmatmul.mubr.f32.gmra.mxu0 %v6698
        %v6808 = vpop.f32.mrf.mxu0
        %v6809 = vadd.f32 0.0, %v6808
        %v6810 = vpop.f32.mrf.mxu0
        %v6811 = vadd.f32 0.0, %v6810
        %6812 = vmatprep.mubr.f32.mxu0 0.0
        %6813 = vmatmul.mubr.f32.gmra.mxu0 %v6701
        %v6814 = vpop.f32.mrf.mxu0
        %v6815 = vadd.f32 0.0, %v6814
        %v6816 = vpop.f32.mrf.mxu0
        %v6817 = vadd.f32 0.0, %v6816
        %6818 = vmatprep.mubr.f32.mxu0 0.0
        %6819 = vmatmul.mubr.f32.gmra.mxu0 %v6704
        %v6820 = vpop.f32.mrf.mxu0
        %v6821 = vadd.f32 0.0, %v6820
        %v6822 = vpop.f32.mrf.mxu0
        %v6823 = vadd.f32 0.0, %v6822
        %6824 = vmatprep.mubr.f32.mxu0 0.0
        %6825 = vmatmul.mubr.f32.gmra.mxu0 %v6707
        %v6826 = vpop.f32.mrf.mxu0
        %v6827 = vadd.f32 0.0, %v6826
        %v6828 = vpop.f32.mrf.mxu0
        %v6829 = vadd.f32 0.0, %v6828
        %6830 = vmatprep.mubr.f32.mxu0 0.0
        %6831 = vmatmul.mubr.f32.gmra.mxu0 %v6710
        %v6832 = vpop.f32.mrf.mxu0
        %v6833 = vadd.f32 0.0, %v6832
        %v6834 = vpop.f32.mrf.mxu0
        %v6835 = vadd.f32 0.0, %v6834
        %6836 = vmatprep.mubr.f32.mxu0 0.0
        %6837 = vmatmul.mubr.f32.gmra.mxu0 %v6713
        %v6838 = vpop.f32.mrf.mxu0
        %v6839 = vadd.f32 0.0, %v6838
        %v6840 = vpop.f32.mrf.mxu0
        %v6841 = vadd.f32 0.0, %v6840
        %6842 = vmatprep.mubr.f32.mxu0 0.0
        %6843 = vmatmul.mubr.f32.gmra.mxu0 %v6716
        %v6844 = vpop.f32.mrf.mxu0
        %v6845 = vadd.f32 0.0, %v6844
        %v6846 = vpop.f32.mrf.mxu0
        %v6847 = vadd.f32 0.0, %v6846
        %6848 = vmatprep.mubr.f32.mxu0 0.0
        %6849 = vmatmul.mubr.f32.gmra.mxu0 %v6719
        %v6850 = vpop.f32.mrf.mxu0
        %v6851 = vadd.f32 0.0, %v6850
        %v6852 = vpop.f32.mrf.mxu0
        %v6853 = vadd.f32 0.0, %v6852
        %6854 = vmatprep.mubr.f32.mxu0 0.0
        %6855 = vmatmul.mubr.f32.gmra.mxu0 %v6722
        %v6856 = vpop.f32.mrf.mxu0
        %v6857 = vadd.f32 0.0, %v6856
        %v6858 = vpop.f32.mrf.mxu0
        %v6859 = vadd.f32 0.0, %v6858
        %6860 = vdwg.mxu0
        %v6861 = vadd.f32 %v6612, %v6791
        %v6862 = vadd.f32 %v6613, %v6793
        %v6863 = vadd.f32 %v6614, %v6797
        %v6864 = vadd.f32 %v6615, %v6799
        %v6865 = vadd.f32 %v6616, %v6803
        %v6866 = vadd.f32 %v6617, %v6805
        %v6867 = vadd.f32 %v6618, %v6809
        %v6868 = vadd.f32 %v6619, %v6811
        %v6869 = vadd.f32 %v6620, %v6815
        %v6870 = vadd.f32 %v6621, %v6817
        %v6871 = vadd.f32 %v6622, %v6821
        %v6872 = vadd.f32 %v6623, %v6823
        %v6873 = vadd.f32 %v6624, %v6827
        %v6874 = vadd.f32 %v6625, %v6829
        %v6875 = vadd.f32 %v6626, %v6833
        %v6876 = vadd.f32 %v6627, %v6835
        %v6877 = vadd.f32 %v6628, %v6839
        %v6878 = vadd.f32 %v6629, %v6841
        %v6879 = vadd.f32 %v6630, %v6845
        %v6880 = vadd.f32 %v6631, %v6847
        %v6881 = vadd.f32 %v6632, %v6851
        %v6882 = vadd.f32 %v6633, %v6853
        %v6883 = vadd.f32 %v6634, %v6857
        %v6884 = vadd.f32 %v6635, %v6859
        %6885 = vrot.lane.b32.xlu0 %v4893, 111
        %v6886 = vpop.permute.xlu0 %6885
        %6887 = vrot.lane.b32.xlu0 %v4895, 111
        %v6888 = vpop.permute.xlu0 %6887
        %6889 = vrot.lane.b32.xlu0 %v4897, 111
        %v6890 = vpop.permute.xlu0 %6889
        %6891 = vrot.lane.b32.xlu0 %v4899, 111
        %v6892 = vpop.permute.xlu0 %6891
        %6893 = vrot.lane.b32.xlu0 %v4894, 111
        %v6894 = vpop.permute.xlu0 %6893
        %6895 = vrot.lane.b32.xlu0 %v4896, 111
        %v6896 = vpop.permute.xlu0 %6895
        %6897 = vrot.lane.b32.xlu0 %v4898, 111
        %v6898 = vpop.permute.xlu0 %6897
        %6899 = vrot.lane.b32.xlu0 %v4900, 111
        %v6900 = vpop.permute.xlu0 %6899
        %v6901 = vsel %vm2025, %v6886, %v6894
        %v6902 = vsel %vm2025, %v6888, %v6896
        %v6903 = vsel %vm2025, %v6890, %v6898
        %v6904 = vsel %vm2025, %v6892, %v6900
        %v6905 = vsel %vm2025, %v6894, %v6886
        %v6906 = vsel %vm2025, %v6896, %v6888
        %v6907 = vsel %vm2025, %v6898, %v6890
        %v6908 = vsel %vm2025, %v6900, %v6892
        %v6909 = vld [vmem:[%s2026] sm:$0xff]
        %v6910 = vld [vmem:[%s2026 + $0x8] sm:$0xff]
        %v6911 = vld [vmem:[%s2026 + $0x10] sm:$0xff]
        %v6912 = vld [vmem:[%s2026 + $0x18] sm:$0xff]
        %v6913 = vld [vmem:[%s2026 + $0x20] sm:$0xff]
        %v6914 = vld [vmem:[%s2026 + $0x28] sm:$0xff]
        %v6915 = vld [vmem:[%s2026 + $0x30] sm:$0xff]
        %v6916 = vld [vmem:[%s2026 + $0x38] sm:$0xff]
        %v6917 = vmul.f32 %v6901, %v6909
        %v6918 = vmul.f32 %v6905, %v6910
        %v6919 = vmul.f32 %v6902, %v6911
        %v6920 = vmul.f32 %v6906, %v6912
        %v6921 = vmul.f32 %v6903, %v6913
        %v6922 = vmul.f32 %v6907, %v6914
        %v6923 = vmul.f32 %v6904, %v6915
        %v6924 = vmul.f32 %v6908, %v6916
        %v6925 = vld [vmem:[%s2043] sm:$0xff]
        %v6926 = vld [vmem:[%s2043 + $0x8] sm:$0xff]
        %v6927 = vld [vmem:[%s2043 + $0x10] sm:$0xff]
        %v6928 = vld [vmem:[%s2043 + $0x18] sm:$0xff]
        %v6929 = vld [vmem:[%s2043 + $0x20] sm:$0xff]
        %v6930 = vld [vmem:[%s2043 + $0x28] sm:$0xff]
        %v6931 = vld [vmem:[%s2043 + $0x30] sm:$0xff]
        %v6932 = vld [vmem:[%s2043 + $0x38] sm:$0xff]
        %v6933 = vld [vmem:[%s2043 + $0x40] sm:$0xff]
        %v6934 = vld [vmem:[%s2043 + $0x48] sm:$0xff]
        %v6935 = vld [vmem:[%s2043 + $0x50] sm:$0xff]
        %v6936 = vld [vmem:[%s2043 + $0x58] sm:$0xff]
        %v6938 = vsel %vm316, %v6925, 0
        %v6941 = vsel %vm316, %v6926, 0
        %v6944 = vsel %vm316, %v6927, 0
        %v6947 = vsel %vm316, %v6928, 0
        %v6950 = vsel %vm316, %v6929, 0
        %v6953 = vsel %vm316, %v6930, 0
        %v6956 = vsel %vm316, %v6931, 0
        %v6959 = vsel %vm316, %v6932, 0
        %v6962 = vsel %vm316, %v6933, 0
        %v6965 = vsel %vm316, %v6934, 0
        %v6968 = vsel %vm316, %v6935, 0
        %v6971 = vsel %vm316, %v6936, 0
        %6973 = vmatprep.subr.mxu0 0.0
        %6974 = vmatpush1.msra.mxu0 0.0
        %6975 = vmatprep.subr.mxu0 0.0
        %6976 = vmatpush1.msra.mxu0 0.0
        %6977 = vmatprep.subr.mxu0 0.0
        %6978 = vmatpush1.msra.mxu0 0.0
        %6979 = vmatprep.subr.mxu0 0.0
        %6980 = vmatpush1.msra.mxu0 0.0
        %6981 = vmatprep.subr.mxu0 0.0
        %6982 = vmatpush1.msra.mxu0 0.0
        %6983 = vmatprep.subr.mxu0 0.0
        %6984 = vmatpush1.msra.mxu0 0.0
        %6985 = vmatprep.subr.mxu0 0.0
        %6986 = vmatpush1.msra.mxu0 0.0
        %6987 = vmatprep.subr.mxu0 0.0
        %6988 = vmatpush1.msra.mxu0 0.0
        %6989 = vmatprep.subr.mxu0 0.0
        %6990 = vmatpush1.msra.mxu0 0.0
        %6991 = vmatprep.subr.mxu0 0.0
        %6992 = vmatpush1.msra.mxu0 0.0
        %6993 = vmatprep.subr.mxu0 0.0
        %6994 = vmatpush1.msra.mxu0 0.0
        %6995 = vmatprep.subr.mxu0 0.0
        %6996 = vmatpush1.msra.mxu0 0.0
        %6997 = vmatprep.subr.mxu0 %v6924
        %6998 = vmatpush1.msra.mxu0 %v6923
        %6999 = vmatprep.subr.mxu0 %v6922
        %7000 = vmatpush1.msra.mxu0 %v6921
        %7001 = vmatprep.subr.mxu0 %v6920
        %7002 = vmatpush1.msra.mxu0 %v6919
        %7003 = vmatprep.subr.mxu0 %v6918
        %7004 = vmatpush1.msra.mxu0 %v6917
        %7005 = vmatprep.subr.mxu0 0.0
        %7006 = vmatpush2.msra.mxu0 0.0
        %7007 = vmatprep.subr.mxu0 0.0
        %7008 = vmatpush2.msra.mxu0 0.0
        %7009 = vmatprep.subr.mxu0 0.0
        %7010 = vmatpush2.msra.mxu0 0.0
        %7011 = vmatprep.subr.mxu0 0.0
        %7012 = vmatpush2.msra.mxu0 0.0
        %7013 = vmatprep.subr.mxu0 0.0
        %7014 = vmatpush2.msra.mxu0 0.0
        %7015 = vmatprep.subr.mxu0 0.0
        %7016 = vmatpush2.msra.mxu0 0.0
        %7017 = vmatprep.subr.mxu0 0.0
        %7018 = vmatpush2.msra.mxu0 0.0
        %7019 = vmatprep.subr.mxu0 0.0
        %7020 = vmatpush2.msra.mxu0 0.0
        %7021 = vmatprep.subr.mxu0 0.0
        %7022 = vmatpush2.msra.mxu0 0.0
        %7023 = vmatprep.subr.mxu0 0.0
        %7024 = vmatpush2.msra.mxu0 0.0
        %7025 = vmatprep.subr.mxu0 0.0
        %7026 = vmatpush2.msra.mxu0 0.0
        %7027 = vmatprep.subr.mxu0 0.0
        %7028 = vmatpush2.msra.mxu0 0.0
        %7029 = vmatprep.subr.mxu0 0.0
        %7030 = vmatpush2.msra.mxu0 0.0
        %7031 = vmatprep.subr.mxu0 0.0
        %7032 = vmatpush2.msra.mxu0 0.0
        %7033 = vmatprep.subr.mxu0 0.0
        %7034 = vmatpush2.msra.mxu0 0.0
        %7035 = vmatprep.subr.mxu0 0.0
        %7036 = vmatpush2.msra.mxu0 0.0
        %7037 = vmatprep.mubr.f32.mxu0 0.0
        %7038 = vmatmul.mubr.f32.gmra.mxu0 %v6938
        %v7039 = vpop.f32.mrf.mxu0
        %v7040 = vadd.f32 0.0, %v7039
        %v7041 = vpop.f32.mrf.mxu0
        %v7042 = vadd.f32 0.0, %v7041
        %7043 = vmatprep.mubr.f32.mxu0 0.0
        %7044 = vmatmul.mubr.f32.gmra.mxu0 %v6941
        %v7045 = vpop.f32.mrf.mxu0
        %v7046 = vadd.f32 0.0, %v7045
        %v7047 = vpop.f32.mrf.mxu0
        %v7048 = vadd.f32 0.0, %v7047
        %7049 = vmatprep.mubr.f32.mxu0 0.0
        %7050 = vmatmul.mubr.f32.gmra.mxu0 %v6944
        %v7051 = vpop.f32.mrf.mxu0
        %v7052 = vadd.f32 0.0, %v7051
        %v7053 = vpop.f32.mrf.mxu0
        %v7054 = vadd.f32 0.0, %v7053
        %7055 = vmatprep.mubr.f32.mxu0 0.0
        %7056 = vmatmul.mubr.f32.gmra.mxu0 %v6947
        %v7057 = vpop.f32.mrf.mxu0
        %v7058 = vadd.f32 0.0, %v7057
        %v7059 = vpop.f32.mrf.mxu0
        %v7060 = vadd.f32 0.0, %v7059
        %7061 = vmatprep.mubr.f32.mxu0 0.0
        %7062 = vmatmul.mubr.f32.gmra.mxu0 %v6950
        %v7063 = vpop.f32.mrf.mxu0
        %v7064 = vadd.f32 0.0, %v7063
        %v7065 = vpop.f32.mrf.mxu0
        %v7066 = vadd.f32 0.0, %v7065
        %7067 = vmatprep.mubr.f32.mxu0 0.0
        %7068 = vmatmul.mubr.f32.gmra.mxu0 %v6953
        %v7069 = vpop.f32.mrf.mxu0
        %v7070 = vadd.f32 0.0, %v7069
        %v7071 = vpop.f32.mrf.mxu0
        %v7072 = vadd.f32 0.0, %v7071
        %7073 = vmatprep.mubr.f32.mxu0 0.0
        %7074 = vmatmul.mubr.f32.gmra.mxu0 %v6956
        %v7075 = vpop.f32.mrf.mxu0
        %v7076 = vadd.f32 0.0, %v7075
        %v7077 = vpop.f32.mrf.mxu0
        %v7078 = vadd.f32 0.0, %v7077
        %7079 = vmatprep.mubr.f32.mxu0 0.0
        %7080 = vmatmul.mubr.f32.gmra.mxu0 %v6959
        %v7081 = vpop.f32.mrf.mxu0
        %v7082 = vadd.f32 0.0, %v7081
        %v7083 = vpop.f32.mrf.mxu0
        %v7084 = vadd.f32 0.0, %v7083
        %7085 = vmatprep.mubr.f32.mxu0 0.0
        %7086 = vmatmul.mubr.f32.gmra.mxu0 %v6962
        %v7087 = vpop.f32.mrf.mxu0
        %v7088 = vadd.f32 0.0, %v7087
        %v7089 = vpop.f32.mrf.mxu0
        %v7090 = vadd.f32 0.0, %v7089
        %7091 = vmatprep.mubr.f32.mxu0 0.0
        %7092 = vmatmul.mubr.f32.gmra.mxu0 %v6965
        %v7093 = vpop.f32.mrf.mxu0
        %v7094 = vadd.f32 0.0, %v7093
        %v7095 = vpop.f32.mrf.mxu0
        %v7096 = vadd.f32 0.0, %v7095
        %7097 = vmatprep.mubr.f32.mxu0 0.0
        %7098 = vmatmul.mubr.f32.gmra.mxu0 %v6968
        %v7099 = vpop.f32.mrf.mxu0
        %v7100 = vadd.f32 0.0, %v7099
        %v7101 = vpop.f32.mrf.mxu0
        %v7102 = vadd.f32 0.0, %v7101
        %7103 = vmatprep.mubr.f32.mxu0 0.0
        %7104 = vmatmul.mubr.f32.gmra.mxu0 %v6971
        %v7105 = vpop.f32.mrf.mxu0
        %v7106 = vadd.f32 0.0, %v7105
        %v7107 = vpop.f32.mrf.mxu0
        %v7108 = vadd.f32 0.0, %v7107
        %7109 = vdwg.mxu0
        %v7110 = vadd.f32 %v6861, %v7040
        %v7111 = vadd.f32 %v6862, %v7042
        %v7112 = vadd.f32 %v6863, %v7046
        %v7113 = vadd.f32 %v6864, %v7048
        %v7114 = vadd.f32 %v6865, %v7052
        %v7115 = vadd.f32 %v6866, %v7054
        %v7116 = vadd.f32 %v6867, %v7058
        %v7117 = vadd.f32 %v6868, %v7060
        %v7118 = vadd.f32 %v6869, %v7064
        %v7119 = vadd.f32 %v6870, %v7066
        %v7120 = vadd.f32 %v6871, %v7070
        %v7121 = vadd.f32 %v6872, %v7072
        %v7122 = vadd.f32 %v6873, %v7076
        %v7123 = vadd.f32 %v6874, %v7078
        %v7124 = vadd.f32 %v6875, %v7082
        %v7125 = vadd.f32 %v6876, %v7084
        %v7126 = vadd.f32 %v6877, %v7088
        %v7127 = vadd.f32 %v6878, %v7090
        %v7128 = vadd.f32 %v6879, %v7094
        %v7129 = vadd.f32 %v6880, %v7096
        %v7130 = vadd.f32 %v6881, %v7100
        %v7131 = vadd.f32 %v6882, %v7102
        %v7132 = vadd.f32 %v6883, %v7106
        %v7133 = vadd.f32 %v6884, %v7108
        %v7134 = vld [vmem:[%s249] sm:$0xff]
        %v7135 = vld [vmem:[%s249 + $0x8] sm:$0xff]
        %v7136 = vld [vmem:[%s249 + $0x10] sm:$0xff]
        %v7137 = vld [vmem:[%s249 + $0x18] sm:$0xff]
        %v7138 = vld [vmem:[%s249 + $0x20] sm:$0xff]
        %v7139 = vld [vmem:[%s249 + $0x28] sm:$0xff]
        %v7140 = vld [vmem:[%s249 + $0x30] sm:$0xff]
        %v7141 = vld [vmem:[%s249 + $0x38] sm:$0xff]
        %v7142 = vld [vmem:[%s249 + $0x40] sm:$0xff]
        %v7143 = vld [vmem:[%s249 + $0x48] sm:$0xff]
        %v7144 = vld [vmem:[%s249 + $0x50] sm:$0xff]
        %v7145 = vld [vmem:[%s249 + $0x58] sm:$0xff]
        %v7146 = vld [vmem:[%s249 + $0x60] sm:$0xff]
        %v7147 = vld [vmem:[%s249 + $0x68] sm:$0xff]
        %v7148 = vld [vmem:[%s249 + $0x70] sm:$0xff]
        %v7149 = vld [vmem:[%s249 + $0x78] sm:$0xff]
        %v7150 = vadd.f32 %v7134, %v7110
        %v7151 = vadd.f32 %v7135, %v7111
        %v7152 = vadd.f32 %v7136, %v7112
        %v7153 = vadd.f32 %v7137, %v7113
        %v7154 = vadd.f32 %v7138, %v7114
        %v7155 = vadd.f32 %v7139, %v7115
        %v7156 = vadd.f32 %v7140, %v7116
        %v7157 = vadd.f32 %v7141, %v7117
        %v7158 = vadd.f32 %v7142, %v7118
        %v7159 = vadd.f32 %v7143, %v7119
        %v7160 = vadd.f32 %v7144, %v7120
        %v7161 = vadd.f32 %v7145, %v7121
        %v7162 = vadd.f32 %v7146, %v7122
        %v7163 = vadd.f32 %v7147, %v7123
        %v7164 = vadd.f32 %v7148, %v7124
        %v7165 = vadd.f32 %v7149, %v7125
        %v7166 = vxor.u32 %v7150, 2147483648
        %v7167 = vxor.u32 %v7151, 2147483648
        %v7168 = vxor.u32 %v7152, 2147483648
        %v7169 = vxor.u32 %v7153, 2147483648
        %v7170 = vxor.u32 %v7154, 2147483648
        %v7171 = vxor.u32 %v7155, 2147483648
        %v7172 = vxor.u32 %v7156, 2147483648
        %v7173 = vxor.u32 %v7157, 2147483648
        %v7174 = vxor.u32 %v7158, 2147483648
        %v7175 = vxor.u32 %v7159, 2147483648
        %v7176 = vxor.u32 %v7160, 2147483648
        %v7177 = vxor.u32 %v7161, 2147483648
        %v7178 = vxor.u32 %v7162, 2147483648
        %v7179 = vxor.u32 %v7163, 2147483648
        %v7180 = vxor.u32 %v7164, 2147483648
        %v7181 = vxor.u32 %v7165, 2147483648
        %v7182 = vmul.f32 %v7166, 1.442695
        %v7183 = vpow.pop %v7182
        %v7184 = vmul.f32 %v7167, 1.442695
        %v7185 = vpow.pop %v7184
        %v7186 = vmul.f32 %v7168, 1.442695
        %v7187 = vpow.pop %v7186
        %v7188 = vmul.f32 %v7169, 1.442695
        %v7189 = vpow.pop %v7188
        %v7190 = vmul.f32 %v7170, 1.442695
        %v7191 = vpow.pop %v7190
        %v7192 = vmul.f32 %v7171, 1.442695
        %v7193 = vpow.pop %v7192
        %v7194 = vmul.f32 %v7172, 1.442695
        %v7195 = vpow.pop %v7194
        %v7196 = vmul.f32 %v7173, 1.442695
        %v7197 = vpow.pop %v7196
        %v7198 = vmul.f32 %v7174, 1.442695
        %v7199 = vpow.pop %v7198
        %v7200 = vmul.f32 %v7175, 1.442695
        %v7201 = vpow.pop %v7200
        %v7202 = vmul.f32 %v7176, 1.442695
        %v7203 = vpow.pop %v7202
        %v7204 = vmul.f32 %v7177, 1.442695
        %v7205 = vpow.pop %v7204
        %v7206 = vmul.f32 %v7178, 1.442695
        %v7207 = vpow.pop %v7206
        %v7208 = vmul.f32 %v7179, 1.442695
        %v7209 = vpow.pop %v7208
        %v7210 = vmul.f32 %v7180, 1.442695
        %v7211 = vpow.pop %v7210
        %v7212 = vmul.f32 %v7181, 1.442695
        %v7213 = vpow.pop %v7212
        %v7214 = vadd.f32 %v7183, 1.0
        %v7215 = vadd.f32 %v7185, 1.0
        %v7216 = vadd.f32 %v7187, 1.0
        %v7217 = vadd.f32 %v7189, 1.0
        %v7218 = vadd.f32 %v7191, 1.0
        %v7219 = vadd.f32 %v7193, 1.0
        %v7220 = vadd.f32 %v7195, 1.0
        %v7221 = vadd.f32 %v7197, 1.0
        %v7222 = vadd.f32 %v7199, 1.0
        %v7223 = vadd.f32 %v7201, 1.0
        %v7224 = vadd.f32 %v7203, 1.0
        %v7225 = vadd.f32 %v7205, 1.0
        %v7226 = vadd.f32 %v7207, 1.0
        %v7227 = vadd.f32 %v7209, 1.0
        %v7228 = vadd.f32 %v7211, 1.0
        %v7229 = vadd.f32 %v7213, 1.0
        %v7230 = vrcp.pop %v7214
        %v7231 = vmul.f32 1.0, %v7230
        %v7232 = vrcp.pop %v7215
        %v7233 = vmul.f32 1.0, %v7232
        %v7234 = vrcp.pop %v7216
        %v7235 = vmul.f32 1.0, %v7234
        %v7236 = vrcp.pop %v7217
        %v7237 = vmul.f32 1.0, %v7236
        %v7238 = vrcp.pop %v7218
        %v7239 = vmul.f32 1.0, %v7238
        %v7240 = vrcp.pop %v7219
        %v7241 = vmul.f32 1.0, %v7240
        %v7242 = vrcp.pop %v7220
        %v7243 = vmul.f32 1.0, %v7242
        %v7244 = vrcp.pop %v7221
        %v7245 = vmul.f32 1.0, %v7244
        %v7246 = vrcp.pop %v7222
        %v7247 = vmul.f32 1.0, %v7246
        %v7248 = vrcp.pop %v7223
        %v7249 = vmul.f32 1.0, %v7248
        %v7250 = vrcp.pop %v7224
        %v7251 = vmul.f32 1.0, %v7250
        %v7252 = vrcp.pop %v7225
        %v7253 = vmul.f32 1.0, %v7252
        %v7254 = vrcp.pop %v7226
        %v7255 = vmul.f32 1.0, %v7254
        %v7256 = vrcp.pop %v7227
        %v7257 = vmul.f32 1.0, %v7256
        %v7258 = vrcp.pop %v7228
        %v7259 = vmul.f32 1.0, %v7258
        %v7260 = vrcp.pop %v7229
        %v7261 = vmul.f32 1.0, %v7260
        %v7262 = vld [vmem:[%s249 + $0x80] sm:$0xff]
        %v7263 = vld [vmem:[%s249 + $0x88] sm:$0xff]
        %v7264 = vld [vmem:[%s249 + $0x90] sm:$0xff]
        %v7265 = vld [vmem:[%s249 + $0x98] sm:$0xff]
        %v7266 = vld [vmem:[%s249 + $0xa0] sm:$0xff]
        %v7267 = vld [vmem:[%s249 + $0xa8] sm:$0xff]
        %v7268 = vld [vmem:[%s249 + $0xb0] sm:$0xff]
        %v7269 = vld [vmem:[%s249 + $0xb8] sm:$0xff]
        %v7270 = vld [vmem:[%s2] sm:$0xff]
        %v7271 = vld [vmem:[%s2 + $0x8] sm:$0xff]
        %v7272 = vld [vmem:[%s2 + $0x10] sm:$0xff]
        %v7273 = vld [vmem:[%s2 + $0x18] sm:$0xff]
        %v7274 = vld [vmem:[%s2 + $0x20] sm:$0xff]
        %v7275 = vld [vmem:[%s2 + $0x28] sm:$0xff]
        %v7276 = vld [vmem:[%s2 + $0x30] sm:$0xff]
        %v7277 = vld [vmem:[%s2 + $0x38] sm:$0xff]
        %v7278 = vadd.f32 %v7126, %v7270
        %v7279 = vadd.f32 %v7127, %v7271
        %v7280 = vadd.f32 %v7128, %v7272
        %v7281 = vadd.f32 %v7129, %v7273
        %v7282 = vadd.f32 %v7130, %v7274
        %v7283 = vadd.f32 %v7131, %v7275
        %v7284 = vadd.f32 %v7132, %v7276
        %v7285 = vadd.f32 %v7133, %v7277
        %v7286 = vmul.f32 %v7247, %v7278
        %v7287 = vmul.f32 %v7249, %v7279
        %v7288 = vmul.f32 %v7251, %v7280
        %v7289 = vmul.f32 %v7253, %v7281
        %v7290 = vmul.f32 %v7255, %v7282
        %v7291 = vmul.f32 %v7257, %v7283
        %v7292 = vmul.f32 %v7259, %v7284
        %v7293 = vmul.f32 %v7261, %v7285
        %v7294 = vadd.f32 %v7262, %v7286
        %v7295 = vadd.f32 %v7263, %v7287
        %v7296 = vadd.f32 %v7264, %v7288
        %v7297 = vadd.f32 %v7265, %v7289
        %v7298 = vadd.f32 %v7266, %v7290
        %v7299 = vadd.f32 %v7267, %v7291
        %v7300 = vadd.f32 %v7268, %v7292
        %v7301 = vadd.f32 %v7269, %v7293
        %v7302 = vtanh.pop %v7294
        %v7303 = vtanh.pop %v7295
        %v7304 = vtanh.pop %v7296
        %v7305 = vtanh.pop %v7297
        %v7306 = vtanh.pop %v7298
        %v7307 = vtanh.pop %v7299
        %v7308 = vtanh.pop %v7300
        %v7309 = vtanh.pop %v7301
        %v7310 = vsub.f32 1.0, %v7231
        %v7311 = vsub.f32 1.0, %v7233
        %v7312 = vsub.f32 1.0, %v7235
        %v7313 = vsub.f32 1.0, %v7237
        %v7314 = vsub.f32 1.0, %v7239
        %v7315 = vsub.f32 1.0, %v7241
        %v7316 = vsub.f32 1.0, %v7243
        %v7317 = vsub.f32 1.0, %v7245
        %v7318 = vmul.f32 %v7310, %v7302
        %v7319 = vmul.f32 %v7311, %v7303
        %v7320 = vmul.f32 %v7312, %v7304
        %v7321 = vmul.f32 %v7313, %v7305
        %v7322 = vmul.f32 %v7314, %v7306
        %v7323 = vmul.f32 %v7315, %v7307
        %v7324 = vmul.f32 %v7316, %v7308
        %v7325 = vmul.f32 %v7317, %v7309
        %v7326 = vmul.f32 %v7231, %v4893
        %v7327 = vmul.f32 %v7233, %v4894
        %v7328 = vmul.f32 %v7235, %v4895
        %v7329 = vmul.f32 %v7237, %v4896
        %v7330 = vmul.f32 %v7239, %v4897
        %v7331 = vmul.f32 %v7241, %v4898
        %v7332 = vmul.f32 %v7243, %v4899
        %v7333 = vmul.f32 %v7245, %v4900
        %v7334 = vadd.f32 %v7318, %v7326
        %v7335 = vadd.f32 %v7319, %v7327
        %v7336 = vadd.f32 %v7320, %v7328
        %v7337 = vadd.f32 %v7321, %v7329
        %v7338 = vadd.f32 %v7322, %v7330
        %v7339 = vadd.f32 %v7323, %v7331
        %v7340 = vadd.f32 %v7324, %v7332
        %v7341 = vadd.f32 %v7325, %v7333
        %v7342 = vld [vmem:[%s4] sm:$0xff]
        %v7343 = vld [vmem:[%s5] sm:$0xff]
        %v7344 = vld [vmem:[%s5 + $0x8] sm:$0xff]
        %v7346 = vsel %vm316, %v7342, 0
        %7348 = vmatprep.subr.mxu0 0.0
        %7349 = vmatpush1.msra.mxu0 0.0
        %7350 = vmatprep.subr.mxu0 0.0
        %7351 = vmatpush1.msra.mxu0 0.0
        %7352 = vmatprep.subr.mxu0 0.0
        %7353 = vmatpush1.msra.mxu0 0.0
        %7354 = vmatprep.subr.mxu0 0.0
        %7355 = vmatpush1.msra.mxu0 0.0
        %7356 = vmatprep.subr.mxu0 0.0
        %7357 = vmatpush1.msra.mxu0 0.0
        %7358 = vmatprep.subr.mxu0 0.0
        %7359 = vmatpush1.msra.mxu0 0.0
        %7360 = vmatprep.subr.mxu0 0.0
        %7361 = vmatpush1.msra.mxu0 0.0
        %7362 = vmatprep.subr.mxu0 0.0
        %7363 = vmatpush1.msra.mxu0 0.0
        %7364 = vmatprep.subr.mxu0 0.0
        %7365 = vmatpush1.msra.mxu0 0.0
        %7366 = vmatprep.subr.mxu0 0.0
        %7367 = vmatpush1.msra.mxu0 0.0
        %7368 = vmatprep.subr.mxu0 0.0
        %7369 = vmatpush1.msra.mxu0 0.0
        %7370 = vmatprep.subr.mxu0 0.0
        %7371 = vmatpush1.msra.mxu0 0.0
        %7372 = vmatprep.subr.mxu0 %v7341
        %7373 = vmatpush1.msra.mxu0 %v7340
        %7374 = vmatprep.subr.mxu0 %v7339
        %7375 = vmatpush1.msra.mxu0 %v7338
        %7376 = vmatprep.subr.mxu0 %v7337
        %7377 = vmatpush1.msra.mxu0 %v7336
        %7378 = vmatprep.subr.mxu0 %v7335
        %7379 = vmatpush1.msra.mxu0 %v7334
        %7380 = vmatprep.subr.mxu0 0.0
        %7381 = vmatpush2.msra.mxu0 0.0
        %7382 = vmatprep.subr.mxu0 0.0
        %7383 = vmatpush2.msra.mxu0 0.0
        %7384 = vmatprep.subr.mxu0 0.0
        %7385 = vmatpush2.msra.mxu0 0.0
        %7386 = vmatprep.subr.mxu0 0.0
        %7387 = vmatpush2.msra.mxu0 0.0
        %7388 = vmatprep.subr.mxu0 0.0
        %7389 = vmatpush2.msra.mxu0 0.0
        %7390 = vmatprep.subr.mxu0 0.0
        %7391 = vmatpush2.msra.mxu0 0.0
        %7392 = vmatprep.subr.mxu0 0.0
        %7393 = vmatpush2.msra.mxu0 0.0
        %7394 = vmatprep.subr.mxu0 0.0
        %7395 = vmatpush2.msra.mxu0 0.0
        %7396 = vmatprep.subr.mxu0 0.0
        %7397 = vmatpush2.msra.mxu0 0.0
        %7398 = vmatprep.subr.mxu0 0.0
        %7399 = vmatpush2.msra.mxu0 0.0
        %7400 = vmatprep.subr.mxu0 0.0
        %7401 = vmatpush2.msra.mxu0 0.0
        %7402 = vmatprep.subr.mxu0 0.0
        %7403 = vmatpush2.msra.mxu0 0.0
        %7404 = vmatprep.subr.mxu0 0.0
        %7405 = vmatpush2.msra.mxu0 0.0
        %7406 = vmatprep.subr.mxu0 0.0
        %7407 = vmatpush2.msra.mxu0 0.0
        %7408 = vmatprep.subr.mxu0 0.0
        %7409 = vmatpush2.msra.mxu0 0.0
        %7410 = vmatprep.subr.mxu0 0.0
        %7411 = vmatpush2.msra.mxu0 0.0
        %7412 = vmatprep.mubr.f32.mxu0 0.0
        %7413 = vmatmul.mubr.f32.gmra.mxu0 %v7346
        %v7414 = vpop.f32.mrf.mxu0
        %v7415 = vadd.f32 %v7343, %v7414
        %v7416 = vpop.f32.mrf.mxu0
        %v7417 = vadd.f32 %v7344, %v7416
        %7418 = vdwg.mxu0
        %s7419 = scalar_lea.vmem %s244, 32 [#allocation2]
        %7420 = vst [vmem:[%s7419] sm:$0xff] %v7415
        %7421 = vst [vmem:[%s7419 + $0x8] sm:$0xff] %v7417
        %s7422 = sand.u32 %s159, 1
        %s7423 = scalar_lea.sflag [#allocation3], %s7422
        %s7424 = sand.u32 %s159, 1
        %s7425 = smul.addr %s7424, 48
        %s7426 = scalar_lea.vmem [#allocation2], %s7425
        // Predicated region
        $region45: #{tpu_custom_call.1} parent=43 // pred_check
          %p7427 = pneg %p169
        $region46: #{tpu_custom_call.1} parent=43 // pred_check_branch
          %7429 = sbr.rel (%p7427) target = $region48
        $region47: #{tpu_custom_call.1} parent=43 // pred_region
          %s7431 = ssub.s32 768, 768
          %7432 = vsyncadd %s7423, %s7431
          %s7433 = smul.addr %s20, 6
          %s7434 = smul.addr %s7433, 128
          %s7435 = scalar_lea.hbm %s6, %s7434
          %s7436 = sshll.u32 %s7426, 4
          %s7437 = int_to_ptr.vmem [resolvable:$true] %s7436
          %7442 = dma.vmem_to_hbm [thread:$0]  %s7437, 768, %s7435, %s7423, 256, 256, 16
        $region48: #{tpu_custom_call.1} parent=43 // pred_fallthru
          _
      $region44: #{tpu_custom_call.1} parent=5 // pred_fallthru
        _
      %p7443 = scmp.le.s32.totalorder 2, %s15
      // Predicated region
      $region49: #{tpu_custom_call.1} parent=5 // pred_check
        %p7444 = pneg %p7443
      $region50: #{tpu_custom_call.1} parent=5 // pred_check_branch
        %7446 = sbr.rel (%p7444) target = $region52
      $region51: #{tpu_custom_call.1} parent=5 // pred_region
        %s7447 = ssub.s32 %s15, 2
        // Predicated region
        $region53: #{tpu_custom_call.1} parent=51 // pred_check
          %p7448 = pneg %p175
        $region54: #{tpu_custom_call.1} parent=51 // pred_check_branch
          %7450 = sbr.rel (%p7448) target = $region56
        $region55: #{tpu_custom_call.1} parent=51 // pred_region
          %s7451 = sand.u32 %s160, 1
          %s7452 = scalar_lea.sflag [#allocation3], %s7451
          %s7453 = sand.u32 %s160, 1
          %s7454 = smul.addr %s7453, 48
          %s7455 = scalar_lea.vmem [#allocation2], %s7454
          %7456 = dma.done %s7452, 768
        $region56: #{tpu_custom_call.1} parent=51 // pred_fallthru
          _
      $region52: #{tpu_custom_call.1} parent=5 // pred_fallthru
        _
    $region6: #{tpu_custom_call.1} parent=1 // loop_footer
      %s19 = sadd.s32 1, %s15
    $region7: #{tpu_custom_call.1} parent=1 // loop_footer_branch
      %14 = sbr.rel target = $region3
    $region8: #{tpu_custom_call.1} parent=1 // loop_exit
      _
    %7457 = vsyncpa [#allocation3], 1
    %s7458 = scalar_lea.sflag [#allocation3], 1
    %7459 = vsyncpa %s7458, 1

</llo_original>
